<compile_context>
chip_gen: v6e
topology: v6e:2x2x1
jax: 0.10.0
libtpu: 0.0.40
codegen_flags: <defaults>
</compile_context>

<pallas_src>
import functools
import math

import jax
import jax.numpy as jnp
from jax import lax
from jax.experimental import pallas as pl
from jax.experimental.pallas import tpu as pltpu


def _l2_normalize(x, eps=1e-12):
    # F.normalize(p=2, dim=-1): x / max(||x||_2, eps) == x * rsqrt(max(sum(x^2), eps^2))
    ss = jnp.sum(x * x, axis=-1, keepdims=True)
    return x * lax.rsqrt(jnp.maximum(ss, eps * eps))


def _mha_kernel(q_ref, k_ref, v_ref,
                wq_ref, wk_ref, wv_ref, wtc_ref,
                w1_ref, b1_ref, w2_ref, b2_ref, g_ref, beta_ref,
                o_ref, *, n_head, d_model, d_key, eps):
    """One batch element: all heads of RelationUnit + TransNonlinear over (S, D)."""
    bf = jnp.bfloat16
    f32 = jnp.float32

    q = q_ref[...]                                   # (S, D) f32
    k = k_ref[...]
    v = v_ref[...]

    # Head-stacked projections: N = Nh*Dk / Nh*D -> 256-wide MXU tiles.
    qp = jnp.dot(q.astype(bf), wq_ref[...], preferred_element_type=f32)   # (S, Nh*Dk)
    kp = jnp.dot(k.astype(bf), wk_ref[...], preferred_element_type=f32)   # (S, Nh*Dk)
    vp = jnp.dot(v.astype(bf), wv_ref[...], preferred_element_type=f32)   # (S, Nh*D)

    wtc_all = wtc_ref[...]                            # (D, Nh*D)  bf16
    w1_all = w1_ref[...]                              # (D, Nh*Dk) bf16
    w2_all = w2_ref[...]                              # (Dk, Nh*D) bf16
    b1_all = b1_ref[...]                              # (Nh, 1, Dk) f32
    b2_all = b2_ref[...]                              # (Nh, 1, D)  f32
    g_all = g_ref[...]                                # (Nh, 1, D)  f32
    beta_all = beta_ref[...]                          # (Nh, 1, D)  f32

    for h in range(n_head):                           # static unroll (Nh is small)
        kq0, kq1 = h * d_key, (h + 1) * d_key
        dm0, dm1 = h * d_model, (h + 1) * d_model

        wq_h = _l2_normalize(qp[:, kq0:kq1])          # (S, Dk) f32
        wk_h = _l2_normalize(kp[:, kq0:kq1])

        # logits = wq @ wk^T  (temp == 1, no mask is ever passed by the module)
        s = lax.dot_general(wq_h.astype(bf), wk_h.astype(bf),
                            dimension_numbers=(((1,), (1,)), ((), ())),
                            preferred_element_type=f32)             # (Sq, Sk)

        # softmax over keys + query-axis renorm, with reciprocal-multiplies
        e = jnp.exp(s - jnp.max(s, axis=-1, keepdims=True))          # (S, S) f32
        inv_row = pl.reciprocal(jnp.sum(e, axis=-1, keepdims=True), approx=True)
        p = e * inv_row                                              # row softmax
        inv_col = pl.reciprocal(1e-9 + jnp.sum(p, axis=0, keepdims=True), approx=True)
        p_bf = (p * inv_col).astype(bf)                # fused column renorm + downcast
        # TODO(synk): for long sequences (S >~ 2k on v7x's 64 MiB VMEM) the (S,S)
        # affinity needs flash-style key tiling + a two-pass query-axis renorm.

        wv_h = vp[:, dm0:dm1]                                        # (S, D)
        out = jnp.dot(p_bf, wv_h.astype(bf), preferred_element_type=f32)

        # trans_conv(query - output) -> ReLU   (residual kept in f32)
        ru = jnp.dot((q - out).astype(bf), wtc_all[:, dm0:dm1],
                     preferred_element_type=f32)
        ru = jnp.maximum(ru, 0.0)                                    # (S, D) f32

        # TransNonlinear: FFN + residual + LayerNorm (dropout = identity in eval)
        hh = jnp.dot(ru.astype(bf), w1_all[:, kq0:kq1],
                     preferred_element_type=f32) + b1_all[h]
        hh = jnp.maximum(hh, 0.0).astype(bf)
        src2 = jnp.dot(hh, w2_all[:, dm0:dm1],
                       preferred_element_type=f32) + b2_all[h]

        z = ru + src2                                                # (S, D) f32
        mean = jnp.mean(z, axis=-1, keepdims=True)
        cent = z - mean
        var = jnp.mean(cent * cent, axis=-1, keepdims=True)
        zn = cent * lax.rsqrt(var + eps)
        o_ref[:, dm0:dm1] = (zn * g_all[h] + beta_all[h]).astype(o_ref.dtype)


def multihead_attention(query, key, value, prepared_params, *, eps=1e-5):
    """query/key/value: (seq, batch, D) f32 -> (seq, batch, n_head * D) f32."""
    S, B, D = query.shape
    wq, wk, wv, wtc, w1, b1, w2, b2, gamma, beta = prepared_params
    Nh = b1.shape[0]
    Dk = wq.shape[1] // Nh
    assert S % 8 == 0 and D % 128 == 0 and Dk % 128 == 0, (
        "pad seq to a multiple of 8 and feature dims to multiples of 128")

    # Zero-copy views: batch b of a (S,B,D) row-major array is a contiguous
    # 128-lane-aligned column block of the (S, B*D) view -> no transposes.
    qf = query.reshape(S, B * D)
    kf = key.reshape(S, B * D)
    vf = value.reshape(S, B * D)

    kernel = functools.partial(_mha_kernel, n_head=Nh, d_model=D, d_key=Dk, eps=eps)

    act_spec = pl.BlockSpec((S, D), lambda b: (0, b))

    def full(x):   # weights / params: constant index_map -> fetched once, resident
        return pl.BlockSpec(x.shape, lambda b, nd=x.ndim: (0,) * nd)

    out = pl.pallas_call(
        kernel,
        out_shape=jax.ShapeDtypeStruct((S, B * Nh * D), query.dtype),
        grid_spec=pltpu.PrefetchScalarGridSpec(
            num_scalar_prefetch=0,
            grid=(B,),
            in_specs=[
                act_spec, act_spec, act_spec,      # q, k, v (per-batch column block)
                full(wq),                          # (D, Nh*Dk) bf16, head-stacked
                full(wk),                          # (D, Nh*Dk)
                full(wv),                          # (D, Nh*D)
                full(wtc),                         # (D, Nh*D)
                full(w1),                          # (D, Nh*Dk)
                full(b1),                          # (Nh, 1, Dk) f32
                full(w2),                          # (Dk, Nh*D)
                full(b2),                          # (Nh, 1, D) f32
                full(gamma),                       # (Nh, 1, D) f32
                full(beta),                        # (Nh, 1, D) f32
            ],
            out_specs=pl.BlockSpec((S, Nh * D), lambda b: (0, b)),
        ),
        compiler_params=pltpu.CompilerParams(
            dimension_semantics=("parallel",),     # B=2 steps -> both v7x TCs busy
            vmem_limit_bytes=32 * 1024 * 1024),
    )(qf, kf, vf, wq, wk, wv, wtc, w1, b1, w2, b2, gamma, beta)

    return out.reshape(S, B, Nh * D)


def prepare_params(params):
    """One-time: stack per-head weights on their output axis and cast to bf16."""
    wq, wk, wv, wtc, w1, b1, w2, b2, gamma, beta = params
    Nh = wq.shape[0]
    bf = jnp.bfloat16

    def stack(w):   # (Nh, In, Out) -> (In, Nh*Out), head h at columns [h*Out,(h+1)*Out)
        return jnp.transpose(w, (1, 0, 2)).reshape(w.shape[1], Nh * w.shape[2])

    return (stack(wq).astype(bf), stack(wk).astype(bf), stack(wv).astype(bf),
            stack(wtc).astype(bf), stack(w1).astype(bf), b1,
            stack(w2).astype(bf), b2, gamma, beta)


def init_params(key, n_head, d, dk):
    """Deterministic synthetic params; weights stored pre-transposed as (in, out)."""
    ks = jax.random.split(key, 8)
    s_k = math.sqrt(2.0 / dk)
    s_d = math.sqrt(2.0 / d)
    wq = jax.random.normal(ks[0], (n_head, d, dk), jnp.float32) * s_k
    wk = jax.random.normal(ks[1], (n_head, d, dk), jnp.float32) * s_k
    wv = jax.random.normal(ks[2], (n_head, d, d), jnp.float32) * s_d
    wtc = jax.random.normal(ks[3], (n_head, d, d), jnp.float32) * (1.0 / math.sqrt(d))
    w1 = jax.random.normal(ks[4], (n_head, d, dk), jnp.float32) * (1.0 / math.sqrt(d))
    b1 = jax.random.normal(ks[5], (n_head, 1, dk), jnp.float32) * 0.05
    w2 = jax.random.normal(ks[6], (n_head, dk, d), jnp.float32) * (1.0 / math.sqrt(dk))
    b2 = jax.random.normal(ks[7], (n_head, 1, d), jnp.float32) * 0.05
    gamma = jnp.ones((n_head, 1, d), jnp.float32)
    beta = jnp.zeros((n_head, 1, d), jnp.float32)
    return (wq, wk, wv, wtc, w1, b1, w2, b2, gamma, beta)


def reference(query, key, value, params, eps=1e-5):
    """Pure-JAX f32 reference of MultiheadAttention.forward (eval mode)."""
    wq, wk, wv, wtc, w1, b1, w2, b2, gamma, beta = params
    Nh = wq.shape[0]
    outs = []
    for h in range(Nh):
        w_k = key @ wk[h]
        w_k = w_k / jnp.maximum(jnp.linalg.norm(w_k, axis=-1, keepdims=True), 1e-12)
        w_q = query @ wq[h]
        w_q = w_q / jnp.maximum(jnp.linalg.norm(w_q, axis=-1, keepdims=True), 1e-12)
        dot = jnp.einsum('qbd,kbd->bqk', w_q, w_k)             # (B, Sq, Sk)
        aff = jax.nn.softmax(dot, axis=-1)
        aff = aff / (1e-9 + jnp.sum(aff, axis=1, keepdims=True))
        w_v = jnp.einsum('sbd,de->bse', value, wv[h])          # (B, S, D)
        out = jnp.einsum('bqk,bkd->qbd', aff, w_v)             # (Sq, B, D)
        out = jnp.maximum((query - out) @ wtc[h], 0.0)
        hh = jnp.maximum(out @ w1[h] + b1[h, 0], 0.0)
        src2 = hh @ w2[h] + b2[h, 0]
        z = out + src2
        mean = jnp.mean(z, axis=-1, keepdims=True)
        var = jnp.mean((z - mean) ** 2, axis=-1, keepdims=True)
        outs.append((z - mean) / jnp.sqrt(var + eps) * gamma[h, 0] + beta[h, 0])
    return jnp.concatenate(outs, axis=-1)


if __name__ == "__main__":
    # TODO(synk): dropout layers are identity at inference; the optional attention
    # mask (never passed by MultiheadAttention.forward) and the unused
    # BatchNorm1d `after_norm` are not implemented.
    seq, batch = 256, 2
    feature_dim, key_feature_dim, n_head = 128, 128, 2   # 128-lane aligned

    root = jax.random.PRNGKey(0)
    kq, kk, kv, kp = jax.random.split(root, 4)
    query = jax.random.normal(kq, (seq, batch, feature_dim), jnp.float32)
    key = jax.random.normal(kk, (seq, batch, feature_dim), jnp.float32)
    value = jax.random.normal(kv, (seq, batch, feature_dim), jnp.float32)
    params = init_params(kp, n_head, feature_dim, key_feature_dim)
    prepared = prepare_params(params)   # one-time head-stack + bf16 cast of weights

    out = multihead_attention(query, key, value, prepared)
    jax.block_until_ready(out)
    assert out.shape == (seq, batch, n_head * feature_dim)

    ref = reference(query, key, value, params)
    max_err = float(jnp.max(jnp.abs(out - ref)))
    # bf16 MXU operands (f32 accumulation) + approx reciprocals vs. f32 reference
    assert jnp.allclose(out, ref, atol=5e-2, rtol=5e-2), max_err
    print("KERNEL_OK")
</pallas_src>

<mosaic_0001>
module attributes {stable_mosaic.version = 11 : i64} {
  func.func @_mha_kernel(%arg0: i32, %arg1: memref<256x128xf32, #tpu.memory_space<vmem>>, %arg2: memref<256x128xf32, #tpu.memory_space<vmem>>, %arg3: memref<256x128xf32, #tpu.memory_space<vmem>>, %arg4: memref<128x256xbf16, #tpu.memory_space<vmem>>, %arg5: memref<128x256xbf16, #tpu.memory_space<vmem>>, %arg6: memref<128x256xbf16, #tpu.memory_space<vmem>>, %arg7: memref<128x256xbf16, #tpu.memory_space<vmem>>, %arg8: memref<128x256xbf16, #tpu.memory_space<vmem>>, %arg9: memref<2x1x128xf32, #tpu.memory_space<vmem>>, %arg10: memref<128x256xbf16, #tpu.memory_space<vmem>>, %arg11: memref<2x1x128xf32, #tpu.memory_space<vmem>>, %arg12: memref<2x1x128xf32, #tpu.memory_space<vmem>>, %arg13: memref<2x1x128xf32, #tpu.memory_space<vmem>>, %arg14: memref<256x256xf32, #tpu.memory_space<vmem>>) attributes {dimension_semantics = [#tpu.dimension_semantics<parallel>], iteration_bounds = array<i64: 2>, scalar_prefetch = 0 : i64, scratch_operands = 0 : i64, tpu.core_type = #tpu.core_type<tc>, window_params = [{transform_indices = @transform_0, window_bounds = array<i64: 256, 128>}, {transform_indices = @transform_1, window_bounds = array<i64: 256, 128>}, {transform_indices = @transform_2, window_bounds = array<i64: 256, 128>}, {pipeline_mode = #tpu.pipeline_mode<synchronous>, transform_indices = @transform_3, window_bounds = array<i64: 128, 256>}, {pipeline_mode = #tpu.pipeline_mode<synchronous>, transform_indices = @transform_4, window_bounds = array<i64: 128, 256>}, {pipeline_mode = #tpu.pipeline_mode<synchronous>, transform_indices = @transform_5, window_bounds = array<i64: 128, 256>}, {pipeline_mode = #tpu.pipeline_mode<synchronous>, transform_indices = @transform_6, window_bounds = array<i64: 128, 256>}, {pipeline_mode = #tpu.pipeline_mode<synchronous>, transform_indices = @transform_7, window_bounds = array<i64: 128, 256>}, {pipeline_mode = #tpu.pipeline_mode<synchronous>, transform_indices = @transform_8, window_bounds = array<i64: 2, 1, 128>}, {pipeline_mode = #tpu.pipeline_mode<synchronous>, transform_indices = @transform_9, window_bounds = array<i64: 128, 256>}, {pipeline_mode = #tpu.pipeline_mode<synchronous>, transform_indices = @transform_10, window_bounds = array<i64: 2, 1, 128>}, {pipeline_mode = #tpu.pipeline_mode<synchronous>, transform_indices = @transform_11, window_bounds = array<i64: 2, 1, 128>}, {pipeline_mode = #tpu.pipeline_mode<synchronous>, transform_indices = @transform_12, window_bounds = array<i64: 2, 1, 128>}, {transform_indices = @transform_13, window_bounds = array<i64: 256, 256>}]} {
    %c0 = arith.constant 0 : index
    %c0_0 = arith.constant 0 : index
    %0 = vector.load %arg1[%c0, %c0_0] : memref<256x128xf32, #tpu.memory_space<vmem>>, vector<256x128xf32>
    %c0_1 = arith.constant 0 : index
    %c0_2 = arith.constant 0 : index
    %1 = vector.load %arg2[%c0_1, %c0_2] : memref<256x128xf32, #tpu.memory_space<vmem>>, vector<256x128xf32>
    %c0_3 = arith.constant 0 : index
    %c0_4 = arith.constant 0 : index
    %2 = vector.load %arg3[%c0_3, %c0_4] : memref<256x128xf32, #tpu.memory_space<vmem>>, vector<256x128xf32>
    %3 = arith.truncf %0 : vector<256x128xf32> to vector<256x128xbf16>
    %c0_5 = arith.constant 0 : index
    %c0_6 = arith.constant 0 : index
    %4 = vector.load %arg4[%c0_5, %c0_6] : memref<128x256xbf16, #tpu.memory_space<vmem>>, vector<128x256xbf16>
    %cst = arith.constant dense<0.000000e+00> : vector<256x256xf32>
    %5 = tpu.matmul %3, %4, %cst {dimension_numbers = #tpu.dot_dimension_numbers<[1], [0], [0], [1], [0, 0, 1, 1], [], []>} : vector<256x128xbf16>, vector<128x256xbf16>, vector<256x256xf32> -> vector<256x256xf32>
    %6 = arith.truncf %1 : vector<256x128xf32> to vector<256x128xbf16>
    %c0_7 = arith.constant 0 : index
    %c0_8 = arith.constant 0 : index
    %7 = vector.load %arg5[%c0_7, %c0_8] : memref<128x256xbf16, #tpu.memory_space<vmem>>, vector<128x256xbf16>
    %cst_9 = arith.constant dense<0.000000e+00> : vector<256x256xf32>
    %8 = tpu.matmul %6, %7, %cst_9 {dimension_numbers = #tpu.dot_dimension_numbers<[1], [0], [0], [1], [0, 0, 1, 1], [], []>} : vector<256x128xbf16>, vector<128x256xbf16>, vector<256x256xf32> -> vector<256x256xf32>
    %9 = arith.truncf %2 : vector<256x128xf32> to vector<256x128xbf16>
    %c0_10 = arith.constant 0 : index
    %c0_11 = arith.constant 0 : index
    %10 = vector.load %arg6[%c0_10, %c0_11] : memref<128x256xbf16, #tpu.memory_space<vmem>>, vector<128x256xbf16>
    %cst_12 = arith.constant dense<0.000000e+00> : vector<256x256xf32>
    %11 = tpu.matmul %9, %10, %cst_12 {dimension_numbers = #tpu.dot_dimension_numbers<[1], [0], [0], [1], [0, 0, 1, 1], [], []>} : vector<256x128xbf16>, vector<128x256xbf16>, vector<256x256xf32> -> vector<256x256xf32>
    %c0_13 = arith.constant 0 : index
    %c0_14 = arith.constant 0 : index
    %12 = vector.load %arg7[%c0_13, %c0_14] : memref<128x256xbf16, #tpu.memory_space<vmem>>, vector<128x256xbf16>
    %c0_15 = arith.constant 0 : index
    %c0_16 = arith.constant 0 : index
    %13 = vector.load %arg8[%c0_15, %c0_16] : memref<128x256xbf16, #tpu.memory_space<vmem>>, vector<128x256xbf16>
    %c0_17 = arith.constant 0 : index
    %c0_18 = arith.constant 0 : index
    %14 = vector.load %arg10[%c0_17, %c0_18] : memref<128x256xbf16, #tpu.memory_space<vmem>>, vector<128x256xbf16>
    %c0_19 = arith.constant 0 : index
    %c0_20 = arith.constant 0 : index
    %c0_21 = arith.constant 0 : index
    %15 = vector.load %arg9[%c0_19, %c0_20, %c0_21] : memref<2x1x128xf32, #tpu.memory_space<vmem>>, vector<2x1x128xf32>
    %c0_22 = arith.constant 0 : index
    %c0_23 = arith.constant 0 : index
    %c0_24 = arith.constant 0 : index
    %16 = vector.load %arg11[%c0_22, %c0_23, %c0_24] : memref<2x1x128xf32, #tpu.memory_space<vmem>>, vector<2x1x128xf32>
    %c0_25 = arith.constant 0 : index
    %c0_26 = arith.constant 0 : index
    %c0_27 = arith.constant 0 : index
    %17 = vector.load %arg12[%c0_25, %c0_26, %c0_27] : memref<2x1x128xf32, #tpu.memory_space<vmem>>, vector<2x1x128xf32>
    %c0_28 = arith.constant 0 : index
    %c0_29 = arith.constant 0 : index
    %c0_30 = arith.constant 0 : index
    %18 = vector.load %arg13[%c0_28, %c0_29, %c0_30] : memref<2x1x128xf32, #tpu.memory_space<vmem>>, vector<2x1x128xf32>
    %19 = vector.extract_strided_slice %5 {offsets = [0, 0], sizes = [256, 128], strides = [1, 1]} : vector<256x256xf32> to vector<256x128xf32>
    %20 = arith.mulf %19, %19 : vector<256x128xf32>
    %cst_31 = arith.constant dense<0.000000e+00> : vector<256xf32>
    %21 = vector.multi_reduction <add>, %20, %cst_31 [1] : vector<256x128xf32> to vector<256xf32>
    %22 = vector.shape_cast %21 : vector<256xf32> to vector<256x1xf32>
    %cst_32 = arith.constant 1.000000e-24 : f32
    %23 = vector.broadcast %cst_32 : f32 to vector<256x1xf32>
    %24 = arith.maximumf %22, %23 : vector<256x1xf32>
    %25 = math.rsqrt %24 : vector<256x1xf32>
    %26 = vector.broadcast %25 : vector<256x1xf32> to vector<256x128xf32>
    %27 = arith.mulf %19, %26 : vector<256x128xf32>
    %28 = vector.extract_strided_slice %8 {offsets = [0, 0], sizes = [256, 128], strides = [1, 1]} : vector<256x256xf32> to vector<256x128xf32>
    %29 = arith.mulf %28, %28 : vector<256x128xf32>
    %cst_33 = arith.constant dense<0.000000e+00> : vector<256xf32>
    %30 = vector.multi_reduction <add>, %29, %cst_33 [1] : vector<256x128xf32> to vector<256xf32>
    %31 = vector.shape_cast %30 : vector<256xf32> to vector<256x1xf32>
    %cst_34 = arith.constant 1.000000e-24 : f32
    %32 = vector.broadcast %cst_34 : f32 to vector<256x1xf32>
    %33 = arith.maximumf %31, %32 : vector<256x1xf32>
    %34 = math.rsqrt %33 : vector<256x1xf32>
    %35 = vector.broadcast %34 : vector<256x1xf32> to vector<256x128xf32>
    %36 = arith.mulf %28, %35 : vector<256x128xf32>
    %37 = arith.truncf %27 : vector<256x128xf32> to vector<256x128xbf16>
    %38 = arith.truncf %36 : vector<256x128xf32> to vector<256x128xbf16>
    %cst_35 = arith.constant dense<0.000000e+00> : vector<256x256xf32>
    %39 = tpu.matmul %37, %38, %cst_35 {dimension_numbers = #tpu.dot_dimension_numbers<[1], [1], [0], [0], [0, 0, 1, 0], [], []>} : vector<256x128xbf16>, vector<256x128xbf16>, vector<256x256xf32> -> vector<256x256xf32>
    %cst_36 = arith.constant dense<0xFF800000> : vector<256xf32>
    %40 = vector.multi_reduction <maximumf>, %39, %cst_36 [1] : vector<256x256xf32> to vector<256xf32>
    %41 = vector.shape_cast %40 : vector<256xf32> to vector<256x1xf32>
    %42 = vector.broadcast %41 : vector<256x1xf32> to vector<256x256xf32>
    %43 = arith.subf %39, %42 : vector<256x256xf32>
    %44 = math.exp %43 : vector<256x256xf32>
    %cst_37 = arith.constant dense<0.000000e+00> : vector<256xf32>
    %45 = vector.multi_reduction <add>, %44, %cst_37 [1] : vector<256x256xf32> to vector<256xf32>
    %46 = vector.shape_cast %45 : vector<256xf32> to vector<256x1xf32>
    %47 = tpu.reciprocal %46 {approx = true} : vector<256x1xf32> -> vector<256x1xf32>
    %48 = vector.broadcast %47 : vector<256x1xf32> to vector<256x256xf32>
    %49 = arith.mulf %44, %48 : vector<256x256xf32>
    %cst_38 = arith.constant dense<0.000000e+00> : vector<256xf32>
    %50 = vector.multi_reduction <add>, %49, %cst_38 [0] : vector<256x256xf32> to vector<256xf32>
    %51 = vector.shape_cast %50 : vector<256xf32> to vector<1x256xf32>
    %cst_39 = arith.constant 9.99999971E-10 : f32
    %52 = vector.broadcast %cst_39 : f32 to vector<1x256xf32>
    %53 = arith.addf %52, %51 : vector<1x256xf32>
    %54 = tpu.reciprocal %53 {approx = true} : vector<1x256xf32> -> vector<1x256xf32>
    %55 = vector.broadcast %54 : vector<1x256xf32> to vector<256x256xf32>
    %56 = arith.mulf %49, %55 : vector<256x256xf32>
    %57 = arith.truncf %56 : vector<256x256xf32> to vector<256x256xbf16>
    %58 = vector.extract_strided_slice %11 {offsets = [0, 0], sizes = [256, 128], strides = [1, 1]} : vector<256x256xf32> to vector<256x128xf32>
    %59 = arith.truncf %58 : vector<256x128xf32> to vector<256x128xbf16>
    %cst_40 = arith.constant dense<0.000000e+00> : vector<256x128xf32>
    %60 = tpu.matmul %57, %59, %cst_40 {dimension_numbers = #tpu.dot_dimension_numbers<[1], [0], [0], [1], [0, 0, 1, 1], [], []>} : vector<256x256xbf16>, vector<256x128xbf16>, vector<256x128xf32> -> vector<256x128xf32>
    %61 = arith.subf %0, %60 : vector<256x128xf32>
    %62 = arith.truncf %61 : vector<256x128xf32> to vector<256x128xbf16>
    %63 = vector.extract_strided_slice %12 {offsets = [0, 0], sizes = [128, 128], strides = [1, 1]} : vector<128x256xbf16> to vector<128x128xbf16>
    %cst_41 = arith.constant dense<0.000000e+00> : vector<256x128xf32>
    %64 = tpu.matmul %62, %63, %cst_41 {dimension_numbers = #tpu.dot_dimension_numbers<[1], [0], [0], [1], [0, 0, 1, 1], [], []>} : vector<256x128xbf16>, vector<128x128xbf16>, vector<256x128xf32> -> vector<256x128xf32>
    %cst_42 = arith.constant 0.000000e+00 : f32
    %65 = vector.broadcast %cst_42 : f32 to vector<256x128xf32>
    %66 = arith.maximumf %64, %65 : vector<256x128xf32>
    %67 = arith.truncf %66 : vector<256x128xf32> to vector<256x128xbf16>
    %68 = vector.extract_strided_slice %13 {offsets = [0, 0], sizes = [128, 128], strides = [1, 1]} : vector<128x256xbf16> to vector<128x128xbf16>
    %cst_43 = arith.constant dense<0.000000e+00> : vector<256x128xf32>
    %69 = tpu.matmul %67, %68, %cst_43 {dimension_numbers = #tpu.dot_dimension_numbers<[1], [0], [0], [1], [0, 0, 1, 1], [], []>} : vector<256x128xbf16>, vector<128x128xbf16>, vector<256x128xf32> -> vector<256x128xf32>
    %70 = vector.extract_strided_slice %15 {offsets = [0, 0, 0], sizes = [1, 1, 128], strides = [1, 1, 1]} : vector<2x1x128xf32> to vector<1x1x128xf32>
    %71 = vector.shape_cast %70 : vector<1x1x128xf32> to vector<1x128xf32>
    %72 = vector.broadcast %71 : vector<1x128xf32> to vector<256x128xf32>
    %73 = arith.addf %69, %72 : vector<256x128xf32>
    %cst_44 = arith.constant 0.000000e+00 : f32
    %74 = vector.broadcast %cst_44 : f32 to vector<256x128xf32>
    %75 = arith.maximumf %73, %74 : vector<256x128xf32>
    %76 = arith.truncf %75 : vector<256x128xf32> to vector<256x128xbf16>
    %77 = vector.extract_strided_slice %14 {offsets = [0, 0], sizes = [128, 128], strides = [1, 1]} : vector<128x256xbf16> to vector<128x128xbf16>
    %cst_45 = arith.constant dense<0.000000e+00> : vector<256x128xf32>
    %78 = tpu.matmul %76, %77, %cst_45 {dimension_numbers = #tpu.dot_dimension_numbers<[1], [0], [0], [1], [0, 0, 1, 1], [], []>} : vector<256x128xbf16>, vector<128x128xbf16>, vector<256x128xf32> -> vector<256x128xf32>
    %79 = vector.extract_strided_slice %16 {offsets = [0, 0, 0], sizes = [1, 1, 128], strides = [1, 1, 1]} : vector<2x1x128xf32> to vector<1x1x128xf32>
    %80 = vector.shape_cast %79 : vector<1x1x128xf32> to vector<1x128xf32>
    %81 = vector.broadcast %80 : vector<1x128xf32> to vector<256x128xf32>
    %82 = arith.addf %78, %81 : vector<256x128xf32>
    %83 = arith.addf %66, %82 : vector<256x128xf32>
    %cst_46 = arith.constant dense<0.000000e+00> : vector<256xf32>
    %84 = vector.multi_reduction <add>, %83, %cst_46 [1] : vector<256x128xf32> to vector<256xf32>
    %85 = vector.shape_cast %84 : vector<256xf32> to vector<256x1xf32>
    %cst_47 = arith.constant 1.280000e+02 : f32
    %86 = vector.broadcast %cst_47 : f32 to vector<256x1xf32>
    %87 = arith.divf %85, %86 : vector<256x1xf32>
    %88 = vector.broadcast %87 : vector<256x1xf32> to vector<256x128xf32>
    %89 = arith.subf %83, %88 : vector<256x128xf32>
    %90 = arith.mulf %89, %89 : vector<256x128xf32>
    %cst_48 = arith.constant dense<0.000000e+00> : vector<256xf32>
    %91 = vector.multi_reduction <add>, %90, %cst_48 [1] : vector<256x128xf32> to vector<256xf32>
    %92 = vector.shape_cast %91 : vector<256xf32> to vector<256x1xf32>
    %cst_49 = arith.constant 1.280000e+02 : f32
    %93 = vector.broadcast %cst_49 : f32 to vector<256x1xf32>
    %94 = arith.divf %92, %93 : vector<256x1xf32>
    %cst_50 = arith.constant 9.99999974E-6 : f32
    %95 = vector.broadcast %cst_50 : f32 to vector<256x1xf32>
    %96 = arith.addf %94, %95 : vector<256x1xf32>
    %97 = math.rsqrt %96 : vector<256x1xf32>
    %98 = vector.broadcast %97 : vector<256x1xf32> to vector<256x128xf32>
    %99 = arith.mulf %89, %98 : vector<256x128xf32>
    %100 = vector.extract_strided_slice %17 {offsets = [0, 0, 0], sizes = [1, 1, 128], strides = [1, 1, 1]} : vector<2x1x128xf32> to vector<1x1x128xf32>
    %101 = vector.shape_cast %100 : vector<1x1x128xf32> to vector<1x128xf32>
    %102 = vector.broadcast %101 : vector<1x128xf32> to vector<256x128xf32>
    %103 = arith.mulf %99, %102 : vector<256x128xf32>
    %104 = vector.extract_strided_slice %18 {offsets = [0, 0, 0], sizes = [1, 1, 128], strides = [1, 1, 1]} : vector<2x1x128xf32> to vector<1x1x128xf32>
    %105 = vector.shape_cast %104 : vector<1x1x128xf32> to vector<1x128xf32>
    %106 = vector.broadcast %105 : vector<1x128xf32> to vector<256x128xf32>
    %107 = arith.addf %103, %106 : vector<256x128xf32>
    %c0_51 = arith.constant 0 : index
    %c0_52 = arith.constant 0 : index
    %108 = vector.load %arg14[%c0_51, %c0_52] : memref<256x256xf32, #tpu.memory_space<vmem>>, vector<256x128xf32>
    tpu.vector_store %arg14[%c0_51, %c0_52], %107 {strides = array<i32>} : memref<256x256xf32, #tpu.memory_space<vmem>>, vector<256x128xf32>,
    %109 = vector.extract_strided_slice %5 {offsets = [0, 128], sizes = [256, 128], strides = [1, 1]} : vector<256x256xf32> to vector<256x128xf32>
    %110 = arith.mulf %109, %109 : vector<256x128xf32>
    %cst_53 = arith.constant dense<0.000000e+00> : vector<256xf32>
    %111 = vector.multi_reduction <add>, %110, %cst_53 [1] : vector<256x128xf32> to vector<256xf32>
    %112 = vector.shape_cast %111 : vector<256xf32> to vector<256x1xf32>
    %cst_54 = arith.constant 1.000000e-24 : f32
    %113 = vector.broadcast %cst_54 : f32 to vector<256x1xf32>
    %114 = arith.maximumf %112, %113 : vector<256x1xf32>
    %115 = math.rsqrt %114 : vector<256x1xf32>
    %116 = vector.broadcast %115 : vector<256x1xf32> to vector<256x128xf32>
    %117 = arith.mulf %109, %116 : vector<256x128xf32>
    %118 = vector.extract_strided_slice %8 {offsets = [0, 128], sizes = [256, 128], strides = [1, 1]} : vector<256x256xf32> to vector<256x128xf32>
    %119 = arith.mulf %118, %118 : vector<256x128xf32>
    %cst_55 = arith.constant dense<0.000000e+00> : vector<256xf32>
    %120 = vector.multi_reduction <add>, %119, %cst_55 [1] : vector<256x128xf32> to vector<256xf32>
    %121 = vector.shape_cast %120 : vector<256xf32> to vector<256x1xf32>
    %cst_56 = arith.constant 1.000000e-24 : f32
    %122 = vector.broadcast %cst_56 : f32 to vector<256x1xf32>
    %123 = arith.maximumf %121, %122 : vector<256x1xf32>
    %124 = math.rsqrt %123 : vector<256x1xf32>
    %125 = vector.broadcast %124 : vector<256x1xf32> to vector<256x128xf32>
    %126 = arith.mulf %118, %125 : vector<256x128xf32>
    %127 = arith.truncf %117 : vector<256x128xf32> to vector<256x128xbf16>
    %128 = arith.truncf %126 : vector<256x128xf32> to vector<256x128xbf16>
    %cst_57 = arith.constant dense<0.000000e+00> : vector<256x256xf32>
    %129 = tpu.matmul %127, %128, %cst_57 {dimension_numbers = #tpu.dot_dimension_numbers<[1], [1], [0], [0], [0, 0, 1, 0], [], []>} : vector<256x128xbf16>, vector<256x128xbf16>, vector<256x256xf32> -> vector<256x256xf32>
    %cst_58 = arith.constant dense<0xFF800000> : vector<256xf32>
    %130 = vector.multi_reduction <maximumf>, %129, %cst_58 [1] : vector<256x256xf32> to vector<256xf32>
    %131 = vector.shape_cast %130 : vector<256xf32> to vector<256x1xf32>
    %132 = vector.broadcast %131 : vector<256x1xf32> to vector<256x256xf32>
    %133 = arith.subf %129, %132 : vector<256x256xf32>
    %134 = math.exp %133 : vector<256x256xf32>
    %cst_59 = arith.constant dense<0.000000e+00> : vector<256xf32>
    %135 = vector.multi_reduction <add>, %134, %cst_59 [1] : vector<256x256xf32> to vector<256xf32>
    %136 = vector.shape_cast %135 : vector<256xf32> to vector<256x1xf32>
    %137 = tpu.reciprocal %136 {approx = true} : vector<256x1xf32> -> vector<256x1xf32>
    %138 = vector.broadcast %137 : vector<256x1xf32> to vector<256x256xf32>
    %139 = arith.mulf %134, %138 : vector<256x256xf32>
    %cst_60 = arith.constant dense<0.000000e+00> : vector<256xf32>
    %140 = vector.multi_reduction <add>, %139, %cst_60 [0] : vector<256x256xf32> to vector<256xf32>
    %141 = vector.shape_cast %140 : vector<256xf32> to vector<1x256xf32>
    %cst_61 = arith.constant 9.99999971E-10 : f32
    %142 = vector.broadcast %cst_61 : f32 to vector<1x256xf32>
    %143 = arith.addf %142, %141 : vector<1x256xf32>
    %144 = tpu.reciprocal %143 {approx = true} : vector<1x256xf32> -> vector<1x256xf32>
    %145 = vector.broadcast %144 : vector<1x256xf32> to vector<256x256xf32>
    %146 = arith.mulf %139, %145 : vector<256x256xf32>
    %147 = arith.truncf %146 : vector<256x256xf32> to vector<256x256xbf16>
    %148 = vector.extract_strided_slice %11 {offsets = [0, 128], sizes = [256, 128], strides = [1, 1]} : vector<256x256xf32> to vector<256x128xf32>
    %149 = arith.truncf %148 : vector<256x128xf32> to vector<256x128xbf16>
    %cst_62 = arith.constant dense<0.000000e+00> : vector<256x128xf32>
    %150 = tpu.matmul %147, %149, %cst_62 {dimension_numbers = #tpu.dot_dimension_numbers<[1], [0], [0], [1], [0, 0, 1, 1], [], []>} : vector<256x256xbf16>, vector<256x128xbf16>, vector<256x128xf32> -> vector<256x128xf32>
    %151 = arith.subf %0, %150 : vector<256x128xf32>
    %152 = arith.truncf %151 : vector<256x128xf32> to vector<256x128xbf16>
    %153 = vector.extract_strided_slice %12 {offsets = [0, 128], sizes = [128, 128], strides = [1, 1]} : vector<128x256xbf16> to vector<128x128xbf16>
    %cst_63 = arith.constant dense<0.000000e+00> : vector<256x128xf32>
    %154 = tpu.matmul %152, %153, %cst_63 {dimension_numbers = #tpu.dot_dimension_numbers<[1], [0], [0], [1], [0, 0, 1, 1], [], []>} : vector<256x128xbf16>, vector<128x128xbf16>, vector<256x128xf32> -> vector<256x128xf32>
    %cst_64 = arith.constant 0.000000e+00 : f32
    %155 = vector.broadcast %cst_64 : f32 to vector<256x128xf32>
    %156 = arith.maximumf %154, %155 : vector<256x128xf32>
    %157 = arith.truncf %156 : vector<256x128xf32> to vector<256x128xbf16>
    %158 = vector.extract_strided_slice %13 {offsets = [0, 128], sizes = [128, 128], strides = [1, 1]} : vector<128x256xbf16> to vector<128x128xbf16>
    %cst_65 = arith.constant dense<0.000000e+00> : vector<256x128xf32>
    %159 = tpu.matmul %157, %158, %cst_65 {dimension_numbers = #tpu.dot_dimension_numbers<[1], [0], [0], [1], [0, 0, 1, 1], [], []>} : vector<256x128xbf16>, vector<128x128xbf16>, vector<256x128xf32> -> vector<256x128xf32>
    %160 = vector.extract_strided_slice %15 {offsets = [1, 0, 0], sizes = [1, 1, 128], strides = [1, 1, 1]} : vector<2x1x128xf32> to vector<1x1x128xf32>
    %161 = vector.shape_cast %160 : vector<1x1x128xf32> to vector<1x128xf32>
    %162 = vector.broadcast %161 : vector<1x128xf32> to vector<256x128xf32>
    %163 = arith.addf %159, %162 : vector<256x128xf32>
    %cst_66 = arith.constant 0.000000e+00 : f32
    %164 = vector.broadcast %cst_66 : f32 to vector<256x128xf32>
    %165 = arith.maximumf %163, %164 : vector<256x128xf32>
    %166 = arith.truncf %165 : vector<256x128xf32> to vector<256x128xbf16>
    %167 = vector.extract_strided_slice %14 {offsets = [0, 128], sizes = [128, 128], strides = [1, 1]} : vector<128x256xbf16> to vector<128x128xbf16>
    %cst_67 = arith.constant dense<0.000000e+00> : vector<256x128xf32>
    %168 = tpu.matmul %166, %167, %cst_67 {dimension_numbers = #tpu.dot_dimension_numbers<[1], [0], [0], [1], [0, 0, 1, 1], [], []>} : vector<256x128xbf16>, vector<128x128xbf16>, vector<256x128xf32> -> vector<256x128xf32>
    %169 = vector.extract_strided_slice %16 {offsets = [1, 0, 0], sizes = [1, 1, 128], strides = [1, 1, 1]} : vector<2x1x128xf32> to vector<1x1x128xf32>
    %170 = vector.shape_cast %169 : vector<1x1x128xf32> to vector<1x128xf32>
    %171 = vector.broadcast %170 : vector<1x128xf32> to vector<256x128xf32>
    %172 = arith.addf %168, %171 : vector<256x128xf32>
    %173 = arith.addf %156, %172 : vector<256x128xf32>
    %cst_68 = arith.constant dense<0.000000e+00> : vector<256xf32>
    %174 = vector.multi_reduction <add>, %173, %cst_68 [1] : vector<256x128xf32> to vector<256xf32>
    %175 = vector.shape_cast %174 : vector<256xf32> to vector<256x1xf32>
    %cst_69 = arith.constant 1.280000e+02 : f32
    %176 = vector.broadcast %cst_69 : f32 to vector<256x1xf32>
    %177 = arith.divf %175, %176 : vector<256x1xf32>
    %178 = vector.broadcast %177 : vector<256x1xf32> to vector<256x128xf32>
    %179 = arith.subf %173, %178 : vector<256x128xf32>
    %180 = arith.mulf %179, %179 : vector<256x128xf32>
    %cst_70 = arith.constant dense<0.000000e+00> : vector<256xf32>
    %181 = vector.multi_reduction <add>, %180, %cst_70 [1] : vector<256x128xf32> to vector<256xf32>
    %182 = vector.shape_cast %181 : vector<256xf32> to vector<256x1xf32>
    %cst_71 = arith.constant 1.280000e+02 : f32
    %183 = vector.broadcast %cst_71 : f32 to vector<256x1xf32>
    %184 = arith.divf %182, %183 : vector<256x1xf32>
    %cst_72 = arith.constant 9.99999974E-6 : f32
    %185 = vector.broadcast %cst_72 : f32 to vector<256x1xf32>
    %186 = arith.addf %184, %185 : vector<256x1xf32>
    %187 = math.rsqrt %186 : vector<256x1xf32>
    %188 = vector.broadcast %187 : vector<256x1xf32> to vector<256x128xf32>
    %189 = arith.mulf %179, %188 : vector<256x128xf32>
    %190 = vector.extract_strided_slice %17 {offsets = [1, 0, 0], sizes = [1, 1, 128], strides = [1, 1, 1]} : vector<2x1x128xf32> to vector<1x1x128xf32>
    %191 = vector.shape_cast %190 : vector<1x1x128xf32> to vector<1x128xf32>
    %192 = vector.broadcast %191 : vector<1x128xf32> to vector<256x128xf32>
    %193 = arith.mulf %189, %192 : vector<256x128xf32>
    %194 = vector.extract_strided_slice %18 {offsets = [1, 0, 0], sizes = [1, 1, 128], strides = [1, 1, 1]} : vector<2x1x128xf32> to vector<1x1x128xf32>
    %195 = vector.shape_cast %194 : vector<1x1x128xf32> to vector<1x128xf32>
    %196 = vector.broadcast %195 : vector<1x128xf32> to vector<256x128xf32>
    %197 = arith.addf %193, %196 : vector<256x128xf32>
    %c0_73 = arith.constant 0 : index
    %c128 = arith.constant 128 : index
    %198 = vector.load %arg14[%c0_73, %c128] : memref<256x256xf32, #tpu.memory_space<vmem>>, vector<256x128xf32>
    tpu.vector_store %arg14[%c0_73, %c128], %197 {strides = array<i32>} : memref<256x256xf32, #tpu.memory_space<vmem>>, vector<256x128xf32>,
    return
  }
  func.func @transform_0(%arg0: i32) -> (i32, i32) {
    %c0_i32 = arith.constant 0 : i32
    %c0_i32_0 = arith.constant 0 : i32
    return %c0_i32, %arg0 : i32, i32
  }
  func.func @transform_1(%arg0: i32) -> (i32, i32) {
    %c0_i32 = arith.constant 0 : i32
    %c0_i32_0 = arith.constant 0 : i32
    return %c0_i32, %arg0 : i32, i32
  }
  func.func @transform_2(%arg0: i32) -> (i32, i32) {
    %c0_i32 = arith.constant 0 : i32
    %c0_i32_0 = arith.constant 0 : i32
    return %c0_i32, %arg0 : i32, i32
  }
  func.func @transform_3(%arg0: i32) -> (i32, i32) {
    %c0_i32 = arith.constant 0 : i32
    %c0_i32_0 = arith.constant 0 : i32
    %c0_i32_1 = arith.constant 0 : i32
    return %c0_i32, %c0_i32_0 : i32, i32
  }
  func.func @transform_4(%arg0: i32) -> (i32, i32) {
    %c0_i32 = arith.constant 0 : i32
    %c0_i32_0 = arith.constant 0 : i32
    %c0_i32_1 = arith.constant 0 : i32
    return %c0_i32, %c0_i32_0 : i32, i32
  }
  func.func @transform_5(%arg0: i32) -> (i32, i32) {
    %c0_i32 = arith.constant 0 : i32
    %c0_i32_0 = arith.constant 0 : i32
    %c0_i32_1 = arith.constant 0 : i32
    return %c0_i32, %c0_i32_0 : i32, i32
  }
  func.func @transform_6(%arg0: i32) -> (i32, i32) {
    %c0_i32 = arith.constant 0 : i32
    %c0_i32_0 = arith.constant 0 : i32
    %c0_i32_1 = arith.constant 0 : i32
    return %c0_i32, %c0_i32_0 : i32, i32
  }
  func.func @transform_7(%arg0: i32) -> (i32, i32) {
    %c0_i32 = arith.constant 0 : i32
    %c0_i32_0 = arith.constant 0 : i32
    %c0_i32_1 = arith.constant 0 : i32
    return %c0_i32, %c0_i32_0 : i32, i32
  }
  func.func @transform_8(%arg0: i32) -> (i32, i32, i32) {
    %c0_i32 = arith.constant 0 : i32
    %c0_i32_0 = arith.constant 0 : i32
    %c0_i32_1 = arith.constant 0 : i32
    %c0_i32_2 = arith.constant 0 : i32
    return %c0_i32, %c0_i32_0, %c0_i32_1 : i32, i32, i32
  }
  func.func @transform_9(%arg0: i32) -> (i32, i32) {
    %c0_i32 = arith.constant 0 : i32
    %c0_i32_0 = arith.constant 0 : i32
    %c0_i32_1 = arith.constant 0 : i32
    return %c0_i32, %c0_i32_0 : i32, i32
  }
  func.func @transform_10(%arg0: i32) -> (i32, i32, i32) {
    %c0_i32 = arith.constant 0 : i32
    %c0_i32_0 = arith.constant 0 : i32
    %c0_i32_1 = arith.constant 0 : i32
    %c0_i32_2 = arith.constant 0 : i32
    return %c0_i32, %c0_i32_0, %c0_i32_1 : i32, i32, i32
  }
  func.func @transform_11(%arg0: i32) -> (i32, i32, i32) {
    %c0_i32 = arith.constant 0 : i32
    %c0_i32_0 = arith.constant 0 : i32
    %c0_i32_1 = arith.constant 0 : i32
    %c0_i32_2 = arith.constant 0 : i32
    return %c0_i32, %c0_i32_0, %c0_i32_1 : i32, i32, i32
  }
  func.func @transform_12(%arg0: i32) -> (i32, i32, i32) {
    %c0_i32 = arith.constant 0 : i32
    %c0_i32_0 = arith.constant 0 : i32
    %c0_i32_1 = arith.constant 0 : i32
    %c0_i32_2 = arith.constant 0 : i32
    return %c0_i32, %c0_i32_0, %c0_i32_1 : i32, i32, i32
  }
  func.func @transform_13(%arg0: i32) -> (i32, i32) {
    %c0_i32 = arith.constant 0 : i32
    %c0_i32_0 = arith.constant 0 : i32
    return %c0_i32, %arg0 : i32, i32
  }
}

</mosaic_0001>

<llo_original>
// kernel: tpu_custom_call.1
$region0: #{tpu_custom_call.1}
  #allocation0 [shape = 'u32[]', space=smem, size = 0x4, offset = 0x4, fixed_abs, tag = 'smem constant byte address 0x4 - core index']
  #allocation1 [shape = 'u32[144,128]{1,0:T(1,128)}', space=vmem, size = 0x12000, scoped, tag = 'internal scratch']
  %s0 = inlined_call_operand.hbm [shape: f32[256,256], index: 0, kind: input, shape index: {}]
  %s1 = inlined_call_operand.hbm [shape: f32[256,256], index: 1, kind: input, shape index: {}]
  %s2 = inlined_call_operand.hbm [shape: f32[256,256], index: 2, kind: input, shape index: {}]
  %s3 = inlined_call_operand.hbm [shape: bf16[128,256], index: 3, kind: input, shape index: {}]
  %s4 = inlined_call_operand.hbm [shape: bf16[128,256], index: 4, kind: input, shape index: {}]
  %s5 = inlined_call_operand.hbm [shape: bf16[128,256], index: 5, kind: input, shape index: {}]
  %s6 = inlined_call_operand.hbm [shape: bf16[128,256], index: 6, kind: input, shape index: {}]
  %s7 = inlined_call_operand.hbm [shape: bf16[128,256], index: 7, kind: input, shape index: {}]
  %s8 = inlined_call_operand.vmem [shape: f32[2,1,128], index: 8, kind: input, shape index: {}]
  %s9 = inlined_call_operand.hbm [shape: bf16[128,256], index: 9, kind: input, shape index: {}]
  %s10 = inlined_call_operand.vmem [shape: f32[2,1,128], index: 10, kind: input, shape index: {}]
  %s11 = inlined_call_operand.vmem [shape: f32[2,1,128], index: 11, kind: input, shape index: {}]
  %s12 = inlined_call_operand.vmem [shape: f32[2,1,128], index: 12, kind: input, shape index: {}]
  %s13 = inlined_call_operand.hbm [shape: f32[256,512], index: 13, kind: output, shape index: {}]
  %s14 = sld [smem:[#allocation0]]
  $region121: #{tpu_custom_call.1} parent=0
    _
  %s16 = ssub.s32 1, %s14
  %s17 = scalar_select 0, %s16, %s14
  $region1: #{tpu_custom_call.1} parent=0
    #allocation2 [shape = 'u8[262144]{0}', space=vmem, size = 0x40000, scoped, tag = 'input window, operand 0']
    #allocation3 [shape = 's32[2]{0}', space=sflag, size = 0x8, scoped, tag = 'scoped memory for tpu_custom_call.1']
    #allocation4 [shape = 's32[2]{0}', space=sflag, size = 0x8, scoped, tag = 'scoped memory for tpu_custom_call.1']
    #allocation5 [shape = 'u8[262144]{0}', space=vmem, size = 0x40000, scoped, tag = 'input window, operand 1']
    #allocation6 [shape = 's32[2]{0}', space=sflag, size = 0x8, scoped, tag = 'scoped memory for tpu_custom_call.1']
    #allocation7 [shape = 'u8[262144]{0}', space=vmem, size = 0x40000, scoped, tag = 'input window, operand 2']
    #allocation8 [shape = 'u8[65536]{0}', space=vmem, size = 0x10000, scoped, tag = 'input window, operand 3, single buffered']
    #allocation9 [shape = 's32[1]{0}', space=sflag, size = 0x4, scoped, tag = 'scoped memory for tpu_custom_call.1']
    #allocation10 [shape = 'u8[65536]{0}', space=vmem, size = 0x10000, scoped, tag = 'input window, operand 4, single buffered']
    #allocation11 [shape = 'u8[65536]{0}', space=vmem, size = 0x10000, scoped, tag = 'input window, operand 5, single buffered']
    #allocation12 [shape = 's32[1]{0}', space=sflag, size = 0x4, scoped, tag = 'scoped memory for tpu_custom_call.1']
    #allocation13 [shape = 'u8[65536]{0}', space=vmem, size = 0x10000, scoped, tag = 'input window, operand 6, single buffered']
    #allocation14 [shape = 'u8[65536]{0}', space=vmem, size = 0x10000, scoped, tag = 'input window, operand 7, single buffered']
    #allocation15 [shape = 's32[1]{0}', space=sflag, size = 0x4, scoped, tag = 'scoped memory for tpu_custom_call.1']
    #allocation16 [shape = 'u8[65536]{0}', space=vmem, size = 0x10000, scoped, tag = 'input window, operand 9, single buffered']
    #allocation17 [shape = 'u8[524288]{0}', space=vmem, size = 0x80000, scoped, tag = 'output window, operand 0']
    %18 = vsyncpa [#allocation3], 0
    %s19 = scalar_lea.sflag [#allocation3], 1
    %20 = vsyncpa %s19, 0
    %21 = vsyncpa [#allocation6], 0
    %s22 = scalar_lea.sflag [#allocation6], 1
    %23 = vsyncpa %s22, 0
    %24 = vsyncpa [#allocation9], 0
    %25 = vsyncpa [#allocation12], 0
    %26 = vsyncpa [#allocation15], 0
    %27 = vsyncpa [#allocation4], 0
    %s28 = scalar_lea.sflag [#allocation4], 1
    %29 = vsyncpa %s28, 0
    loop: start=0, step=1, limit=4
    $region2: #{tpu_custom_call.1} parent=1 // loop_pre_header
      _
    $region3: #{tpu_custom_call.1} parent=1 // loop_header
      %s31 = sphi 0, %s35
      %p32 = scmp.ge.s32.totalorder %s31, 4
      %s41 = sphi 0, %s43
      %s44 = sphi 0, %s41
      %s45 = sphi 0, %s44
      %s61 = sphi 0, %s45
      %s67 = sphi 0, %s69
      %s70 = sphi 0, %s67
      %s71 = sphi 0, %s70
      %s87 = sphi 0, %s71
      %s93 = sphi 0, %s95
      %s96 = sphi 0, %s93
      %s97 = sphi 0, %s96
      %s113 = sphi 0, %s97
      %s117 = sphi 0, %s117
      %s119 = sphi 0, %s117
      %s120 = sphi 0, %s119
      %s134 = sphi 0, %s120
      %s138 = sphi 0, %s138
      %s140 = sphi 0, %s138
      %s141 = sphi 0, %s140
      %s155 = sphi 0, %s141
      %s159 = sphi 0, %s159
      %s161 = sphi 0, %s159
      %s162 = sphi 0, %s161
      %s176 = sphi 0, %s162
      %s180 = sphi 0, %s180
      %s182 = sphi 0, %s180
      %s183 = sphi 0, %s182
      %s197 = sphi 0, %s183
      %s201 = sphi 0, %s201
      %s203 = sphi 0, %s201
      %s204 = sphi 0, %s203
      %s218 = sphi 0, %s204
      %s222 = sphi 0, %s222
      %s224 = sphi 0, %s222
      %s225 = sphi 0, %s224
      %s239 = sphi 0, %s225
      %s243 = sphi 0, %s243
      %s245 = sphi 0, %s243
      %s246 = sphi 0, %s245
      %s260 = sphi 0, %s246
      %s264 = sphi 0, %s264
      %s266 = sphi 0, %s264
      %s267 = sphi 0, %s266
      %s281 = sphi 0, %s267
      %s285 = sphi 0, %s285
      %s287 = sphi 0, %s285
      %s288 = sphi 0, %s287
      %s302 = sphi 0, %s288
      %s306 = sphi 0, %s306
      %s308 = sphi 0, %s306
      %s309 = sphi 0, %s308
      %s323 = sphi 0, %s309
      %s329 = sphi 0, %s331
      %s332 = sphi 0, %s329
      %s333 = sphi 0, %s332
      %s349 = sphi 0, %s333
    $region4: #{tpu_custom_call.1} parent=1 // loop_header_branch
      %34 = sbr.rel (%p32) target = $region8
    $region5: #{tpu_custom_call.1} parent=1 // loop_body
      %s36 = ssub.s32 %s31, 1
      %s37 = ssub.s32 %s31, 2
      %s38 = sadd.s32 %s31, 1
      %s39 = ssub.s32 %s31, %s38
      %p40 = scmp.eq.s32.totalorder %s39, 0
      %s42 = sadd.s32 %s41, 1
      %s43 = scalar_select %p40, %s41, %s42
      %p46 = pneg %p40
      %p47 = scmp.eq.s32.totalorder %s31, 1
      %p48 = por %p46, %p47
      %p49 = scmp.ne.s32.totalorder %s41, %s44
      %p50 = scmp.eq.s32.totalorder %s31, 0
      %p51 = por %p49, %p50
      %p52 = scmp.ne.s32.totalorder %s41, %s44
      %p53 = scmp.eq.s32.totalorder %s36, 1
      %p54 = por %p52, %p53
      %p55 = scmp.ne.s32.totalorder %s44, %s45
      %p56 = scmp.eq.s32.totalorder %s36, 0
      %p57 = por %p55, %p56
      %p58 = scmp.ne.s32.totalorder %s44, %s45
      %p59 = scmp.eq.s32.totalorder %s37, 1
      %p60 = por %p58, %p59
      %p62 = scmp.ne.s32.totalorder %s45, %s61
      %p63 = scmp.eq.s32.totalorder %s37, 0
      %p64 = por %p62, %p63
      %s65 = ssub.s32 %s31, %s38
      %p66 = scmp.eq.s32.totalorder %s65, 0
      %s68 = sadd.s32 %s67, 1
      %s69 = scalar_select %p66, %s67, %s68
      %p72 = pneg %p66
      %p73 = scmp.eq.s32.totalorder %s31, 1
      %p74 = por %p72, %p73
      %p75 = scmp.ne.s32.totalorder %s67, %s70
      %p76 = scmp.eq.s32.totalorder %s31, 0
      %p77 = por %p75, %p76
      %p78 = scmp.ne.s32.totalorder %s67, %s70
      %p79 = scmp.eq.s32.totalorder %s36, 1
      %p80 = por %p78, %p79
      %p81 = scmp.ne.s32.totalorder %s70, %s71
      %p82 = scmp.eq.s32.totalorder %s36, 0
      %p83 = por %p81, %p82
      %p84 = scmp.ne.s32.totalorder %s70, %s71
      %p85 = scmp.eq.s32.totalorder %s37, 1
      %p86 = por %p84, %p85
      %p88 = scmp.ne.s32.totalorder %s71, %s87
      %p89 = scmp.eq.s32.totalorder %s37, 0
      %p90 = por %p88, %p89
      %s91 = ssub.s32 %s31, %s38
      %p92 = scmp.eq.s32.totalorder %s91, 0
      %s94 = sadd.s32 %s93, 1
      %s95 = scalar_select %p92, %s93, %s94
      %p98 = pneg %p92
      %p99 = scmp.eq.s32.totalorder %s31, 1
      %p100 = por %p98, %p99
      %p101 = scmp.ne.s32.totalorder %s93, %s96
      %p102 = scmp.eq.s32.totalorder %s31, 0
      %p103 = por %p101, %p102
      %p104 = scmp.ne.s32.totalorder %s93, %s96
      %p105 = scmp.eq.s32.totalorder %s36, 1
      %p106 = por %p104, %p105
      %p107 = scmp.ne.s32.totalorder %s96, %s97
      %p108 = scmp.eq.s32.totalorder %s36, 0
      %p109 = por %p107, %p108
      %p110 = scmp.ne.s32.totalorder %s96, %s97
      %p111 = scmp.eq.s32.totalorder %s37, 1
      %p112 = por %p110, %p111
      %p114 = scmp.ne.s32.totalorder %s97, %s113
      %p115 = scmp.eq.s32.totalorder %s37, 0
      %p116 = por %p114, %p115
      %s118 = sadd.s32 %s117, 1
      %p121 = scmp.eq.s32.totalorder %s31, 1
      %p122 = scmp.ne.s32.totalorder %s117, %s119
      %p123 = scmp.eq.s32.totalorder %s31, 0
      %p124 = por %p122, %p123
      %p125 = scmp.ne.s32.totalorder %s117, %s119
      %p126 = scmp.eq.s32.totalorder %s36, 1
      %p127 = por %p125, %p126
      %p128 = scmp.ne.s32.totalorder %s119, %s120
      %p129 = scmp.eq.s32.totalorder %s36, 0
      %p130 = por %p128, %p129
      %p131 = scmp.ne.s32.totalorder %s119, %s120
      %p132 = scmp.eq.s32.totalorder %s37, 1
      %p133 = por %p131, %p132
      %p135 = scmp.ne.s32.totalorder %s120, %s134
      %p136 = scmp.eq.s32.totalorder %s37, 0
      %p137 = por %p135, %p136
      %s139 = sadd.s32 %s138, 1
      %p142 = scmp.eq.s32.totalorder %s31, 1
      %p143 = scmp.ne.s32.totalorder %s138, %s140
      %p144 = scmp.eq.s32.totalorder %s31, 0
      %p145 = por %p143, %p144
      %p146 = scmp.ne.s32.totalorder %s138, %s140
      %p147 = scmp.eq.s32.totalorder %s36, 1
      %p148 = por %p146, %p147
      %p149 = scmp.ne.s32.totalorder %s140, %s141
      %p150 = scmp.eq.s32.totalorder %s36, 0
      %p151 = por %p149, %p150
      %p152 = scmp.ne.s32.totalorder %s140, %s141
      %p153 = scmp.eq.s32.totalorder %s37, 1
      %p154 = por %p152, %p153
      %p156 = scmp.ne.s32.totalorder %s141, %s155
      %p157 = scmp.eq.s32.totalorder %s37, 0
      %p158 = por %p156, %p157
      %s160 = sadd.s32 %s159, 1
      %p163 = scmp.eq.s32.totalorder %s31, 1
      %p164 = scmp.ne.s32.totalorder %s159, %s161
      %p165 = scmp.eq.s32.totalorder %s31, 0
      %p166 = por %p164, %p165
      %p167 = scmp.ne.s32.totalorder %s159, %s161
      %p168 = scmp.eq.s32.totalorder %s36, 1
      %p169 = por %p167, %p168
      %p170 = scmp.ne.s32.totalorder %s161, %s162
      %p171 = scmp.eq.s32.totalorder %s36, 0
      %p172 = por %p170, %p171
      %p173 = scmp.ne.s32.totalorder %s161, %s162
      %p174 = scmp.eq.s32.totalorder %s37, 1
      %p175 = por %p173, %p174
      %p177 = scmp.ne.s32.totalorder %s162, %s176
      %p178 = scmp.eq.s32.totalorder %s37, 0
      %p179 = por %p177, %p178
      %s181 = sadd.s32 %s180, 1
      %p184 = scmp.eq.s32.totalorder %s31, 1
      %p185 = scmp.ne.s32.totalorder %s180, %s182
      %p186 = scmp.eq.s32.totalorder %s31, 0
      %p187 = por %p185, %p186
      %p188 = scmp.ne.s32.totalorder %s180, %s182
      %p189 = scmp.eq.s32.totalorder %s36, 1
      %p190 = por %p188, %p189
      %p191 = scmp.ne.s32.totalorder %s182, %s183
      %p192 = scmp.eq.s32.totalorder %s36, 0
      %p193 = por %p191, %p192
      %p194 = scmp.ne.s32.totalorder %s182, %s183
      %p195 = scmp.eq.s32.totalorder %s37, 1
      %p196 = por %p194, %p195
      %p198 = scmp.ne.s32.totalorder %s183, %s197
      %p199 = scmp.eq.s32.totalorder %s37, 0
      %p200 = por %p198, %p199
      %s202 = sadd.s32 %s201, 1
      %p205 = scmp.eq.s32.totalorder %s31, 1
      %p206 = scmp.ne.s32.totalorder %s201, %s203
      %p207 = scmp.eq.s32.totalorder %s31, 0
      %p208 = por %p206, %p207
      %p209 = scmp.ne.s32.totalorder %s201, %s203
      %p210 = scmp.eq.s32.totalorder %s36, 1
      %p211 = por %p209, %p210
      %p212 = scmp.ne.s32.totalorder %s203, %s204
      %p213 = scmp.eq.s32.totalorder %s36, 0
      %p214 = por %p212, %p213
      %p215 = scmp.ne.s32.totalorder %s203, %s204
      %p216 = scmp.eq.s32.totalorder %s37, 1
      %p217 = por %p215, %p216
      %p219 = scmp.ne.s32.totalorder %s204, %s218
      %p220 = scmp.eq.s32.totalorder %s37, 0
      %p221 = por %p219, %p220
      %s223 = sadd.s32 %s222, 1
      %p226 = scmp.eq.s32.totalorder %s31, 1
      %p227 = scmp.ne.s32.totalorder %s222, %s224
      %p228 = scmp.eq.s32.totalorder %s31, 0
      %p229 = por %p227, %p228
      %p230 = scmp.ne.s32.totalorder %s222, %s224
      %p231 = scmp.eq.s32.totalorder %s36, 1
      %p232 = por %p230, %p231
      %p233 = scmp.ne.s32.totalorder %s224, %s225
      %p234 = scmp.eq.s32.totalorder %s36, 0
      %p235 = por %p233, %p234
      %p236 = scmp.ne.s32.totalorder %s224, %s225
      %p237 = scmp.eq.s32.totalorder %s37, 1
      %p238 = por %p236, %p237
      %p240 = scmp.ne.s32.totalorder %s225, %s239
      %p241 = scmp.eq.s32.totalorder %s37, 0
      %p242 = por %p240, %p241
      %s244 = sadd.s32 %s243, 1
      %p247 = scmp.eq.s32.totalorder %s31, 1
      %p248 = scmp.ne.s32.totalorder %s243, %s245
      %p249 = scmp.eq.s32.totalorder %s31, 0
      %p250 = por %p248, %p249
      %p251 = scmp.ne.s32.totalorder %s243, %s245
      %p252 = scmp.eq.s32.totalorder %s36, 1
      %p253 = por %p251, %p252
      %p254 = scmp.ne.s32.totalorder %s245, %s246
      %p255 = scmp.eq.s32.totalorder %s36, 0
      %p256 = por %p254, %p255
      %p257 = scmp.ne.s32.totalorder %s245, %s246
      %p258 = scmp.eq.s32.totalorder %s37, 1
      %p259 = por %p257, %p258
      %p261 = scmp.ne.s32.totalorder %s246, %s260
      %p262 = scmp.eq.s32.totalorder %s37, 0
      %p263 = por %p261, %p262
      %s265 = sadd.s32 %s264, 1
      %p268 = scmp.eq.s32.totalorder %s31, 1
      %p269 = scmp.ne.s32.totalorder %s264, %s266
      %p270 = scmp.eq.s32.totalorder %s31, 0
      %p271 = por %p269, %p270
      %p272 = scmp.ne.s32.totalorder %s264, %s266
      %p273 = scmp.eq.s32.totalorder %s36, 1
      %p274 = por %p272, %p273
      %p275 = scmp.ne.s32.totalorder %s266, %s267
      %p276 = scmp.eq.s32.totalorder %s36, 0
      %p277 = por %p275, %p276
      %p278 = scmp.ne.s32.totalorder %s266, %s267
      %p279 = scmp.eq.s32.totalorder %s37, 1
      %p280 = por %p278, %p279
      %p282 = scmp.ne.s32.totalorder %s267, %s281
      %p283 = scmp.eq.s32.totalorder %s37, 0
      %p284 = por %p282, %p283
      %s286 = sadd.s32 %s285, 1
      %p289 = scmp.eq.s32.totalorder %s31, 1
      %p290 = scmp.ne.s32.totalorder %s285, %s287
      %p291 = scmp.eq.s32.totalorder %s31, 0
      %p292 = por %p290, %p291
      %p293 = scmp.ne.s32.totalorder %s285, %s287
      %p294 = scmp.eq.s32.totalorder %s36, 1
      %p295 = por %p293, %p294
      %p296 = scmp.ne.s32.totalorder %s287, %s288
      %p297 = scmp.eq.s32.totalorder %s36, 0
      %p298 = por %p296, %p297
      %p299 = scmp.ne.s32.totalorder %s287, %s288
      %p300 = scmp.eq.s32.totalorder %s37, 1
      %p301 = por %p299, %p300
      %p303 = scmp.ne.s32.totalorder %s288, %s302
      %p304 = scmp.eq.s32.totalorder %s37, 0
      %p305 = por %p303, %p304
      %s307 = sadd.s32 %s306, 1
      %p310 = scmp.eq.s32.totalorder %s31, 1
      %p311 = scmp.ne.s32.totalorder %s306, %s308
      %p312 = scmp.eq.s32.totalorder %s31, 0
      %p313 = por %p311, %p312
      %p314 = scmp.ne.s32.totalorder %s306, %s308
      %p315 = scmp.eq.s32.totalorder %s36, 1
      %p316 = por %p314, %p315
      %p317 = scmp.ne.s32.totalorder %s308, %s309
      %p318 = scmp.eq.s32.totalorder %s36, 0
      %p319 = por %p317, %p318
      %p320 = scmp.ne.s32.totalorder %s308, %s309
      %p321 = scmp.eq.s32.totalorder %s37, 1
      %p322 = por %p320, %p321
      %p324 = scmp.ne.s32.totalorder %s309, %s323
      %p325 = scmp.eq.s32.totalorder %s37, 0
      %p326 = por %p324, %p325
      %s327 = ssub.s32 %s31, %s38
      %p328 = scmp.eq.s32.totalorder %s327, 0
      %s330 = sadd.s32 %s329, 1
      %s331 = scalar_select %p328, %s329, %s330
      %p334 = pneg %p328
      %p335 = scmp.eq.s32.totalorder %s31, 1
      %p336 = por %p334, %p335
      %p337 = scmp.ne.s32.totalorder %s329, %s332
      %p338 = scmp.eq.s32.totalorder %s31, 0
      %p339 = por %p337, %p338
      %p340 = scmp.ne.s32.totalorder %s329, %s332
      %p341 = scmp.eq.s32.totalorder %s36, 1
      %p342 = por %p340, %p341
      %p343 = scmp.ne.s32.totalorder %s332, %s333
      %p344 = scmp.eq.s32.totalorder %s36, 0
      %p345 = por %p343, %p344
      %p346 = scmp.ne.s32.totalorder %s332, %s333
      %p347 = scmp.eq.s32.totalorder %s37, 1
      %p348 = por %p346, %p347
      %p350 = scmp.ne.s32.totalorder %s333, %s349
      %p351 = scmp.eq.s32.totalorder %s37, 0
      %p352 = por %p350, %p351
      %p353 = scmp.le.s32.totalorder 1, %s31
      %p354 = scmp.lt.s32.totalorder %s31, 3
      %p355 = pnand %p353, %p354
      %p356 = pneg %p355
      // Predicated region
      $region9: #{tpu_custom_call.1} parent=5 // pred_check
        _
      $region10: #{tpu_custom_call.1} parent=5 // pred_check_branch
        %358 = sbr.rel (%p355) target = $region12
      $region11: #{tpu_custom_call.1} parent=5 // pred_region
        %s359 = ssub.s32 %s31, 1
        // Predicated region
        $region13: #{tpu_custom_call.1} parent=11 // pred_check
          %p360 = pneg %p130
        $region14: #{tpu_custom_call.1} parent=11 // pred_check_branch
          %362 = sbr.rel (%p360) target = $region16
        $region15: #{tpu_custom_call.1} parent=11 // pred_region
          %s364 = ssub.s32 2048, 2048
          %365 = vsyncadd [#allocation9], %s364
          %s366 = sshll.u32 [#allocation8], 4
          %s367 = int_to_ptr.vmem [resolvable:$true] %s366
          %372 = dma.hbm_to_vmem [thread:$0]  %s3, 2048, %s367, [#allocation9], 128, 128, 8
        $region16: #{tpu_custom_call.1} parent=11 // pred_fallthru
          _
        // Predicated region
        $region17: #{tpu_custom_call.1} parent=11 // pred_check
          %p373 = pneg %p151
        $region18: #{tpu_custom_call.1} parent=11 // pred_check_branch
          %375 = sbr.rel (%p373) target = $region20
        $region19: #{tpu_custom_call.1} parent=11 // pred_region
          %s377 = ssub.s32 2048, 2048
          %378 = vsyncadd [#allocation9], %s377
          %s379 = sshll.u32 [#allocation10], 4
          %s380 = int_to_ptr.vmem [resolvable:$true] %s379
          %385 = dma.hbm_to_vmem [thread:$0]  %s4, 2048, %s380, [#allocation9], 128, 128, 8
        $region20: #{tpu_custom_call.1} parent=11 // pred_fallthru
          _
        // Predicated region
        $region21: #{tpu_custom_call.1} parent=11 // pred_check
          %p386 = pneg %p172
        $region22: #{tpu_custom_call.1} parent=11 // pred_check_branch
          %388 = sbr.rel (%p386) target = $region24
        $region23: #{tpu_custom_call.1} parent=11 // pred_region
          %s390 = ssub.s32 2048, 2048
          %391 = vsyncadd [#allocation12], %s390
          %s392 = sshll.u32 [#allocation11], 4
          %s393 = int_to_ptr.vmem [resolvable:$true] %s392
          %398 = dma.hbm_to_vmem [thread:$0]  %s5, 2048, %s393, [#allocation12], 128, 128, 8
        $region24: #{tpu_custom_call.1} parent=11 // pred_fallthru
          _
        // Predicated region
        $region25: #{tpu_custom_call.1} parent=11 // pred_check
          %p399 = pneg %p193
        $region26: #{tpu_custom_call.1} parent=11 // pred_check_branch
          %401 = sbr.rel (%p399) target = $region28
        $region27: #{tpu_custom_call.1} parent=11 // pred_region
          %s403 = ssub.s32 2048, 2048
          %404 = vsyncadd [#allocation12], %s403
          %s405 = sshll.u32 [#allocation13], 4
          %s406 = int_to_ptr.vmem [resolvable:$true] %s405
          %411 = dma.hbm_to_vmem [thread:$0]  %s6, 2048, %s406, [#allocation12], 128, 128, 8
        $region28: #{tpu_custom_call.1} parent=11 // pred_fallthru
          _
        // Predicated region
        $region29: #{tpu_custom_call.1} parent=11 // pred_check
          %p412 = pneg %p214
        $region30: #{tpu_custom_call.1} parent=11 // pred_check_branch
          %414 = sbr.rel (%p412) target = $region32
        $region31: #{tpu_custom_call.1} parent=11 // pred_region
          %s416 = ssub.s32 2048, 2048
          %417 = vsyncadd [#allocation15], %s416
          %s418 = sshll.u32 [#allocation14], 4
          %s419 = int_to_ptr.vmem [resolvable:$true] %s418
          %424 = dma.hbm_to_vmem [thread:$0]  %s7, 2048, %s419, [#allocation15], 128, 128, 8
        $region32: #{tpu_custom_call.1} parent=11 // pred_fallthru
          _
        // Predicated region
        $region33: #{tpu_custom_call.1} parent=11 // pred_check
          %p425 = pneg %p235
        $region34: #{tpu_custom_call.1} parent=11 // pred_check_branch
          %427 = sbr.rel (%p425) target = $region36
        $region35: #{tpu_custom_call.1} parent=11 // pred_region
          _
        $region36: #{tpu_custom_call.1} parent=11 // pred_fallthru
          _
        // Predicated region
        $region37: #{tpu_custom_call.1} parent=11 // pred_check
          %p428 = pneg %p256
        $region38: #{tpu_custom_call.1} parent=11 // pred_check_branch
          %430 = sbr.rel (%p428) target = $region40
        $region39: #{tpu_custom_call.1} parent=11 // pred_region
          %s432 = ssub.s32 2048, 2048
          %433 = vsyncadd [#allocation15], %s432
          %s434 = sshll.u32 [#allocation16], 4
          %s435 = int_to_ptr.vmem [resolvable:$true] %s434
          %440 = dma.hbm_to_vmem [thread:$0]  %s9, 2048, %s435, [#allocation15], 128, 128, 8
        $region40: #{tpu_custom_call.1} parent=11 // pred_fallthru
          _
        // Predicated region
        $region41: #{tpu_custom_call.1} parent=11 // pred_check
          %p441 = pneg %p277
        $region42: #{tpu_custom_call.1} parent=11 // pred_check_branch
          %443 = sbr.rel (%p441) target = $region44
        $region43: #{tpu_custom_call.1} parent=11 // pred_region
          _
        $region44: #{tpu_custom_call.1} parent=11 // pred_fallthru
          _
        // Predicated region
        $region45: #{tpu_custom_call.1} parent=11 // pred_check
          %p444 = pneg %p298
        $region46: #{tpu_custom_call.1} parent=11 // pred_check_branch
          %446 = sbr.rel (%p444) target = $region48
        $region47: #{tpu_custom_call.1} parent=11 // pred_region
          _
        $region48: #{tpu_custom_call.1} parent=11 // pred_fallthru
          _
        // Predicated region
        $region49: #{tpu_custom_call.1} parent=11 // pred_check
          %p447 = pneg %p319
        $region50: #{tpu_custom_call.1} parent=11 // pred_check_branch
          %449 = sbr.rel (%p447) target = $region52
        $region51: #{tpu_custom_call.1} parent=11 // pred_region
          _
        $region52: #{tpu_custom_call.1} parent=11 // pred_fallthru
          _
      $region12: #{tpu_custom_call.1} parent=5 // pred_fallthru
        _
      %p450 = scmp.lt.s32.totalorder %s31, 2
      // Predicated region
      $region53: #{tpu_custom_call.1} parent=5 // pred_check
        %p451 = pneg %p450
      $region54: #{tpu_custom_call.1} parent=5 // pred_check_branch
        %453 = sbr.rel (%p451) target = $region56
      $region55: #{tpu_custom_call.1} parent=5 // pred_region
        // Predicated region
        $region57: #{tpu_custom_call.1} parent=55 // pred_check
          %p454 = pneg %p51
        $region58: #{tpu_custom_call.1} parent=55 // pred_check_branch
          %456 = sbr.rel (%p454) target = $region60
        $region59: #{tpu_custom_call.1} parent=55 // pred_region
          %s457 = sand.u32 %s41, 1
          %s458 = scalar_lea.sflag [#allocation3], %s457
          %s459 = sand.u32 %s41, 1
          %s460 = smul.addr %s459, 256
          %s461 = scalar_lea.vmem [#allocation2], %s460
          %s463 = ssub.s32 4096, 4096
          %464 = vsyncadd %s458, %s463
          %s465 = smul.addr %s31, 128
          %s466 = scalar_lea.hbm %s0, %s465
          %s467 = sshll.u32 %s461, 4
          %s468 = int_to_ptr.vmem [resolvable:$true] %s467
          %473 = dma.hbm_to_vmem [thread:$0]  %s466, 4096, %s468, %s458, 256, 128, 8
        $region60: #{tpu_custom_call.1} parent=55 // pred_fallthru
          _
        // Predicated region
        $region61: #{tpu_custom_call.1} parent=55 // pred_check
          %p474 = pneg %p77
        $region62: #{tpu_custom_call.1} parent=55 // pred_check_branch
          %476 = sbr.rel (%p474) target = $region64
        $region63: #{tpu_custom_call.1} parent=55 // pred_region
          %s477 = sand.u32 %s31, 1
          %s478 = scalar_lea.sflag [#allocation6], %s477
          %s479 = sand.u32 %s67, 1
          %s480 = smul.addr %s479, 256
          %s481 = scalar_lea.vmem [#allocation5], %s480
          %s483 = ssub.s32 4096, 4096
          %484 = vsyncadd %s478, %s483
          %s485 = smul.addr %s31, 128
          %s486 = scalar_lea.hbm %s1, %s485
          %s487 = sshll.u32 %s481, 4
          %s488 = int_to_ptr.vmem [resolvable:$true] %s487
          %493 = dma.hbm_to_vmem [thread:$0]  %s486, 4096, %s488, %s478, 256, 128, 8
        $region64: #{tpu_custom_call.1} parent=55 // pred_fallthru
          _
        // Predicated region
        $region65: #{tpu_custom_call.1} parent=55 // pred_check
          %p494 = pneg %p103
        $region66: #{tpu_custom_call.1} parent=55 // pred_check_branch
          %496 = sbr.rel (%p494) target = $region68
        $region67: #{tpu_custom_call.1} parent=55 // pred_region
          %s497 = sand.u32 %s31, 1
          %s498 = scalar_lea.sflag [#allocation6], %s497
          %s499 = sand.u32 %s93, 1
          %s500 = smul.addr %s499, 256
          %s501 = scalar_lea.vmem [#allocation7], %s500
          %s503 = ssub.s32 4096, 4096
          %504 = vsyncadd %s498, %s503
          %s505 = smul.addr %s31, 128
          %s506 = scalar_lea.hbm %s2, %s505
          %s507 = sshll.u32 %s501, 4
          %s508 = int_to_ptr.vmem [resolvable:$true] %s507
          %513 = dma.hbm_to_vmem [thread:$0]  %s506, 4096, %s508, %s498, 256, 128, 8
        $region68: #{tpu_custom_call.1} parent=55 // pred_fallthru
          _
      $region56: #{tpu_custom_call.1} parent=5 // pred_fallthru
        _
      %p514 = scmp.le.s32.totalorder 1, %s31
      %p515 = scmp.lt.s32.totalorder %s31, 3
      %p516 = pnand %p514, %p515
      %p517 = pneg %p516
      // Predicated region
      $region69: #{tpu_custom_call.1} parent=5 // pred_check
        _
      $region70: #{tpu_custom_call.1} parent=5 // pred_check_branch
        %519 = sbr.rel (%p516) target = $region72
      $region71: #{tpu_custom_call.1} parent=5 // pred_region
        %s520 = ssub.s32 %s31, 1
        %s521 = sand.u32 %s44, 1
        %s522 = scalar_lea.sflag [#allocation3], %s521
        %s523 = sand.u32 %s44, 1
        %s524 = smul.addr %s523, 256
        %s525 = scalar_lea.vmem [#allocation2], %s524
        // Predicated region
        $region73: #{tpu_custom_call.1} parent=71 // pred_check
          %p526 = pneg %p57
        $region74: #{tpu_custom_call.1} parent=71 // pred_check_branch
          %528 = sbr.rel (%p526) target = $region76
        $region75: #{tpu_custom_call.1} parent=71 // pred_region
          %529 = dma.done %s522, 4096
        $region76: #{tpu_custom_call.1} parent=71 // pred_fallthru
          _
        %s530 = sand.u32 %s36, 1
        %s531 = scalar_lea.sflag [#allocation6], %s530
        %s532 = sand.u32 %s70, 1
        %s533 = smul.addr %s532, 256
        %s534 = scalar_lea.vmem [#allocation5], %s533
        // Predicated region
        $region77: #{tpu_custom_call.1} parent=71 // pred_check
          %p535 = pneg %p83
        $region78: #{tpu_custom_call.1} parent=71 // pred_check_branch
          %537 = sbr.rel (%p535) target = $region80
        $region79: #{tpu_custom_call.1} parent=71 // pred_region
          %538 = dma.done %s531, 4096
        $region80: #{tpu_custom_call.1} parent=71 // pred_fallthru
          _
        %s539 = sand.u32 %s36, 1
        %s540 = scalar_lea.sflag [#allocation6], %s539
        %s541 = sand.u32 %s96, 1
        %s542 = smul.addr %s541, 256
        %s543 = scalar_lea.vmem [#allocation7], %s542
        // Predicated region
        $region81: #{tpu_custom_call.1} parent=71 // pred_check
          %p544 = pneg %p109
        $region82: #{tpu_custom_call.1} parent=71 // pred_check_branch
          %546 = sbr.rel (%p544) target = $region84
        $region83: #{tpu_custom_call.1} parent=71 // pred_region
          %547 = dma.done %s540, 4096
        $region84: #{tpu_custom_call.1} parent=71 // pred_fallthru
          _
        // Predicated region
        $region85: #{tpu_custom_call.1} parent=71 // pred_check
          %p548 = pneg %p130
        $region86: #{tpu_custom_call.1} parent=71 // pred_check_branch
          %550 = sbr.rel (%p548) target = $region88
        $region87: #{tpu_custom_call.1} parent=71 // pred_region
          %551 = dma.done [#allocation9], 2048
        $region88: #{tpu_custom_call.1} parent=71 // pred_fallthru
          _
        // Predicated region
        $region89: #{tpu_custom_call.1} parent=71 // pred_check
          %p552 = pneg %p151
        $region90: #{tpu_custom_call.1} parent=71 // pred_check_branch
          %554 = sbr.rel (%p552) target = $region92
        $region91: #{tpu_custom_call.1} parent=71 // pred_region
          %555 = dma.done [#allocation9], 2048
        $region92: #{tpu_custom_call.1} parent=71 // pred_fallthru
          _
        // Predicated region
        $region93: #{tpu_custom_call.1} parent=71 // pred_check
          %p556 = pneg %p172
        $region94: #{tpu_custom_call.1} parent=71 // pred_check_branch
          %558 = sbr.rel (%p556) target = $region96
        $region95: #{tpu_custom_call.1} parent=71 // pred_region
          %559 = dma.done [#allocation12], 2048
        $region96: #{tpu_custom_call.1} parent=71 // pred_fallthru
          _
        // Predicated region
        $region97: #{tpu_custom_call.1} parent=71 // pred_check
          %p560 = pneg %p193
        $region98: #{tpu_custom_call.1} parent=71 // pred_check_branch
          %562 = sbr.rel (%p560) target = $region100
        $region99: #{tpu_custom_call.1} parent=71 // pred_region
          %563 = dma.done [#allocation12], 2048
        $region100: #{tpu_custom_call.1} parent=71 // pred_fallthru
          _
        // Predicated region
        $region101: #{tpu_custom_call.1} parent=71 // pred_check
          %p564 = pneg %p214
        $region102: #{tpu_custom_call.1} parent=71 // pred_check_branch
          %566 = sbr.rel (%p564) target = $region104
        $region103: #{tpu_custom_call.1} parent=71 // pred_region
          %567 = dma.done [#allocation15], 2048
        $region104: #{tpu_custom_call.1} parent=71 // pred_fallthru
          _
        // Predicated region
        $region105: #{tpu_custom_call.1} parent=71 // pred_check
          %p568 = pneg %p256
        $region106: #{tpu_custom_call.1} parent=71 // pred_check_branch
          %570 = sbr.rel (%p568) target = $region108
        $region107: #{tpu_custom_call.1} parent=71 // pred_region
          %571 = dma.done [#allocation15], 2048
        $region108: #{tpu_custom_call.1} parent=71 // pred_fallthru
          _
        %s572 = sand.u32 %s44, 1
        %s573 = scalar_lea.sflag [#allocation3], %s572
        %s574 = sand.u32 %s44, 1
        %s575 = smul.addr %s574, 256
        %s576 = scalar_lea.vmem [#allocation2], %s575
        %p577 = pneg %p57
        %p578 = pneg %p54
        %s579 = sand.u32 %s36, 1
        %s580 = scalar_lea.sflag [#allocation6], %s579
        %s581 = sand.u32 %s70, 1
        %s582 = smul.addr %s581, 256
        %s583 = scalar_lea.vmem [#allocation5], %s582
        %p584 = pneg %p83
        %p585 = pneg %p80
        %s586 = sand.u32 %s36, 1
        %s587 = scalar_lea.sflag [#allocation6], %s586
        %s588 = sand.u32 %s96, 1
        %s589 = smul.addr %s588, 256
        %s590 = scalar_lea.vmem [#allocation7], %s589
        %p591 = pneg %p109
        %p592 = pneg %p106
        %p593 = pneg %p130
        %p594 = pneg %p127
        %p595 = pneg %p151
        %p596 = pneg %p148
        %p597 = pneg %p172
        %p598 = pneg %p169
        %p599 = pneg %p193
        %p600 = pneg %p190
        %p601 = pneg %p214
        %p602 = pneg %p211
        %p603 = pneg %p235
        %p604 = pneg %p232
        %p605 = pneg %p256
        %p606 = pneg %p253
        %p607 = pneg %p277
        %p608 = pneg %p274
        %p609 = pneg %p298
        %p610 = pneg %p295
        %p611 = pneg %p319
        %p612 = pneg %p316
        %p613 = pneg %p345
        %p614 = pneg %p342
        %s615 = sand.u32 %s332, 1
        %s616 = scalar_lea.sflag [#allocation4], %s615
        %s617 = sand.u32 %s332, 1
        %s618 = smul.addr %s617, 512
        %s619 = scalar_lea.vmem [#allocation17], %s618
        %s620 = smul.u32 2, %s36
        %v622 = vld [vmem:[%s525] sm:$0xff]
        %v623 = vld [vmem:[%s525 + $0x8] sm:$0xff]
        %v624 = vld [vmem:[%s525 + $0x10] sm:$0xff]
        %v625 = vld [vmem:[%s525 + $0x18] sm:$0xff]
        %v626 = vld [vmem:[%s525 + $0x20] sm:$0xff]
        %v627 = vld [vmem:[%s525 + $0x28] sm:$0xff]
        %v628 = vld [vmem:[%s525 + $0x30] sm:$0xff]
        %v629 = vld [vmem:[%s525 + $0x38] sm:$0xff]
        %v630 = vld [vmem:[%s525 + $0x40] sm:$0xff]
        %v631 = vld [vmem:[%s525 + $0x48] sm:$0xff]
        %v632 = vld [vmem:[%s525 + $0x50] sm:$0xff]
        %v633 = vld [vmem:[%s525 + $0x58] sm:$0xff]
        %v634 = vld [vmem:[%s525 + $0x60] sm:$0xff]
        %v635 = vld [vmem:[%s525 + $0x68] sm:$0xff]
        %v636 = vld [vmem:[%s525 + $0x70] sm:$0xff]
        %v637 = vld [vmem:[%s525 + $0x78] sm:$0xff]
        %v638 = vld [vmem:[%s525 + $0x80] sm:$0xff]
        %v639 = vld [vmem:[%s525 + $0x88] sm:$0xff]
        %v640 = vld [vmem:[%s525 + $0x90] sm:$0xff]
        %v641 = vld [vmem:[%s525 + $0x98] sm:$0xff]
        %v642 = vld [vmem:[%s525 + $0xa0] sm:$0xff]
        %v643 = vld [vmem:[%s525 + $0xa8] sm:$0xff]
        %v644 = vld [vmem:[%s525 + $0xb0] sm:$0xff]
        %v645 = vld [vmem:[%s525 + $0xb8] sm:$0xff]
        %v646 = vld [vmem:[%s525 + $0xc0] sm:$0xff]
        %v647 = vld [vmem:[%s525 + $0xc8] sm:$0xff]
        %v648 = vld [vmem:[%s525 + $0xd0] sm:$0xff]
        %v649 = vld [vmem:[%s525 + $0xd8] sm:$0xff]
        %v650 = vld [vmem:[%s525 + $0xe0] sm:$0xff]
        %v651 = vld [vmem:[%s525 + $0xe8] sm:$0xff]
        %v652 = vld [vmem:[%s525 + $0xf0] sm:$0xff]
        %v653 = vld [vmem:[%s525 + $0xf8] sm:$0xff]
        %v654 = vld [vmem:[%s534] sm:$0xff]
        %v655 = vld [vmem:[%s534 + $0x8] sm:$0xff]
        %v656 = vld [vmem:[%s534 + $0x10] sm:$0xff]
        %v657 = vld [vmem:[%s534 + $0x18] sm:$0xff]
        %v658 = vld [vmem:[%s534 + $0x20] sm:$0xff]
        %v659 = vld [vmem:[%s534 + $0x28] sm:$0xff]
        %v660 = vld [vmem:[%s534 + $0x30] sm:$0xff]
        %v661 = vld [vmem:[%s534 + $0x38] sm:$0xff]
        %v662 = vld [vmem:[%s534 + $0x40] sm:$0xff]
        %v663 = vld [vmem:[%s534 + $0x48] sm:$0xff]
        %v664 = vld [vmem:[%s534 + $0x50] sm:$0xff]
        %v665 = vld [vmem:[%s534 + $0x58] sm:$0xff]
        %v666 = vld [vmem:[%s534 + $0x60] sm:$0xff]
        %v667 = vld [vmem:[%s534 + $0x68] sm:$0xff]
        %v668 = vld [vmem:[%s534 + $0x70] sm:$0xff]
        %v669 = vld [vmem:[%s534 + $0x78] sm:$0xff]
        %v670 = vld [vmem:[%s534 + $0x80] sm:$0xff]
        %v671 = vld [vmem:[%s534 + $0x88] sm:$0xff]
        %v672 = vld [vmem:[%s534 + $0x90] sm:$0xff]
        %v673 = vld [vmem:[%s534 + $0x98] sm:$0xff]
        %v674 = vld [vmem:[%s534 + $0xa0] sm:$0xff]
        %v675 = vld [vmem:[%s534 + $0xa8] sm:$0xff]
        %v676 = vld [vmem:[%s534 + $0xb0] sm:$0xff]
        %v677 = vld [vmem:[%s534 + $0xb8] sm:$0xff]
        %v678 = vld [vmem:[%s534 + $0xc0] sm:$0xff]
        %v679 = vld [vmem:[%s534 + $0xc8] sm:$0xff]
        %v680 = vld [vmem:[%s534 + $0xd0] sm:$0xff]
        %v681 = vld [vmem:[%s534 + $0xd8] sm:$0xff]
        %v682 = vld [vmem:[%s534 + $0xe0] sm:$0xff]
        %v683 = vld [vmem:[%s534 + $0xe8] sm:$0xff]
        %v684 = vld [vmem:[%s534 + $0xf0] sm:$0xff]
        %v685 = vld [vmem:[%s534 + $0xf8] sm:$0xff]
        %v686 = vld [vmem:[%s543] sm:$0xff]
        %v687 = vld [vmem:[%s543 + $0x8] sm:$0xff]
        %v688 = vld [vmem:[%s543 + $0x10] sm:$0xff]
        %v689 = vld [vmem:[%s543 + $0x18] sm:$0xff]
        %v690 = vld [vmem:[%s543 + $0x20] sm:$0xff]
        %v691 = vld [vmem:[%s543 + $0x28] sm:$0xff]
        %v692 = vld [vmem:[%s543 + $0x30] sm:$0xff]
        %v693 = vld [vmem:[%s543 + $0x38] sm:$0xff]
        %v694 = vld [vmem:[%s543 + $0x40] sm:$0xff]
        %v695 = vld [vmem:[%s543 + $0x48] sm:$0xff]
        %v696 = vld [vmem:[%s543 + $0x50] sm:$0xff]
        %v697 = vld [vmem:[%s543 + $0x58] sm:$0xff]
        %v698 = vld [vmem:[%s543 + $0x60] sm:$0xff]
        %v699 = vld [vmem:[%s543 + $0x68] sm:$0xff]
        %v700 = vld [vmem:[%s543 + $0x70] sm:$0xff]
        %v701 = vld [vmem:[%s543 + $0x78] sm:$0xff]
        %v702 = vld [vmem:[%s543 + $0x80] sm:$0xff]
        %v703 = vld [vmem:[%s543 + $0x88] sm:$0xff]
        %v704 = vld [vmem:[%s543 + $0x90] sm:$0xff]
        %v705 = vld [vmem:[%s543 + $0x98] sm:$0xff]
        %v706 = vld [vmem:[%s543 + $0xa0] sm:$0xff]
        %v707 = vld [vmem:[%s543 + $0xa8] sm:$0xff]
        %v708 = vld [vmem:[%s543 + $0xb0] sm:$0xff]
        %v709 = vld [vmem:[%s543 + $0xb8] sm:$0xff]
        %v710 = vld [vmem:[%s543 + $0xc0] sm:$0xff]
        %v711 = vld [vmem:[%s543 + $0xc8] sm:$0xff]
        %v712 = vld [vmem:[%s543 + $0xd0] sm:$0xff]
        %v713 = vld [vmem:[%s543 + $0xd8] sm:$0xff]
        %v714 = vld [vmem:[%s543 + $0xe0] sm:$0xff]
        %v715 = vld [vmem:[%s543 + $0xe8] sm:$0xff]
        %v716 = vld [vmem:[%s543 + $0xf0] sm:$0xff]
        %v717 = vld [vmem:[%s543 + $0xf8] sm:$0xff]
        %v718 = vpack.c.bf16 %v623, %v622
        %v719 = vpack.c.bf16 %v625, %v624
        %v720 = vpack.c.bf16 %v627, %v626
        %v721 = vpack.c.bf16 %v629, %v628
        %v722 = vpack.c.bf16 %v631, %v630
        %v723 = vpack.c.bf16 %v633, %v632
        %v724 = vpack.c.bf16 %v635, %v634
        %v725 = vpack.c.bf16 %v637, %v636
        %v726 = vpack.c.bf16 %v639, %v638
        %v727 = vpack.c.bf16 %v641, %v640
        %v728 = vpack.c.bf16 %v643, %v642
        %v729 = vpack.c.bf16 %v645, %v644
        %v730 = vpack.c.bf16 %v647, %v646
        %v731 = vpack.c.bf16 %v649, %v648
        %v732 = vpack.c.bf16 %v651, %v650
        %v733 = vpack.c.bf16 %v653, %v652
        %v734 = vld [vmem:[#allocation8] sm:$0xff]
        %v735 = vld [vmem:[#allocation8 + $0x8] sm:$0xff]
        %v736 = vld [vmem:[#allocation8 + $0x10] sm:$0xff]
        %v737 = vld [vmem:[#allocation8 + $0x18] sm:$0xff]
        %v738 = vld [vmem:[#allocation8 + $0x20] sm:$0xff]
        %v739 = vld [vmem:[#allocation8 + $0x28] sm:$0xff]
        %v740 = vld [vmem:[#allocation8 + $0x30] sm:$0xff]
        %v741 = vld [vmem:[#allocation8 + $0x38] sm:$0xff]
        %v742 = vld [vmem:[#allocation8 + $0x40] sm:$0xff]
        %v743 = vld [vmem:[#allocation8 + $0x48] sm:$0xff]
        %v744 = vld [vmem:[#allocation8 + $0x50] sm:$0xff]
        %v745 = vld [vmem:[#allocation8 + $0x58] sm:$0xff]
        %v746 = vld [vmem:[#allocation8 + $0x60] sm:$0xff]
        %v747 = vld [vmem:[#allocation8 + $0x68] sm:$0xff]
        %v748 = vld [vmem:[#allocation8 + $0x70] sm:$0xff]
        %v749 = vld [vmem:[#allocation8 + $0x78] sm:$0xff]
        %v766 = vunpack.c.l.b16 %v734
        %v767 = vunpack.c.h.b16 %v734
        %v768 = vunpack.c.l.b16 %v735
        %v769 = vunpack.c.h.b16 %v735
        %v770 = vunpack.c.l.b16 %v736
        %v771 = vunpack.c.h.b16 %v736
        %v772 = vunpack.c.l.b16 %v737
        %v773 = vunpack.c.h.b16 %v737
        %v774 = vunpack.c.l.b16 %v738
        %v775 = vunpack.c.h.b16 %v738
        %v776 = vunpack.c.l.b16 %v739
        %v777 = vunpack.c.h.b16 %v739
        %v778 = vunpack.c.l.b16 %v740
        %v779 = vunpack.c.h.b16 %v740
        %v780 = vunpack.c.l.b16 %v741
        %v781 = vunpack.c.h.b16 %v741
        %v782 = vunpack.c.l.b16 %v742
        %v783 = vunpack.c.h.b16 %v742
        %v784 = vunpack.c.l.b16 %v743
        %v785 = vunpack.c.h.b16 %v743
        %v786 = vunpack.c.l.b16 %v744
        %v787 = vunpack.c.h.b16 %v744
        %v788 = vunpack.c.l.b16 %v745
        %v789 = vunpack.c.h.b16 %v745
        %v790 = vunpack.c.l.b16 %v746
        %v791 = vunpack.c.h.b16 %v746
        %v792 = vunpack.c.l.b16 %v747
        %v793 = vunpack.c.h.b16 %v747
        %v794 = vunpack.c.l.b16 %v748
        %v795 = vunpack.c.h.b16 %v748
        %v796 = vunpack.c.l.b16 %v749
        %v797 = vunpack.c.h.b16 %v749
        %v798 = vpack.c.b16 %v768, %v766
        %v799 = vpack.c.b16 %v769, %v767
        %v800 = vpack.c.b16 %v772, %v770
        %v801 = vpack.c.b16 %v773, %v771
        %v802 = vpack.c.b16 %v776, %v774
        %v803 = vpack.c.b16 %v777, %v775
        %v804 = vpack.c.b16 %v780, %v778
        %v805 = vpack.c.b16 %v781, %v779
        %v806 = vpack.c.b16 %v784, %v782
        %v807 = vpack.c.b16 %v785, %v783
        %v808 = vpack.c.b16 %v788, %v786
        %v809 = vpack.c.b16 %v789, %v787
        %v810 = vpack.c.b16 %v792, %v790
        %v811 = vpack.c.b16 %v793, %v791
        %v812 = vpack.c.b16 %v796, %v794
        %v813 = vpack.c.b16 %v797, %v795
        %830 = vmatprep.subr.bf16.mxu0 %v813
        %831 = vmatpush1.bf16.msra.mxu0 %v812
        %832 = vmatprep.subr.bf16.mxu0 %v811
        %833 = vmatpush1.bf16.msra.mxu0 %v810
        %834 = vmatprep.subr.bf16.mxu0 %v809
        %835 = vmatpush1.bf16.msra.mxu0 %v808
        %836 = vmatprep.subr.bf16.mxu0 %v807
        %837 = vmatpush1.bf16.msra.mxu0 %v806
        %838 = vmatprep.subr.bf16.mxu0 %v805
        %839 = vmatpush1.bf16.msra.mxu0 %v804
        %840 = vmatprep.subr.bf16.mxu0 %v803
        %841 = vmatpush1.bf16.msra.mxu0 %v802
        %842 = vmatprep.subr.bf16.mxu0 %v801
        %843 = vmatpush1.bf16.msra.mxu0 %v800
        %844 = vmatprep.subr.bf16.mxu0 %v799
        %845 = vmatpush1.bf16.msra.mxu0 %v798
        %846 = vmatprep.subr.bf16.mxu0 0
        %847 = vmatpush2.bf16.msra.mxu0 0
        %848 = vmatprep.subr.bf16.mxu0 0
        %849 = vmatpush2.bf16.msra.mxu0 0
        %850 = vmatprep.subr.bf16.mxu0 0
        %851 = vmatpush2.bf16.msra.mxu0 0
        %852 = vmatprep.subr.bf16.mxu0 0
        %853 = vmatpush2.bf16.msra.mxu0 0
        %854 = vmatprep.subr.bf16.mxu0 0
        %855 = vmatpush2.bf16.msra.mxu0 0
        %856 = vmatprep.subr.bf16.mxu0 0
        %857 = vmatpush2.bf16.msra.mxu0 0
        %858 = vmatprep.subr.bf16.mxu0 0
        %859 = vmatpush2.bf16.msra.mxu0 0
        %860 = vmatprep.subr.bf16.mxu0 0
        %861 = vmatpush2.bf16.msra.mxu0 0
        %862 = vmatprep.mubr.bf16.mxu0 0
        %863 = vmatmul.mubr.bf16.gmra.mxu0 %v718
        %v864 = vpop.f32.mrf.mxu0
        %v865 = vadd.f32 0.0, %v864
        %v866 = vpop.f32.mrf.mxu0
        %v867 = vadd.f32 0.0, %v866
        %v868 = vpop.f32.mrf.mxu0
        %v869 = vadd.f32 0.0, %v868
        %v870 = vpop.f32.mrf.mxu0
        %v871 = vadd.f32 0.0, %v870
        %872 = vmatprep.mubr.bf16.mxu0 0
        %873 = vmatmul.mubr.bf16.gmra.mxu0 %v719
        %v874 = vpop.f32.mrf.mxu0
        %v875 = vadd.f32 0.0, %v874
        %v876 = vpop.f32.mrf.mxu0
        %v877 = vadd.f32 0.0, %v876
        %v878 = vpop.f32.mrf.mxu0
        %v879 = vadd.f32 0.0, %v878
        %v880 = vpop.f32.mrf.mxu0
        %v881 = vadd.f32 0.0, %v880
        %882 = vmatprep.mubr.bf16.mxu0 0
        %883 = vmatmul.mubr.bf16.gmra.mxu0 %v720
        %v884 = vpop.f32.mrf.mxu0
        %v885 = vadd.f32 0.0, %v884
        %v886 = vpop.f32.mrf.mxu0
        %v887 = vadd.f32 0.0, %v886
        %v888 = vpop.f32.mrf.mxu0
        %v889 = vadd.f32 0.0, %v888
        %v890 = vpop.f32.mrf.mxu0
        %v891 = vadd.f32 0.0, %v890
        %892 = vmatprep.mubr.bf16.mxu0 0
        %893 = vmatmul.mubr.bf16.gmra.mxu0 %v721
        %v894 = vpop.f32.mrf.mxu0
        %v895 = vadd.f32 0.0, %v894
        %v896 = vpop.f32.mrf.mxu0
        %v897 = vadd.f32 0.0, %v896
        %v898 = vpop.f32.mrf.mxu0
        %v899 = vadd.f32 0.0, %v898
        %v900 = vpop.f32.mrf.mxu0
        %v901 = vadd.f32 0.0, %v900
        %902 = vmatprep.mubr.bf16.mxu0 0
        %903 = vmatmul.mubr.bf16.gmra.mxu0 %v722
        %v904 = vpop.f32.mrf.mxu0
        %v905 = vadd.f32 0.0, %v904
        %v906 = vpop.f32.mrf.mxu0
        %v907 = vadd.f32 0.0, %v906
        %v908 = vpop.f32.mrf.mxu0
        %v909 = vadd.f32 0.0, %v908
        %v910 = vpop.f32.mrf.mxu0
        %v911 = vadd.f32 0.0, %v910
        %912 = vmatprep.mubr.bf16.mxu0 0
        %913 = vmatmul.mubr.bf16.gmra.mxu0 %v723
        %v914 = vpop.f32.mrf.mxu0
        %v915 = vadd.f32 0.0, %v914
        %v916 = vpop.f32.mrf.mxu0
        %v917 = vadd.f32 0.0, %v916
        %v918 = vpop.f32.mrf.mxu0
        %v919 = vadd.f32 0.0, %v918
        %v920 = vpop.f32.mrf.mxu0
        %v921 = vadd.f32 0.0, %v920
        %922 = vmatprep.mubr.bf16.mxu0 0
        %923 = vmatmul.mubr.bf16.gmra.mxu0 %v724
        %v924 = vpop.f32.mrf.mxu0
        %v925 = vadd.f32 0.0, %v924
        %v926 = vpop.f32.mrf.mxu0
        %v927 = vadd.f32 0.0, %v926
        %v928 = vpop.f32.mrf.mxu0
        %v929 = vadd.f32 0.0, %v928
        %v930 = vpop.f32.mrf.mxu0
        %v931 = vadd.f32 0.0, %v930
        %932 = vmatprep.mubr.bf16.mxu0 0
        %933 = vmatmul.mubr.bf16.gmra.mxu0 %v725
        %v934 = vpop.f32.mrf.mxu0
        %v935 = vadd.f32 0.0, %v934
        %v936 = vpop.f32.mrf.mxu0
        %v937 = vadd.f32 0.0, %v936
        %v938 = vpop.f32.mrf.mxu0
        %v939 = vadd.f32 0.0, %v938
        %v940 = vpop.f32.mrf.mxu0
        %v941 = vadd.f32 0.0, %v940
        %942 = vmatprep.mubr.bf16.mxu0 0
        %943 = vmatmul.mubr.bf16.gmra.mxu0 %v726
        %v944 = vpop.f32.mrf.mxu0
        %v945 = vadd.f32 0.0, %v944
        %v946 = vpop.f32.mrf.mxu0
        %v947 = vadd.f32 0.0, %v946
        %v948 = vpop.f32.mrf.mxu0
        %v949 = vadd.f32 0.0, %v948
        %v950 = vpop.f32.mrf.mxu0
        %v951 = vadd.f32 0.0, %v950
        %952 = vmatprep.mubr.bf16.mxu0 0
        %953 = vmatmul.mubr.bf16.gmra.mxu0 %v727
        %v954 = vpop.f32.mrf.mxu0
        %v955 = vadd.f32 0.0, %v954
        %v956 = vpop.f32.mrf.mxu0
        %v957 = vadd.f32 0.0, %v956
        %v958 = vpop.f32.mrf.mxu0
        %v959 = vadd.f32 0.0, %v958
        %v960 = vpop.f32.mrf.mxu0
        %v961 = vadd.f32 0.0, %v960
        %962 = vmatprep.mubr.bf16.mxu0 0
        %963 = vmatmul.mubr.bf16.gmra.mxu0 %v728
        %v964 = vpop.f32.mrf.mxu0
        %v965 = vadd.f32 0.0, %v964
        %v966 = vpop.f32.mrf.mxu0
        %v967 = vadd.f32 0.0, %v966
        %v968 = vpop.f32.mrf.mxu0
        %v969 = vadd.f32 0.0, %v968
        %v970 = vpop.f32.mrf.mxu0
        %v971 = vadd.f32 0.0, %v970
        %972 = vmatprep.mubr.bf16.mxu0 0
        %973 = vmatmul.mubr.bf16.gmra.mxu0 %v729
        %v974 = vpop.f32.mrf.mxu0
        %v975 = vadd.f32 0.0, %v974
        %v976 = vpop.f32.mrf.mxu0
        %v977 = vadd.f32 0.0, %v976
        %v978 = vpop.f32.mrf.mxu0
        %v979 = vadd.f32 0.0, %v978
        %v980 = vpop.f32.mrf.mxu0
        %v981 = vadd.f32 0.0, %v980
        %982 = vmatprep.mubr.bf16.mxu0 0
        %983 = vmatmul.mubr.bf16.gmra.mxu0 %v730
        %v984 = vpop.f32.mrf.mxu0
        %v985 = vadd.f32 0.0, %v984
        %v986 = vpop.f32.mrf.mxu0
        %v987 = vadd.f32 0.0, %v986
        %v988 = vpop.f32.mrf.mxu0
        %v989 = vadd.f32 0.0, %v988
        %v990 = vpop.f32.mrf.mxu0
        %v991 = vadd.f32 0.0, %v990
        %992 = vmatprep.mubr.bf16.mxu0 0
        %993 = vmatmul.mubr.bf16.gmra.mxu0 %v731
        %v994 = vpop.f32.mrf.mxu0
        %v995 = vadd.f32 0.0, %v994
        %v996 = vpop.f32.mrf.mxu0
        %v997 = vadd.f32 0.0, %v996
        %v998 = vpop.f32.mrf.mxu0
        %v999 = vadd.f32 0.0, %v998
        %v1000 = vpop.f32.mrf.mxu0
        %v1001 = vadd.f32 0.0, %v1000
        %1002 = vmatprep.mubr.bf16.mxu0 0
        %1003 = vmatmul.mubr.bf16.gmra.mxu0 %v732
        %v1004 = vpop.f32.mrf.mxu0
        %v1005 = vadd.f32 0.0, %v1004
        %v1006 = vpop.f32.mrf.mxu0
        %v1007 = vadd.f32 0.0, %v1006
        %v1008 = vpop.f32.mrf.mxu0
        %v1009 = vadd.f32 0.0, %v1008
        %v1010 = vpop.f32.mrf.mxu0
        %v1011 = vadd.f32 0.0, %v1010
        %1012 = vmatprep.mubr.bf16.mxu0 0
        %1013 = vmatmul.mubr.bf16.gmra.mxu0 %v733
        %v1014 = vpop.f32.mrf.mxu0
        %v1015 = vadd.f32 0.0, %v1014
        %v1016 = vpop.f32.mrf.mxu0
        %v1017 = vadd.f32 0.0, %v1016
        %v1018 = vpop.f32.mrf.mxu0
        %v1019 = vadd.f32 0.0, %v1018
        %v1020 = vpop.f32.mrf.mxu0
        %v1021 = vadd.f32 0.0, %v1020
        %1022 = vdwg.mxu0
        %v1023 = vpack.c.bf16 %v655, %v654
        %v1024 = vpack.c.bf16 %v657, %v656
        %v1025 = vpack.c.bf16 %v659, %v658
        %v1026 = vpack.c.bf16 %v661, %v660
        %v1027 = vpack.c.bf16 %v663, %v662
        %v1028 = vpack.c.bf16 %v665, %v664
        %v1029 = vpack.c.bf16 %v667, %v666
        %v1030 = vpack.c.bf16 %v669, %v668
        %v1031 = vpack.c.bf16 %v671, %v670
        %v1032 = vpack.c.bf16 %v673, %v672
        %v1033 = vpack.c.bf16 %v675, %v674
        %v1034 = vpack.c.bf16 %v677, %v676
        %v1035 = vpack.c.bf16 %v679, %v678
        %v1036 = vpack.c.bf16 %v681, %v680
        %v1037 = vpack.c.bf16 %v683, %v682
        %v1038 = vpack.c.bf16 %v685, %v684
        %v1039 = vld [vmem:[#allocation10] sm:$0xff]
        %v1040 = vld [vmem:[#allocation10 + $0x8] sm:$0xff]
        %v1041 = vld [vmem:[#allocation10 + $0x10] sm:$0xff]
        %v1042 = vld [vmem:[#allocation10 + $0x18] sm:$0xff]
        %v1043 = vld [vmem:[#allocation10 + $0x20] sm:$0xff]
        %v1044 = vld [vmem:[#allocation10 + $0x28] sm:$0xff]
        %v1045 = vld [vmem:[#allocation10 + $0x30] sm:$0xff]
        %v1046 = vld [vmem:[#allocation10 + $0x38] sm:$0xff]
        %v1047 = vld [vmem:[#allocation10 + $0x40] sm:$0xff]
        %v1048 = vld [vmem:[#allocation10 + $0x48] sm:$0xff]
        %v1049 = vld [vmem:[#allocation10 + $0x50] sm:$0xff]
        %v1050 = vld [vmem:[#allocation10 + $0x58] sm:$0xff]
        %v1051 = vld [vmem:[#allocation10 + $0x60] sm:$0xff]
        %v1052 = vld [vmem:[#allocation10 + $0x68] sm:$0xff]
        %v1053 = vld [vmem:[#allocation10 + $0x70] sm:$0xff]
        %v1054 = vld [vmem:[#allocation10 + $0x78] sm:$0xff]
        %v1071 = vunpack.c.l.b16 %v1039
        %v1072 = vunpack.c.h.b16 %v1039
        %v1073 = vunpack.c.l.b16 %v1040
        %v1074 = vunpack.c.h.b16 %v1040
        %v1075 = vunpack.c.l.b16 %v1041
        %v1076 = vunpack.c.h.b16 %v1041
        %v1077 = vunpack.c.l.b16 %v1042
        %v1078 = vunpack.c.h.b16 %v1042
        %v1079 = vunpack.c.l.b16 %v1043
        %v1080 = vunpack.c.h.b16 %v1043
        %v1081 = vunpack.c.l.b16 %v1044
        %v1082 = vunpack.c.h.b16 %v1044
        %v1083 = vunpack.c.l.b16 %v1045
        %v1084 = vunpack.c.h.b16 %v1045
        %v1085 = vunpack.c.l.b16 %v1046
        %v1086 = vunpack.c.h.b16 %v1046
        %v1087 = vunpack.c.l.b16 %v1047
        %v1088 = vunpack.c.h.b16 %v1047
        %v1089 = vunpack.c.l.b16 %v1048
        %v1090 = vunpack.c.h.b16 %v1048
        %v1091 = vunpack.c.l.b16 %v1049
        %v1092 = vunpack.c.h.b16 %v1049
        %v1093 = vunpack.c.l.b16 %v1050
        %v1094 = vunpack.c.h.b16 %v1050
        %v1095 = vunpack.c.l.b16 %v1051
        %v1096 = vunpack.c.h.b16 %v1051
        %v1097 = vunpack.c.l.b16 %v1052
        %v1098 = vunpack.c.h.b16 %v1052
        %v1099 = vunpack.c.l.b16 %v1053
        %v1100 = vunpack.c.h.b16 %v1053
        %v1101 = vunpack.c.l.b16 %v1054
        %v1102 = vunpack.c.h.b16 %v1054
        %v1103 = vpack.c.b16 %v1073, %v1071
        %v1104 = vpack.c.b16 %v1074, %v1072
        %v1105 = vpack.c.b16 %v1077, %v1075
        %v1106 = vpack.c.b16 %v1078, %v1076
        %v1107 = vpack.c.b16 %v1081, %v1079
        %v1108 = vpack.c.b16 %v1082, %v1080
        %v1109 = vpack.c.b16 %v1085, %v1083
        %v1110 = vpack.c.b16 %v1086, %v1084
        %v1111 = vpack.c.b16 %v1089, %v1087
        %v1112 = vpack.c.b16 %v1090, %v1088
        %v1113 = vpack.c.b16 %v1093, %v1091
        %v1114 = vpack.c.b16 %v1094, %v1092
        %v1115 = vpack.c.b16 %v1097, %v1095
        %v1116 = vpack.c.b16 %v1098, %v1096
        %v1117 = vpack.c.b16 %v1101, %v1099
        %v1118 = vpack.c.b16 %v1102, %v1100
        %1135 = vmatprep.subr.bf16.mxu0 %v1118
        %1136 = vmatpush1.bf16.msra.mxu0 %v1117
        %1137 = vmatprep.subr.bf16.mxu0 %v1116
        %1138 = vmatpush1.bf16.msra.mxu0 %v1115
        %1139 = vmatprep.subr.bf16.mxu0 %v1114
        %1140 = vmatpush1.bf16.msra.mxu0 %v1113
        %1141 = vmatprep.subr.bf16.mxu0 %v1112
        %1142 = vmatpush1.bf16.msra.mxu0 %v1111
        %1143 = vmatprep.subr.bf16.mxu0 %v1110
        %1144 = vmatpush1.bf16.msra.mxu0 %v1109
        %1145 = vmatprep.subr.bf16.mxu0 %v1108
        %1146 = vmatpush1.bf16.msra.mxu0 %v1107
        %1147 = vmatprep.subr.bf16.mxu0 %v1106
        %1148 = vmatpush1.bf16.msra.mxu0 %v1105
        %1149 = vmatprep.subr.bf16.mxu0 %v1104
        %1150 = vmatpush1.bf16.msra.mxu0 %v1103
        %1151 = vmatprep.subr.bf16.mxu0 0
        %1152 = vmatpush2.bf16.msra.mxu0 0
        %1153 = vmatprep.subr.bf16.mxu0 0
        %1154 = vmatpush2.bf16.msra.mxu0 0
        %1155 = vmatprep.subr.bf16.mxu0 0
        %1156 = vmatpush2.bf16.msra.mxu0 0
        %1157 = vmatprep.subr.bf16.mxu0 0
        %1158 = vmatpush2.bf16.msra.mxu0 0
        %1159 = vmatprep.subr.bf16.mxu0 0
        %1160 = vmatpush2.bf16.msra.mxu0 0
        %1161 = vmatprep.subr.bf16.mxu0 0
        %1162 = vmatpush2.bf16.msra.mxu0 0
        %1163 = vmatprep.subr.bf16.mxu0 0
        %1164 = vmatpush2.bf16.msra.mxu0 0
        %1165 = vmatprep.subr.bf16.mxu0 0
        %1166 = vmatpush2.bf16.msra.mxu0 0
        %1167 = vmatprep.mubr.bf16.mxu0 0
        %1168 = vmatmul.mubr.bf16.gmra.mxu0 %v1023
        %v1169 = vpop.f32.mrf.mxu0
        %v1170 = vadd.f32 0.0, %v1169
        %v1171 = vpop.f32.mrf.mxu0
        %v1172 = vadd.f32 0.0, %v1171
        %v1173 = vpop.f32.mrf.mxu0
        %v1174 = vadd.f32 0.0, %v1173
        %v1175 = vpop.f32.mrf.mxu0
        %v1176 = vadd.f32 0.0, %v1175
        %1177 = vmatprep.mubr.bf16.mxu0 0
        %1178 = vmatmul.mubr.bf16.gmra.mxu0 %v1024
        %v1179 = vpop.f32.mrf.mxu0
        %v1180 = vadd.f32 0.0, %v1179
        %v1181 = vpop.f32.mrf.mxu0
        %v1182 = vadd.f32 0.0, %v1181
        %v1183 = vpop.f32.mrf.mxu0
        %v1184 = vadd.f32 0.0, %v1183
        %v1185 = vpop.f32.mrf.mxu0
        %v1186 = vadd.f32 0.0, %v1185
        %1187 = vmatprep.mubr.bf16.mxu0 0
        %1188 = vmatmul.mubr.bf16.gmra.mxu0 %v1025
        %v1189 = vpop.f32.mrf.mxu0
        %v1190 = vadd.f32 0.0, %v1189
        %v1191 = vpop.f32.mrf.mxu0
        %v1192 = vadd.f32 0.0, %v1191
        %v1193 = vpop.f32.mrf.mxu0
        %v1194 = vadd.f32 0.0, %v1193
        %v1195 = vpop.f32.mrf.mxu0
        %v1196 = vadd.f32 0.0, %v1195
        %1197 = vmatprep.mubr.bf16.mxu0 0
        %1198 = vmatmul.mubr.bf16.gmra.mxu0 %v1026
        %v1199 = vpop.f32.mrf.mxu0
        %v1200 = vadd.f32 0.0, %v1199
        %v1201 = vpop.f32.mrf.mxu0
        %v1202 = vadd.f32 0.0, %v1201
        %v1203 = vpop.f32.mrf.mxu0
        %v1204 = vadd.f32 0.0, %v1203
        %v1205 = vpop.f32.mrf.mxu0
        %v1206 = vadd.f32 0.0, %v1205
        %1207 = vmatprep.mubr.bf16.mxu0 0
        %1208 = vmatmul.mubr.bf16.gmra.mxu0 %v1027
        %v1209 = vpop.f32.mrf.mxu0
        %v1210 = vadd.f32 0.0, %v1209
        %v1211 = vpop.f32.mrf.mxu0
        %v1212 = vadd.f32 0.0, %v1211
        %v1213 = vpop.f32.mrf.mxu0
        %v1214 = vadd.f32 0.0, %v1213
        %v1215 = vpop.f32.mrf.mxu0
        %v1216 = vadd.f32 0.0, %v1215
        %1217 = vmatprep.mubr.bf16.mxu0 0
        %1218 = vmatmul.mubr.bf16.gmra.mxu0 %v1028
        %v1219 = vpop.f32.mrf.mxu0
        %v1220 = vadd.f32 0.0, %v1219
        %v1221 = vpop.f32.mrf.mxu0
        %v1222 = vadd.f32 0.0, %v1221
        %v1223 = vpop.f32.mrf.mxu0
        %v1224 = vadd.f32 0.0, %v1223
        %v1225 = vpop.f32.mrf.mxu0
        %v1226 = vadd.f32 0.0, %v1225
        %1227 = vmatprep.mubr.bf16.mxu0 0
        %1228 = vmatmul.mubr.bf16.gmra.mxu0 %v1029
        %v1229 = vpop.f32.mrf.mxu0
        %v1230 = vadd.f32 0.0, %v1229
        %v1231 = vpop.f32.mrf.mxu0
        %v1232 = vadd.f32 0.0, %v1231
        %v1233 = vpop.f32.mrf.mxu0
        %v1234 = vadd.f32 0.0, %v1233
        %v1235 = vpop.f32.mrf.mxu0
        %v1236 = vadd.f32 0.0, %v1235
        %1237 = vmatprep.mubr.bf16.mxu0 0
        %1238 = vmatmul.mubr.bf16.gmra.mxu0 %v1030
        %v1239 = vpop.f32.mrf.mxu0
        %v1240 = vadd.f32 0.0, %v1239
        %v1241 = vpop.f32.mrf.mxu0
        %v1242 = vadd.f32 0.0, %v1241
        %v1243 = vpop.f32.mrf.mxu0
        %v1244 = vadd.f32 0.0, %v1243
        %v1245 = vpop.f32.mrf.mxu0
        %v1246 = vadd.f32 0.0, %v1245
        %1247 = vmatprep.mubr.bf16.mxu0 0
        %1248 = vmatmul.mubr.bf16.gmra.mxu0 %v1031
        %v1249 = vpop.f32.mrf.mxu0
        %v1250 = vadd.f32 0.0, %v1249
        %v1251 = vpop.f32.mrf.mxu0
        %v1252 = vadd.f32 0.0, %v1251
        %v1253 = vpop.f32.mrf.mxu0
        %v1254 = vadd.f32 0.0, %v1253
        %v1255 = vpop.f32.mrf.mxu0
        %v1256 = vadd.f32 0.0, %v1255
        %1257 = vmatprep.mubr.bf16.mxu0 0
        %1258 = vmatmul.mubr.bf16.gmra.mxu0 %v1032
        %v1259 = vpop.f32.mrf.mxu0
        %v1260 = vadd.f32 0.0, %v1259
        %v1261 = vpop.f32.mrf.mxu0
        %v1262 = vadd.f32 0.0, %v1261
        %v1263 = vpop.f32.mrf.mxu0
        %v1264 = vadd.f32 0.0, %v1263
        %v1265 = vpop.f32.mrf.mxu0
        %v1266 = vadd.f32 0.0, %v1265
        %1267 = vmatprep.mubr.bf16.mxu0 0
        %1268 = vmatmul.mubr.bf16.gmra.mxu0 %v1033
        %v1269 = vpop.f32.mrf.mxu0
        %v1270 = vadd.f32 0.0, %v1269
        %v1271 = vpop.f32.mrf.mxu0
        %v1272 = vadd.f32 0.0, %v1271
        %v1273 = vpop.f32.mrf.mxu0
        %v1274 = vadd.f32 0.0, %v1273
        %v1275 = vpop.f32.mrf.mxu0
        %v1276 = vadd.f32 0.0, %v1275
        %1277 = vmatprep.mubr.bf16.mxu0 0
        %1278 = vmatmul.mubr.bf16.gmra.mxu0 %v1034
        %v1279 = vpop.f32.mrf.mxu0
        %v1280 = vadd.f32 0.0, %v1279
        %v1281 = vpop.f32.mrf.mxu0
        %v1282 = vadd.f32 0.0, %v1281
        %v1283 = vpop.f32.mrf.mxu0
        %v1284 = vadd.f32 0.0, %v1283
        %v1285 = vpop.f32.mrf.mxu0
        %v1286 = vadd.f32 0.0, %v1285
        %1287 = vmatprep.mubr.bf16.mxu0 0
        %1288 = vmatmul.mubr.bf16.gmra.mxu0 %v1035
        %v1289 = vpop.f32.mrf.mxu0
        %v1290 = vadd.f32 0.0, %v1289
        %v1291 = vpop.f32.mrf.mxu0
        %v1292 = vadd.f32 0.0, %v1291
        %v1293 = vpop.f32.mrf.mxu0
        %v1294 = vadd.f32 0.0, %v1293
        %v1295 = vpop.f32.mrf.mxu0
        %v1296 = vadd.f32 0.0, %v1295
        %1297 = vmatprep.mubr.bf16.mxu0 0
        %1298 = vmatmul.mubr.bf16.gmra.mxu0 %v1036
        %v1299 = vpop.f32.mrf.mxu0
        %v1300 = vadd.f32 0.0, %v1299
        %v1301 = vpop.f32.mrf.mxu0
        %v1302 = vadd.f32 0.0, %v1301
        %v1303 = vpop.f32.mrf.mxu0
        %v1304 = vadd.f32 0.0, %v1303
        %v1305 = vpop.f32.mrf.mxu0
        %v1306 = vadd.f32 0.0, %v1305
        %1307 = vmatprep.mubr.bf16.mxu0 0
        %1308 = vmatmul.mubr.bf16.gmra.mxu0 %v1037
        %v1309 = vpop.f32.mrf.mxu0
        %v1310 = vadd.f32 0.0, %v1309
        %v1311 = vpop.f32.mrf.mxu0
        %v1312 = vadd.f32 0.0, %v1311
        %v1313 = vpop.f32.mrf.mxu0
        %v1314 = vadd.f32 0.0, %v1313
        %v1315 = vpop.f32.mrf.mxu0
        %v1316 = vadd.f32 0.0, %v1315
        %1317 = vmatprep.mubr.bf16.mxu0 0
        %1318 = vmatmul.mubr.bf16.gmra.mxu0 %v1038
        %v1319 = vpop.f32.mrf.mxu0
        %v1320 = vadd.f32 0.0, %v1319
        %v1321 = vpop.f32.mrf.mxu0
        %v1322 = vadd.f32 0.0, %v1321
        %v1323 = vpop.f32.mrf.mxu0
        %v1324 = vadd.f32 0.0, %v1323
        %v1325 = vpop.f32.mrf.mxu0
        %v1326 = vadd.f32 0.0, %v1325
        %1327 = vdwg.mxu0
        %v1328 = vpack.c.bf16 %v687, %v686
        %v1329 = vpack.c.bf16 %v689, %v688
        %v1330 = vpack.c.bf16 %v691, %v690
        %v1331 = vpack.c.bf16 %v693, %v692
        %v1332 = vpack.c.bf16 %v695, %v694
        %v1333 = vpack.c.bf16 %v697, %v696
        %v1334 = vpack.c.bf16 %v699, %v698
        %v1335 = vpack.c.bf16 %v701, %v700
        %v1336 = vpack.c.bf16 %v703, %v702
        %v1337 = vpack.c.bf16 %v705, %v704
        %v1338 = vpack.c.bf16 %v707, %v706
        %v1339 = vpack.c.bf16 %v709, %v708
        %v1340 = vpack.c.bf16 %v711, %v710
        %v1341 = vpack.c.bf16 %v713, %v712
        %v1342 = vpack.c.bf16 %v715, %v714
        %v1343 = vpack.c.bf16 %v717, %v716
        %v1344 = vld [vmem:[#allocation11] sm:$0xff]
        %v1345 = vld [vmem:[#allocation11 + $0x8] sm:$0xff]
        %v1346 = vld [vmem:[#allocation11 + $0x10] sm:$0xff]
        %v1347 = vld [vmem:[#allocation11 + $0x18] sm:$0xff]
        %v1348 = vld [vmem:[#allocation11 + $0x20] sm:$0xff]
        %v1349 = vld [vmem:[#allocation11 + $0x28] sm:$0xff]
        %v1350 = vld [vmem:[#allocation11 + $0x30] sm:$0xff]
        %v1351 = vld [vmem:[#allocation11 + $0x38] sm:$0xff]
        %v1352 = vld [vmem:[#allocation11 + $0x40] sm:$0xff]
        %v1353 = vld [vmem:[#allocation11 + $0x48] sm:$0xff]
        %v1354 = vld [vmem:[#allocation11 + $0x50] sm:$0xff]
        %v1355 = vld [vmem:[#allocation11 + $0x58] sm:$0xff]
        %v1356 = vld [vmem:[#allocation11 + $0x60] sm:$0xff]
        %v1357 = vld [vmem:[#allocation11 + $0x68] sm:$0xff]
        %v1358 = vld [vmem:[#allocation11 + $0x70] sm:$0xff]
        %v1359 = vld [vmem:[#allocation11 + $0x78] sm:$0xff]
        %v1376 = vunpack.c.l.b16 %v1344
        %v1377 = vunpack.c.h.b16 %v1344
        %v1378 = vunpack.c.l.b16 %v1345
        %v1379 = vunpack.c.h.b16 %v1345
        %v1380 = vunpack.c.l.b16 %v1346
        %v1381 = vunpack.c.h.b16 %v1346
        %v1382 = vunpack.c.l.b16 %v1347
        %v1383 = vunpack.c.h.b16 %v1347
        %v1384 = vunpack.c.l.b16 %v1348
        %v1385 = vunpack.c.h.b16 %v1348
        %v1386 = vunpack.c.l.b16 %v1349
        %v1387 = vunpack.c.h.b16 %v1349
        %v1388 = vunpack.c.l.b16 %v1350
        %v1389 = vunpack.c.h.b16 %v1350
        %v1390 = vunpack.c.l.b16 %v1351
        %v1391 = vunpack.c.h.b16 %v1351
        %v1392 = vunpack.c.l.b16 %v1352
        %v1393 = vunpack.c.h.b16 %v1352
        %v1394 = vunpack.c.l.b16 %v1353
        %v1395 = vunpack.c.h.b16 %v1353
        %v1396 = vunpack.c.l.b16 %v1354
        %v1397 = vunpack.c.h.b16 %v1354
        %v1398 = vunpack.c.l.b16 %v1355
        %v1399 = vunpack.c.h.b16 %v1355
        %v1400 = vunpack.c.l.b16 %v1356
        %v1401 = vunpack.c.h.b16 %v1356
        %v1402 = vunpack.c.l.b16 %v1357
        %v1403 = vunpack.c.h.b16 %v1357
        %v1404 = vunpack.c.l.b16 %v1358
        %v1405 = vunpack.c.h.b16 %v1358
        %v1406 = vunpack.c.l.b16 %v1359
        %v1407 = vunpack.c.h.b16 %v1359
        %v1408 = vpack.c.b16 %v1378, %v1376
        %v1409 = vpack.c.b16 %v1379, %v1377
        %v1410 = vpack.c.b16 %v1382, %v1380
        %v1411 = vpack.c.b16 %v1383, %v1381
        %v1412 = vpack.c.b16 %v1386, %v1384
        %v1413 = vpack.c.b16 %v1387, %v1385
        %v1414 = vpack.c.b16 %v1390, %v1388
        %v1415 = vpack.c.b16 %v1391, %v1389
        %v1416 = vpack.c.b16 %v1394, %v1392
        %v1417 = vpack.c.b16 %v1395, %v1393
        %v1418 = vpack.c.b16 %v1398, %v1396
        %v1419 = vpack.c.b16 %v1399, %v1397
        %v1420 = vpack.c.b16 %v1402, %v1400
        %v1421 = vpack.c.b16 %v1403, %v1401
        %v1422 = vpack.c.b16 %v1406, %v1404
        %v1423 = vpack.c.b16 %v1407, %v1405
        %1440 = vmatprep.subr.bf16.mxu0 %v1423
        %1441 = vmatpush1.bf16.msra.mxu0 %v1422
        %1442 = vmatprep.subr.bf16.mxu0 %v1421
        %1443 = vmatpush1.bf16.msra.mxu0 %v1420
        %1444 = vmatprep.subr.bf16.mxu0 %v1419
        %1445 = vmatpush1.bf16.msra.mxu0 %v1418
        %1446 = vmatprep.subr.bf16.mxu0 %v1417
        %1447 = vmatpush1.bf16.msra.mxu0 %v1416
        %1448 = vmatprep.subr.bf16.mxu0 %v1415
        %1449 = vmatpush1.bf16.msra.mxu0 %v1414
        %1450 = vmatprep.subr.bf16.mxu0 %v1413
        %1451 = vmatpush1.bf16.msra.mxu0 %v1412
        %1452 = vmatprep.subr.bf16.mxu0 %v1411
        %1453 = vmatpush1.bf16.msra.mxu0 %v1410
        %1454 = vmatprep.subr.bf16.mxu0 %v1409
        %1455 = vmatpush1.bf16.msra.mxu0 %v1408
        %1456 = vmatprep.subr.bf16.mxu0 0
        %1457 = vmatpush2.bf16.msra.mxu0 0
        %1458 = vmatprep.subr.bf16.mxu0 0
        %1459 = vmatpush2.bf16.msra.mxu0 0
        %1460 = vmatprep.subr.bf16.mxu0 0
        %1461 = vmatpush2.bf16.msra.mxu0 0
        %1462 = vmatprep.subr.bf16.mxu0 0
        %1463 = vmatpush2.bf16.msra.mxu0 0
        %1464 = vmatprep.subr.bf16.mxu0 0
        %1465 = vmatpush2.bf16.msra.mxu0 0
        %1466 = vmatprep.subr.bf16.mxu0 0
        %1467 = vmatpush2.bf16.msra.mxu0 0
        %1468 = vmatprep.subr.bf16.mxu0 0
        %1469 = vmatpush2.bf16.msra.mxu0 0
        %1470 = vmatprep.subr.bf16.mxu0 0
        %1471 = vmatpush2.bf16.msra.mxu0 0
        %1472 = vmatprep.mubr.bf16.mxu0 0
        %1473 = vmatmul.mubr.bf16.gmra.mxu0 %v1328
        %v1474 = vpop.f32.mrf.mxu0
        %v1475 = vadd.f32 0.0, %v1474
        %v1476 = vpop.f32.mrf.mxu0
        %v1477 = vadd.f32 0.0, %v1476
        %v1478 = vpop.f32.mrf.mxu0
        %v1479 = vadd.f32 0.0, %v1478
        %v1480 = vpop.f32.mrf.mxu0
        %v1481 = vadd.f32 0.0, %v1480
        %1482 = vmatprep.mubr.bf16.mxu0 0
        %1483 = vmatmul.mubr.bf16.gmra.mxu0 %v1329
        %v1484 = vpop.f32.mrf.mxu0
        %v1485 = vadd.f32 0.0, %v1484
        %v1486 = vpop.f32.mrf.mxu0
        %v1487 = vadd.f32 0.0, %v1486
        %v1488 = vpop.f32.mrf.mxu0
        %v1489 = vadd.f32 0.0, %v1488
        %v1490 = vpop.f32.mrf.mxu0
        %v1491 = vadd.f32 0.0, %v1490
        %1492 = vmatprep.mubr.bf16.mxu0 0
        %1493 = vmatmul.mubr.bf16.gmra.mxu0 %v1330
        %v1494 = vpop.f32.mrf.mxu0
        %v1495 = vadd.f32 0.0, %v1494
        %v1496 = vpop.f32.mrf.mxu0
        %v1497 = vadd.f32 0.0, %v1496
        %v1498 = vpop.f32.mrf.mxu0
        %v1499 = vadd.f32 0.0, %v1498
        %v1500 = vpop.f32.mrf.mxu0
        %v1501 = vadd.f32 0.0, %v1500
        %1502 = vmatprep.mubr.bf16.mxu0 0
        %1503 = vmatmul.mubr.bf16.gmra.mxu0 %v1331
        %v1504 = vpop.f32.mrf.mxu0
        %v1505 = vadd.f32 0.0, %v1504
        %v1506 = vpop.f32.mrf.mxu0
        %v1507 = vadd.f32 0.0, %v1506
        %v1508 = vpop.f32.mrf.mxu0
        %v1509 = vadd.f32 0.0, %v1508
        %v1510 = vpop.f32.mrf.mxu0
        %v1511 = vadd.f32 0.0, %v1510
        %1512 = vmatprep.mubr.bf16.mxu0 0
        %1513 = vmatmul.mubr.bf16.gmra.mxu0 %v1332
        %v1514 = vpop.f32.mrf.mxu0
        %v1515 = vadd.f32 0.0, %v1514
        %v1516 = vpop.f32.mrf.mxu0
        %v1517 = vadd.f32 0.0, %v1516
        %v1518 = vpop.f32.mrf.mxu0
        %v1519 = vadd.f32 0.0, %v1518
        %v1520 = vpop.f32.mrf.mxu0
        %v1521 = vadd.f32 0.0, %v1520
        %1522 = vmatprep.mubr.bf16.mxu0 0
        %1523 = vmatmul.mubr.bf16.gmra.mxu0 %v1333
        %v1524 = vpop.f32.mrf.mxu0
        %v1525 = vadd.f32 0.0, %v1524
        %v1526 = vpop.f32.mrf.mxu0
        %v1527 = vadd.f32 0.0, %v1526
        %v1528 = vpop.f32.mrf.mxu0
        %v1529 = vadd.f32 0.0, %v1528
        %v1530 = vpop.f32.mrf.mxu0
        %v1531 = vadd.f32 0.0, %v1530
        %1532 = vmatprep.mubr.bf16.mxu0 0
        %1533 = vmatmul.mubr.bf16.gmra.mxu0 %v1334
        %v1534 = vpop.f32.mrf.mxu0
        %v1535 = vadd.f32 0.0, %v1534
        %v1536 = vpop.f32.mrf.mxu0
        %v1537 = vadd.f32 0.0, %v1536
        %v1538 = vpop.f32.mrf.mxu0
        %v1539 = vadd.f32 0.0, %v1538
        %v1540 = vpop.f32.mrf.mxu0
        %v1541 = vadd.f32 0.0, %v1540
        %1542 = vmatprep.mubr.bf16.mxu0 0
        %1543 = vmatmul.mubr.bf16.gmra.mxu0 %v1335
        %v1544 = vpop.f32.mrf.mxu0
        %v1545 = vadd.f32 0.0, %v1544
        %v1546 = vpop.f32.mrf.mxu0
        %v1547 = vadd.f32 0.0, %v1546
        %v1548 = vpop.f32.mrf.mxu0
        %v1549 = vadd.f32 0.0, %v1548
        %v1550 = vpop.f32.mrf.mxu0
        %v1551 = vadd.f32 0.0, %v1550
        %1552 = vmatprep.mubr.bf16.mxu0 0
        %1553 = vmatmul.mubr.bf16.gmra.mxu0 %v1336
        %v1554 = vpop.f32.mrf.mxu0
        %v1555 = vadd.f32 0.0, %v1554
        %v1556 = vpop.f32.mrf.mxu0
        %v1557 = vadd.f32 0.0, %v1556
        %v1558 = vpop.f32.mrf.mxu0
        %v1559 = vadd.f32 0.0, %v1558
        %v1560 = vpop.f32.mrf.mxu0
        %v1561 = vadd.f32 0.0, %v1560
        %1562 = vmatprep.mubr.bf16.mxu0 0
        %1563 = vmatmul.mubr.bf16.gmra.mxu0 %v1337
        %v1564 = vpop.f32.mrf.mxu0
        %v1565 = vadd.f32 0.0, %v1564
        %v1566 = vpop.f32.mrf.mxu0
        %v1567 = vadd.f32 0.0, %v1566
        %v1568 = vpop.f32.mrf.mxu0
        %v1569 = vadd.f32 0.0, %v1568
        %v1570 = vpop.f32.mrf.mxu0
        %v1571 = vadd.f32 0.0, %v1570
        %1572 = vmatprep.mubr.bf16.mxu0 0
        %1573 = vmatmul.mubr.bf16.gmra.mxu0 %v1338
        %v1574 = vpop.f32.mrf.mxu0
        %v1575 = vadd.f32 0.0, %v1574
        %v1576 = vpop.f32.mrf.mxu0
        %v1577 = vadd.f32 0.0, %v1576
        %v1578 = vpop.f32.mrf.mxu0
        %v1579 = vadd.f32 0.0, %v1578
        %v1580 = vpop.f32.mrf.mxu0
        %v1581 = vadd.f32 0.0, %v1580
        %1582 = vmatprep.mubr.bf16.mxu0 0
        %1583 = vmatmul.mubr.bf16.gmra.mxu0 %v1339
        %v1584 = vpop.f32.mrf.mxu0
        %v1585 = vadd.f32 0.0, %v1584
        %v1586 = vpop.f32.mrf.mxu0
        %v1587 = vadd.f32 0.0, %v1586
        %v1588 = vpop.f32.mrf.mxu0
        %v1589 = vadd.f32 0.0, %v1588
        %v1590 = vpop.f32.mrf.mxu0
        %v1591 = vadd.f32 0.0, %v1590
        %1592 = vmatprep.mubr.bf16.mxu0 0
        %1593 = vmatmul.mubr.bf16.gmra.mxu0 %v1340
        %v1594 = vpop.f32.mrf.mxu0
        %v1595 = vadd.f32 0.0, %v1594
        %v1596 = vpop.f32.mrf.mxu0
        %v1597 = vadd.f32 0.0, %v1596
        %v1598 = vpop.f32.mrf.mxu0
        %v1599 = vadd.f32 0.0, %v1598
        %v1600 = vpop.f32.mrf.mxu0
        %v1601 = vadd.f32 0.0, %v1600
        %1602 = vmatprep.mubr.bf16.mxu0 0
        %1603 = vmatmul.mubr.bf16.gmra.mxu0 %v1341
        %v1604 = vpop.f32.mrf.mxu0
        %v1605 = vadd.f32 0.0, %v1604
        %v1606 = vpop.f32.mrf.mxu0
        %v1607 = vadd.f32 0.0, %v1606
        %v1608 = vpop.f32.mrf.mxu0
        %v1609 = vadd.f32 0.0, %v1608
        %v1610 = vpop.f32.mrf.mxu0
        %v1611 = vadd.f32 0.0, %v1610
        %1612 = vmatprep.mubr.bf16.mxu0 0
        %1613 = vmatmul.mubr.bf16.gmra.mxu0 %v1342
        %v1614 = vpop.f32.mrf.mxu0
        %v1615 = vadd.f32 0.0, %v1614
        %v1616 = vpop.f32.mrf.mxu0
        %v1617 = vadd.f32 0.0, %v1616
        %v1618 = vpop.f32.mrf.mxu0
        %v1619 = vadd.f32 0.0, %v1618
        %v1620 = vpop.f32.mrf.mxu0
        %v1621 = vadd.f32 0.0, %v1620
        %1622 = vmatprep.mubr.bf16.mxu0 0
        %1623 = vmatmul.mubr.bf16.gmra.mxu0 %v1343
        %v1624 = vpop.f32.mrf.mxu0
        %v1625 = vadd.f32 0.0, %v1624
        %v1626 = vpop.f32.mrf.mxu0
        %v1627 = vadd.f32 0.0, %v1626
        %v1628 = vpop.f32.mrf.mxu0
        %v1629 = vadd.f32 0.0, %v1628
        %v1630 = vpop.f32.mrf.mxu0
        %v1631 = vadd.f32 0.0, %v1630
        %1632 = vdwg.mxu0
        %v1633 = vld [vmem:[#allocation13] sm:$0xff]
        %v1634 = vld [vmem:[#allocation13 + $0x8] sm:$0xff]
        %v1635 = vld [vmem:[#allocation13 + $0x10] sm:$0xff]
        %v1636 = vld [vmem:[#allocation13 + $0x18] sm:$0xff]
        %v1637 = vld [vmem:[#allocation13 + $0x20] sm:$0xff]
        %v1638 = vld [vmem:[#allocation13 + $0x28] sm:$0xff]
        %v1639 = vld [vmem:[#allocation13 + $0x30] sm:$0xff]
        %v1640 = vld [vmem:[#allocation13 + $0x38] sm:$0xff]
        %v1641 = vld [vmem:[#allocation13 + $0x40] sm:$0xff]
        %v1642 = vld [vmem:[#allocation13 + $0x48] sm:$0xff]
        %v1643 = vld [vmem:[#allocation13 + $0x50] sm:$0xff]
        %v1644 = vld [vmem:[#allocation13 + $0x58] sm:$0xff]
        %v1645 = vld [vmem:[#allocation13 + $0x60] sm:$0xff]
        %v1646 = vld [vmem:[#allocation13 + $0x68] sm:$0xff]
        %v1647 = vld [vmem:[#allocation13 + $0x70] sm:$0xff]
        %v1648 = vld [vmem:[#allocation13 + $0x78] sm:$0xff]
        %v1649 = vld [vmem:[#allocation14] sm:$0xff]
        %v1650 = vld [vmem:[#allocation14 + $0x8] sm:$0xff]
        %v1651 = vld [vmem:[#allocation14 + $0x10] sm:$0xff]
        %v1652 = vld [vmem:[#allocation14 + $0x18] sm:$0xff]
        %v1653 = vld [vmem:[#allocation14 + $0x20] sm:$0xff]
        %v1654 = vld [vmem:[#allocation14 + $0x28] sm:$0xff]
        %v1655 = vld [vmem:[#allocation14 + $0x30] sm:$0xff]
        %v1656 = vld [vmem:[#allocation14 + $0x38] sm:$0xff]
        %v1657 = vld [vmem:[#allocation14 + $0x40] sm:$0xff]
        %v1658 = vld [vmem:[#allocation14 + $0x48] sm:$0xff]
        %v1659 = vld [vmem:[#allocation14 + $0x50] sm:$0xff]
        %v1660 = vld [vmem:[#allocation14 + $0x58] sm:$0xff]
        %v1661 = vld [vmem:[#allocation14 + $0x60] sm:$0xff]
        %v1662 = vld [vmem:[#allocation14 + $0x68] sm:$0xff]
        %v1663 = vld [vmem:[#allocation14 + $0x70] sm:$0xff]
        %v1664 = vld [vmem:[#allocation14 + $0x78] sm:$0xff]
        %v1665 = vld [vmem:[#allocation16] sm:$0xff]
        %v1666 = vld [vmem:[#allocation16 + $0x8] sm:$0xff]
        %v1667 = vld [vmem:[#allocation16 + $0x10] sm:$0xff]
        %v1668 = vld [vmem:[#allocation16 + $0x18] sm:$0xff]
        %v1669 = vld [vmem:[#allocation16 + $0x20] sm:$0xff]
        %v1670 = vld [vmem:[#allocation16 + $0x28] sm:$0xff]
        %v1671 = vld [vmem:[#allocation16 + $0x30] sm:$0xff]
        %v1672 = vld [vmem:[#allocation16 + $0x38] sm:$0xff]
        %v1673 = vld [vmem:[#allocation16 + $0x40] sm:$0xff]
        %v1674 = vld [vmem:[#allocation16 + $0x48] sm:$0xff]
        %v1675 = vld [vmem:[#allocation16 + $0x50] sm:$0xff]
        %v1676 = vld [vmem:[#allocation16 + $0x58] sm:$0xff]
        %v1677 = vld [vmem:[#allocation16 + $0x60] sm:$0xff]
        %v1678 = vld [vmem:[#allocation16 + $0x68] sm:$0xff]
        %v1679 = vld [vmem:[#allocation16 + $0x70] sm:$0xff]
        %v1680 = vld [vmem:[#allocation16 + $0x78] sm:$0xff]
        %v1681 = vld [vmem:[%s8] sm:$0x1]
        %v1682 = vld [vmem:[%s8 + $0x1] sm:$0x1]
        %v1683 = vld [vmem:[%s10] sm:$0x1]
        %v1684 = vld [vmem:[%s10 + $0x1] sm:$0x1]
        %v1685 = vld [vmem:[%s11] sm:$0x1]
        %v1686 = vld [vmem:[%s11 + $0x1] sm:$0x1]
        %v1687 = vld [vmem:[%s12] sm:$0x1]
        %v1688 = vld [vmem:[%s12 + $0x1] sm:$0x1]
        %v1689 = vmul.f32 %v865, %v865
        %v1690 = vmul.f32 %v869, %v869
        %v1691 = vmul.f32 %v875, %v875
        %v1692 = vmul.f32 %v879, %v879
        %v1693 = vmul.f32 %v885, %v885
        %v1694 = vmul.f32 %v889, %v889
        %v1695 = vmul.f32 %v895, %v895
        %v1696 = vmul.f32 %v899, %v899
        %v1697 = vmul.f32 %v905, %v905
        %v1698 = vmul.f32 %v909, %v909
        %v1699 = vmul.f32 %v915, %v915
        %v1700 = vmul.f32 %v919, %v919
        %v1701 = vmul.f32 %v925, %v925
        %v1702 = vmul.f32 %v929, %v929
        %v1703 = vmul.f32 %v935, %v935
        %v1704 = vmul.f32 %v939, %v939
        %v1705 = vmul.f32 %v945, %v945
        %v1706 = vmul.f32 %v949, %v949
        %v1707 = vmul.f32 %v955, %v955
        %v1708 = vmul.f32 %v959, %v959
        %v1709 = vmul.f32 %v965, %v965
        %v1710 = vmul.f32 %v969, %v969
        %v1711 = vmul.f32 %v975, %v975
        %v1712 = vmul.f32 %v979, %v979
        %v1713 = vmul.f32 %v985, %v985
        %v1714 = vmul.f32 %v989, %v989
        %v1715 = vmul.f32 %v995, %v995
        %v1716 = vmul.f32 %v999, %v999
        %v1717 = vmul.f32 %v1005, %v1005
        %v1718 = vmul.f32 %v1009, %v1009
        %v1719 = vmul.f32 %v1015, %v1015
        %v1720 = vmul.f32 %v1019, %v1019
        %1721 = vadd.xlane.f32.xlu0 %v1689
        %v1722 = vpop.xlane.xlu0 %1721
        %1723 = vadd.xlane.f32.xlu0 %v1690
        %v1724 = vpop.xlane.xlu0 %1723
        %1725 = vadd.xlane.f32.xlu0 %v1691
        %v1726 = vpop.xlane.xlu0 %1725
        %1727 = vadd.xlane.f32.xlu0 %v1692
        %v1728 = vpop.xlane.xlu0 %1727
        %1729 = vadd.xlane.f32.xlu0 %v1693
        %v1730 = vpop.xlane.xlu0 %1729
        %1731 = vadd.xlane.f32.xlu0 %v1694
        %v1732 = vpop.xlane.xlu0 %1731
        %1733 = vadd.xlane.f32.xlu0 %v1695
        %v1734 = vpop.xlane.xlu0 %1733
        %1735 = vadd.xlane.f32.xlu0 %v1696
        %v1736 = vpop.xlane.xlu0 %1735
        %1737 = vadd.xlane.f32.xlu0 %v1697
        %v1738 = vpop.xlane.xlu0 %1737
        %1739 = vadd.xlane.f32.xlu0 %v1698
        %v1740 = vpop.xlane.xlu0 %1739
        %1741 = vadd.xlane.f32.xlu0 %v1699
        %v1742 = vpop.xlane.xlu0 %1741
        %1743 = vadd.xlane.f32.xlu0 %v1700
        %v1744 = vpop.xlane.xlu0 %1743
        %1745 = vadd.xlane.f32.xlu0 %v1701
        %v1746 = vpop.xlane.xlu0 %1745
        %1747 = vadd.xlane.f32.xlu0 %v1702
        %v1748 = vpop.xlane.xlu0 %1747
        %1749 = vadd.xlane.f32.xlu0 %v1703
        %v1750 = vpop.xlane.xlu0 %1749
        %1751 = vadd.xlane.f32.xlu0 %v1704
        %v1752 = vpop.xlane.xlu0 %1751
        %1753 = vadd.xlane.f32.xlu0 %v1705
        %v1754 = vpop.xlane.xlu0 %1753
        %1755 = vadd.xlane.f32.xlu0 %v1706
        %v1756 = vpop.xlane.xlu0 %1755
        %1757 = vadd.xlane.f32.xlu0 %v1707
        %v1758 = vpop.xlane.xlu0 %1757
        %1759 = vadd.xlane.f32.xlu0 %v1708
        %v1760 = vpop.xlane.xlu0 %1759
        %1761 = vadd.xlane.f32.xlu0 %v1709
        %v1762 = vpop.xlane.xlu0 %1761
        %1763 = vadd.xlane.f32.xlu0 %v1710
        %v1764 = vpop.xlane.xlu0 %1763
        %1765 = vadd.xlane.f32.xlu0 %v1711
        %v1766 = vpop.xlane.xlu0 %1765
        %1767 = vadd.xlane.f32.xlu0 %v1712
        %v1768 = vpop.xlane.xlu0 %1767
        %1769 = vadd.xlane.f32.xlu0 %v1713
        %v1770 = vpop.xlane.xlu0 %1769
        %1771 = vadd.xlane.f32.xlu0 %v1714
        %v1772 = vpop.xlane.xlu0 %1771
        %1773 = vadd.xlane.f32.xlu0 %v1715
        %v1774 = vpop.xlane.xlu0 %1773
        %1775 = vadd.xlane.f32.xlu0 %v1716
        %v1776 = vpop.xlane.xlu0 %1775
        %1777 = vadd.xlane.f32.xlu0 %v1717
        %v1778 = vpop.xlane.xlu0 %1777
        %1779 = vadd.xlane.f32.xlu0 %v1718
        %v1780 = vpop.xlane.xlu0 %1779
        %1781 = vadd.xlane.f32.xlu0 %v1719
        %v1782 = vpop.xlane.xlu0 %1781
        %1783 = vadd.xlane.f32.xlu0 %v1720
        %v1784 = vpop.xlane.xlu0 %1783
        %v1785 = vmax.f32 %v1722, 1e-24
        %v1786 = vmax.f32 %v1724, 1e-24
        %v1787 = vmax.f32 %v1726, 1e-24
        %v1788 = vmax.f32 %v1728, 1e-24
        %v1789 = vmax.f32 %v1730, 1e-24
        %v1790 = vmax.f32 %v1732, 1e-24
        %v1791 = vmax.f32 %v1734, 1e-24
        %v1792 = vmax.f32 %v1736, 1e-24
        %v1793 = vmax.f32 %v1738, 1e-24
        %v1794 = vmax.f32 %v1740, 1e-24
        %v1795 = vmax.f32 %v1742, 1e-24
        %v1796 = vmax.f32 %v1744, 1e-24
        %v1797 = vmax.f32 %v1746, 1e-24
        %v1798 = vmax.f32 %v1748, 1e-24
        %v1799 = vmax.f32 %v1750, 1e-24
        %v1800 = vmax.f32 %v1752, 1e-24
        %v1801 = vmax.f32 %v1754, 1e-24
        %v1802 = vmax.f32 %v1756, 1e-24
        %v1803 = vmax.f32 %v1758, 1e-24
        %v1804 = vmax.f32 %v1760, 1e-24
        %v1805 = vmax.f32 %v1762, 1e-24
        %v1806 = vmax.f32 %v1764, 1e-24
        %v1807 = vmax.f32 %v1766, 1e-24
        %v1808 = vmax.f32 %v1768, 1e-24
        %v1809 = vmax.f32 %v1770, 1e-24
        %v1810 = vmax.f32 %v1772, 1e-24
        %v1811 = vmax.f32 %v1774, 1e-24
        %v1812 = vmax.f32 %v1776, 1e-24
        %v1813 = vmax.f32 %v1778, 1e-24
        %v1814 = vmax.f32 %v1780, 1e-24
        %v1815 = vmax.f32 %v1782, 1e-24
        %v1816 = vmax.f32 %v1784, 1e-24
        %v1817 = vrsqrt.pop %v1785
        %v1818 = vrsqrt.pop %v1786
        %v1819 = vrsqrt.pop %v1787
        %v1820 = vrsqrt.pop %v1788
        %v1821 = vrsqrt.pop %v1789
        %v1822 = vrsqrt.pop %v1790
        %v1823 = vrsqrt.pop %v1791
        %v1824 = vrsqrt.pop %v1792
        %v1825 = vrsqrt.pop %v1793
        %v1826 = vrsqrt.pop %v1794
        %v1827 = vrsqrt.pop %v1795
        %v1828 = vrsqrt.pop %v1796
        %v1829 = vrsqrt.pop %v1797
        %v1830 = vrsqrt.pop %v1798
        %v1831 = vrsqrt.pop %v1799
        %v1832 = vrsqrt.pop %v1800
        %v1833 = vrsqrt.pop %v1801
        %v1834 = vrsqrt.pop %v1802
        %v1835 = vrsqrt.pop %v1803
        %v1836 = vrsqrt.pop %v1804
        %v1837 = vrsqrt.pop %v1805
        %v1838 = vrsqrt.pop %v1806
        %v1839 = vrsqrt.pop %v1807
        %v1840 = vrsqrt.pop %v1808
        %v1841 = vrsqrt.pop %v1809
        %v1842 = vrsqrt.pop %v1810
        %v1843 = vrsqrt.pop %v1811
        %v1844 = vrsqrt.pop %v1812
        %v1845 = vrsqrt.pop %v1813
        %v1846 = vrsqrt.pop %v1814
        %v1847 = vrsqrt.pop %v1815
        %v1848 = vrsqrt.pop %v1816
        %v1849 = vmul.f32 %v865, %v1817
        %v1850 = vmul.f32 %v869, %v1818
        %v1851 = vmul.f32 %v875, %v1819
        %v1852 = vmul.f32 %v879, %v1820
        %v1853 = vmul.f32 %v885, %v1821
        %v1854 = vmul.f32 %v889, %v1822
        %v1855 = vmul.f32 %v895, %v1823
        %v1856 = vmul.f32 %v899, %v1824
        %v1857 = vmul.f32 %v905, %v1825
        %v1858 = vmul.f32 %v909, %v1826
        %v1859 = vmul.f32 %v915, %v1827
        %v1860 = vmul.f32 %v919, %v1828
        %v1861 = vmul.f32 %v925, %v1829
        %v1862 = vmul.f32 %v929, %v1830
        %v1863 = vmul.f32 %v935, %v1831
        %v1864 = vmul.f32 %v939, %v1832
        %v1865 = vmul.f32 %v945, %v1833
        %v1866 = vmul.f32 %v949, %v1834
        %v1867 = vmul.f32 %v955, %v1835
        %v1868 = vmul.f32 %v959, %v1836
        %v1869 = vmul.f32 %v965, %v1837
        %v1870 = vmul.f32 %v969, %v1838
        %v1871 = vmul.f32 %v975, %v1839
        %v1872 = vmul.f32 %v979, %v1840
        %v1873 = vmul.f32 %v985, %v1841
        %v1874 = vmul.f32 %v989, %v1842
        %v1875 = vmul.f32 %v995, %v1843
        %v1876 = vmul.f32 %v999, %v1844
        %v1877 = vmul.f32 %v1005, %v1845
        %v1878 = vmul.f32 %v1009, %v1846
        %v1879 = vmul.f32 %v1015, %v1847
        %v1880 = vmul.f32 %v1019, %v1848
        %v1881 = vmul.f32 %v1170, %v1170
        %v1882 = vmul.f32 %v1174, %v1174
        %v1883 = vmul.f32 %v1180, %v1180
        %v1884 = vmul.f32 %v1184, %v1184
        %v1885 = vmul.f32 %v1190, %v1190
        %v1886 = vmul.f32 %v1194, %v1194
        %v1887 = vmul.f32 %v1200, %v1200
        %v1888 = vmul.f32 %v1204, %v1204
        %v1889 = vmul.f32 %v1210, %v1210
        %v1890 = vmul.f32 %v1214, %v1214
        %v1891 = vmul.f32 %v1220, %v1220
        %v1892 = vmul.f32 %v1224, %v1224
        %v1893 = vmul.f32 %v1230, %v1230
        %v1894 = vmul.f32 %v1234, %v1234
        %v1895 = vmul.f32 %v1240, %v1240
        %v1896 = vmul.f32 %v1244, %v1244
        %v1897 = vmul.f32 %v1250, %v1250
        %v1898 = vmul.f32 %v1254, %v1254
        %v1899 = vmul.f32 %v1260, %v1260
        %v1900 = vmul.f32 %v1264, %v1264
        %v1901 = vmul.f32 %v1270, %v1270
        %v1902 = vmul.f32 %v1274, %v1274
        %v1903 = vmul.f32 %v1280, %v1280
        %v1904 = vmul.f32 %v1284, %v1284
        %v1905 = vmul.f32 %v1290, %v1290
        %v1906 = vmul.f32 %v1294, %v1294
        %v1907 = vmul.f32 %v1300, %v1300
        %v1908 = vmul.f32 %v1304, %v1304
        %v1909 = vmul.f32 %v1310, %v1310
        %v1910 = vmul.f32 %v1314, %v1314
        %v1911 = vmul.f32 %v1320, %v1320
        %v1912 = vmul.f32 %v1324, %v1324
        %1913 = vadd.xlane.f32.xlu0 %v1881
        %v1914 = vpop.xlane.xlu0 %1913
        %1915 = vadd.xlane.f32.xlu0 %v1882
        %v1916 = vpop.xlane.xlu0 %1915
        %1917 = vadd.xlane.f32.xlu0 %v1883
        %v1918 = vpop.xlane.xlu0 %1917
        %1919 = vadd.xlane.f32.xlu0 %v1884
        %v1920 = vpop.xlane.xlu0 %1919
        %1921 = vadd.xlane.f32.xlu0 %v1885
        %v1922 = vpop.xlane.xlu0 %1921
        %1923 = vadd.xlane.f32.xlu0 %v1886
        %v1924 = vpop.xlane.xlu0 %1923
        %1925 = vadd.xlane.f32.xlu0 %v1887
        %v1926 = vpop.xlane.xlu0 %1925
        %1927 = vadd.xlane.f32.xlu0 %v1888
        %v1928 = vpop.xlane.xlu0 %1927
        %1929 = vadd.xlane.f32.xlu0 %v1889
        %v1930 = vpop.xlane.xlu0 %1929
        %1931 = vadd.xlane.f32.xlu0 %v1890
        %v1932 = vpop.xlane.xlu0 %1931
        %1933 = vadd.xlane.f32.xlu0 %v1891
        %v1934 = vpop.xlane.xlu0 %1933
        %1935 = vadd.xlane.f32.xlu0 %v1892
        %v1936 = vpop.xlane.xlu0 %1935
        %1937 = vadd.xlane.f32.xlu0 %v1893
        %v1938 = vpop.xlane.xlu0 %1937
        %1939 = vadd.xlane.f32.xlu0 %v1894
        %v1940 = vpop.xlane.xlu0 %1939
        %1941 = vadd.xlane.f32.xlu0 %v1895
        %v1942 = vpop.xlane.xlu0 %1941
        %1943 = vadd.xlane.f32.xlu0 %v1896
        %v1944 = vpop.xlane.xlu0 %1943
        %1945 = vadd.xlane.f32.xlu0 %v1897
        %v1946 = vpop.xlane.xlu0 %1945
        %1947 = vadd.xlane.f32.xlu0 %v1898
        %v1948 = vpop.xlane.xlu0 %1947
        %1949 = vadd.xlane.f32.xlu0 %v1899
        %v1950 = vpop.xlane.xlu0 %1949
        %1951 = vadd.xlane.f32.xlu0 %v1900
        %v1952 = vpop.xlane.xlu0 %1951
        %1953 = vadd.xlane.f32.xlu0 %v1901
        %v1954 = vpop.xlane.xlu0 %1953
        %1955 = vadd.xlane.f32.xlu0 %v1902
        %v1956 = vpop.xlane.xlu0 %1955
        %1957 = vadd.xlane.f32.xlu0 %v1903
        %v1958 = vpop.xlane.xlu0 %1957
        %1959 = vadd.xlane.f32.xlu0 %v1904
        %v1960 = vpop.xlane.xlu0 %1959
        %1961 = vadd.xlane.f32.xlu0 %v1905
        %v1962 = vpop.xlane.xlu0 %1961
        %1963 = vadd.xlane.f32.xlu0 %v1906
        %v1964 = vpop.xlane.xlu0 %1963
        %1965 = vadd.xlane.f32.xlu0 %v1907
        %v1966 = vpop.xlane.xlu0 %1965
        %1967 = vadd.xlane.f32.xlu0 %v1908
        %v1968 = vpop.xlane.xlu0 %1967
        %1969 = vadd.xlane.f32.xlu0 %v1909
        %v1970 = vpop.xlane.xlu0 %1969
        %1971 = vadd.xlane.f32.xlu0 %v1910
        %v1972 = vpop.xlane.xlu0 %1971
        %1973 = vadd.xlane.f32.xlu0 %v1911
        %v1974 = vpop.xlane.xlu0 %1973
        %1975 = vadd.xlane.f32.xlu0 %v1912
        %v1976 = vpop.xlane.xlu0 %1975
        %v1977 = vmax.f32 %v1914, 1e-24
        %v1978 = vmax.f32 %v1916, 1e-24
        %v1979 = vmax.f32 %v1918, 1e-24
        %v1980 = vmax.f32 %v1920, 1e-24
        %v1981 = vmax.f32 %v1922, 1e-24
        %v1982 = vmax.f32 %v1924, 1e-24
        %v1983 = vmax.f32 %v1926, 1e-24
        %v1984 = vmax.f32 %v1928, 1e-24
        %v1985 = vmax.f32 %v1930, 1e-24
        %v1986 = vmax.f32 %v1932, 1e-24
        %v1987 = vmax.f32 %v1934, 1e-24
        %v1988 = vmax.f32 %v1936, 1e-24
        %v1989 = vmax.f32 %v1938, 1e-24
        %v1990 = vmax.f32 %v1940, 1e-24
        %v1991 = vmax.f32 %v1942, 1e-24
        %v1992 = vmax.f32 %v1944, 1e-24
        %v1993 = vmax.f32 %v1946, 1e-24
        %v1994 = vmax.f32 %v1948, 1e-24
        %v1995 = vmax.f32 %v1950, 1e-24
        %v1996 = vmax.f32 %v1952, 1e-24
        %v1997 = vmax.f32 %v1954, 1e-24
        %v1998 = vmax.f32 %v1956, 1e-24
        %v1999 = vmax.f32 %v1958, 1e-24
        %v2000 = vmax.f32 %v1960, 1e-24
        %v2001 = vmax.f32 %v1962, 1e-24
        %v2002 = vmax.f32 %v1964, 1e-24
        %v2003 = vmax.f32 %v1966, 1e-24
        %v2004 = vmax.f32 %v1968, 1e-24
        %v2005 = vmax.f32 %v1970, 1e-24
        %v2006 = vmax.f32 %v1972, 1e-24
        %v2007 = vmax.f32 %v1974, 1e-24
        %v2008 = vmax.f32 %v1976, 1e-24
        %v2009 = vrsqrt.pop %v1977
        %v2010 = vrsqrt.pop %v1978
        %v2011 = vrsqrt.pop %v1979
        %v2012 = vrsqrt.pop %v1980
        %v2013 = vrsqrt.pop %v1981
        %v2014 = vrsqrt.pop %v1982
        %v2015 = vrsqrt.pop %v1983
        %v2016 = vrsqrt.pop %v1984
        %v2017 = vrsqrt.pop %v1985
        %v2018 = vrsqrt.pop %v1986
        %v2019 = vrsqrt.pop %v1987
        %v2020 = vrsqrt.pop %v1988
        %v2021 = vrsqrt.pop %v1989
        %v2022 = vrsqrt.pop %v1990
        %v2023 = vrsqrt.pop %v1991
        %v2024 = vrsqrt.pop %v1992
        %v2025 = vrsqrt.pop %v1993
        %v2026 = vrsqrt.pop %v1994
        %v2027 = vrsqrt.pop %v1995
        %v2028 = vrsqrt.pop %v1996
        %v2029 = vrsqrt.pop %v1997
        %v2030 = vrsqrt.pop %v1998
        %v2031 = vrsqrt.pop %v1999
        %v2032 = vrsqrt.pop %v2000
        %v2033 = vrsqrt.pop %v2001
        %v2034 = vrsqrt.pop %v2002
        %v2035 = vrsqrt.pop %v2003
        %v2036 = vrsqrt.pop %v2004
        %v2037 = vrsqrt.pop %v2005
        %v2038 = vrsqrt.pop %v2006
        %v2039 = vrsqrt.pop %v2007
        %v2040 = vrsqrt.pop %v2008
        %v2041 = vmul.f32 %v1170, %v2009
        %v2042 = vmul.f32 %v1174, %v2010
        %v2043 = vmul.f32 %v1180, %v2011
        %v2044 = vmul.f32 %v1184, %v2012
        %v2045 = vmul.f32 %v1190, %v2013
        %v2046 = vmul.f32 %v1194, %v2014
        %v2047 = vmul.f32 %v1200, %v2015
        %v2048 = vmul.f32 %v1204, %v2016
        %v2049 = vmul.f32 %v1210, %v2017
        %v2050 = vmul.f32 %v1214, %v2018
        %v2051 = vmul.f32 %v1220, %v2019
        %v2052 = vmul.f32 %v1224, %v2020
        %v2053 = vmul.f32 %v1230, %v2021
        %v2054 = vmul.f32 %v1234, %v2022
        %v2055 = vmul.f32 %v1240, %v2023
        %v2056 = vmul.f32 %v1244, %v2024
        %v2057 = vmul.f32 %v1250, %v2025
        %v2058 = vmul.f32 %v1254, %v2026
        %v2059 = vmul.f32 %v1260, %v2027
        %v2060 = vmul.f32 %v1264, %v2028
        %v2061 = vmul.f32 %v1270, %v2029
        %v2062 = vmul.f32 %v1274, %v2030
        %v2063 = vmul.f32 %v1280, %v2031
        %v2064 = vmul.f32 %v1284, %v2032
        %v2065 = vmul.f32 %v1290, %v2033
        %v2066 = vmul.f32 %v1294, %v2034
        %v2067 = vmul.f32 %v1300, %v2035
        %v2068 = vmul.f32 %v1304, %v2036
        %v2069 = vmul.f32 %v1310, %v2037
        %v2070 = vmul.f32 %v1314, %v2038
        %v2071 = vmul.f32 %v1320, %v2039
        %v2072 = vmul.f32 %v1324, %v2040
        %v2073 = vpack.c.bf16 %v1850, %v1849
        %v2074 = vpack.c.bf16 %v1852, %v1851
        %v2075 = vpack.c.bf16 %v1854, %v1853
        %v2076 = vpack.c.bf16 %v1856, %v1855
        %v2077 = vpack.c.bf16 %v1858, %v1857
        %v2078 = vpack.c.bf16 %v1860, %v1859
        %v2079 = vpack.c.bf16 %v1862, %v1861
        %v2080 = vpack.c.bf16 %v1864, %v1863
        %v2081 = vpack.c.bf16 %v1866, %v1865
        %v2082 = vpack.c.bf16 %v1868, %v1867
        %v2083 = vpack.c.bf16 %v1870, %v1869
        %v2084 = vpack.c.bf16 %v1872, %v1871
        %v2085 = vpack.c.bf16 %v1874, %v1873
        %v2086 = vpack.c.bf16 %v1876, %v1875
        %v2087 = vpack.c.bf16 %v1878, %v1877
        %v2088 = vpack.c.bf16 %v1880, %v1879
        %v2089 = vpack.c.bf16 %v2042, %v2041
        %v2090 = vpack.c.bf16 %v2044, %v2043
        %v2091 = vpack.c.bf16 %v2046, %v2045
        %v2092 = vpack.c.bf16 %v2048, %v2047
        %v2093 = vpack.c.bf16 %v2050, %v2049
        %v2094 = vpack.c.bf16 %v2052, %v2051
        %v2095 = vpack.c.bf16 %v2054, %v2053
        %v2096 = vpack.c.bf16 %v2056, %v2055
        %v2097 = vpack.c.bf16 %v2058, %v2057
        %v2098 = vpack.c.bf16 %v2060, %v2059
        %v2099 = vpack.c.bf16 %v2062, %v2061
        %v2100 = vpack.c.bf16 %v2064, %v2063
        %v2101 = vpack.c.bf16 %v2066, %v2065
        %v2102 = vpack.c.bf16 %v2068, %v2067
        %v2103 = vpack.c.bf16 %v2070, %v2069
        %v2104 = vpack.c.bf16 %v2072, %v2071
        %2105 = vmatprep.subr.bf16.mxu0 0
        %2106 = vmatpush1.bf16.xpose.msra.mxu0 %v2096
        %2107 = vmatprep.subr.bf16.mxu0 0
        %2108 = vmatpush1.bf16.xpose.msra.mxu0 %v2095
        %2109 = vmatprep.subr.bf16.mxu0 0
        %2110 = vmatpush1.bf16.xpose.msra.mxu0 %v2094
        %2111 = vmatprep.subr.bf16.mxu0 0
        %2112 = vmatpush1.bf16.xpose.msra.mxu0 %v2093
        %2113 = vmatprep.subr.bf16.mxu0 0
        %2114 = vmatpush1.bf16.xpose.msra.mxu0 %v2092
        %2115 = vmatprep.subr.bf16.mxu0 0
        %2116 = vmatpush1.bf16.xpose.msra.mxu0 %v2091
        %2117 = vmatprep.subr.bf16.mxu0 0
        %2118 = vmatpush1.bf16.xpose.msra.mxu0 %v2090
        %2119 = vmatprep.subr.bf16.mxu0 0
        %2120 = vmatpush1.bf16.xpose.msra.mxu0 %v2089
        %2121 = vmatprep.subr.bf16.mxu0 0
        %2122 = vmatpush2.bf16.xpose.msra.mxu0 %v2104
        %2123 = vmatprep.subr.bf16.mxu0 0
        %2124 = vmatpush2.bf16.xpose.msra.mxu0 %v2103
        %2125 = vmatprep.subr.bf16.mxu0 0
        %2126 = vmatpush2.bf16.xpose.msra.mxu0 %v2102
        %2127 = vmatprep.subr.bf16.mxu0 0
        %2128 = vmatpush2.bf16.xpose.msra.mxu0 %v2101
        %2129 = vmatprep.subr.bf16.mxu0 0
        %2130 = vmatpush2.bf16.xpose.msra.mxu0 %v2100
        %2131 = vmatprep.subr.bf16.mxu0 0
        %2132 = vmatpush2.bf16.xpose.msra.mxu0 %v2099
        %2133 = vmatprep.subr.bf16.mxu0 0
        %2134 = vmatpush2.bf16.xpose.msra.mxu0 %v2098
        %2135 = vmatprep.subr.bf16.mxu0 0
        %2136 = vmatpush2.bf16.xpose.msra.mxu0 %v2097
        %2137 = vmatprep.mubr.bf16.mxu0 0
        %2138 = vmatmul.mubr.bf16.gmra.mxu0 %v2073
        %v2139 = vpop.f32.mrf.mxu0
        %v2140 = vadd.f32 0.0, %v2139
        %v2141 = vpop.f32.mrf.mxu0
        %v2142 = vadd.f32 0.0, %v2141
        %v2143 = vpop.f32.mrf.mxu0
        %v2144 = vadd.f32 0.0, %v2143
        %v2145 = vpop.f32.mrf.mxu0
        %v2146 = vadd.f32 0.0, %v2145
        %2147 = vmatprep.mubr.bf16.mxu0 0
        %2148 = vmatmul.mubr.bf16.gmra.mxu0 %v2074
        %v2149 = vpop.f32.mrf.mxu0
        %v2150 = vadd.f32 0.0, %v2149
        %v2151 = vpop.f32.mrf.mxu0
        %v2152 = vadd.f32 0.0, %v2151
        %v2153 = vpop.f32.mrf.mxu0
        %v2154 = vadd.f32 0.0, %v2153
        %v2155 = vpop.f32.mrf.mxu0
        %v2156 = vadd.f32 0.0, %v2155
        %2157 = vmatprep.mubr.bf16.mxu0 0
        %2158 = vmatmul.mubr.bf16.gmra.mxu0 %v2075
        %v2159 = vpop.f32.mrf.mxu0
        %v2160 = vadd.f32 0.0, %v2159
        %v2161 = vpop.f32.mrf.mxu0
        %v2162 = vadd.f32 0.0, %v2161
        %v2163 = vpop.f32.mrf.mxu0
        %v2164 = vadd.f32 0.0, %v2163
        %v2165 = vpop.f32.mrf.mxu0
        %v2166 = vadd.f32 0.0, %v2165
        %2167 = vmatprep.mubr.bf16.mxu0 0
        %2168 = vmatmul.mubr.bf16.gmra.mxu0 %v2076
        %v2169 = vpop.f32.mrf.mxu0
        %v2170 = vadd.f32 0.0, %v2169
        %v2171 = vpop.f32.mrf.mxu0
        %v2172 = vadd.f32 0.0, %v2171
        %v2173 = vpop.f32.mrf.mxu0
        %v2174 = vadd.f32 0.0, %v2173
        %v2175 = vpop.f32.mrf.mxu0
        %v2176 = vadd.f32 0.0, %v2175
        %2177 = vmatprep.mubr.bf16.mxu0 0
        %2178 = vmatmul.mubr.bf16.gmra.mxu0 %v2077
        %v2179 = vpop.f32.mrf.mxu0
        %v2180 = vadd.f32 0.0, %v2179
        %v2181 = vpop.f32.mrf.mxu0
        %v2182 = vadd.f32 0.0, %v2181
        %v2183 = vpop.f32.mrf.mxu0
        %v2184 = vadd.f32 0.0, %v2183
        %v2185 = vpop.f32.mrf.mxu0
        %v2186 = vadd.f32 0.0, %v2185
        %2187 = vmatprep.mubr.bf16.mxu0 0
        %2188 = vmatmul.mubr.bf16.gmra.mxu0 %v2078
        %v2189 = vpop.f32.mrf.mxu0
        %v2190 = vadd.f32 0.0, %v2189
        %v2191 = vpop.f32.mrf.mxu0
        %v2192 = vadd.f32 0.0, %v2191
        %v2193 = vpop.f32.mrf.mxu0
        %v2194 = vadd.f32 0.0, %v2193
        %v2195 = vpop.f32.mrf.mxu0
        %v2196 = vadd.f32 0.0, %v2195
        %2197 = vmatprep.mubr.bf16.mxu0 0
        %2198 = vmatmul.mubr.bf16.gmra.mxu0 %v2079
        %v2199 = vpop.f32.mrf.mxu0
        %v2200 = vadd.f32 0.0, %v2199
        %v2201 = vpop.f32.mrf.mxu0
        %v2202 = vadd.f32 0.0, %v2201
        %v2203 = vpop.f32.mrf.mxu0
        %v2204 = vadd.f32 0.0, %v2203
        %v2205 = vpop.f32.mrf.mxu0
        %v2206 = vadd.f32 0.0, %v2205
        %2207 = vmatprep.mubr.bf16.mxu0 0
        %2208 = vmatmul.mubr.bf16.gmra.mxu0 %v2080
        %v2209 = vpop.f32.mrf.mxu0
        %v2210 = vadd.f32 0.0, %v2209
        %v2211 = vpop.f32.mrf.mxu0
        %v2212 = vadd.f32 0.0, %v2211
        %v2213 = vpop.f32.mrf.mxu0
        %v2214 = vadd.f32 0.0, %v2213
        %v2215 = vpop.f32.mrf.mxu0
        %v2216 = vadd.f32 0.0, %v2215
        %2217 = vmatprep.mubr.bf16.mxu0 0
        %2218 = vmatmul.mubr.bf16.gmra.mxu0 %v2081
        %v2219 = vpop.f32.mrf.mxu0
        %v2220 = vadd.f32 0.0, %v2219
        %v2221 = vpop.f32.mrf.mxu0
        %v2222 = vadd.f32 0.0, %v2221
        %v2223 = vpop.f32.mrf.mxu0
        %v2224 = vadd.f32 0.0, %v2223
        %v2225 = vpop.f32.mrf.mxu0
        %v2226 = vadd.f32 0.0, %v2225
        %2227 = vmatprep.mubr.bf16.mxu0 0
        %2228 = vmatmul.mubr.bf16.gmra.mxu0 %v2082
        %v2229 = vpop.f32.mrf.mxu0
        %v2230 = vadd.f32 0.0, %v2229
        %v2231 = vpop.f32.mrf.mxu0
        %v2232 = vadd.f32 0.0, %v2231
        %v2233 = vpop.f32.mrf.mxu0
        %v2234 = vadd.f32 0.0, %v2233
        %v2235 = vpop.f32.mrf.mxu0
        %v2236 = vadd.f32 0.0, %v2235
        %2237 = vmatprep.mubr.bf16.mxu0 0
        %2238 = vmatmul.mubr.bf16.gmra.mxu0 %v2083
        %v2239 = vpop.f32.mrf.mxu0
        %v2240 = vadd.f32 0.0, %v2239
        %v2241 = vpop.f32.mrf.mxu0
        %v2242 = vadd.f32 0.0, %v2241
        %v2243 = vpop.f32.mrf.mxu0
        %v2244 = vadd.f32 0.0, %v2243
        %v2245 = vpop.f32.mrf.mxu0
        %v2246 = vadd.f32 0.0, %v2245
        %2247 = vmatprep.mubr.bf16.mxu0 0
        %2248 = vmatmul.mubr.bf16.gmra.mxu0 %v2084
        %v2249 = vpop.f32.mrf.mxu0
        %v2250 = vadd.f32 0.0, %v2249
        %v2251 = vpop.f32.mrf.mxu0
        %v2252 = vadd.f32 0.0, %v2251
        %v2253 = vpop.f32.mrf.mxu0
        %v2254 = vadd.f32 0.0, %v2253
        %v2255 = vpop.f32.mrf.mxu0
        %v2256 = vadd.f32 0.0, %v2255
        %2257 = vmatprep.mubr.bf16.mxu0 0
        %2258 = vmatmul.mubr.bf16.gmra.mxu0 %v2085
        %v2259 = vpop.f32.mrf.mxu0
        %v2260 = vadd.f32 0.0, %v2259
        %v2261 = vpop.f32.mrf.mxu0
        %v2262 = vadd.f32 0.0, %v2261
        %v2263 = vpop.f32.mrf.mxu0
        %v2264 = vadd.f32 0.0, %v2263
        %v2265 = vpop.f32.mrf.mxu0
        %v2266 = vadd.f32 0.0, %v2265
        %2267 = vmatprep.mubr.bf16.mxu0 0
        %2268 = vmatmul.mubr.bf16.gmra.mxu0 %v2086
        %v2269 = vpop.f32.mrf.mxu0
        %v2270 = vadd.f32 0.0, %v2269
        %v2271 = vpop.f32.mrf.mxu0
        %v2272 = vadd.f32 0.0, %v2271
        %v2273 = vpop.f32.mrf.mxu0
        %v2274 = vadd.f32 0.0, %v2273
        %v2275 = vpop.f32.mrf.mxu0
        %v2276 = vadd.f32 0.0, %v2275
        %2277 = vmatprep.mubr.bf16.mxu0 0
        %2278 = vmatmul.mubr.bf16.gmra.mxu0 %v2087
        %v2279 = vpop.f32.mrf.mxu0
        %v2280 = vadd.f32 0.0, %v2279
        %v2281 = vpop.f32.mrf.mxu0
        %v2282 = vadd.f32 0.0, %v2281
        %v2283 = vpop.f32.mrf.mxu0
        %v2284 = vadd.f32 0.0, %v2283
        %v2285 = vpop.f32.mrf.mxu0
        %v2286 = vadd.f32 0.0, %v2285
        %2287 = vmatprep.mubr.bf16.mxu0 0
        %2288 = vmatmul.mubr.bf16.gmra.mxu0 %v2088
        %v2289 = vpop.f32.mrf.mxu0
        %v2290 = vadd.f32 0.0, %v2289
        %v2291 = vpop.f32.mrf.mxu0
        %v2292 = vadd.f32 0.0, %v2291
        %v2293 = vpop.f32.mrf.mxu0
        %v2294 = vadd.f32 0.0, %v2293
        %v2295 = vpop.f32.mrf.mxu0
        %v2296 = vadd.f32 0.0, %v2295
        %2297 = vdwg.mxu0
        %v2298 = vmax.f32 %v2140, %v2142
        %2299 = vmax.xlane.f32.xlu0 %v2298
        %v2300 = vpop.xlane.xlu0 %2299
        %v2301 = vmax.f32 %v2144, %v2146
        %2302 = vmax.xlane.f32.xlu0 %v2301
        %v2303 = vpop.xlane.xlu0 %2302
        %v2304 = vmax.f32 %v2150, %v2152
        %2305 = vmax.xlane.f32.xlu0 %v2304
        %v2306 = vpop.xlane.xlu0 %2305
        %v2307 = vmax.f32 %v2154, %v2156
        %2308 = vmax.xlane.f32.xlu0 %v2307
        %v2309 = vpop.xlane.xlu0 %2308
        %v2310 = vmax.f32 %v2160, %v2162
        %2311 = vmax.xlane.f32.xlu0 %v2310
        %v2312 = vpop.xlane.xlu0 %2311
        %v2313 = vmax.f32 %v2164, %v2166
        %2314 = vmax.xlane.f32.xlu0 %v2313
        %v2315 = vpop.xlane.xlu0 %2314
        %v2316 = vmax.f32 %v2170, %v2172
        %2317 = vmax.xlane.f32.xlu0 %v2316
        %v2318 = vpop.xlane.xlu0 %2317
        %v2319 = vmax.f32 %v2174, %v2176
        %2320 = vmax.xlane.f32.xlu0 %v2319
        %v2321 = vpop.xlane.xlu0 %2320
        %v2322 = vmax.f32 %v2180, %v2182
        %2323 = vmax.xlane.f32.xlu0 %v2322
        %v2324 = vpop.xlane.xlu0 %2323
        %v2325 = vmax.f32 %v2184, %v2186
        %2326 = vmax.xlane.f32.xlu0 %v2325
        %v2327 = vpop.xlane.xlu0 %2326
        %v2328 = vmax.f32 %v2190, %v2192
        %2329 = vmax.xlane.f32.xlu0 %v2328
        %v2330 = vpop.xlane.xlu0 %2329
        %v2331 = vmax.f32 %v2194, %v2196
        %2332 = vmax.xlane.f32.xlu0 %v2331
        %v2333 = vpop.xlane.xlu0 %2332
        %v2334 = vmax.f32 %v2200, %v2202
        %2335 = vmax.xlane.f32.xlu0 %v2334
        %v2336 = vpop.xlane.xlu0 %2335
        %v2337 = vmax.f32 %v2204, %v2206
        %2338 = vmax.xlane.f32.xlu0 %v2337
        %v2339 = vpop.xlane.xlu0 %2338
        %v2340 = vmax.f32 %v2210, %v2212
        %2341 = vmax.xlane.f32.xlu0 %v2340
        %v2342 = vpop.xlane.xlu0 %2341
        %v2343 = vmax.f32 %v2214, %v2216
        %2344 = vmax.xlane.f32.xlu0 %v2343
        %v2345 = vpop.xlane.xlu0 %2344
        %v2346 = vmax.f32 %v2220, %v2222
        %2347 = vmax.xlane.f32.xlu0 %v2346
        %v2348 = vpop.xlane.xlu0 %2347
        %v2349 = vmax.f32 %v2224, %v2226
        %2350 = vmax.xlane.f32.xlu0 %v2349
        %v2351 = vpop.xlane.xlu0 %2350
        %v2352 = vmax.f32 %v2230, %v2232
        %2353 = vmax.xlane.f32.xlu0 %v2352
        %v2354 = vpop.xlane.xlu0 %2353
        %v2355 = vmax.f32 %v2234, %v2236
        %2356 = vmax.xlane.f32.xlu0 %v2355
        %v2357 = vpop.xlane.xlu0 %2356
        %v2358 = vmax.f32 %v2240, %v2242
        %2359 = vmax.xlane.f32.xlu0 %v2358
        %v2360 = vpop.xlane.xlu0 %2359
        %v2361 = vmax.f32 %v2244, %v2246
        %2362 = vmax.xlane.f32.xlu0 %v2361
        %v2363 = vpop.xlane.xlu0 %2362
        %v2364 = vmax.f32 %v2250, %v2252
        %2365 = vmax.xlane.f32.xlu0 %v2364
        %v2366 = vpop.xlane.xlu0 %2365
        %v2367 = vmax.f32 %v2254, %v2256
        %2368 = vmax.xlane.f32.xlu0 %v2367
        %v2369 = vpop.xlane.xlu0 %2368
        %v2370 = vmax.f32 %v2260, %v2262
        %2371 = vmax.xlane.f32.xlu0 %v2370
        %v2372 = vpop.xlane.xlu0 %2371
        %v2373 = vmax.f32 %v2264, %v2266
        %2374 = vmax.xlane.f32.xlu0 %v2373
        %v2375 = vpop.xlane.xlu0 %2374
        %v2376 = vmax.f32 %v2270, %v2272
        %2377 = vmax.xlane.f32.xlu0 %v2376
        %v2378 = vpop.xlane.xlu0 %2377
        %v2379 = vmax.f32 %v2274, %v2276
        %2380 = vmax.xlane.f32.xlu0 %v2379
        %v2381 = vpop.xlane.xlu0 %2380
        %v2382 = vmax.f32 %v2280, %v2282
        %2383 = vmax.xlane.f32.xlu0 %v2382
        %v2384 = vpop.xlane.xlu0 %2383
        %v2385 = vmax.f32 %v2284, %v2286
        %2386 = vmax.xlane.f32.xlu0 %v2385
        %v2387 = vpop.xlane.xlu0 %2386
        %v2388 = vmax.f32 %v2290, %v2292
        %2389 = vmax.xlane.f32.xlu0 %v2388
        %v2390 = vpop.xlane.xlu0 %2389
        %v2391 = vmax.f32 %v2294, %v2296
        %2392 = vmax.xlane.f32.xlu0 %v2391
        %v2393 = vpop.xlane.xlu0 %2392
        %v2394 = vsub.f32 %v2140, %v2300
        %v2395 = vsub.f32 %v2142, %v2300
        %v2396 = vsub.f32 %v2144, %v2303
        %v2397 = vsub.f32 %v2146, %v2303
        %v2398 = vsub.f32 %v2150, %v2306
        %v2399 = vsub.f32 %v2152, %v2306
        %v2400 = vsub.f32 %v2154, %v2309
        %v2401 = vsub.f32 %v2156, %v2309
        %v2402 = vsub.f32 %v2160, %v2312
        %v2403 = vsub.f32 %v2162, %v2312
        %v2404 = vsub.f32 %v2164, %v2315
        %v2405 = vsub.f32 %v2166, %v2315
        %v2406 = vsub.f32 %v2170, %v2318
        %v2407 = vsub.f32 %v2172, %v2318
        %v2408 = vsub.f32 %v2174, %v2321
        %v2409 = vsub.f32 %v2176, %v2321
        %v2410 = vsub.f32 %v2180, %v2324
        %v2411 = vsub.f32 %v2182, %v2324
        %v2412 = vsub.f32 %v2184, %v2327
        %v2413 = vsub.f32 %v2186, %v2327
        %v2414 = vsub.f32 %v2190, %v2330
        %v2415 = vsub.f32 %v2192, %v2330
        %v2416 = vsub.f32 %v2194, %v2333
        %v2417 = vsub.f32 %v2196, %v2333
        %v2418 = vsub.f32 %v2200, %v2336
        %v2419 = vsub.f32 %v2202, %v2336
        %v2420 = vsub.f32 %v2204, %v2339
        %v2421 = vsub.f32 %v2206, %v2339
        %v2422 = vsub.f32 %v2210, %v2342
        %v2423 = vsub.f32 %v2212, %v2342
        %v2424 = vsub.f32 %v2214, %v2345
        %v2425 = vsub.f32 %v2216, %v2345
        %v2426 = vsub.f32 %v2220, %v2348
        %v2427 = vsub.f32 %v2222, %v2348
        %v2428 = vsub.f32 %v2224, %v2351
        %v2429 = vsub.f32 %v2226, %v2351
        %v2430 = vsub.f32 %v2230, %v2354
        %v2431 = vsub.f32 %v2232, %v2354
        %v2432 = vsub.f32 %v2234, %v2357
        %v2433 = vsub.f32 %v2236, %v2357
        %v2434 = vsub.f32 %v2240, %v2360
        %v2435 = vsub.f32 %v2242, %v2360
        %v2436 = vsub.f32 %v2244, %v2363
        %v2437 = vsub.f32 %v2246, %v2363
        %v2438 = vsub.f32 %v2250, %v2366
        %v2439 = vsub.f32 %v2252, %v2366
        %v2440 = vsub.f32 %v2254, %v2369
        %v2441 = vsub.f32 %v2256, %v2369
        %v2442 = vsub.f32 %v2260, %v2372
        %v2443 = vsub.f32 %v2262, %v2372
        %v2444 = vsub.f32 %v2264, %v2375
        %v2445 = vsub.f32 %v2266, %v2375
        %v2446 = vsub.f32 %v2270, %v2378
        %v2447 = vsub.f32 %v2272, %v2378
        %v2448 = vsub.f32 %v2274, %v2381
        %v2449 = vsub.f32 %v2276, %v2381
        %v2450 = vsub.f32 %v2280, %v2384
        %v2451 = vsub.f32 %v2282, %v2384
        %v2452 = vsub.f32 %v2284, %v2387
        %v2453 = vsub.f32 %v2286, %v2387
        %v2454 = vsub.f32 %v2290, %v2390
        %v2455 = vsub.f32 %v2292, %v2390
        %v2456 = vsub.f32 %v2294, %v2393
        %v2457 = vsub.f32 %v2296, %v2393
        %v2458 = vmul.f32 %v2394, 1.442695
        %v2459 = vpow.pop %v2458
        %v2460 = vmul.f32 %v2395, 1.442695
        %v2461 = vpow.pop %v2460
        %v2462 = vmul.f32 %v2396, 1.442695
        %v2463 = vpow.pop %v2462
        %v2464 = vmul.f32 %v2397, 1.442695
        %v2465 = vpow.pop %v2464
        %v2466 = vmul.f32 %v2398, 1.442695
        %v2467 = vpow.pop %v2466
        %v2468 = vmul.f32 %v2399, 1.442695
        %v2469 = vpow.pop %v2468
        %v2470 = vmul.f32 %v2400, 1.442695
        %v2471 = vpow.pop %v2470
        %v2472 = vmul.f32 %v2401, 1.442695
        %v2473 = vpow.pop %v2472
        %v2474 = vmul.f32 %v2402, 1.442695
        %v2475 = vpow.pop %v2474
        %v2476 = vmul.f32 %v2403, 1.442695
        %v2477 = vpow.pop %v2476
        %v2478 = vmul.f32 %v2404, 1.442695
        %v2479 = vpow.pop %v2478
        %v2480 = vmul.f32 %v2405, 1.442695
        %v2481 = vpow.pop %v2480
        %v2482 = vmul.f32 %v2406, 1.442695
        %v2483 = vpow.pop %v2482
        %v2484 = vmul.f32 %v2407, 1.442695
        %v2485 = vpow.pop %v2484
        %v2486 = vmul.f32 %v2408, 1.442695
        %v2487 = vpow.pop %v2486
        %v2488 = vmul.f32 %v2409, 1.442695
        %v2489 = vpow.pop %v2488
        %v2490 = vmul.f32 %v2410, 1.442695
        %v2491 = vpow.pop %v2490
        %v2492 = vmul.f32 %v2411, 1.442695
        %v2493 = vpow.pop %v2492
        %v2494 = vmul.f32 %v2412, 1.442695
        %v2495 = vpow.pop %v2494
        %v2496 = vmul.f32 %v2413, 1.442695
        %v2497 = vpow.pop %v2496
        %v2498 = vmul.f32 %v2414, 1.442695
        %v2499 = vpow.pop %v2498
        %v2500 = vmul.f32 %v2415, 1.442695
        %v2501 = vpow.pop %v2500
        %v2502 = vmul.f32 %v2416, 1.442695
        %v2503 = vpow.pop %v2502
        %v2504 = vmul.f32 %v2417, 1.442695
        %v2505 = vpow.pop %v2504
        %v2506 = vmul.f32 %v2418, 1.442695
        %v2507 = vpow.pop %v2506
        %v2508 = vmul.f32 %v2419, 1.442695
        %v2509 = vpow.pop %v2508
        %v2510 = vmul.f32 %v2420, 1.442695
        %v2511 = vpow.pop %v2510
        %v2512 = vmul.f32 %v2421, 1.442695
        %v2513 = vpow.pop %v2512
        %v2514 = vmul.f32 %v2422, 1.442695
        %v2515 = vpow.pop %v2514
        %v2516 = vmul.f32 %v2423, 1.442695
        %v2517 = vpow.pop %v2516
        %v2518 = vmul.f32 %v2424, 1.442695
        %v2519 = vpow.pop %v2518
        %v2520 = vmul.f32 %v2425, 1.442695
        %v2521 = vpow.pop %v2520
        %v2522 = vmul.f32 %v2426, 1.442695
        %v2523 = vpow.pop %v2522
        %v2524 = vmul.f32 %v2427, 1.442695
        %v2525 = vpow.pop %v2524
        %v2526 = vmul.f32 %v2428, 1.442695
        %v2527 = vpow.pop %v2526
        %v2528 = vmul.f32 %v2429, 1.442695
        %v2529 = vpow.pop %v2528
        %v2530 = vmul.f32 %v2430, 1.442695
        %v2531 = vpow.pop %v2530
        %v2532 = vmul.f32 %v2431, 1.442695
        %v2533 = vpow.pop %v2532
        %v2534 = vmul.f32 %v2432, 1.442695
        %v2535 = vpow.pop %v2534
        %v2536 = vmul.f32 %v2433, 1.442695
        %v2537 = vpow.pop %v2536
        %v2538 = vmul.f32 %v2434, 1.442695
        %v2539 = vpow.pop %v2538
        %v2540 = vmul.f32 %v2435, 1.442695
        %v2541 = vpow.pop %v2540
        %v2542 = vmul.f32 %v2436, 1.442695
        %v2543 = vpow.pop %v2542
        %v2544 = vmul.f32 %v2437, 1.442695
        %v2545 = vpow.pop %v2544
        %v2546 = vmul.f32 %v2438, 1.442695
        %v2547 = vpow.pop %v2546
        %v2548 = vmul.f32 %v2439, 1.442695
        %v2549 = vpow.pop %v2548
        %v2550 = vmul.f32 %v2440, 1.442695
        %v2551 = vpow.pop %v2550
        %v2552 = vmul.f32 %v2441, 1.442695
        %v2553 = vpow.pop %v2552
        %v2554 = vmul.f32 %v2442, 1.442695
        %v2555 = vpow.pop %v2554
        %v2556 = vmul.f32 %v2443, 1.442695
        %v2557 = vpow.pop %v2556
        %v2558 = vmul.f32 %v2444, 1.442695
        %v2559 = vpow.pop %v2558
        %v2560 = vmul.f32 %v2445, 1.442695
        %v2561 = vpow.pop %v2560
        %v2562 = vmul.f32 %v2446, 1.442695
        %v2563 = vpow.pop %v2562
        %v2564 = vmul.f32 %v2447, 1.442695
        %v2565 = vpow.pop %v2564
        %v2566 = vmul.f32 %v2448, 1.442695
        %v2567 = vpow.pop %v2566
        %v2568 = vmul.f32 %v2449, 1.442695
        %v2569 = vpow.pop %v2568
        %v2570 = vmul.f32 %v2450, 1.442695
        %v2571 = vpow.pop %v2570
        %v2572 = vmul.f32 %v2451, 1.442695
        %v2573 = vpow.pop %v2572
        %v2574 = vmul.f32 %v2452, 1.442695
        %v2575 = vpow.pop %v2574
        %v2576 = vmul.f32 %v2453, 1.442695
        %v2577 = vpow.pop %v2576
        %v2578 = vmul.f32 %v2454, 1.442695
        %v2579 = vpow.pop %v2578
        %v2580 = vmul.f32 %v2455, 1.442695
        %v2581 = vpow.pop %v2580
        %v2582 = vmul.f32 %v2456, 1.442695
        %v2583 = vpow.pop %v2582
        %v2584 = vmul.f32 %v2457, 1.442695
        %v2585 = vpow.pop %v2584
        %v2586 = vadd.f32 %v2459, %v2461
        %2587 = vadd.xlane.f32.xlu0 %v2586
        %v2588 = vpop.xlane.xlu0 %2587
        %v2589 = vadd.f32 %v2463, %v2465
        %2590 = vadd.xlane.f32.xlu0 %v2589
        %v2591 = vpop.xlane.xlu0 %2590
        %v2592 = vadd.f32 %v2467, %v2469
        %2593 = vadd.xlane.f32.xlu0 %v2592
        %v2594 = vpop.xlane.xlu0 %2593
        %v2595 = vadd.f32 %v2471, %v2473
        %2596 = vadd.xlane.f32.xlu0 %v2595
        %v2597 = vpop.xlane.xlu0 %2596
        %v2598 = vadd.f32 %v2475, %v2477
        %2599 = vadd.xlane.f32.xlu0 %v2598
        %v2600 = vpop.xlane.xlu0 %2599
        %v2601 = vadd.f32 %v2479, %v2481
        %2602 = vadd.xlane.f32.xlu0 %v2601
        %v2603 = vpop.xlane.xlu0 %2602
        %v2604 = vadd.f32 %v2483, %v2485
        %2605 = vadd.xlane.f32.xlu0 %v2604
        %v2606 = vpop.xlane.xlu0 %2605
        %v2607 = vadd.f32 %v2487, %v2489
        %2608 = vadd.xlane.f32.xlu0 %v2607
        %v2609 = vpop.xlane.xlu0 %2608
        %v2610 = vadd.f32 %v2491, %v2493
        %2611 = vadd.xlane.f32.xlu0 %v2610
        %v2612 = vpop.xlane.xlu0 %2611
        %v2613 = vadd.f32 %v2495, %v2497
        %2614 = vadd.xlane.f32.xlu0 %v2613
        %v2615 = vpop.xlane.xlu0 %2614
        %v2616 = vadd.f32 %v2499, %v2501
        %2617 = vadd.xlane.f32.xlu0 %v2616
        %v2618 = vpop.xlane.xlu0 %2617
        %v2619 = vadd.f32 %v2503, %v2505
        %2620 = vadd.xlane.f32.xlu0 %v2619
        %v2621 = vpop.xlane.xlu0 %2620
        %v2622 = vadd.f32 %v2507, %v2509
        %2623 = vadd.xlane.f32.xlu0 %v2622
        %v2624 = vpop.xlane.xlu0 %2623
        %v2625 = vadd.f32 %v2511, %v2513
        %2626 = vadd.xlane.f32.xlu0 %v2625
        %v2627 = vpop.xlane.xlu0 %2626
        %v2628 = vadd.f32 %v2515, %v2517
        %2629 = vadd.xlane.f32.xlu0 %v2628
        %v2630 = vpop.xlane.xlu0 %2629
        %v2631 = vadd.f32 %v2519, %v2521
        %2632 = vadd.xlane.f32.xlu0 %v2631
        %v2633 = vpop.xlane.xlu0 %2632
        %v2634 = vadd.f32 %v2523, %v2525
        %2635 = vadd.xlane.f32.xlu0 %v2634
        %v2636 = vpop.xlane.xlu0 %2635
        %v2637 = vadd.f32 %v2527, %v2529
        %2638 = vadd.xlane.f32.xlu0 %v2637
        %v2639 = vpop.xlane.xlu0 %2638
        %v2640 = vadd.f32 %v2531, %v2533
        %2641 = vadd.xlane.f32.xlu0 %v2640
        %v2642 = vpop.xlane.xlu0 %2641
        %v2643 = vadd.f32 %v2535, %v2537
        %2644 = vadd.xlane.f32.xlu0 %v2643
        %v2645 = vpop.xlane.xlu0 %2644
        %v2646 = vadd.f32 %v2539, %v2541
        %2647 = vadd.xlane.f32.xlu0 %v2646
        %v2648 = vpop.xlane.xlu0 %2647
        %v2649 = vadd.f32 %v2543, %v2545
        %2650 = vadd.xlane.f32.xlu0 %v2649
        %v2651 = vpop.xlane.xlu0 %2650
        %v2652 = vadd.f32 %v2547, %v2549
        %2653 = vadd.xlane.f32.xlu0 %v2652
        %v2654 = vpop.xlane.xlu0 %2653
        %v2655 = vadd.f32 %v2551, %v2553
        %2656 = vadd.xlane.f32.xlu0 %v2655
        %v2657 = vpop.xlane.xlu0 %2656
        %v2658 = vadd.f32 %v2555, %v2557
        %2659 = vadd.xlane.f32.xlu0 %v2658
        %v2660 = vpop.xlane.xlu0 %2659
        %v2661 = vadd.f32 %v2559, %v2561
        %2662 = vadd.xlane.f32.xlu0 %v2661
        %v2663 = vpop.xlane.xlu0 %2662
        %v2664 = vadd.f32 %v2563, %v2565
        %2665 = vadd.xlane.f32.xlu0 %v2664
        %v2666 = vpop.xlane.xlu0 %2665
        %v2667 = vadd.f32 %v2567, %v2569
        %2668 = vadd.xlane.f32.xlu0 %v2667
        %v2669 = vpop.xlane.xlu0 %2668
        %v2670 = vadd.f32 %v2571, %v2573
        %2671 = vadd.xlane.f32.xlu0 %v2670
        %v2672 = vpop.xlane.xlu0 %2671
        %v2673 = vadd.f32 %v2575, %v2577
        %2674 = vadd.xlane.f32.xlu0 %v2673
        %v2675 = vpop.xlane.xlu0 %2674
        %v2676 = vadd.f32 %v2579, %v2581
        %2677 = vadd.xlane.f32.xlu0 %v2676
        %v2678 = vpop.xlane.xlu0 %2677
        %v2679 = vadd.f32 %v2583, %v2585
        %2680 = vadd.xlane.f32.xlu0 %v2679
        %v2681 = vpop.xlane.xlu0 %2680
        %v2682 = vrcp.pop %v2588
        %v2683 = vrcp.pop %v2591
        %v2684 = vrcp.pop %v2594
        %v2685 = vrcp.pop %v2597
        %v2686 = vrcp.pop %v2600
        %v2687 = vrcp.pop %v2603
        %v2688 = vrcp.pop %v2606
        %v2689 = vrcp.pop %v2609
        %v2690 = vrcp.pop %v2612
        %v2691 = vrcp.pop %v2615
        %v2692 = vrcp.pop %v2618
        %v2693 = vrcp.pop %v2621
        %v2694 = vrcp.pop %v2624
        %v2695 = vrcp.pop %v2627
        %v2696 = vrcp.pop %v2630
        %v2697 = vrcp.pop %v2633
        %v2698 = vrcp.pop %v2636
        %v2699 = vrcp.pop %v2639
        %v2700 = vrcp.pop %v2642
        %v2701 = vrcp.pop %v2645
        %v2702 = vrcp.pop %v2648
        %v2703 = vrcp.pop %v2651
        %v2704 = vrcp.pop %v2654
        %v2705 = vrcp.pop %v2657
        %v2706 = vrcp.pop %v2660
        %v2707 = vrcp.pop %v2663
        %v2708 = vrcp.pop %v2666
        %v2709 = vrcp.pop %v2669
        %v2710 = vrcp.pop %v2672
        %v2711 = vrcp.pop %v2675
        %v2712 = vrcp.pop %v2678
        %v2713 = vrcp.pop %v2681
        %v2714 = vmul.f32 %v2459, %v2682
        %v2715 = vmul.f32 %v2461, %v2682
        %v2716 = vmul.f32 %v2463, %v2683
        %v2717 = vmul.f32 %v2465, %v2683
        %v2718 = vmul.f32 %v2467, %v2684
        %v2719 = vmul.f32 %v2469, %v2684
        %v2720 = vmul.f32 %v2471, %v2685
        %v2721 = vmul.f32 %v2473, %v2685
        %v2722 = vmul.f32 %v2475, %v2686
        %v2723 = vmul.f32 %v2477, %v2686
        %v2724 = vmul.f32 %v2479, %v2687
        %v2725 = vmul.f32 %v2481, %v2687
        %v2726 = vmul.f32 %v2483, %v2688
        %v2727 = vmul.f32 %v2485, %v2688
        %v2728 = vmul.f32 %v2487, %v2689
        %v2729 = vmul.f32 %v2489, %v2689
        %v2730 = vmul.f32 %v2491, %v2690
        %v2731 = vmul.f32 %v2493, %v2690
        %v2732 = vmul.f32 %v2495, %v2691
        %v2733 = vmul.f32 %v2497, %v2691
        %v2734 = vmul.f32 %v2499, %v2692
        %v2735 = vmul.f32 %v2501, %v2692
        %v2736 = vmul.f32 %v2503, %v2693
        %v2737 = vmul.f32 %v2505, %v2693
        %v2738 = vmul.f32 %v2507, %v2694
        %v2739 = vmul.f32 %v2509, %v2694
        %v2740 = vmul.f32 %v2511, %v2695
        %v2741 = vmul.f32 %v2513, %v2695
        %v2742 = vmul.f32 %v2515, %v2696
        %v2743 = vmul.f32 %v2517, %v2696
        %v2744 = vmul.f32 %v2519, %v2697
        %v2745 = vmul.f32 %v2521, %v2697
        %v2746 = vmul.f32 %v2523, %v2698
        %v2747 = vmul.f32 %v2525, %v2698
        %v2748 = vmul.f32 %v2527, %v2699
        %v2749 = vmul.f32 %v2529, %v2699
        %v2750 = vmul.f32 %v2531, %v2700
        %v2751 = vmul.f32 %v2533, %v2700
        %v2752 = vmul.f32 %v2535, %v2701
        %v2753 = vmul.f32 %v2537, %v2701
        %v2754 = vmul.f32 %v2539, %v2702
        %v2755 = vmul.f32 %v2541, %v2702
        %v2756 = vmul.f32 %v2543, %v2703
        %v2757 = vmul.f32 %v2545, %v2703
        %v2758 = vmul.f32 %v2547, %v2704
        %v2759 = vmul.f32 %v2549, %v2704
        %v2760 = vmul.f32 %v2551, %v2705
        %v2761 = vmul.f32 %v2553, %v2705
        %v2762 = vmul.f32 %v2555, %v2706
        %v2763 = vmul.f32 %v2557, %v2706
        %v2764 = vmul.f32 %v2559, %v2707
        %v2765 = vmul.f32 %v2561, %v2707
        %v2766 = vmul.f32 %v2563, %v2708
        %v2767 = vmul.f32 %v2565, %v2708
        %v2768 = vmul.f32 %v2567, %v2709
        %v2769 = vmul.f32 %v2569, %v2709
        %v2770 = vmul.f32 %v2571, %v2710
        %v2771 = vmul.f32 %v2573, %v2710
        %v2772 = vmul.f32 %v2575, %v2711
        %v2773 = vmul.f32 %v2577, %v2711
        %v2774 = vmul.f32 %v2579, %v2712
        %v2775 = vmul.f32 %v2581, %v2712
        %v2776 = vmul.f32 %v2583, %v2713
        %v2777 = vmul.f32 %v2585, %v2713
        %v2778 = vadd.f32 %v2714, %v2716
        %v2779 = vadd.f32 %v2778, %v2718
        %v2780 = vadd.f32 %v2779, %v2720
        %v2781 = vadd.f32 %v2780, %v2722
        %v2782 = vadd.f32 %v2781, %v2724
        %v2783 = vadd.f32 %v2782, %v2726
        %v2784 = vadd.f32 %v2783, %v2728
        %v2785 = vadd.f32 %v2784, %v2730
        %v2786 = vadd.f32 %v2785, %v2732
        %v2787 = vadd.f32 %v2786, %v2734
        %v2788 = vadd.f32 %v2787, %v2736
        %v2789 = vadd.f32 %v2788, %v2738
        %v2790 = vadd.f32 %v2789, %v2740
        %v2791 = vadd.f32 %v2790, %v2742
        %v2792 = vadd.f32 %v2791, %v2744
        %v2793 = vadd.f32 %v2792, %v2746
        %v2794 = vadd.f32 %v2793, %v2748
        %v2795 = vadd.f32 %v2794, %v2750
        %v2796 = vadd.f32 %v2795, %v2752
        %v2797 = vadd.f32 %v2796, %v2754
        %v2798 = vadd.f32 %v2797, %v2756
        %v2799 = vadd.f32 %v2798, %v2758
        %v2800 = vadd.f32 %v2799, %v2760
        %v2801 = vadd.f32 %v2800, %v2762
        %v2802 = vadd.f32 %v2801, %v2764
        %v2803 = vadd.f32 %v2802, %v2766
        %v2804 = vadd.f32 %v2803, %v2768
        %v2805 = vadd.f32 %v2804, %v2770
        %v2806 = vadd.f32 %v2805, %v2772
        %v2807 = vadd.f32 %v2806, %v2774
        %v2808 = vadd.f32 %v2807, %v2776
        %v2809 = vrot.slane %v2808, 4
        %v2810 = vadd.f32 %v2808, %v2809
        %v2811 = vrot.slane %v2810, 2
        %v2812 = vadd.f32 %v2810, %v2811
        %v2813 = vrot.slane %v2812, 1
        %v2814 = vadd.f32 %v2812, %v2813
        %v2815 = vadd.f32 %v2715, %v2717
        %v2816 = vadd.f32 %v2815, %v2719
        %v2817 = vadd.f32 %v2816, %v2721
        %v2818 = vadd.f32 %v2817, %v2723
        %v2819 = vadd.f32 %v2818, %v2725
        %v2820 = vadd.f32 %v2819, %v2727
        %v2821 = vadd.f32 %v2820, %v2729
        %v2822 = vadd.f32 %v2821, %v2731
        %v2823 = vadd.f32 %v2822, %v2733
        %v2824 = vadd.f32 %v2823, %v2735
        %v2825 = vadd.f32 %v2824, %v2737
        %v2826 = vadd.f32 %v2825, %v2739
        %v2827 = vadd.f32 %v2826, %v2741
        %v2828 = vadd.f32 %v2827, %v2743
        %v2829 = vadd.f32 %v2828, %v2745
        %v2830 = vadd.f32 %v2829, %v2747
        %v2831 = vadd.f32 %v2830, %v2749
        %v2832 = vadd.f32 %v2831, %v2751
        %v2833 = vadd.f32 %v2832, %v2753
        %v2834 = vadd.f32 %v2833, %v2755
        %v2835 = vadd.f32 %v2834, %v2757
        %v2836 = vadd.f32 %v2835, %v2759
        %v2837 = vadd.f32 %v2836, %v2761
        %v2838 = vadd.f32 %v2837, %v2763
        %v2839 = vadd.f32 %v2838, %v2765
        %v2840 = vadd.f32 %v2839, %v2767
        %v2841 = vadd.f32 %v2840, %v2769
        %v2842 = vadd.f32 %v2841, %v2771
        %v2843 = vadd.f32 %v2842, %v2773
        %v2844 = vadd.f32 %v2843, %v2775
        %v2845 = vadd.f32 %v2844, %v2777
        %v2846 = vrot.slane %v2845, 4
        %v2847 = vadd.f32 %v2845, %v2846
        %v2848 = vrot.slane %v2847, 2
        %v2849 = vadd.f32 %v2847, %v2848
        %v2850 = vrot.slane %v2849, 1
        %v2851 = vadd.f32 %v2849, %v2850
        %v2852 = vadd.f32 %v2814, 1e-09
        %v2853 = vadd.f32 %v2851, 1e-09
        %v2854 = vrcp.pop %v2852
        %v2855 = vrcp.pop %v2853
        %v2856 = vmul.f32 %v2714, %v2854
        %v2857 = vmul.f32 %v2715, %v2855
        %v2858 = vmul.f32 %v2716, %v2854
        %v2859 = vmul.f32 %v2717, %v2855
        %v2860 = vmul.f32 %v2718, %v2854
        %v2861 = vmul.f32 %v2719, %v2855
        %v2862 = vmul.f32 %v2720, %v2854
        %v2863 = vmul.f32 %v2721, %v2855
        %v2864 = vmul.f32 %v2722, %v2854
        %v2865 = vmul.f32 %v2723, %v2855
        %v2866 = vmul.f32 %v2724, %v2854
        %v2867 = vmul.f32 %v2725, %v2855
        %v2868 = vmul.f32 %v2726, %v2854
        %v2869 = vmul.f32 %v2727, %v2855
        %v2870 = vmul.f32 %v2728, %v2854
        %v2871 = vmul.f32 %v2729, %v2855
        %v2872 = vmul.f32 %v2730, %v2854
        %v2873 = vmul.f32 %v2731, %v2855
        %v2874 = vmul.f32 %v2732, %v2854
        %v2875 = vmul.f32 %v2733, %v2855
        %v2876 = vmul.f32 %v2734, %v2854
        %v2877 = vmul.f32 %v2735, %v2855
        %v2878 = vmul.f32 %v2736, %v2854
        %v2879 = vmul.f32 %v2737, %v2855
        %v2880 = vmul.f32 %v2738, %v2854
        %v2881 = vmul.f32 %v2739, %v2855
        %v2882 = vmul.f32 %v2740, %v2854
        %v2883 = vmul.f32 %v2741, %v2855
        %v2884 = vmul.f32 %v2742, %v2854
        %v2885 = vmul.f32 %v2743, %v2855
        %v2886 = vmul.f32 %v2744, %v2854
        %v2887 = vmul.f32 %v2745, %v2855
        %v2888 = vmul.f32 %v2746, %v2854
        %v2889 = vmul.f32 %v2747, %v2855
        %v2890 = vmul.f32 %v2748, %v2854
        %v2891 = vmul.f32 %v2749, %v2855
        %v2892 = vmul.f32 %v2750, %v2854
        %v2893 = vmul.f32 %v2751, %v2855
        %v2894 = vmul.f32 %v2752, %v2854
        %v2895 = vmul.f32 %v2753, %v2855
        %v2896 = vmul.f32 %v2754, %v2854
        %v2897 = vmul.f32 %v2755, %v2855
        %v2898 = vmul.f32 %v2756, %v2854
        %v2899 = vmul.f32 %v2757, %v2855
        %v2900 = vmul.f32 %v2758, %v2854
        %v2901 = vmul.f32 %v2759, %v2855
        %v2902 = vmul.f32 %v2760, %v2854
        %v2903 = vmul.f32 %v2761, %v2855
        %v2904 = vmul.f32 %v2762, %v2854
        %v2905 = vmul.f32 %v2763, %v2855
        %v2906 = vmul.f32 %v2764, %v2854
        %v2907 = vmul.f32 %v2765, %v2855
        %v2908 = vmul.f32 %v2766, %v2854
        %v2909 = vmul.f32 %v2767, %v2855
        %v2910 = vmul.f32 %v2768, %v2854
        %v2911 = vmul.f32 %v2769, %v2855
        %v2912 = vmul.f32 %v2770, %v2854
        %v2913 = vmul.f32 %v2771, %v2855
        %v2914 = vmul.f32 %v2772, %v2854
        %v2915 = vmul.f32 %v2773, %v2855
        %v2916 = vmul.f32 %v2774, %v2854
        %v2917 = vmul.f32 %v2775, %v2855
        %v2918 = vmul.f32 %v2776, %v2854
        %v2919 = vmul.f32 %v2777, %v2855
        %v2920 = vpack.c.bf16 %v2858, %v2856
        %v2921 = vpack.c.bf16 %v2859, %v2857
        %v2922 = vpack.c.bf16 %v2862, %v2860
        %v2923 = vpack.c.bf16 %v2863, %v2861
        %v2924 = vpack.c.bf16 %v2866, %v2864
        %v2925 = vpack.c.bf16 %v2867, %v2865
        %v2926 = vpack.c.bf16 %v2870, %v2868
        %v2927 = vpack.c.bf16 %v2871, %v2869
        %v2928 = vpack.c.bf16 %v2874, %v2872
        %v2929 = vpack.c.bf16 %v2875, %v2873
        %v2930 = vpack.c.bf16 %v2878, %v2876
        %v2931 = vpack.c.bf16 %v2879, %v2877
        %v2932 = vpack.c.bf16 %v2882, %v2880
        %v2933 = vpack.c.bf16 %v2883, %v2881
        %v2934 = vpack.c.bf16 %v2886, %v2884
        %v2935 = vpack.c.bf16 %v2887, %v2885
        %v2936 = vpack.c.bf16 %v2890, %v2888
        %v2937 = vpack.c.bf16 %v2891, %v2889
        %v2938 = vpack.c.bf16 %v2894, %v2892
        %v2939 = vpack.c.bf16 %v2895, %v2893
        %v2940 = vpack.c.bf16 %v2898, %v2896
        %v2941 = vpack.c.bf16 %v2899, %v2897
        %v2942 = vpack.c.bf16 %v2902, %v2900
        %v2943 = vpack.c.bf16 %v2903, %v2901
        %v2944 = vpack.c.bf16 %v2906, %v2904
        %v2945 = vpack.c.bf16 %v2907, %v2905
        %v2946 = vpack.c.bf16 %v2910, %v2908
        %v2947 = vpack.c.bf16 %v2911, %v2909
        %v2948 = vpack.c.bf16 %v2914, %v2912
        %v2949 = vpack.c.bf16 %v2915, %v2913
        %v2950 = vpack.c.bf16 %v2918, %v2916
        %v2951 = vpack.c.bf16 %v2919, %v2917
        %v2952 = vpack.c.bf16 %v1479, %v1475
        %v2953 = vpack.c.bf16 %v1489, %v1485
        %v2954 = vpack.c.bf16 %v1499, %v1495
        %v2955 = vpack.c.bf16 %v1509, %v1505
        %v2956 = vpack.c.bf16 %v1519, %v1515
        %v2957 = vpack.c.bf16 %v1529, %v1525
        %v2958 = vpack.c.bf16 %v1539, %v1535
        %v2959 = vpack.c.bf16 %v1549, %v1545
        %v2960 = vpack.c.bf16 %v1559, %v1555
        %v2961 = vpack.c.bf16 %v1569, %v1565
        %v2962 = vpack.c.bf16 %v1579, %v1575
        %v2963 = vpack.c.bf16 %v1589, %v1585
        %v2964 = vpack.c.bf16 %v1599, %v1595
        %v2965 = vpack.c.bf16 %v1609, %v1605
        %v2966 = vpack.c.bf16 %v1619, %v1615
        %v2967 = vpack.c.bf16 %v1629, %v1625
        %2968 = vmatprep.subr.bf16.mxu0 0
        %2969 = vmatpush1.bf16.msra.mxu0 %v2959
        %2970 = vmatprep.subr.bf16.mxu0 0
        %2971 = vmatpush1.bf16.msra.mxu0 %v2958
        %2972 = vmatprep.subr.bf16.mxu0 0
        %2973 = vmatpush1.bf16.msra.mxu0 %v2957
        %2974 = vmatprep.subr.bf16.mxu0 0
        %2975 = vmatpush1.bf16.msra.mxu0 %v2956
        %2976 = vmatprep.subr.bf16.mxu0 0
        %2977 = vmatpush1.bf16.msra.mxu0 %v2955
        %2978 = vmatprep.subr.bf16.mxu0 0
        %2979 = vmatpush1.bf16.msra.mxu0 %v2954
        %2980 = vmatprep.subr.bf16.mxu0 0
        %2981 = vmatpush1.bf16.msra.mxu0 %v2953
        %2982 = vmatprep.subr.bf16.mxu0 0
        %2983 = vmatpush1.bf16.msra.mxu0 %v2952
        %2984 = vmatprep.subr.bf16.mxu0 0
        %2985 = vmatpush2.bf16.msra.mxu0 %v2967
        %2986 = vmatprep.subr.bf16.mxu0 0
        %2987 = vmatpush2.bf16.msra.mxu0 %v2966
        %2988 = vmatprep.subr.bf16.mxu0 0
        %2989 = vmatpush2.bf16.msra.mxu0 %v2965
        %2990 = vmatprep.subr.bf16.mxu0 0
        %2991 = vmatpush2.bf16.msra.mxu0 %v2964
        %2992 = vmatprep.subr.bf16.mxu0 0
        %2993 = vmatpush2.bf16.msra.mxu0 %v2963
        %2994 = vmatprep.subr.bf16.mxu0 0
        %2995 = vmatpush2.bf16.msra.mxu0 %v2962
        %2996 = vmatprep.subr.bf16.mxu0 0
        %2997 = vmatpush2.bf16.msra.mxu0 %v2961
        %2998 = vmatprep.subr.bf16.mxu0 0
        %2999 = vmatpush2.bf16.msra.mxu0 %v2960
        %3000 = vmatprep.mubr.bf16.mxu0 %v2921
        %3001 = vmatmul.mubr.bf16.gmra.mxu0 %v2920
        %v3002 = vpop.f32.mrf.mxu0
        %v3003 = vadd.f32 0.0, %v3002
        %v3004 = vpop.f32.mrf.mxu0
        %v3005 = vpop.f32.mrf.mxu0
        %v3006 = vadd.f32 0.0, %v3005
        %v3007 = vpop.f32.mrf.mxu0
        %3008 = vmatprep.mubr.bf16.mxu0 %v2923
        %3009 = vmatmul.mubr.bf16.gmra.mxu0 %v2922
        %v3010 = vpop.f32.mrf.mxu0
        %v3011 = vadd.f32 0.0, %v3010
        %v3012 = vpop.f32.mrf.mxu0
        %v3013 = vpop.f32.mrf.mxu0
        %v3014 = vadd.f32 0.0, %v3013
        %v3015 = vpop.f32.mrf.mxu0
        %3016 = vmatprep.mubr.bf16.mxu0 %v2925
        %3017 = vmatmul.mubr.bf16.gmra.mxu0 %v2924
        %v3018 = vpop.f32.mrf.mxu0
        %v3019 = vadd.f32 0.0, %v3018
        %v3020 = vpop.f32.mrf.mxu0
        %v3021 = vpop.f32.mrf.mxu0
        %v3022 = vadd.f32 0.0, %v3021
        %v3023 = vpop.f32.mrf.mxu0
        %3024 = vmatprep.mubr.bf16.mxu0 %v2927
        %3025 = vmatmul.mubr.bf16.gmra.mxu0 %v2926
        %v3026 = vpop.f32.mrf.mxu0
        %v3027 = vadd.f32 0.0, %v3026
        %v3028 = vpop.f32.mrf.mxu0
        %v3029 = vpop.f32.mrf.mxu0
        %v3030 = vadd.f32 0.0, %v3029
        %v3031 = vpop.f32.mrf.mxu0
        %3032 = vmatprep.mubr.bf16.mxu0 %v2929
        %3033 = vmatmul.mubr.bf16.gmra.mxu0 %v2928
        %v3034 = vpop.f32.mrf.mxu0
        %v3035 = vadd.f32 0.0, %v3034
        %v3036 = vpop.f32.mrf.mxu0
        %v3037 = vpop.f32.mrf.mxu0
        %v3038 = vadd.f32 0.0, %v3037
        %v3039 = vpop.f32.mrf.mxu0
        %3040 = vmatprep.mubr.bf16.mxu0 %v2931
        %3041 = vmatmul.mubr.bf16.gmra.mxu0 %v2930
        %v3042 = vpop.f32.mrf.mxu0
        %v3043 = vadd.f32 0.0, %v3042
        %v3044 = vpop.f32.mrf.mxu0
        %v3045 = vpop.f32.mrf.mxu0
        %v3046 = vadd.f32 0.0, %v3045
        %v3047 = vpop.f32.mrf.mxu0
        %3048 = vmatprep.mubr.bf16.mxu0 %v2933
        %3049 = vmatmul.mubr.bf16.gmra.mxu0 %v2932
        %v3050 = vpop.f32.mrf.mxu0
        %v3051 = vadd.f32 0.0, %v3050
        %v3052 = vpop.f32.mrf.mxu0
        %v3053 = vpop.f32.mrf.mxu0
        %v3054 = vadd.f32 0.0, %v3053
        %v3055 = vpop.f32.mrf.mxu0
        %3056 = vmatprep.mubr.bf16.mxu0 %v2935
        %3057 = vmatmul.mubr.bf16.gmra.mxu0 %v2934
        %v3058 = vpop.f32.mrf.mxu0
        %v3059 = vadd.f32 0.0, %v3058
        %v3060 = vpop.f32.mrf.mxu0
        %v3061 = vpop.f32.mrf.mxu0
        %v3062 = vadd.f32 0.0, %v3061
        %v3063 = vpop.f32.mrf.mxu0
        %3064 = vmatprep.mubr.bf16.mxu0 %v2937
        %3065 = vmatmul.mubr.bf16.gmra.mxu0 %v2936
        %v3066 = vpop.f32.mrf.mxu0
        %v3067 = vadd.f32 0.0, %v3066
        %v3068 = vpop.f32.mrf.mxu0
        %v3069 = vpop.f32.mrf.mxu0
        %v3070 = vadd.f32 0.0, %v3069
        %v3071 = vpop.f32.mrf.mxu0
        %3072 = vmatprep.mubr.bf16.mxu0 %v2939
        %3073 = vmatmul.mubr.bf16.gmra.mxu0 %v2938
        %v3074 = vpop.f32.mrf.mxu0
        %v3075 = vadd.f32 0.0, %v3074
        %v3076 = vpop.f32.mrf.mxu0
        %v3077 = vpop.f32.mrf.mxu0
        %v3078 = vadd.f32 0.0, %v3077
        %v3079 = vpop.f32.mrf.mxu0
        %3080 = vmatprep.mubr.bf16.mxu0 %v2941
        %3081 = vmatmul.mubr.bf16.gmra.mxu0 %v2940
        %v3082 = vpop.f32.mrf.mxu0
        %v3083 = vadd.f32 0.0, %v3082
        %v3084 = vpop.f32.mrf.mxu0
        %v3085 = vpop.f32.mrf.mxu0
        %v3086 = vadd.f32 0.0, %v3085
        %v3087 = vpop.f32.mrf.mxu0
        %3088 = vmatprep.mubr.bf16.mxu0 %v2943
        %3089 = vmatmul.mubr.bf16.gmra.mxu0 %v2942
        %v3090 = vpop.f32.mrf.mxu0
        %v3091 = vadd.f32 0.0, %v3090
        %v3092 = vpop.f32.mrf.mxu0
        %v3093 = vpop.f32.mrf.mxu0
        %v3094 = vadd.f32 0.0, %v3093
        %v3095 = vpop.f32.mrf.mxu0
        %3096 = vmatprep.mubr.bf16.mxu0 %v2945
        %3097 = vmatmul.mubr.bf16.gmra.mxu0 %v2944
        %v3098 = vpop.f32.mrf.mxu0
        %v3099 = vadd.f32 0.0, %v3098
        %v3100 = vpop.f32.mrf.mxu0
        %v3101 = vpop.f32.mrf.mxu0
        %v3102 = vadd.f32 0.0, %v3101
        %v3103 = vpop.f32.mrf.mxu0
        %3104 = vmatprep.mubr.bf16.mxu0 %v2947
        %3105 = vmatmul.mubr.bf16.gmra.mxu0 %v2946
        %v3106 = vpop.f32.mrf.mxu0
        %v3107 = vadd.f32 0.0, %v3106
        %v3108 = vpop.f32.mrf.mxu0
        %v3109 = vpop.f32.mrf.mxu0
        %v3110 = vadd.f32 0.0, %v3109
        %v3111 = vpop.f32.mrf.mxu0
        %3112 = vmatprep.mubr.bf16.mxu0 %v2949
        %3113 = vmatmul.mubr.bf16.gmra.mxu0 %v2948
        %v3114 = vpop.f32.mrf.mxu0
        %v3115 = vadd.f32 0.0, %v3114
        %v3116 = vpop.f32.mrf.mxu0
        %v3117 = vpop.f32.mrf.mxu0
        %v3118 = vadd.f32 0.0, %v3117
        %v3119 = vpop.f32.mrf.mxu0
        %3120 = vmatprep.mubr.bf16.mxu0 %v2951
        %3121 = vmatmul.mubr.bf16.gmra.mxu0 %v2950
        %v3122 = vpop.f32.mrf.mxu0
        %v3123 = vadd.f32 0.0, %v3122
        %v3124 = vpop.f32.mrf.mxu0
        %v3125 = vpop.f32.mrf.mxu0
        %v3126 = vadd.f32 0.0, %v3125
        %v3127 = vpop.f32.mrf.mxu0
        %3128 = vdwg.mxu0
        %v3129 = vsub.f32 %v622, %v3003
        %v3130 = vsub.f32 %v623, %v3006
        %v3131 = vsub.f32 %v624, %v3011
        %v3132 = vsub.f32 %v625, %v3014
        %v3133 = vsub.f32 %v626, %v3019
        %v3134 = vsub.f32 %v627, %v3022
        %v3135 = vsub.f32 %v628, %v3027
        %v3136 = vsub.f32 %v629, %v3030
        %v3137 = vsub.f32 %v630, %v3035
        %v3138 = vsub.f32 %v631, %v3038
        %v3139 = vsub.f32 %v632, %v3043
        %v3140 = vsub.f32 %v633, %v3046
        %v3141 = vsub.f32 %v634, %v3051
        %v3142 = vsub.f32 %v635, %v3054
        %v3143 = vsub.f32 %v636, %v3059
        %v3144 = vsub.f32 %v637, %v3062
        %v3145 = vsub.f32 %v638, %v3067
        %v3146 = vsub.f32 %v639, %v3070
        %v3147 = vsub.f32 %v640, %v3075
        %v3148 = vsub.f32 %v641, %v3078
        %v3149 = vsub.f32 %v642, %v3083
        %v3150 = vsub.f32 %v643, %v3086
        %v3151 = vsub.f32 %v644, %v3091
        %v3152 = vsub.f32 %v645, %v3094
        %v3153 = vsub.f32 %v646, %v3099
        %v3154 = vsub.f32 %v647, %v3102
        %v3155 = vsub.f32 %v648, %v3107
        %v3156 = vsub.f32 %v649, %v3110
        %v3157 = vsub.f32 %v650, %v3115
        %v3158 = vsub.f32 %v651, %v3118
        %v3159 = vsub.f32 %v652, %v3123
        %v3160 = vsub.f32 %v653, %v3126
        %v3161 = vpack.c.bf16 %v3130, %v3129
        %v3162 = vpack.c.bf16 %v3132, %v3131
        %v3163 = vpack.c.bf16 %v3134, %v3133
        %v3164 = vpack.c.bf16 %v3136, %v3135
        %v3165 = vpack.c.bf16 %v3138, %v3137
        %v3166 = vpack.c.bf16 %v3140, %v3139
        %v3167 = vpack.c.bf16 %v3142, %v3141
        %v3168 = vpack.c.bf16 %v3144, %v3143
        %v3169 = vpack.c.bf16 %v3146, %v3145
        %v3170 = vpack.c.bf16 %v3148, %v3147
        %v3171 = vpack.c.bf16 %v3150, %v3149
        %v3172 = vpack.c.bf16 %v3152, %v3151
        %v3173 = vpack.c.bf16 %v3154, %v3153
        %v3174 = vpack.c.bf16 %v3156, %v3155
        %v3175 = vpack.c.bf16 %v3158, %v3157
        %v3176 = vpack.c.bf16 %v3160, %v3159
        %v3193 = vunpack.c.l.b16 %v1633
        %v3194 = vunpack.c.l.b16 %v1634
        %v3195 = vunpack.c.l.b16 %v1635
        %v3196 = vunpack.c.l.b16 %v1636
        %v3197 = vunpack.c.l.b16 %v1637
        %v3198 = vunpack.c.l.b16 %v1638
        %v3199 = vunpack.c.l.b16 %v1639
        %v3200 = vunpack.c.l.b16 %v1640
        %v3201 = vunpack.c.l.b16 %v1641
        %v3202 = vunpack.c.l.b16 %v1642
        %v3203 = vunpack.c.l.b16 %v1643
        %v3204 = vunpack.c.l.b16 %v1644
        %v3205 = vunpack.c.l.b16 %v1645
        %v3206 = vunpack.c.l.b16 %v1646
        %v3207 = vunpack.c.l.b16 %v1647
        %v3208 = vunpack.c.l.b16 %v1648
        %v3209 = vpack.c.b16 %v3194, %v3193
        %v3210 = vpack.c.b16 %v3196, %v3195
        %v3211 = vpack.c.b16 %v3198, %v3197
        %v3212 = vpack.c.b16 %v3200, %v3199
        %v3213 = vpack.c.b16 %v3202, %v3201
        %v3214 = vpack.c.b16 %v3204, %v3203
        %v3215 = vpack.c.b16 %v3206, %v3205
        %v3216 = vpack.c.b16 %v3208, %v3207
        %3225 = vmatprep.subr.bf16.mxu0 0
        %3226 = vmatpush1.bf16.msra.mxu0 %v3216
        %3227 = vmatprep.subr.bf16.mxu0 0
        %3228 = vmatpush1.bf16.msra.mxu0 %v3215
        %3229 = vmatprep.subr.bf16.mxu0 0
        %3230 = vmatpush1.bf16.msra.mxu0 %v3214
        %3231 = vmatprep.subr.bf16.mxu0 0
        %3232 = vmatpush1.bf16.msra.mxu0 %v3213
        %3233 = vmatprep.subr.bf16.mxu0 0
        %3234 = vmatpush1.bf16.msra.mxu0 %v3212
        %3235 = vmatprep.subr.bf16.mxu0 0
        %3236 = vmatpush1.bf16.msra.mxu0 %v3211
        %3237 = vmatprep.subr.bf16.mxu0 0
        %3238 = vmatpush1.bf16.msra.mxu0 %v3210
        %3239 = vmatprep.subr.bf16.mxu0 0
        %3240 = vmatpush1.bf16.msra.mxu0 %v3209
        %3241 = vmatprep.subr.bf16.mxu0 0
        %3242 = vmatpush2.bf16.msra.mxu0 0
        %3243 = vmatprep.subr.bf16.mxu0 0
        %3244 = vmatpush2.bf16.msra.mxu0 0
        %3245 = vmatprep.subr.bf16.mxu0 0
        %3246 = vmatpush2.bf16.msra.mxu0 0
        %3247 = vmatprep.subr.bf16.mxu0 0
        %3248 = vmatpush2.bf16.msra.mxu0 0
        %3249 = vmatprep.subr.bf16.mxu0 0
        %3250 = vmatpush2.bf16.msra.mxu0 0
        %3251 = vmatprep.subr.bf16.mxu0 0
        %3252 = vmatpush2.bf16.msra.mxu0 0
        %3253 = vmatprep.subr.bf16.mxu0 0
        %3254 = vmatpush2.bf16.msra.mxu0 0
        %3255 = vmatprep.subr.bf16.mxu0 0
        %3256 = vmatpush2.bf16.msra.mxu0 0
        %3257 = vmatprep.mubr.bf16.mxu0 0
        %3258 = vmatmul.mubr.bf16.gmra.mxu0 %v3161
        %v3259 = vpop.f32.mrf.mxu0
        %v3260 = vadd.f32 0.0, %v3259
        %v3261 = vpop.f32.mrf.mxu0
        %v3262 = vpop.f32.mrf.mxu0
        %v3263 = vadd.f32 0.0, %v3262
        %v3264 = vpop.f32.mrf.mxu0
        %3265 = vmatprep.mubr.bf16.mxu0 0
        %3266 = vmatmul.mubr.bf16.gmra.mxu0 %v3162
        %v3267 = vpop.f32.mrf.mxu0
        %v3268 = vadd.f32 0.0, %v3267
        %v3269 = vpop.f32.mrf.mxu0
        %v3270 = vpop.f32.mrf.mxu0
        %v3271 = vadd.f32 0.0, %v3270
        %v3272 = vpop.f32.mrf.mxu0
        %3273 = vmatprep.mubr.bf16.mxu0 0
        %3274 = vmatmul.mubr.bf16.gmra.mxu0 %v3163
        %v3275 = vpop.f32.mrf.mxu0
        %v3276 = vadd.f32 0.0, %v3275
        %v3277 = vpop.f32.mrf.mxu0
        %v3278 = vpop.f32.mrf.mxu0
        %v3279 = vadd.f32 0.0, %v3278
        %v3280 = vpop.f32.mrf.mxu0
        %3281 = vmatprep.mubr.bf16.mxu0 0
        %3282 = vmatmul.mubr.bf16.gmra.mxu0 %v3164
        %v3283 = vpop.f32.mrf.mxu0
        %v3284 = vadd.f32 0.0, %v3283
        %v3285 = vpop.f32.mrf.mxu0
        %v3286 = vpop.f32.mrf.mxu0
        %v3287 = vadd.f32 0.0, %v3286
        %v3288 = vpop.f32.mrf.mxu0
        %3289 = vmatprep.mubr.bf16.mxu0 0
        %3290 = vmatmul.mubr.bf16.gmra.mxu0 %v3165
        %v3291 = vpop.f32.mrf.mxu0
        %v3292 = vadd.f32 0.0, %v3291
        %v3293 = vpop.f32.mrf.mxu0
        %v3294 = vpop.f32.mrf.mxu0
        %v3295 = vadd.f32 0.0, %v3294
        %v3296 = vpop.f32.mrf.mxu0
        %3297 = vmatprep.mubr.bf16.mxu0 0
        %3298 = vmatmul.mubr.bf16.gmra.mxu0 %v3166
        %v3299 = vpop.f32.mrf.mxu0
        %v3300 = vadd.f32 0.0, %v3299
        %v3301 = vpop.f32.mrf.mxu0
        %v3302 = vpop.f32.mrf.mxu0
        %v3303 = vadd.f32 0.0, %v3302
        %v3304 = vpop.f32.mrf.mxu0
        %3305 = vmatprep.mubr.bf16.mxu0 0
        %3306 = vmatmul.mubr.bf16.gmra.mxu0 %v3167
        %v3307 = vpop.f32.mrf.mxu0
        %v3308 = vadd.f32 0.0, %v3307
        %v3309 = vpop.f32.mrf.mxu0
        %v3310 = vpop.f32.mrf.mxu0
        %v3311 = vadd.f32 0.0, %v3310
        %v3312 = vpop.f32.mrf.mxu0
        %3313 = vmatprep.mubr.bf16.mxu0 0
        %3314 = vmatmul.mubr.bf16.gmra.mxu0 %v3168
        %v3315 = vpop.f32.mrf.mxu0
        %v3316 = vadd.f32 0.0, %v3315
        %v3317 = vpop.f32.mrf.mxu0
        %v3318 = vpop.f32.mrf.mxu0
        %v3319 = vadd.f32 0.0, %v3318
        %v3320 = vpop.f32.mrf.mxu0
        %3321 = vmatprep.mubr.bf16.mxu0 0
        %3322 = vmatmul.mubr.bf16.gmra.mxu0 %v3169
        %v3323 = vpop.f32.mrf.mxu0
        %v3324 = vadd.f32 0.0, %v3323
        %v3325 = vpop.f32.mrf.mxu0
        %v3326 = vpop.f32.mrf.mxu0
        %v3327 = vadd.f32 0.0, %v3326
        %v3328 = vpop.f32.mrf.mxu0
        %3329 = vmatprep.mubr.bf16.mxu0 0
        %3330 = vmatmul.mubr.bf16.gmra.mxu0 %v3170
        %v3331 = vpop.f32.mrf.mxu0
        %v3332 = vadd.f32 0.0, %v3331
        %v3333 = vpop.f32.mrf.mxu0
        %v3334 = vpop.f32.mrf.mxu0
        %v3335 = vadd.f32 0.0, %v3334
        %v3336 = vpop.f32.mrf.mxu0
        %3337 = vmatprep.mubr.bf16.mxu0 0
        %3338 = vmatmul.mubr.bf16.gmra.mxu0 %v3171
        %v3339 = vpop.f32.mrf.mxu0
        %v3340 = vadd.f32 0.0, %v3339
        %v3341 = vpop.f32.mrf.mxu0
        %v3342 = vpop.f32.mrf.mxu0
        %v3343 = vadd.f32 0.0, %v3342
        %v3344 = vpop.f32.mrf.mxu0
        %3345 = vmatprep.mubr.bf16.mxu0 0
        %3346 = vmatmul.mubr.bf16.gmra.mxu0 %v3172
        %v3347 = vpop.f32.mrf.mxu0
        %v3348 = vadd.f32 0.0, %v3347
        %v3349 = vpop.f32.mrf.mxu0
        %v3350 = vpop.f32.mrf.mxu0
        %v3351 = vadd.f32 0.0, %v3350
        %v3352 = vpop.f32.mrf.mxu0
        %3353 = vmatprep.mubr.bf16.mxu0 0
        %3354 = vmatmul.mubr.bf16.gmra.mxu0 %v3173
        %v3355 = vpop.f32.mrf.mxu0
        %v3356 = vadd.f32 0.0, %v3355
        %v3357 = vpop.f32.mrf.mxu0
        %v3358 = vpop.f32.mrf.mxu0
        %v3359 = vadd.f32 0.0, %v3358
        %v3360 = vpop.f32.mrf.mxu0
        %3361 = vmatprep.mubr.bf16.mxu0 0
        %3362 = vmatmul.mubr.bf16.gmra.mxu0 %v3174
        %v3363 = vpop.f32.mrf.mxu0
        %v3364 = vadd.f32 0.0, %v3363
        %v3365 = vpop.f32.mrf.mxu0
        %v3366 = vpop.f32.mrf.mxu0
        %v3367 = vadd.f32 0.0, %v3366
        %v3368 = vpop.f32.mrf.mxu0
        %3369 = vmatprep.mubr.bf16.mxu0 0
        %3370 = vmatmul.mubr.bf16.gmra.mxu0 %v3175
        %v3371 = vpop.f32.mrf.mxu0
        %v3372 = vadd.f32 0.0, %v3371
        %v3373 = vpop.f32.mrf.mxu0
        %v3374 = vpop.f32.mrf.mxu0
        %v3375 = vadd.f32 0.0, %v3374
        %v3376 = vpop.f32.mrf.mxu0
        %3377 = vmatprep.mubr.bf16.mxu0 0
        %3378 = vmatmul.mubr.bf16.gmra.mxu0 %v3176
        %v3379 = vpop.f32.mrf.mxu0
        %v3380 = vadd.f32 0.0, %v3379
        %v3381 = vpop.f32.mrf.mxu0
        %v3382 = vpop.f32.mrf.mxu0
        %v3383 = vadd.f32 0.0, %v3382
        %v3384 = vpop.f32.mrf.mxu0
        %3385 = vdwg.mxu0
        %v3386 = vmax.f32 %v3260, 0.0
        %v3387 = vmax.f32 %v3263, 0.0
        %v3388 = vmax.f32 %v3268, 0.0
        %v3389 = vmax.f32 %v3271, 0.0
        %v3390 = vmax.f32 %v3276, 0.0
        %v3391 = vmax.f32 %v3279, 0.0
        %v3392 = vmax.f32 %v3284, 0.0
        %v3393 = vmax.f32 %v3287, 0.0
        %v3394 = vmax.f32 %v3292, 0.0
        %v3395 = vmax.f32 %v3295, 0.0
        %v3396 = vmax.f32 %v3300, 0.0
        %v3397 = vmax.f32 %v3303, 0.0
        %v3398 = vmax.f32 %v3308, 0.0
        %v3399 = vmax.f32 %v3311, 0.0
        %v3400 = vmax.f32 %v3316, 0.0
        %v3401 = vmax.f32 %v3319, 0.0
        %v3402 = vmax.f32 %v3324, 0.0
        %v3403 = vmax.f32 %v3327, 0.0
        %v3404 = vmax.f32 %v3332, 0.0
        %v3405 = vmax.f32 %v3335, 0.0
        %v3406 = vmax.f32 %v3340, 0.0
        %v3407 = vmax.f32 %v3343, 0.0
        %v3408 = vmax.f32 %v3348, 0.0
        %v3409 = vmax.f32 %v3351, 0.0
        %v3410 = vmax.f32 %v3356, 0.0
        %v3411 = vmax.f32 %v3359, 0.0
        %v3412 = vmax.f32 %v3364, 0.0
        %v3413 = vmax.f32 %v3367, 0.0
        %v3414 = vmax.f32 %v3372, 0.0
        %v3415 = vmax.f32 %v3375, 0.0
        %v3416 = vmax.f32 %v3380, 0.0
        %v3417 = vmax.f32 %v3383, 0.0
        %v3418 = vpack.c.bf16 %v3387, %v3386
        %v3419 = vpack.c.bf16 %v3389, %v3388
        %v3420 = vpack.c.bf16 %v3391, %v3390
        %v3421 = vpack.c.bf16 %v3393, %v3392
        %v3422 = vpack.c.bf16 %v3395, %v3394
        %v3423 = vpack.c.bf16 %v3397, %v3396
        %v3424 = vpack.c.bf16 %v3399, %v3398
        %v3425 = vpack.c.bf16 %v3401, %v3400
        %v3426 = vpack.c.bf16 %v3403, %v3402
        %v3427 = vpack.c.bf16 %v3405, %v3404
        %v3428 = vpack.c.bf16 %v3407, %v3406
        %v3429 = vpack.c.bf16 %v3409, %v3408
        %v3430 = vpack.c.bf16 %v3411, %v3410
        %v3431 = vpack.c.bf16 %v3413, %v3412
        %v3432 = vpack.c.bf16 %v3415, %v3414
        %v3433 = vpack.c.bf16 %v3417, %v3416
        %v3435 = vlaneseq
        %v3436 = vshrl.u32 %v3435, 7
        %v3437 = vsub.s32 0, %v3436
        %v3438 = vrot.slane %v1681, %v3437
        %v3456 = vunpack.c.l.b16 %v1649
        %v3457 = vunpack.c.l.b16 %v1650
        %v3458 = vunpack.c.l.b16 %v1651
        %v3459 = vunpack.c.l.b16 %v1652
        %v3460 = vunpack.c.l.b16 %v1653
        %v3461 = vunpack.c.l.b16 %v1654
        %v3462 = vunpack.c.l.b16 %v1655
        %v3463 = vunpack.c.l.b16 %v1656
        %v3464 = vunpack.c.l.b16 %v1657
        %v3465 = vunpack.c.l.b16 %v1658
        %v3466 = vunpack.c.l.b16 %v1659
        %v3467 = vunpack.c.l.b16 %v1660
        %v3468 = vunpack.c.l.b16 %v1661
        %v3469 = vunpack.c.l.b16 %v1662
        %v3470 = vunpack.c.l.b16 %v1663
        %v3471 = vunpack.c.l.b16 %v1664
        %v3472 = vpack.c.b16 %v3457, %v3456
        %v3473 = vpack.c.b16 %v3459, %v3458
        %v3474 = vpack.c.b16 %v3461, %v3460
        %v3475 = vpack.c.b16 %v3463, %v3462
        %v3476 = vpack.c.b16 %v3465, %v3464
        %v3477 = vpack.c.b16 %v3467, %v3466
        %v3478 = vpack.c.b16 %v3469, %v3468
        %v3479 = vpack.c.b16 %v3471, %v3470
        %3488 = vmatprep.subr.bf16.mxu0 0
        %3489 = vmatpush1.bf16.msra.mxu0 %v3479
        %3490 = vmatprep.subr.bf16.mxu0 0
        %3491 = vmatpush1.bf16.msra.mxu0 %v3478
        %3492 = vmatprep.subr.bf16.mxu0 0
        %3493 = vmatpush1.bf16.msra.mxu0 %v3477
        %3494 = vmatprep.subr.bf16.mxu0 0
        %3495 = vmatpush1.bf16.msra.mxu0 %v3476
        %3496 = vmatprep.subr.bf16.mxu0 0
        %3497 = vmatpush1.bf16.msra.mxu0 %v3475
        %3498 = vmatprep.subr.bf16.mxu0 0
        %3499 = vmatpush1.bf16.msra.mxu0 %v3474
        %3500 = vmatprep.subr.bf16.mxu0 0
        %3501 = vmatpush1.bf16.msra.mxu0 %v3473
        %3502 = vmatprep.subr.bf16.mxu0 0
        %3503 = vmatpush1.bf16.msra.mxu0 %v3472
        %3504 = vmatprep.subr.bf16.mxu0 0
        %3505 = vmatpush2.bf16.msra.mxu0 0
        %3506 = vmatprep.subr.bf16.mxu0 0
        %3507 = vmatpush2.bf16.msra.mxu0 0
        %3508 = vmatprep.subr.bf16.mxu0 0
        %3509 = vmatpush2.bf16.msra.mxu0 0
        %3510 = vmatprep.subr.bf16.mxu0 0
        %3511 = vmatpush2.bf16.msra.mxu0 0
        %3512 = vmatprep.subr.bf16.mxu0 0
        %3513 = vmatpush2.bf16.msra.mxu0 0
        %3514 = vmatprep.subr.bf16.mxu0 0
        %3515 = vmatpush2.bf16.msra.mxu0 0
        %3516 = vmatprep.subr.bf16.mxu0 0
        %3517 = vmatpush2.bf16.msra.mxu0 0
        %3518 = vmatprep.subr.bf16.mxu0 0
        %3519 = vmatpush2.bf16.msra.mxu0 0
        %3520 = vmatprep.mubr.bf16.mxu0 0
        %3521 = vmatmul.mubr.bf16.gmra.mxu0 %v3418
        %v3522 = vpop.f32.mrf.mxu0
        %v3523 = vadd.f32 %v3438, %v3522
        %v3524 = vpop.f32.mrf.mxu0
        %v3525 = vpop.f32.mrf.mxu0
        %v3526 = vadd.f32 %v3438, %v3525
        %v3527 = vpop.f32.mrf.mxu0
        %3528 = vmatprep.mubr.bf16.mxu0 0
        %3529 = vmatmul.mubr.bf16.gmra.mxu0 %v3419
        %v3530 = vpop.f32.mrf.mxu0
        %v3531 = vadd.f32 %v3438, %v3530
        %v3532 = vpop.f32.mrf.mxu0
        %v3533 = vpop.f32.mrf.mxu0
        %v3534 = vadd.f32 %v3438, %v3533
        %v3535 = vpop.f32.mrf.mxu0
        %3536 = vmatprep.mubr.bf16.mxu0 0
        %3537 = vmatmul.mubr.bf16.gmra.mxu0 %v3420
        %v3538 = vpop.f32.mrf.mxu0
        %v3539 = vadd.f32 %v3438, %v3538
        %v3540 = vpop.f32.mrf.mxu0
        %v3541 = vpop.f32.mrf.mxu0
        %v3542 = vadd.f32 %v3438, %v3541
        %v3543 = vpop.f32.mrf.mxu0
        %3544 = vmatprep.mubr.bf16.mxu0 0
        %3545 = vmatmul.mubr.bf16.gmra.mxu0 %v3421
        %v3546 = vpop.f32.mrf.mxu0
        %v3547 = vadd.f32 %v3438, %v3546
        %v3548 = vpop.f32.mrf.mxu0
        %v3549 = vpop.f32.mrf.mxu0
        %v3550 = vadd.f32 %v3438, %v3549
        %v3551 = vpop.f32.mrf.mxu0
        %3552 = vmatprep.mubr.bf16.mxu0 0
        %3553 = vmatmul.mubr.bf16.gmra.mxu0 %v3422
        %v3554 = vpop.f32.mrf.mxu0
        %v3555 = vadd.f32 %v3438, %v3554
        %v3556 = vpop.f32.mrf.mxu0
        %v3557 = vpop.f32.mrf.mxu0
        %v3558 = vadd.f32 %v3438, %v3557
        %v3559 = vpop.f32.mrf.mxu0
        %3560 = vmatprep.mubr.bf16.mxu0 0
        %3561 = vmatmul.mubr.bf16.gmra.mxu0 %v3423
        %v3562 = vpop.f32.mrf.mxu0
        %v3563 = vadd.f32 %v3438, %v3562
        %v3564 = vpop.f32.mrf.mxu0
        %v3565 = vpop.f32.mrf.mxu0
        %v3566 = vadd.f32 %v3438, %v3565
        %v3567 = vpop.f32.mrf.mxu0
        %3568 = vmatprep.mubr.bf16.mxu0 0
        %3569 = vmatmul.mubr.bf16.gmra.mxu0 %v3424
        %v3570 = vpop.f32.mrf.mxu0
        %v3571 = vadd.f32 %v3438, %v3570
        %v3572 = vpop.f32.mrf.mxu0
        %v3573 = vpop.f32.mrf.mxu0
        %v3574 = vadd.f32 %v3438, %v3573
        %v3575 = vpop.f32.mrf.mxu0
        %3576 = vmatprep.mubr.bf16.mxu0 0
        %3577 = vmatmul.mubr.bf16.gmra.mxu0 %v3425
        %v3578 = vpop.f32.mrf.mxu0
        %v3579 = vadd.f32 %v3438, %v3578
        %v3580 = vpop.f32.mrf.mxu0
        %v3581 = vpop.f32.mrf.mxu0
        %v3582 = vadd.f32 %v3438, %v3581
        %v3583 = vpop.f32.mrf.mxu0
        %3584 = vmatprep.mubr.bf16.mxu0 0
        %3585 = vmatmul.mubr.bf16.gmra.mxu0 %v3426
        %v3586 = vpop.f32.mrf.mxu0
        %v3587 = vadd.f32 %v3438, %v3586
        %v3588 = vpop.f32.mrf.mxu0
        %v3589 = vpop.f32.mrf.mxu0
        %v3590 = vadd.f32 %v3438, %v3589
        %v3591 = vpop.f32.mrf.mxu0
        %3592 = vmatprep.mubr.bf16.mxu0 0
        %3593 = vmatmul.mubr.bf16.gmra.mxu0 %v3427
        %v3594 = vpop.f32.mrf.mxu0
        %v3595 = vadd.f32 %v3438, %v3594
        %v3596 = vpop.f32.mrf.mxu0
        %v3597 = vpop.f32.mrf.mxu0
        %v3598 = vadd.f32 %v3438, %v3597
        %v3599 = vpop.f32.mrf.mxu0
        %3600 = vmatprep.mubr.bf16.mxu0 0
        %3601 = vmatmul.mubr.bf16.gmra.mxu0 %v3428
        %v3602 = vpop.f32.mrf.mxu0
        %v3603 = vadd.f32 %v3438, %v3602
        %v3604 = vpop.f32.mrf.mxu0
        %v3605 = vpop.f32.mrf.mxu0
        %v3606 = vadd.f32 %v3438, %v3605
        %v3607 = vpop.f32.mrf.mxu0
        %3608 = vmatprep.mubr.bf16.mxu0 0
        %3609 = vmatmul.mubr.bf16.gmra.mxu0 %v3429
        %v3610 = vpop.f32.mrf.mxu0
        %v3611 = vadd.f32 %v3438, %v3610
        %v3612 = vpop.f32.mrf.mxu0
        %v3613 = vpop.f32.mrf.mxu0
        %v3614 = vadd.f32 %v3438, %v3613
        %v3615 = vpop.f32.mrf.mxu0
        %3616 = vmatprep.mubr.bf16.mxu0 0
        %3617 = vmatmul.mubr.bf16.gmra.mxu0 %v3430
        %v3618 = vpop.f32.mrf.mxu0
        %v3619 = vadd.f32 %v3438, %v3618
        %v3620 = vpop.f32.mrf.mxu0
        %v3621 = vpop.f32.mrf.mxu0
        %v3622 = vadd.f32 %v3438, %v3621
        %v3623 = vpop.f32.mrf.mxu0
        %3624 = vmatprep.mubr.bf16.mxu0 0
        %3625 = vmatmul.mubr.bf16.gmra.mxu0 %v3431
        %v3626 = vpop.f32.mrf.mxu0
        %v3627 = vadd.f32 %v3438, %v3626
        %v3628 = vpop.f32.mrf.mxu0
        %v3629 = vpop.f32.mrf.mxu0
        %v3630 = vadd.f32 %v3438, %v3629
        %v3631 = vpop.f32.mrf.mxu0
        %3632 = vmatprep.mubr.bf16.mxu0 0
        %3633 = vmatmul.mubr.bf16.gmra.mxu0 %v3432
        %v3634 = vpop.f32.mrf.mxu0
        %v3635 = vadd.f32 %v3438, %v3634
        %v3636 = vpop.f32.mrf.mxu0
        %v3637 = vpop.f32.mrf.mxu0
        %v3638 = vadd.f32 %v3438, %v3637
        %v3639 = vpop.f32.mrf.mxu0
        %3640 = vmatprep.mubr.bf16.mxu0 0
        %3641 = vmatmul.mubr.bf16.gmra.mxu0 %v3433
        %v3642 = vpop.f32.mrf.mxu0
        %v3643 = vadd.f32 %v3438, %v3642
        %v3644 = vpop.f32.mrf.mxu0
        %v3645 = vpop.f32.mrf.mxu0
        %v3646 = vadd.f32 %v3438, %v3645
        %v3647 = vpop.f32.mrf.mxu0
        %3648 = vdwg.mxu0
        %v3649 = vmax.f32 %v3523, 0.0
        %v3650 = vmax.f32 %v3526, 0.0
        %v3651 = vmax.f32 %v3531, 0.0
        %v3652 = vmax.f32 %v3534, 0.0
        %v3653 = vmax.f32 %v3539, 0.0
        %v3654 = vmax.f32 %v3542, 0.0
        %v3655 = vmax.f32 %v3547, 0.0
        %v3656 = vmax.f32 %v3550, 0.0
        %v3657 = vmax.f32 %v3555, 0.0
        %v3658 = vmax.f32 %v3558, 0.0
        %v3659 = vmax.f32 %v3563, 0.0
        %v3660 = vmax.f32 %v3566, 0.0
        %v3661 = vmax.f32 %v3571, 0.0
        %v3662 = vmax.f32 %v3574, 0.0
        %v3663 = vmax.f32 %v3579, 0.0
        %v3664 = vmax.f32 %v3582, 0.0
        %v3665 = vmax.f32 %v3587, 0.0
        %v3666 = vmax.f32 %v3590, 0.0
        %v3667 = vmax.f32 %v3595, 0.0
        %v3668 = vmax.f32 %v3598, 0.0
        %v3669 = vmax.f32 %v3603, 0.0
        %v3670 = vmax.f32 %v3606, 0.0
        %v3671 = vmax.f32 %v3611, 0.0
        %v3672 = vmax.f32 %v3614, 0.0
        %v3673 = vmax.f32 %v3619, 0.0
        %v3674 = vmax.f32 %v3622, 0.0
        %v3675 = vmax.f32 %v3627, 0.0
        %v3676 = vmax.f32 %v3630, 0.0
        %v3677 = vmax.f32 %v3635, 0.0
        %v3678 = vmax.f32 %v3638, 0.0
        %v3679 = vmax.f32 %v3643, 0.0
        %v3680 = vmax.f32 %v3646, 0.0
        %v3681 = vpack.c.bf16 %v3650, %v3649
        %v3682 = vpack.c.bf16 %v3652, %v3651
        %v3683 = vpack.c.bf16 %v3654, %v3653
        %v3684 = vpack.c.bf16 %v3656, %v3655
        %v3685 = vpack.c.bf16 %v3658, %v3657
        %v3686 = vpack.c.bf16 %v3660, %v3659
        %v3687 = vpack.c.bf16 %v3662, %v3661
        %v3688 = vpack.c.bf16 %v3664, %v3663
        %v3689 = vpack.c.bf16 %v3666, %v3665
        %v3690 = vpack.c.bf16 %v3668, %v3667
        %v3691 = vpack.c.bf16 %v3670, %v3669
        %v3692 = vpack.c.bf16 %v3672, %v3671
        %v3693 = vpack.c.bf16 %v3674, %v3673
        %v3694 = vpack.c.bf16 %v3676, %v3675
        %v3695 = vpack.c.bf16 %v3678, %v3677
        %v3696 = vpack.c.bf16 %v3680, %v3679
        %v3698 = vlaneseq
        %v3699 = vshrl.u32 %v3698, 7
        %v3700 = vsub.s32 0, %v3699
        %v3701 = vrot.slane %v1683, %v3700
        %v3719 = vunpack.c.l.b16 %v1665
        %v3720 = vunpack.c.l.b16 %v1666
        %v3721 = vunpack.c.l.b16 %v1667
        %v3722 = vunpack.c.l.b16 %v1668
        %v3723 = vunpack.c.l.b16 %v1669
        %v3724 = vunpack.c.l.b16 %v1670
        %v3725 = vunpack.c.l.b16 %v1671
        %v3726 = vunpack.c.l.b16 %v1672
        %v3727 = vunpack.c.l.b16 %v1673
        %v3728 = vunpack.c.l.b16 %v1674
        %v3729 = vunpack.c.l.b16 %v1675
        %v3730 = vunpack.c.l.b16 %v1676
        %v3731 = vunpack.c.l.b16 %v1677
        %v3732 = vunpack.c.l.b16 %v1678
        %v3733 = vunpack.c.l.b16 %v1679
        %v3734 = vunpack.c.l.b16 %v1680
        %v3735 = vpack.c.b16 %v3720, %v3719
        %v3736 = vpack.c.b16 %v3722, %v3721
        %v3737 = vpack.c.b16 %v3724, %v3723
        %v3738 = vpack.c.b16 %v3726, %v3725
        %v3739 = vpack.c.b16 %v3728, %v3727
        %v3740 = vpack.c.b16 %v3730, %v3729
        %v3741 = vpack.c.b16 %v3732, %v3731
        %v3742 = vpack.c.b16 %v3734, %v3733
        %3751 = vmatprep.subr.bf16.mxu0 0
        %3752 = vmatpush1.bf16.msra.mxu0 %v3742
        %3753 = vmatprep.subr.bf16.mxu0 0
        %3754 = vmatpush1.bf16.msra.mxu0 %v3741
        %3755 = vmatprep.subr.bf16.mxu0 0
        %3756 = vmatpush1.bf16.msra.mxu0 %v3740
        %3757 = vmatprep.subr.bf16.mxu0 0
        %3758 = vmatpush1.bf16.msra.mxu0 %v3739
        %3759 = vmatprep.subr.bf16.mxu0 0
        %3760 = vmatpush1.bf16.msra.mxu0 %v3738
        %3761 = vmatprep.subr.bf16.mxu0 0
        %3762 = vmatpush1.bf16.msra.mxu0 %v3737
        %3763 = vmatprep.subr.bf16.mxu0 0
        %3764 = vmatpush1.bf16.msra.mxu0 %v3736
        %3765 = vmatprep.subr.bf16.mxu0 0
        %3766 = vmatpush1.bf16.msra.mxu0 %v3735
        %3767 = vmatprep.subr.bf16.mxu0 0
        %3768 = vmatpush2.bf16.msra.mxu0 0
        %3769 = vmatprep.subr.bf16.mxu0 0
        %3770 = vmatpush2.bf16.msra.mxu0 0
        %3771 = vmatprep.subr.bf16.mxu0 0
        %3772 = vmatpush2.bf16.msra.mxu0 0
        %3773 = vmatprep.subr.bf16.mxu0 0
        %3774 = vmatpush2.bf16.msra.mxu0 0
        %3775 = vmatprep.subr.bf16.mxu0 0
        %3776 = vmatpush2.bf16.msra.mxu0 0
        %3777 = vmatprep.subr.bf16.mxu0 0
        %3778 = vmatpush2.bf16.msra.mxu0 0
        %3779 = vmatprep.subr.bf16.mxu0 0
        %3780 = vmatpush2.bf16.msra.mxu0 0
        %3781 = vmatprep.subr.bf16.mxu0 0
        %3782 = vmatpush2.bf16.msra.mxu0 0
        %3783 = vmatprep.mubr.bf16.mxu0 0
        %3784 = vmatmul.mubr.bf16.gmra.mxu0 %v3681
        %v3785 = vpop.f32.mrf.mxu0
        %v3786 = vadd.f32 %v3701, %v3785
        %v3787 = vpop.f32.mrf.mxu0
        %v3788 = vpop.f32.mrf.mxu0
        %v3789 = vadd.f32 %v3701, %v3788
        %v3790 = vpop.f32.mrf.mxu0
        %3791 = vmatprep.mubr.bf16.mxu0 0
        %3792 = vmatmul.mubr.bf16.gmra.mxu0 %v3682
        %v3793 = vpop.f32.mrf.mxu0
        %v3794 = vadd.f32 %v3701, %v3793
        %v3795 = vpop.f32.mrf.mxu0
        %v3796 = vpop.f32.mrf.mxu0
        %v3797 = vadd.f32 %v3701, %v3796
        %v3798 = vpop.f32.mrf.mxu0
        %3799 = vmatprep.mubr.bf16.mxu0 0
        %3800 = vmatmul.mubr.bf16.gmra.mxu0 %v3683
        %v3801 = vpop.f32.mrf.mxu0
        %v3802 = vadd.f32 %v3701, %v3801
        %v3803 = vpop.f32.mrf.mxu0
        %v3804 = vpop.f32.mrf.mxu0
        %v3805 = vadd.f32 %v3701, %v3804
        %v3806 = vpop.f32.mrf.mxu0
        %3807 = vmatprep.mubr.bf16.mxu0 0
        %3808 = vmatmul.mubr.bf16.gmra.mxu0 %v3684
        %v3809 = vpop.f32.mrf.mxu0
        %v3810 = vadd.f32 %v3701, %v3809
        %v3811 = vpop.f32.mrf.mxu0
        %v3812 = vpop.f32.mrf.mxu0
        %v3813 = vadd.f32 %v3701, %v3812
        %v3814 = vpop.f32.mrf.mxu0
        %3815 = vmatprep.mubr.bf16.mxu0 0
        %3816 = vmatmul.mubr.bf16.gmra.mxu0 %v3685
        %v3817 = vpop.f32.mrf.mxu0
        %v3818 = vadd.f32 %v3701, %v3817
        %v3819 = vpop.f32.mrf.mxu0
        %v3820 = vpop.f32.mrf.mxu0
        %v3821 = vadd.f32 %v3701, %v3820
        %v3822 = vpop.f32.mrf.mxu0
        %3823 = vmatprep.mubr.bf16.mxu0 0
        %3824 = vmatmul.mubr.bf16.gmra.mxu0 %v3686
        %v3825 = vpop.f32.mrf.mxu0
        %v3826 = vadd.f32 %v3701, %v3825
        %v3827 = vpop.f32.mrf.mxu0
        %v3828 = vpop.f32.mrf.mxu0
        %v3829 = vadd.f32 %v3701, %v3828
        %v3830 = vpop.f32.mrf.mxu0
        %3831 = vmatprep.mubr.bf16.mxu0 0
        %3832 = vmatmul.mubr.bf16.gmra.mxu0 %v3687
        %v3833 = vpop.f32.mrf.mxu0
        %v3834 = vadd.f32 %v3701, %v3833
        %v3835 = vpop.f32.mrf.mxu0
        %v3836 = vpop.f32.mrf.mxu0
        %v3837 = vadd.f32 %v3701, %v3836
        %v3838 = vpop.f32.mrf.mxu0
        %3839 = vmatprep.mubr.bf16.mxu0 0
        %3840 = vmatmul.mubr.bf16.gmra.mxu0 %v3688
        %v3841 = vpop.f32.mrf.mxu0
        %v3842 = vadd.f32 %v3701, %v3841
        %v3843 = vpop.f32.mrf.mxu0
        %v3844 = vpop.f32.mrf.mxu0
        %v3845 = vadd.f32 %v3701, %v3844
        %v3846 = vpop.f32.mrf.mxu0
        %3847 = vmatprep.mubr.bf16.mxu0 0
        %3848 = vmatmul.mubr.bf16.gmra.mxu0 %v3689
        %v3849 = vpop.f32.mrf.mxu0
        %v3850 = vadd.f32 %v3701, %v3849
        %v3851 = vpop.f32.mrf.mxu0
        %v3852 = vpop.f32.mrf.mxu0
        %v3853 = vadd.f32 %v3701, %v3852
        %v3854 = vpop.f32.mrf.mxu0
        %3855 = vmatprep.mubr.bf16.mxu0 0
        %3856 = vmatmul.mubr.bf16.gmra.mxu0 %v3690
        %v3857 = vpop.f32.mrf.mxu0
        %v3858 = vadd.f32 %v3701, %v3857
        %v3859 = vpop.f32.mrf.mxu0
        %v3860 = vpop.f32.mrf.mxu0
        %v3861 = vadd.f32 %v3701, %v3860
        %v3862 = vpop.f32.mrf.mxu0
        %3863 = vmatprep.mubr.bf16.mxu0 0
        %3864 = vmatmul.mubr.bf16.gmra.mxu0 %v3691
        %v3865 = vpop.f32.mrf.mxu0
        %v3866 = vadd.f32 %v3701, %v3865
        %v3867 = vpop.f32.mrf.mxu0
        %v3868 = vpop.f32.mrf.mxu0
        %v3869 = vadd.f32 %v3701, %v3868
        %v3870 = vpop.f32.mrf.mxu0
        %3871 = vmatprep.mubr.bf16.mxu0 0
        %3872 = vmatmul.mubr.bf16.gmra.mxu0 %v3692
        %v3873 = vpop.f32.mrf.mxu0
        %v3874 = vadd.f32 %v3701, %v3873
        %v3875 = vpop.f32.mrf.mxu0
        %v3876 = vpop.f32.mrf.mxu0
        %v3877 = vadd.f32 %v3701, %v3876
        %v3878 = vpop.f32.mrf.mxu0
        %3879 = vmatprep.mubr.bf16.mxu0 0
        %3880 = vmatmul.mubr.bf16.gmra.mxu0 %v3693
        %v3881 = vpop.f32.mrf.mxu0
        %v3882 = vadd.f32 %v3701, %v3881
        %v3883 = vpop.f32.mrf.mxu0
        %v3884 = vpop.f32.mrf.mxu0
        %v3885 = vadd.f32 %v3701, %v3884
        %v3886 = vpop.f32.mrf.mxu0
        %3887 = vmatprep.mubr.bf16.mxu0 0
        %3888 = vmatmul.mubr.bf16.gmra.mxu0 %v3694
        %v3889 = vpop.f32.mrf.mxu0
        %v3890 = vadd.f32 %v3701, %v3889
        %v3891 = vpop.f32.mrf.mxu0
        %v3892 = vpop.f32.mrf.mxu0
        %v3893 = vadd.f32 %v3701, %v3892
        %v3894 = vpop.f32.mrf.mxu0
        %3895 = vmatprep.mubr.bf16.mxu0 0
        %3896 = vmatmul.mubr.bf16.gmra.mxu0 %v3695
        %v3897 = vpop.f32.mrf.mxu0
        %v3898 = vadd.f32 %v3701, %v3897
        %v3899 = vpop.f32.mrf.mxu0
        %v3900 = vpop.f32.mrf.mxu0
        %v3901 = vadd.f32 %v3701, %v3900
        %v3902 = vpop.f32.mrf.mxu0
        %3903 = vmatprep.mubr.bf16.mxu0 0
        %3904 = vmatmul.mubr.bf16.gmra.mxu0 %v3696
        %v3905 = vpop.f32.mrf.mxu0
        %v3906 = vadd.f32 %v3701, %v3905
        %v3907 = vpop.f32.mrf.mxu0
        %v3908 = vpop.f32.mrf.mxu0
        %v3909 = vadd.f32 %v3701, %v3908
        %v3910 = vpop.f32.mrf.mxu0
        %3911 = vdwg.mxu0
        %v3912 = vadd.f32 %v3386, %v3786
        %v3913 = vadd.f32 %v3387, %v3789
        %v3914 = vadd.f32 %v3388, %v3794
        %v3915 = vadd.f32 %v3389, %v3797
        %v3916 = vadd.f32 %v3390, %v3802
        %v3917 = vadd.f32 %v3391, %v3805
        %v3918 = vadd.f32 %v3392, %v3810
        %v3919 = vadd.f32 %v3393, %v3813
        %v3920 = vadd.f32 %v3394, %v3818
        %v3921 = vadd.f32 %v3395, %v3821
        %v3922 = vadd.f32 %v3396, %v3826
        %v3923 = vadd.f32 %v3397, %v3829
        %v3924 = vadd.f32 %v3398, %v3834
        %v3925 = vadd.f32 %v3399, %v3837
        %v3926 = vadd.f32 %v3400, %v3842
        %v3927 = vadd.f32 %v3401, %v3845
        %v3928 = vadd.f32 %v3402, %v3850
        %v3929 = vadd.f32 %v3403, %v3853
        %v3930 = vadd.f32 %v3404, %v3858
        %v3931 = vadd.f32 %v3405, %v3861
        %v3932 = vadd.f32 %v3406, %v3866
        %v3933 = vadd.f32 %v3407, %v3869
        %v3934 = vadd.f32 %v3408, %v3874
        %v3935 = vadd.f32 %v3409, %v3877
        %v3936 = vadd.f32 %v3410, %v3882
        %v3937 = vadd.f32 %v3411, %v3885
        %v3938 = vadd.f32 %v3412, %v3890
        %v3939 = vadd.f32 %v3413, %v3893
        %v3940 = vadd.f32 %v3414, %v3898
        %v3941 = vadd.f32 %v3415, %v3901
        %v3942 = vadd.f32 %v3416, %v3906
        %v3943 = vadd.f32 %v3417, %v3909
        %3944 = vadd.xlane.f32.xlu0 %v3912
        %v3945 = vpop.xlane.xlu0 %3944
        %3946 = vadd.xlane.f32.xlu0 %v3913
        %v3947 = vpop.xlane.xlu0 %3946
        %3948 = vadd.xlane.f32.xlu0 %v3914
        %v3949 = vpop.xlane.xlu0 %3948
        %3950 = vadd.xlane.f32.xlu0 %v3915
        %v3951 = vpop.xlane.xlu0 %3950
        %3952 = vadd.xlane.f32.xlu0 %v3916
        %v3953 = vpop.xlane.xlu0 %3952
        %3954 = vadd.xlane.f32.xlu0 %v3917
        %v3955 = vpop.xlane.xlu0 %3954
        %3956 = vadd.xlane.f32.xlu0 %v3918
        %v3957 = vpop.xlane.xlu0 %3956
        %3958 = vadd.xlane.f32.xlu0 %v3919
        %v3959 = vpop.xlane.xlu0 %3958
        %3960 = vadd.xlane.f32.xlu0 %v3920
        %v3961 = vpop.xlane.xlu0 %3960
        %3962 = vadd.xlane.f32.xlu0 %v3921
        %v3963 = vpop.xlane.xlu0 %3962
        %3964 = vadd.xlane.f32.xlu0 %v3922
        %v3965 = vpop.xlane.xlu0 %3964
        %3966 = vadd.xlane.f32.xlu0 %v3923
        %v3967 = vpop.xlane.xlu0 %3966
        %3968 = vadd.xlane.f32.xlu0 %v3924
        %v3969 = vpop.xlane.xlu0 %3968
        %3970 = vadd.xlane.f32.xlu0 %v3925
        %v3971 = vpop.xlane.xlu0 %3970
        %3972 = vadd.xlane.f32.xlu0 %v3926
        %v3973 = vpop.xlane.xlu0 %3972
        %3974 = vadd.xlane.f32.xlu0 %v3927
        %v3975 = vpop.xlane.xlu0 %3974
        %3976 = vadd.xlane.f32.xlu0 %v3928
        %v3977 = vpop.xlane.xlu0 %3976
        %3978 = vadd.xlane.f32.xlu0 %v3929
        %v3979 = vpop.xlane.xlu0 %3978
        %3980 = vadd.xlane.f32.xlu0 %v3930
        %v3981 = vpop.xlane.xlu0 %3980
        %3982 = vadd.xlane.f32.xlu0 %v3931
        %v3983 = vpop.xlane.xlu0 %3982
        %3984 = vadd.xlane.f32.xlu0 %v3932
        %v3985 = vpop.xlane.xlu0 %3984
        %3986 = vadd.xlane.f32.xlu0 %v3933
        %v3987 = vpop.xlane.xlu0 %3986
        %3988 = vadd.xlane.f32.xlu0 %v3934
        %v3989 = vpop.xlane.xlu0 %3988
        %3990 = vadd.xlane.f32.xlu0 %v3935
        %v3991 = vpop.xlane.xlu0 %3990
        %3992 = vadd.xlane.f32.xlu0 %v3936
        %v3993 = vpop.xlane.xlu0 %3992
        %3994 = vadd.xlane.f32.xlu0 %v3937
        %v3995 = vpop.xlane.xlu0 %3994
        %3996 = vadd.xlane.f32.xlu0 %v3938
        %v3997 = vpop.xlane.xlu0 %3996
        %3998 = vadd.xlane.f32.xlu0 %v3939
        %v3999 = vpop.xlane.xlu0 %3998
        %4000 = vadd.xlane.f32.xlu0 %v3940
        %v4001 = vpop.xlane.xlu0 %4000
        %4002 = vadd.xlane.f32.xlu0 %v3941
        %v4003 = vpop.xlane.xlu0 %4002
        %4004 = vadd.xlane.f32.xlu0 %v3942
        %v4005 = vpop.xlane.xlu0 %4004
        %4006 = vadd.xlane.f32.xlu0 %v3943
        %v4007 = vpop.xlane.xlu0 %4006
        %v4008 = vrcp.pop 128.0
        %v4009 = vmul.f32 %v3945, %v4008
        %v4010 = vmul.f32 %v3947, %v4008
        %v4011 = vmul.f32 %v3949, %v4008
        %v4012 = vmul.f32 %v3951, %v4008
        %v4013 = vmul.f32 %v3953, %v4008
        %v4014 = vmul.f32 %v3955, %v4008
        %v4015 = vmul.f32 %v3957, %v4008
        %v4016 = vmul.f32 %v3959, %v4008
        %v4017 = vmul.f32 %v3961, %v4008
        %v4018 = vmul.f32 %v3963, %v4008
        %v4019 = vmul.f32 %v3965, %v4008
        %v4020 = vmul.f32 %v3967, %v4008
        %v4021 = vmul.f32 %v3969, %v4008
        %v4022 = vmul.f32 %v3971, %v4008
        %v4023 = vmul.f32 %v3973, %v4008
        %v4024 = vmul.f32 %v3975, %v4008
        %v4025 = vmul.f32 %v3977, %v4008
        %v4026 = vmul.f32 %v3979, %v4008
        %v4027 = vmul.f32 %v3981, %v4008
        %v4028 = vmul.f32 %v3983, %v4008
        %v4029 = vmul.f32 %v3985, %v4008
        %v4030 = vmul.f32 %v3987, %v4008
        %v4031 = vmul.f32 %v3989, %v4008
        %v4032 = vmul.f32 %v3991, %v4008
        %v4033 = vmul.f32 %v3993, %v4008
        %v4034 = vmul.f32 %v3995, %v4008
        %v4035 = vmul.f32 %v3997, %v4008
        %v4036 = vmul.f32 %v3999, %v4008
        %v4037 = vmul.f32 %v4001, %v4008
        %v4038 = vmul.f32 %v4003, %v4008
        %v4039 = vmul.f32 %v4005, %v4008
        %v4040 = vmul.f32 %v4007, %v4008
        %v4041 = vsub.f32 %v3912, %v4009
        %v4042 = vsub.f32 %v3913, %v4010
        %v4043 = vsub.f32 %v3914, %v4011
        %v4044 = vsub.f32 %v3915, %v4012
        %v4045 = vsub.f32 %v3916, %v4013
        %v4046 = vsub.f32 %v3917, %v4014
        %v4047 = vsub.f32 %v3918, %v4015
        %v4048 = vsub.f32 %v3919, %v4016
        %v4049 = vsub.f32 %v3920, %v4017
        %v4050 = vsub.f32 %v3921, %v4018
        %v4051 = vsub.f32 %v3922, %v4019
        %v4052 = vsub.f32 %v3923, %v4020
        %v4053 = vsub.f32 %v3924, %v4021
        %v4054 = vsub.f32 %v3925, %v4022
        %v4055 = vsub.f32 %v3926, %v4023
        %v4056 = vsub.f32 %v3927, %v4024
        %v4057 = vsub.f32 %v3928, %v4025
        %v4058 = vsub.f32 %v3929, %v4026
        %v4059 = vsub.f32 %v3930, %v4027
        %v4060 = vsub.f32 %v3931, %v4028
        %v4061 = vsub.f32 %v3932, %v4029
        %v4062 = vsub.f32 %v3933, %v4030
        %v4063 = vsub.f32 %v3934, %v4031
        %v4064 = vsub.f32 %v3935, %v4032
        %v4065 = vsub.f32 %v3936, %v4033
        %v4066 = vsub.f32 %v3937, %v4034
        %v4067 = vsub.f32 %v3938, %v4035
        %v4068 = vsub.f32 %v3939, %v4036
        %v4069 = vsub.f32 %v3940, %v4037
        %v4070 = vsub.f32 %v3941, %v4038
        %v4071 = vsub.f32 %v3942, %v4039
        %v4072 = vsub.f32 %v3943, %v4040
        %v4073 = vmul.f32 %v4041, %v4041
        %v4074 = vmul.f32 %v4042, %v4042
        %v4075 = vmul.f32 %v4043, %v4043
        %v4076 = vmul.f32 %v4044, %v4044
        %v4077 = vmul.f32 %v4045, %v4045
        %v4078 = vmul.f32 %v4046, %v4046
        %v4079 = vmul.f32 %v4047, %v4047
        %v4080 = vmul.f32 %v4048, %v4048
        %v4081 = vmul.f32 %v4049, %v4049
        %v4082 = vmul.f32 %v4050, %v4050
        %v4083 = vmul.f32 %v4051, %v4051
        %v4084 = vmul.f32 %v4052, %v4052
        %v4085 = vmul.f32 %v4053, %v4053
        %v4086 = vmul.f32 %v4054, %v4054
        %v4087 = vmul.f32 %v4055, %v4055
        %v4088 = vmul.f32 %v4056, %v4056
        %v4089 = vmul.f32 %v4057, %v4057
        %v4090 = vmul.f32 %v4058, %v4058
        %v4091 = vmul.f32 %v4059, %v4059
        %v4092 = vmul.f32 %v4060, %v4060
        %v4093 = vmul.f32 %v4061, %v4061
        %v4094 = vmul.f32 %v4062, %v4062
        %v4095 = vmul.f32 %v4063, %v4063
        %v4096 = vmul.f32 %v4064, %v4064
        %v4097 = vmul.f32 %v4065, %v4065
        %v4098 = vmul.f32 %v4066, %v4066
        %v4099 = vmul.f32 %v4067, %v4067
        %v4100 = vmul.f32 %v4068, %v4068
        %v4101 = vmul.f32 %v4069, %v4069
        %v4102 = vmul.f32 %v4070, %v4070
        %v4103 = vmul.f32 %v4071, %v4071
        %v4104 = vmul.f32 %v4072, %v4072
        %4105 = vadd.xlane.f32.xlu0 %v4073
        %v4106 = vpop.xlane.xlu0 %4105
        %4107 = vadd.xlane.f32.xlu0 %v4074
        %v4108 = vpop.xlane.xlu0 %4107
        %4109 = vadd.xlane.f32.xlu0 %v4075
        %v4110 = vpop.xlane.xlu0 %4109
        %4111 = vadd.xlane.f32.xlu0 %v4076
        %v4112 = vpop.xlane.xlu0 %4111
        %4113 = vadd.xlane.f32.xlu0 %v4077
        %v4114 = vpop.xlane.xlu0 %4113
        %4115 = vadd.xlane.f32.xlu0 %v4078
        %v4116 = vpop.xlane.xlu0 %4115
        %4117 = vadd.xlane.f32.xlu0 %v4079
        %v4118 = vpop.xlane.xlu0 %4117
        %4119 = vadd.xlane.f32.xlu0 %v4080
        %v4120 = vpop.xlane.xlu0 %4119
        %4121 = vadd.xlane.f32.xlu0 %v4081
        %v4122 = vpop.xlane.xlu0 %4121
        %4123 = vadd.xlane.f32.xlu0 %v4082
        %v4124 = vpop.xlane.xlu0 %4123
        %4125 = vadd.xlane.f32.xlu0 %v4083
        %v4126 = vpop.xlane.xlu0 %4125
        %4127 = vadd.xlane.f32.xlu0 %v4084
        %v4128 = vpop.xlane.xlu0 %4127
        %4129 = vadd.xlane.f32.xlu0 %v4085
        %v4130 = vpop.xlane.xlu0 %4129
        %4131 = vadd.xlane.f32.xlu0 %v4086
        %v4132 = vpop.xlane.xlu0 %4131
        %4133 = vadd.xlane.f32.xlu0 %v4087
        %v4134 = vpop.xlane.xlu0 %4133
        %4135 = vadd.xlane.f32.xlu0 %v4088
        %v4136 = vpop.xlane.xlu0 %4135
        %4137 = vadd.xlane.f32.xlu0 %v4089
        %v4138 = vpop.xlane.xlu0 %4137
        %4139 = vadd.xlane.f32.xlu0 %v4090
        %v4140 = vpop.xlane.xlu0 %4139
        %4141 = vadd.xlane.f32.xlu0 %v4091
        %v4142 = vpop.xlane.xlu0 %4141
        %4143 = vadd.xlane.f32.xlu0 %v4092
        %v4144 = vpop.xlane.xlu0 %4143
        %4145 = vadd.xlane.f32.xlu0 %v4093
        %v4146 = vpop.xlane.xlu0 %4145
        %4147 = vadd.xlane.f32.xlu0 %v4094
        %v4148 = vpop.xlane.xlu0 %4147
        %4149 = vadd.xlane.f32.xlu0 %v4095
        %v4150 = vpop.xlane.xlu0 %4149
        %4151 = vadd.xlane.f32.xlu0 %v4096
        %v4152 = vpop.xlane.xlu0 %4151
        %4153 = vadd.xlane.f32.xlu0 %v4097
        %v4154 = vpop.xlane.xlu0 %4153
        %4155 = vadd.xlane.f32.xlu0 %v4098
        %v4156 = vpop.xlane.xlu0 %4155
        %4157 = vadd.xlane.f32.xlu0 %v4099
        %v4158 = vpop.xlane.xlu0 %4157
        %4159 = vadd.xlane.f32.xlu0 %v4100
        %v4160 = vpop.xlane.xlu0 %4159
        %4161 = vadd.xlane.f32.xlu0 %v4101
        %v4162 = vpop.xlane.xlu0 %4161
        %4163 = vadd.xlane.f32.xlu0 %v4102
        %v4164 = vpop.xlane.xlu0 %4163
        %4165 = vadd.xlane.f32.xlu0 %v4103
        %v4166 = vpop.xlane.xlu0 %4165
        %4167 = vadd.xlane.f32.xlu0 %v4104
        %v4168 = vpop.xlane.xlu0 %4167
        %v4169 = vmul.f32 %v4106, %v4008
        %v4170 = vmul.f32 %v4108, %v4008
        %v4171 = vmul.f32 %v4110, %v4008
        %v4172 = vmul.f32 %v4112, %v4008
        %v4173 = vmul.f32 %v4114, %v4008
        %v4174 = vmul.f32 %v4116, %v4008
        %v4175 = vmul.f32 %v4118, %v4008
        %v4176 = vmul.f32 %v4120, %v4008
        %v4177 = vmul.f32 %v4122, %v4008
        %v4178 = vmul.f32 %v4124, %v4008
        %v4179 = vmul.f32 %v4126, %v4008
        %v4180 = vmul.f32 %v4128, %v4008
        %v4181 = vmul.f32 %v4130, %v4008
        %v4182 = vmul.f32 %v4132, %v4008
        %v4183 = vmul.f32 %v4134, %v4008
        %v4184 = vmul.f32 %v4136, %v4008
        %v4185 = vmul.f32 %v4138, %v4008
        %v4186 = vmul.f32 %v4140, %v4008
        %v4187 = vmul.f32 %v4142, %v4008
        %v4188 = vmul.f32 %v4144, %v4008
        %v4189 = vmul.f32 %v4146, %v4008
        %v4190 = vmul.f32 %v4148, %v4008
        %v4191 = vmul.f32 %v4150, %v4008
        %v4192 = vmul.f32 %v4152, %v4008
        %v4193 = vmul.f32 %v4154, %v4008
        %v4194 = vmul.f32 %v4156, %v4008
        %v4195 = vmul.f32 %v4158, %v4008
        %v4196 = vmul.f32 %v4160, %v4008
        %v4197 = vmul.f32 %v4162, %v4008
        %v4198 = vmul.f32 %v4164, %v4008
        %v4199 = vmul.f32 %v4166, %v4008
        %v4200 = vmul.f32 %v4168, %v4008
        %v4201 = vadd.f32 %v4169, 1e-05
        %v4202 = vadd.f32 %v4170, 1e-05
        %v4203 = vadd.f32 %v4171, 1e-05
        %v4204 = vadd.f32 %v4172, 1e-05
        %v4205 = vadd.f32 %v4173, 1e-05
        %v4206 = vadd.f32 %v4174, 1e-05
        %v4207 = vadd.f32 %v4175, 1e-05
        %v4208 = vadd.f32 %v4176, 1e-05
        %v4209 = vadd.f32 %v4177, 1e-05
        %v4210 = vadd.f32 %v4178, 1e-05
        %v4211 = vadd.f32 %v4179, 1e-05
        %v4212 = vadd.f32 %v4180, 1e-05
        %v4213 = vadd.f32 %v4181, 1e-05
        %v4214 = vadd.f32 %v4182, 1e-05
        %v4215 = vadd.f32 %v4183, 1e-05
        %v4216 = vadd.f32 %v4184, 1e-05
        %v4217 = vadd.f32 %v4185, 1e-05
        %v4218 = vadd.f32 %v4186, 1e-05
        %v4219 = vadd.f32 %v4187, 1e-05
        %v4220 = vadd.f32 %v4188, 1e-05
        %v4221 = vadd.f32 %v4189, 1e-05
        %v4222 = vadd.f32 %v4190, 1e-05
        %v4223 = vadd.f32 %v4191, 1e-05
        %v4224 = vadd.f32 %v4192, 1e-05
        %v4225 = vadd.f32 %v4193, 1e-05
        %v4226 = vadd.f32 %v4194, 1e-05
        %v4227 = vadd.f32 %v4195, 1e-05
        %v4228 = vadd.f32 %v4196, 1e-05
        %v4229 = vadd.f32 %v4197, 1e-05
        %v4230 = vadd.f32 %v4198, 1e-05
        %v4231 = vadd.f32 %v4199, 1e-05
        %v4232 = vadd.f32 %v4200, 1e-05
        %v4233 = vrsqrt.pop %v4201
        %v4234 = vrsqrt.pop %v4202
        %v4235 = vrsqrt.pop %v4203
        %v4236 = vrsqrt.pop %v4204
        %v4237 = vrsqrt.pop %v4205
        %v4238 = vrsqrt.pop %v4206
        %v4239 = vrsqrt.pop %v4207
        %v4240 = vrsqrt.pop %v4208
        %v4241 = vrsqrt.pop %v4209
        %v4242 = vrsqrt.pop %v4210
        %v4243 = vrsqrt.pop %v4211
        %v4244 = vrsqrt.pop %v4212
        %v4245 = vrsqrt.pop %v4213
        %v4246 = vrsqrt.pop %v4214
        %v4247 = vrsqrt.pop %v4215
        %v4248 = vrsqrt.pop %v4216
        %v4249 = vrsqrt.pop %v4217
        %v4250 = vrsqrt.pop %v4218
        %v4251 = vrsqrt.pop %v4219
        %v4252 = vrsqrt.pop %v4220
        %v4253 = vrsqrt.pop %v4221
        %v4254 = vrsqrt.pop %v4222
        %v4255 = vrsqrt.pop %v4223
        %v4256 = vrsqrt.pop %v4224
        %v4257 = vrsqrt.pop %v4225
        %v4258 = vrsqrt.pop %v4226
        %v4259 = vrsqrt.pop %v4227
        %v4260 = vrsqrt.pop %v4228
        %v4261 = vrsqrt.pop %v4229
        %v4262 = vrsqrt.pop %v4230
        %v4263 = vrsqrt.pop %v4231
        %v4264 = vrsqrt.pop %v4232
        %v4265 = vmul.f32 %v4041, %v4233
        %v4266 = vmul.f32 %v4042, %v4234
        %v4267 = vmul.f32 %v4043, %v4235
        %v4268 = vmul.f32 %v4044, %v4236
        %v4269 = vmul.f32 %v4045, %v4237
        %v4270 = vmul.f32 %v4046, %v4238
        %v4271 = vmul.f32 %v4047, %v4239
        %v4272 = vmul.f32 %v4048, %v4240
        %v4273 = vmul.f32 %v4049, %v4241
        %v4274 = vmul.f32 %v4050, %v4242
        %v4275 = vmul.f32 %v4051, %v4243
        %v4276 = vmul.f32 %v4052, %v4244
        %v4277 = vmul.f32 %v4053, %v4245
        %v4278 = vmul.f32 %v4054, %v4246
        %v4279 = vmul.f32 %v4055, %v4247
        %v4280 = vmul.f32 %v4056, %v4248
        %v4281 = vmul.f32 %v4057, %v4249
        %v4282 = vmul.f32 %v4058, %v4250
        %v4283 = vmul.f32 %v4059, %v4251
        %v4284 = vmul.f32 %v4060, %v4252
        %v4285 = vmul.f32 %v4061, %v4253
        %v4286 = vmul.f32 %v4062, %v4254
        %v4287 = vmul.f32 %v4063, %v4255
        %v4288 = vmul.f32 %v4064, %v4256
        %v4289 = vmul.f32 %v4065, %v4257
        %v4290 = vmul.f32 %v4066, %v4258
        %v4291 = vmul.f32 %v4067, %v4259
        %v4292 = vmul.f32 %v4068, %v4260
        %v4293 = vmul.f32 %v4069, %v4261
        %v4294 = vmul.f32 %v4070, %v4262
        %v4295 = vmul.f32 %v4071, %v4263
        %v4296 = vmul.f32 %v4072, %v4264
        %v4298 = vlaneseq
        %v4299 = vshrl.u32 %v4298, 7
        %v4300 = vsub.s32 0, %v4299
        %v4301 = vrot.slane %v1685, %v4300
        %v4303 = vmul.f32 %v4265, %v4301
        %v4304 = vmul.f32 %v4266, %v4301
        %v4305 = vmul.f32 %v4267, %v4301
        %v4306 = vmul.f32 %v4268, %v4301
        %v4307 = vmul.f32 %v4269, %v4301
        %v4308 = vmul.f32 %v4270, %v4301
        %v4309 = vmul.f32 %v4271, %v4301
        %v4310 = vmul.f32 %v4272, %v4301
        %v4311 = vmul.f32 %v4273, %v4301
        %v4312 = vmul.f32 %v4274, %v4301
        %v4313 = vmul.f32 %v4275, %v4301
        %v4314 = vmul.f32 %v4276, %v4301
        %v4315 = vmul.f32 %v4277, %v4301
        %v4316 = vmul.f32 %v4278, %v4301
        %v4317 = vmul.f32 %v4279, %v4301
        %v4318 = vmul.f32 %v4280, %v4301
        %v4319 = vmul.f32 %v4281, %v4301
        %v4320 = vmul.f32 %v4282, %v4301
        %v4321 = vmul.f32 %v4283, %v4301
        %v4322 = vmul.f32 %v4284, %v4301
        %v4323 = vmul.f32 %v4285, %v4301
        %v4324 = vmul.f32 %v4286, %v4301
        %v4325 = vmul.f32 %v4287, %v4301
        %v4326 = vmul.f32 %v4288, %v4301
        %v4327 = vmul.f32 %v4289, %v4301
        %v4328 = vmul.f32 %v4290, %v4301
        %v4329 = vmul.f32 %v4291, %v4301
        %v4330 = vmul.f32 %v4292, %v4301
        %v4331 = vmul.f32 %v4293, %v4301
        %v4332 = vmul.f32 %v4294, %v4301
        %v4333 = vmul.f32 %v4295, %v4301
        %v4334 = vmul.f32 %v4296, %v4301
        %v4336 = vlaneseq
        %v4337 = vshrl.u32 %v4336, 7
        %v4338 = vsub.s32 0, %v4337
        %v4339 = vrot.slane %v1687, %v4338
        %v4341 = vadd.f32 %v4303, %v4339
        %v4342 = vadd.f32 %v4304, %v4339
        %v4343 = vadd.f32 %v4305, %v4339
        %v4344 = vadd.f32 %v4306, %v4339
        %v4345 = vadd.f32 %v4307, %v4339
        %v4346 = vadd.f32 %v4308, %v4339
        %v4347 = vadd.f32 %v4309, %v4339
        %v4348 = vadd.f32 %v4310, %v4339
        %v4349 = vadd.f32 %v4311, %v4339
        %v4350 = vadd.f32 %v4312, %v4339
        %v4351 = vadd.f32 %v4313, %v4339
        %v4352 = vadd.f32 %v4314, %v4339
        %v4353 = vadd.f32 %v4315, %v4339
        %v4354 = vadd.f32 %v4316, %v4339
        %v4355 = vadd.f32 %v4317, %v4339
        %v4356 = vadd.f32 %v4318, %v4339
        %v4357 = vadd.f32 %v4319, %v4339
        %v4358 = vadd.f32 %v4320, %v4339
        %v4359 = vadd.f32 %v4321, %v4339
        %v4360 = vadd.f32 %v4322, %v4339
        %v4361 = vadd.f32 %v4323, %v4339
        %v4362 = vadd.f32 %v4324, %v4339
        %v4363 = vadd.f32 %v4325, %v4339
        %v4364 = vadd.f32 %v4326, %v4339
        %v4365 = vadd.f32 %v4327, %v4339
        %v4366 = vadd.f32 %v4328, %v4339
        %v4367 = vadd.f32 %v4329, %v4339
        %v4368 = vadd.f32 %v4330, %v4339
        %v4369 = vadd.f32 %v4331, %v4339
        %v4370 = vadd.f32 %v4332, %v4339
        %v4371 = vadd.f32 %v4333, %v4339
        %v4372 = vadd.f32 %v4334, %v4339
        %4373 = vst [vmem:[%s619] sm:$0xff] %v4341
        %4374 = vst [vmem:[%s619 + $0x10] sm:$0xff] %v4342
        %4375 = vst [vmem:[%s619 + $0x20] sm:$0xff] %v4343
        %4376 = vst [vmem:[%s619 + $0x30] sm:$0xff] %v4344
        %4377 = vst [vmem:[%s619 + $0x40] sm:$0xff] %v4345
        %4378 = vst [vmem:[%s619 + $0x50] sm:$0xff] %v4346
        %4379 = vst [vmem:[%s619 + $0x60] sm:$0xff] %v4347
        %4380 = vst [vmem:[%s619 + $0x70] sm:$0xff] %v4348
        %4381 = vst [vmem:[%s619 + $0x80] sm:$0xff] %v4349
        %4382 = vst [vmem:[%s619 + $0x90] sm:$0xff] %v4350
        %4383 = vst [vmem:[%s619 + $0xa0] sm:$0xff] %v4351
        %4384 = vst [vmem:[%s619 + $0xb0] sm:$0xff] %v4352
        %4385 = vst [vmem:[%s619 + $0xc0] sm:$0xff] %v4353
        %4386 = vst [vmem:[%s619 + $0xd0] sm:$0xff] %v4354
        %4387 = vst [vmem:[%s619 + $0xe0] sm:$0xff] %v4355
        %4388 = vst [vmem:[%s619 + $0xf0] sm:$0xff] %v4356
        %4389 = vst [vmem:[%s619 + $0x100] sm:$0xff] %v4357
        %4390 = vst [vmem:[%s619 + $0x110] sm:$0xff] %v4358
        %4391 = vst [vmem:[%s619 + $0x120] sm:$0xff] %v4359
        %4392 = vst [vmem:[%s619 + $0x130] sm:$0xff] %v4360
        %4393 = vst [vmem:[%s619 + $0x140] sm:$0xff] %v4361
        %4394 = vst [vmem:[%s619 + $0x150] sm:$0xff] %v4362
        %4395 = vst [vmem:[%s619 + $0x160] sm:$0xff] %v4363
        %4396 = vst [vmem:[%s619 + $0x170] sm:$0xff] %v4364
        %4397 = vst [vmem:[%s619 + $0x180] sm:$0xff] %v4365
        %4398 = vst [vmem:[%s619 + $0x190] sm:$0xff] %v4366
        %4399 = vst [vmem:[%s619 + $0x1a0] sm:$0xff] %v4367
        %4400 = vst [vmem:[%s619 + $0x1b0] sm:$0xff] %v4368
        %4401 = vst [vmem:[%s619 + $0x1c0] sm:$0xff] %v4369
        %4402 = vst [vmem:[%s619 + $0x1d0] sm:$0xff] %v4370
        %4403 = vst [vmem:[%s619 + $0x1e0] sm:$0xff] %v4371
        %4404 = vst [vmem:[%s619 + $0x1f0] sm:$0xff] %v4372
        %v4405 = vmul.f32 %v867, %v867
        %v4406 = vmul.f32 %v871, %v871
        %v4407 = vmul.f32 %v877, %v877
        %v4408 = vmul.f32 %v881, %v881
        %v4409 = vmul.f32 %v887, %v887
        %v4410 = vmul.f32 %v891, %v891
        %v4411 = vmul.f32 %v897, %v897
        %v4412 = vmul.f32 %v901, %v901
        %v4413 = vmul.f32 %v907, %v907
        %v4414 = vmul.f32 %v911, %v911
        %v4415 = vmul.f32 %v917, %v917
        %v4416 = vmul.f32 %v921, %v921
        %v4417 = vmul.f32 %v927, %v927
        %v4418 = vmul.f32 %v931, %v931
        %v4419 = vmul.f32 %v937, %v937
        %v4420 = vmul.f32 %v941, %v941
        %v4421 = vmul.f32 %v947, %v947
        %v4422 = vmul.f32 %v951, %v951
        %v4423 = vmul.f32 %v957, %v957
        %v4424 = vmul.f32 %v961, %v961
        %v4425 = vmul.f32 %v967, %v967
        %v4426 = vmul.f32 %v971, %v971
        %v4427 = vmul.f32 %v977, %v977
        %v4428 = vmul.f32 %v981, %v981
        %v4429 = vmul.f32 %v987, %v987
        %v4430 = vmul.f32 %v991, %v991
        %v4431 = vmul.f32 %v997, %v997
        %v4432 = vmul.f32 %v1001, %v1001
        %v4433 = vmul.f32 %v1007, %v1007
        %v4434 = vmul.f32 %v1011, %v1011
        %v4435 = vmul.f32 %v1017, %v1017
        %v4436 = vmul.f32 %v1021, %v1021
        %4437 = vadd.xlane.f32.xlu0 %v4405
        %v4438 = vpop.xlane.xlu0 %4437
        %4439 = vadd.xlane.f32.xlu0 %v4406
        %v4440 = vpop.xlane.xlu0 %4439
        %4441 = vadd.xlane.f32.xlu0 %v4407
        %v4442 = vpop.xlane.xlu0 %4441
        %4443 = vadd.xlane.f32.xlu0 %v4408
        %v4444 = vpop.xlane.xlu0 %4443
        %4445 = vadd.xlane.f32.xlu0 %v4409
        %v4446 = vpop.xlane.xlu0 %4445
        %4447 = vadd.xlane.f32.xlu0 %v4410
        %v4448 = vpop.xlane.xlu0 %4447
        %4449 = vadd.xlane.f32.xlu0 %v4411
        %v4450 = vpop.xlane.xlu0 %4449
        %4451 = vadd.xlane.f32.xlu0 %v4412
        %v4452 = vpop.xlane.xlu0 %4451
        %4453 = vadd.xlane.f32.xlu0 %v4413
        %v4454 = vpop.xlane.xlu0 %4453
        %4455 = vadd.xlane.f32.xlu0 %v4414
        %v4456 = vpop.xlane.xlu0 %4455
        %4457 = vadd.xlane.f32.xlu0 %v4415
        %v4458 = vpop.xlane.xlu0 %4457
        %4459 = vadd.xlane.f32.xlu0 %v4416
        %v4460 = vpop.xlane.xlu0 %4459
        %4461 = vadd.xlane.f32.xlu0 %v4417
        %v4462 = vpop.xlane.xlu0 %4461
        %4463 = vadd.xlane.f32.xlu0 %v4418
        %v4464 = vpop.xlane.xlu0 %4463
        %4465 = vadd.xlane.f32.xlu0 %v4419
        %v4466 = vpop.xlane.xlu0 %4465
        %4467 = vadd.xlane.f32.xlu0 %v4420
        %v4468 = vpop.xlane.xlu0 %4467
        %4469 = vadd.xlane.f32.xlu0 %v4421
        %v4470 = vpop.xlane.xlu0 %4469
        %4471 = vadd.xlane.f32.xlu0 %v4422
        %v4472 = vpop.xlane.xlu0 %4471
        %4473 = vadd.xlane.f32.xlu0 %v4423
        %v4474 = vpop.xlane.xlu0 %4473
        %4475 = vadd.xlane.f32.xlu0 %v4424
        %v4476 = vpop.xlane.xlu0 %4475
        %4477 = vadd.xlane.f32.xlu0 %v4425
        %v4478 = vpop.xlane.xlu0 %4477
        %4479 = vadd.xlane.f32.xlu0 %v4426
        %v4480 = vpop.xlane.xlu0 %4479
        %4481 = vadd.xlane.f32.xlu0 %v4427
        %v4482 = vpop.xlane.xlu0 %4481
        %4483 = vadd.xlane.f32.xlu0 %v4428
        %v4484 = vpop.xlane.xlu0 %4483
        %4485 = vadd.xlane.f32.xlu0 %v4429
        %v4486 = vpop.xlane.xlu0 %4485
        %4487 = vadd.xlane.f32.xlu0 %v4430
        %v4488 = vpop.xlane.xlu0 %4487
        %4489 = vadd.xlane.f32.xlu0 %v4431
        %v4490 = vpop.xlane.xlu0 %4489
        %4491 = vadd.xlane.f32.xlu0 %v4432
        %v4492 = vpop.xlane.xlu0 %4491
        %4493 = vadd.xlane.f32.xlu0 %v4433
        %v4494 = vpop.xlane.xlu0 %4493
        %4495 = vadd.xlane.f32.xlu0 %v4434
        %v4496 = vpop.xlane.xlu0 %4495
        %4497 = vadd.xlane.f32.xlu0 %v4435
        %v4498 = vpop.xlane.xlu0 %4497
        %4499 = vadd.xlane.f32.xlu0 %v4436
        %v4500 = vpop.xlane.xlu0 %4499
        %v4501 = vmax.f32 %v4438, 1e-24
        %v4502 = vmax.f32 %v4440, 1e-24
        %v4503 = vmax.f32 %v4442, 1e-24
        %v4504 = vmax.f32 %v4444, 1e-24
        %v4505 = vmax.f32 %v4446, 1e-24
        %v4506 = vmax.f32 %v4448, 1e-24
        %v4507 = vmax.f32 %v4450, 1e-24
        %v4508 = vmax.f32 %v4452, 1e-24
        %v4509 = vmax.f32 %v4454, 1e-24
        %v4510 = vmax.f32 %v4456, 1e-24
        %v4511 = vmax.f32 %v4458, 1e-24
        %v4512 = vmax.f32 %v4460, 1e-24
        %v4513 = vmax.f32 %v4462, 1e-24
        %v4514 = vmax.f32 %v4464, 1e-24
        %v4515 = vmax.f32 %v4466, 1e-24
        %v4516 = vmax.f32 %v4468, 1e-24
        %v4517 = vmax.f32 %v4470, 1e-24
        %v4518 = vmax.f32 %v4472, 1e-24
        %v4519 = vmax.f32 %v4474, 1e-24
        %v4520 = vmax.f32 %v4476, 1e-24
        %v4521 = vmax.f32 %v4478, 1e-24
        %v4522 = vmax.f32 %v4480, 1e-24
        %v4523 = vmax.f32 %v4482, 1e-24
        %v4524 = vmax.f32 %v4484, 1e-24
        %v4525 = vmax.f32 %v4486, 1e-24
        %v4526 = vmax.f32 %v4488, 1e-24
        %v4527 = vmax.f32 %v4490, 1e-24
        %v4528 = vmax.f32 %v4492, 1e-24
        %v4529 = vmax.f32 %v4494, 1e-24
        %v4530 = vmax.f32 %v4496, 1e-24
        %v4531 = vmax.f32 %v4498, 1e-24
        %v4532 = vmax.f32 %v4500, 1e-24
        %v4533 = vrsqrt.pop %v4501
        %v4534 = vrsqrt.pop %v4502
        %v4535 = vrsqrt.pop %v4503
        %v4536 = vrsqrt.pop %v4504
        %v4537 = vrsqrt.pop %v4505
        %v4538 = vrsqrt.pop %v4506
        %v4539 = vrsqrt.pop %v4507
        %v4540 = vrsqrt.pop %v4508
        %v4541 = vrsqrt.pop %v4509
        %v4542 = vrsqrt.pop %v4510
        %v4543 = vrsqrt.pop %v4511
        %v4544 = vrsqrt.pop %v4512
        %v4545 = vrsqrt.pop %v4513
        %v4546 = vrsqrt.pop %v4514
        %v4547 = vrsqrt.pop %v4515
        %v4548 = vrsqrt.pop %v4516
        %v4549 = vrsqrt.pop %v4517
        %v4550 = vrsqrt.pop %v4518
        %v4551 = vrsqrt.pop %v4519
        %v4552 = vrsqrt.pop %v4520
        %v4553 = vrsqrt.pop %v4521
        %v4554 = vrsqrt.pop %v4522
        %v4555 = vrsqrt.pop %v4523
        %v4556 = vrsqrt.pop %v4524
        %v4557 = vrsqrt.pop %v4525
        %v4558 = vrsqrt.pop %v4526
        %v4559 = vrsqrt.pop %v4527
        %v4560 = vrsqrt.pop %v4528
        %v4561 = vrsqrt.pop %v4529
        %v4562 = vrsqrt.pop %v4530
        %v4563 = vrsqrt.pop %v4531
        %v4564 = vrsqrt.pop %v4532
        %v4565 = vmul.f32 %v867, %v4533
        %v4566 = vmul.f32 %v871, %v4534
        %v4567 = vmul.f32 %v877, %v4535
        %v4568 = vmul.f32 %v881, %v4536
        %v4569 = vmul.f32 %v887, %v4537
        %v4570 = vmul.f32 %v891, %v4538
        %v4571 = vmul.f32 %v897, %v4539
        %v4572 = vmul.f32 %v901, %v4540
        %v4573 = vmul.f32 %v907, %v4541
        %v4574 = vmul.f32 %v911, %v4542
        %v4575 = vmul.f32 %v917, %v4543
        %v4576 = vmul.f32 %v921, %v4544
        %v4577 = vmul.f32 %v927, %v4545
        %v4578 = vmul.f32 %v931, %v4546
        %v4579 = vmul.f32 %v937, %v4547
        %v4580 = vmul.f32 %v941, %v4548
        %v4581 = vmul.f32 %v947, %v4549
        %v4582 = vmul.f32 %v951, %v4550
        %v4583 = vmul.f32 %v957, %v4551
        %v4584 = vmul.f32 %v961, %v4552
        %v4585 = vmul.f32 %v967, %v4553
        %v4586 = vmul.f32 %v971, %v4554
        %v4587 = vmul.f32 %v977, %v4555
        %v4588 = vmul.f32 %v981, %v4556
        %v4589 = vmul.f32 %v987, %v4557
        %v4590 = vmul.f32 %v991, %v4558
        %v4591 = vmul.f32 %v997, %v4559
        %v4592 = vmul.f32 %v1001, %v4560
        %v4593 = vmul.f32 %v1007, %v4561
        %v4594 = vmul.f32 %v1011, %v4562
        %v4595 = vmul.f32 %v1017, %v4563
        %v4596 = vmul.f32 %v1021, %v4564
        %v4597 = vmul.f32 %v1172, %v1172
        %v4598 = vmul.f32 %v1176, %v1176
        %v4599 = vmul.f32 %v1182, %v1182
        %v4600 = vmul.f32 %v1186, %v1186
        %v4601 = vmul.f32 %v1192, %v1192
        %v4602 = vmul.f32 %v1196, %v1196
        %v4603 = vmul.f32 %v1202, %v1202
        %v4604 = vmul.f32 %v1206, %v1206
        %v4605 = vmul.f32 %v1212, %v1212
        %v4606 = vmul.f32 %v1216, %v1216
        %v4607 = vmul.f32 %v1222, %v1222
        %v4608 = vmul.f32 %v1226, %v1226
        %v4609 = vmul.f32 %v1232, %v1232
        %v4610 = vmul.f32 %v1236, %v1236
        %v4611 = vmul.f32 %v1242, %v1242
        %v4612 = vmul.f32 %v1246, %v1246
        %v4613 = vmul.f32 %v1252, %v1252
        %v4614 = vmul.f32 %v1256, %v1256
        %v4615 = vmul.f32 %v1262, %v1262
        %v4616 = vmul.f32 %v1266, %v1266
        %v4617 = vmul.f32 %v1272, %v1272
        %v4618 = vmul.f32 %v1276, %v1276
        %v4619 = vmul.f32 %v1282, %v1282
        %v4620 = vmul.f32 %v1286, %v1286
        %v4621 = vmul.f32 %v1292, %v1292
        %v4622 = vmul.f32 %v1296, %v1296
        %v4623 = vmul.f32 %v1302, %v1302
        %v4624 = vmul.f32 %v1306, %v1306
        %v4625 = vmul.f32 %v1312, %v1312
        %v4626 = vmul.f32 %v1316, %v1316
        %v4627 = vmul.f32 %v1322, %v1322
        %v4628 = vmul.f32 %v1326, %v1326
        %4629 = vadd.xlane.f32.xlu0 %v4597
        %v4630 = vpop.xlane.xlu0 %4629
        %4631 = vadd.xlane.f32.xlu0 %v4598
        %v4632 = vpop.xlane.xlu0 %4631
        %4633 = vadd.xlane.f32.xlu0 %v4599
        %v4634 = vpop.xlane.xlu0 %4633
        %4635 = vadd.xlane.f32.xlu0 %v4600
        %v4636 = vpop.xlane.xlu0 %4635
        %4637 = vadd.xlane.f32.xlu0 %v4601
        %v4638 = vpop.xlane.xlu0 %4637
        %4639 = vadd.xlane.f32.xlu0 %v4602
        %v4640 = vpop.xlane.xlu0 %4639
        %4641 = vadd.xlane.f32.xlu0 %v4603
        %v4642 = vpop.xlane.xlu0 %4641
        %4643 = vadd.xlane.f32.xlu0 %v4604
        %v4644 = vpop.xlane.xlu0 %4643
        %4645 = vadd.xlane.f32.xlu0 %v4605
        %v4646 = vpop.xlane.xlu0 %4645
        %4647 = vadd.xlane.f32.xlu0 %v4606
        %v4648 = vpop.xlane.xlu0 %4647
        %4649 = vadd.xlane.f32.xlu0 %v4607
        %v4650 = vpop.xlane.xlu0 %4649
        %4651 = vadd.xlane.f32.xlu0 %v4608
        %v4652 = vpop.xlane.xlu0 %4651
        %4653 = vadd.xlane.f32.xlu0 %v4609
        %v4654 = vpop.xlane.xlu0 %4653
        %4655 = vadd.xlane.f32.xlu0 %v4610
        %v4656 = vpop.xlane.xlu0 %4655
        %4657 = vadd.xlane.f32.xlu0 %v4611
        %v4658 = vpop.xlane.xlu0 %4657
        %4659 = vadd.xlane.f32.xlu0 %v4612
        %v4660 = vpop.xlane.xlu0 %4659
        %4661 = vadd.xlane.f32.xlu0 %v4613
        %v4662 = vpop.xlane.xlu0 %4661
        %4663 = vadd.xlane.f32.xlu0 %v4614
        %v4664 = vpop.xlane.xlu0 %4663
        %4665 = vadd.xlane.f32.xlu0 %v4615
        %v4666 = vpop.xlane.xlu0 %4665
        %4667 = vadd.xlane.f32.xlu0 %v4616
        %v4668 = vpop.xlane.xlu0 %4667
        %4669 = vadd.xlane.f32.xlu0 %v4617
        %v4670 = vpop.xlane.xlu0 %4669
        %4671 = vadd.xlane.f32.xlu0 %v4618
        %v4672 = vpop.xlane.xlu0 %4671
        %4673 = vadd.xlane.f32.xlu0 %v4619
        %v4674 = vpop.xlane.xlu0 %4673
        %4675 = vadd.xlane.f32.xlu0 %v4620
        %v4676 = vpop.xlane.xlu0 %4675
        %4677 = vadd.xlane.f32.xlu0 %v4621
        %v4678 = vpop.xlane.xlu0 %4677
        %4679 = vadd.xlane.f32.xlu0 %v4622
        %v4680 = vpop.xlane.xlu0 %4679
        %4681 = vadd.xlane.f32.xlu0 %v4623
        %v4682 = vpop.xlane.xlu0 %4681
        %4683 = vadd.xlane.f32.xlu0 %v4624
        %v4684 = vpop.xlane.xlu0 %4683
        %4685 = vadd.xlane.f32.xlu0 %v4625
        %v4686 = vpop.xlane.xlu0 %4685
        %4687 = vadd.xlane.f32.xlu0 %v4626
        %v4688 = vpop.xlane.xlu0 %4687
        %4689 = vadd.xlane.f32.xlu0 %v4627
        %v4690 = vpop.xlane.xlu0 %4689
        %4691 = vadd.xlane.f32.xlu0 %v4628
        %v4692 = vpop.xlane.xlu0 %4691
        %v4693 = vmax.f32 %v4630, 1e-24
        %v4694 = vmax.f32 %v4632, 1e-24
        %v4695 = vmax.f32 %v4634, 1e-24
        %v4696 = vmax.f32 %v4636, 1e-24
        %v4697 = vmax.f32 %v4638, 1e-24
        %v4698 = vmax.f32 %v4640, 1e-24
        %v4699 = vmax.f32 %v4642, 1e-24
        %v4700 = vmax.f32 %v4644, 1e-24
        %v4701 = vmax.f32 %v4646, 1e-24
        %v4702 = vmax.f32 %v4648, 1e-24
        %v4703 = vmax.f32 %v4650, 1e-24
        %v4704 = vmax.f32 %v4652, 1e-24
        %v4705 = vmax.f32 %v4654, 1e-24
        %v4706 = vmax.f32 %v4656, 1e-24
        %v4707 = vmax.f32 %v4658, 1e-24
        %v4708 = vmax.f32 %v4660, 1e-24
        %v4709 = vmax.f32 %v4662, 1e-24
        %v4710 = vmax.f32 %v4664, 1e-24
        %v4711 = vmax.f32 %v4666, 1e-24
        %v4712 = vmax.f32 %v4668, 1e-24
        %v4713 = vmax.f32 %v4670, 1e-24
        %v4714 = vmax.f32 %v4672, 1e-24
        %v4715 = vmax.f32 %v4674, 1e-24
        %v4716 = vmax.f32 %v4676, 1e-24
        %v4717 = vmax.f32 %v4678, 1e-24
        %v4718 = vmax.f32 %v4680, 1e-24
        %v4719 = vmax.f32 %v4682, 1e-24
        %v4720 = vmax.f32 %v4684, 1e-24
        %v4721 = vmax.f32 %v4686, 1e-24
        %v4722 = vmax.f32 %v4688, 1e-24
        %v4723 = vmax.f32 %v4690, 1e-24
        %v4724 = vmax.f32 %v4692, 1e-24
        %v4725 = vrsqrt.pop %v4693
        %v4726 = vrsqrt.pop %v4694
        %v4727 = vrsqrt.pop %v4695
        %v4728 = vrsqrt.pop %v4696
        %v4729 = vrsqrt.pop %v4697
        %v4730 = vrsqrt.pop %v4698
        %v4731 = vrsqrt.pop %v4699
        %v4732 = vrsqrt.pop %v4700
        %v4733 = vrsqrt.pop %v4701
        %v4734 = vrsqrt.pop %v4702
        %v4735 = vrsqrt.pop %v4703
        %v4736 = vrsqrt.pop %v4704
        %v4737 = vrsqrt.pop %v4705
        %v4738 = vrsqrt.pop %v4706
        %v4739 = vrsqrt.pop %v4707
        %v4740 = vrsqrt.pop %v4708
        %v4741 = vrsqrt.pop %v4709
        %v4742 = vrsqrt.pop %v4710
        %v4743 = vrsqrt.pop %v4711
        %v4744 = vrsqrt.pop %v4712
        %v4745 = vrsqrt.pop %v4713
        %v4746 = vrsqrt.pop %v4714
        %v4747 = vrsqrt.pop %v4715
        %v4748 = vrsqrt.pop %v4716
        %v4749 = vrsqrt.pop %v4717
        %v4750 = vrsqrt.pop %v4718
        %v4751 = vrsqrt.pop %v4719
        %v4752 = vrsqrt.pop %v4720
        %v4753 = vrsqrt.pop %v4721
        %v4754 = vrsqrt.pop %v4722
        %v4755 = vrsqrt.pop %v4723
        %v4756 = vrsqrt.pop %v4724
        %v4757 = vmul.f32 %v1172, %v4725
        %v4758 = vmul.f32 %v1176, %v4726
        %v4759 = vmul.f32 %v1182, %v4727
        %v4760 = vmul.f32 %v1186, %v4728
        %v4761 = vmul.f32 %v1192, %v4729
        %v4762 = vmul.f32 %v1196, %v4730
        %v4763 = vmul.f32 %v1202, %v4731
        %v4764 = vmul.f32 %v1206, %v4732
        %v4765 = vmul.f32 %v1212, %v4733
        %v4766 = vmul.f32 %v1216, %v4734
        %v4767 = vmul.f32 %v1222, %v4735
        %v4768 = vmul.f32 %v1226, %v4736
        %v4769 = vmul.f32 %v1232, %v4737
        %v4770 = vmul.f32 %v1236, %v4738
        %v4771 = vmul.f32 %v1242, %v4739
        %v4772 = vmul.f32 %v1246, %v4740
        %v4773 = vmul.f32 %v1252, %v4741
        %v4774 = vmul.f32 %v1256, %v4742
        %v4775 = vmul.f32 %v1262, %v4743
        %v4776 = vmul.f32 %v1266, %v4744
        %v4777 = vmul.f32 %v1272, %v4745
        %v4778 = vmul.f32 %v1276, %v4746
        %v4779 = vmul.f32 %v1282, %v4747
        %v4780 = vmul.f32 %v1286, %v4748
        %v4781 = vmul.f32 %v1292, %v4749
        %v4782 = vmul.f32 %v1296, %v4750
        %v4783 = vmul.f32 %v1302, %v4751
        %v4784 = vmul.f32 %v1306, %v4752
        %v4785 = vmul.f32 %v1312, %v4753
        %v4786 = vmul.f32 %v1316, %v4754
        %v4787 = vmul.f32 %v1322, %v4755
        %v4788 = vmul.f32 %v1326, %v4756
        %v4789 = vpack.c.bf16 %v4566, %v4565
        %v4790 = vpack.c.bf16 %v4568, %v4567
        %v4791 = vpack.c.bf16 %v4570, %v4569
        %v4792 = vpack.c.bf16 %v4572, %v4571
        %v4793 = vpack.c.bf16 %v4574, %v4573
        %v4794 = vpack.c.bf16 %v4576, %v4575
        %v4795 = vpack.c.bf16 %v4578, %v4577
        %v4796 = vpack.c.bf16 %v4580, %v4579
        %v4797 = vpack.c.bf16 %v4582, %v4581
        %v4798 = vpack.c.bf16 %v4584, %v4583
        %v4799 = vpack.c.bf16 %v4586, %v4585
        %v4800 = vpack.c.bf16 %v4588, %v4587
        %v4801 = vpack.c.bf16 %v4590, %v4589
        %v4802 = vpack.c.bf16 %v4592, %v4591
        %v4803 = vpack.c.bf16 %v4594, %v4593
        %v4804 = vpack.c.bf16 %v4596, %v4595
        %v4805 = vpack.c.bf16 %v4758, %v4757
        %v4806 = vpack.c.bf16 %v4760, %v4759
        %v4807 = vpack.c.bf16 %v4762, %v4761
        %v4808 = vpack.c.bf16 %v4764, %v4763
        %v4809 = vpack.c.bf16 %v4766, %v4765
        %v4810 = vpack.c.bf16 %v4768, %v4767
        %v4811 = vpack.c.bf16 %v4770, %v4769
        %v4812 = vpack.c.bf16 %v4772, %v4771
        %v4813 = vpack.c.bf16 %v4774, %v4773
        %v4814 = vpack.c.bf16 %v4776, %v4775
        %v4815 = vpack.c.bf16 %v4778, %v4777
        %v4816 = vpack.c.bf16 %v4780, %v4779
        %v4817 = vpack.c.bf16 %v4782, %v4781
        %v4818 = vpack.c.bf16 %v4784, %v4783
        %v4819 = vpack.c.bf16 %v4786, %v4785
        %v4820 = vpack.c.bf16 %v4788, %v4787
        %4821 = vmatprep.subr.bf16.mxu0 0
        %4822 = vmatpush1.bf16.xpose.msra.mxu0 %v4812
        %4823 = vmatprep.subr.bf16.mxu0 0
        %4824 = vmatpush1.bf16.xpose.msra.mxu0 %v4811
        %4825 = vmatprep.subr.bf16.mxu0 0
        %4826 = vmatpush1.bf16.xpose.msra.mxu0 %v4810
        %4827 = vmatprep.subr.bf16.mxu0 0
        %4828 = vmatpush1.bf16.xpose.msra.mxu0 %v4809
        %4829 = vmatprep.subr.bf16.mxu0 0
        %4830 = vmatpush1.bf16.xpose.msra.mxu0 %v4808
        %4831 = vmatprep.subr.bf16.mxu0 0
        %4832 = vmatpush1.bf16.xpose.msra.mxu0 %v4807
        %4833 = vmatprep.subr.bf16.mxu0 0
        %4834 = vmatpush1.bf16.xpose.msra.mxu0 %v4806
        %4835 = vmatprep.subr.bf16.mxu0 0
        %4836 = vmatpush1.bf16.xpose.msra.mxu0 %v4805
        %4837 = vmatprep.subr.bf16.mxu0 0
        %4838 = vmatpush2.bf16.xpose.msra.mxu0 %v4820
        %4839 = vmatprep.subr.bf16.mxu0 0
        %4840 = vmatpush2.bf16.xpose.msra.mxu0 %v4819
        %4841 = vmatprep.subr.bf16.mxu0 0
        %4842 = vmatpush2.bf16.xpose.msra.mxu0 %v4818
        %4843 = vmatprep.subr.bf16.mxu0 0
        %4844 = vmatpush2.bf16.xpose.msra.mxu0 %v4817
        %4845 = vmatprep.subr.bf16.mxu0 0
        %4846 = vmatpush2.bf16.xpose.msra.mxu0 %v4816
        %4847 = vmatprep.subr.bf16.mxu0 0
        %4848 = vmatpush2.bf16.xpose.msra.mxu0 %v4815
        %4849 = vmatprep.subr.bf16.mxu0 0
        %4850 = vmatpush2.bf16.xpose.msra.mxu0 %v4814
        %4851 = vmatprep.subr.bf16.mxu0 0
        %4852 = vmatpush2.bf16.xpose.msra.mxu0 %v4813
        %4853 = vmatprep.mubr.bf16.mxu0 0
        %4854 = vmatmul.mubr.bf16.gmra.mxu0 %v4789
        %v4855 = vpop.f32.mrf.mxu0
        %v4856 = vadd.f32 0.0, %v4855
        %v4857 = vpop.f32.mrf.mxu0
        %v4858 = vadd.f32 0.0, %v4857
        %v4859 = vpop.f32.mrf.mxu0
        %v4860 = vadd.f32 0.0, %v4859
        %v4861 = vpop.f32.mrf.mxu0
        %v4862 = vadd.f32 0.0, %v4861
        %4863 = vmatprep.mubr.bf16.mxu0 0
        %4864 = vmatmul.mubr.bf16.gmra.mxu0 %v4790
        %v4865 = vpop.f32.mrf.mxu0
        %v4866 = vadd.f32 0.0, %v4865
        %v4867 = vpop.f32.mrf.mxu0
        %v4868 = vadd.f32 0.0, %v4867
        %v4869 = vpop.f32.mrf.mxu0
        %v4870 = vadd.f32 0.0, %v4869
        %v4871 = vpop.f32.mrf.mxu0
        %v4872 = vadd.f32 0.0, %v4871
        %4873 = vmatprep.mubr.bf16.mxu0 0
        %4874 = vmatmul.mubr.bf16.gmra.mxu0 %v4791
        %v4875 = vpop.f32.mrf.mxu0
        %v4876 = vadd.f32 0.0, %v4875
        %v4877 = vpop.f32.mrf.mxu0
        %v4878 = vadd.f32 0.0, %v4877
        %v4879 = vpop.f32.mrf.mxu0
        %v4880 = vadd.f32 0.0, %v4879
        %v4881 = vpop.f32.mrf.mxu0
        %v4882 = vadd.f32 0.0, %v4881
        %4883 = vmatprep.mubr.bf16.mxu0 0
        %4884 = vmatmul.mubr.bf16.gmra.mxu0 %v4792
        %v4885 = vpop.f32.mrf.mxu0
        %v4886 = vadd.f32 0.0, %v4885
        %v4887 = vpop.f32.mrf.mxu0
        %v4888 = vadd.f32 0.0, %v4887
        %v4889 = vpop.f32.mrf.mxu0
        %v4890 = vadd.f32 0.0, %v4889
        %v4891 = vpop.f32.mrf.mxu0
        %v4892 = vadd.f32 0.0, %v4891
        %4893 = vmatprep.mubr.bf16.mxu0 0
        %4894 = vmatmul.mubr.bf16.gmra.mxu0 %v4793
        %v4895 = vpop.f32.mrf.mxu0
        %v4896 = vadd.f32 0.0, %v4895
        %v4897 = vpop.f32.mrf.mxu0
        %v4898 = vadd.f32 0.0, %v4897
        %v4899 = vpop.f32.mrf.mxu0
        %v4900 = vadd.f32 0.0, %v4899
        %v4901 = vpop.f32.mrf.mxu0
        %v4902 = vadd.f32 0.0, %v4901
        %4903 = vmatprep.mubr.bf16.mxu0 0
        %4904 = vmatmul.mubr.bf16.gmra.mxu0 %v4794
        %v4905 = vpop.f32.mrf.mxu0
        %v4906 = vadd.f32 0.0, %v4905
        %v4907 = vpop.f32.mrf.mxu0
        %v4908 = vadd.f32 0.0, %v4907
        %v4909 = vpop.f32.mrf.mxu0
        %v4910 = vadd.f32 0.0, %v4909
        %v4911 = vpop.f32.mrf.mxu0
        %v4912 = vadd.f32 0.0, %v4911
        %4913 = vmatprep.mubr.bf16.mxu0 0
        %4914 = vmatmul.mubr.bf16.gmra.mxu0 %v4795
        %v4915 = vpop.f32.mrf.mxu0
        %v4916 = vadd.f32 0.0, %v4915
        %v4917 = vpop.f32.mrf.mxu0
        %v4918 = vadd.f32 0.0, %v4917
        %v4919 = vpop.f32.mrf.mxu0
        %v4920 = vadd.f32 0.0, %v4919
        %v4921 = vpop.f32.mrf.mxu0
        %v4922 = vadd.f32 0.0, %v4921
        %4923 = vmatprep.mubr.bf16.mxu0 0
        %4924 = vmatmul.mubr.bf16.gmra.mxu0 %v4796
        %v4925 = vpop.f32.mrf.mxu0
        %v4926 = vadd.f32 0.0, %v4925
        %v4927 = vpop.f32.mrf.mxu0
        %v4928 = vadd.f32 0.0, %v4927
        %v4929 = vpop.f32.mrf.mxu0
        %v4930 = vadd.f32 0.0, %v4929
        %v4931 = vpop.f32.mrf.mxu0
        %v4932 = vadd.f32 0.0, %v4931
        %4933 = vmatprep.mubr.bf16.mxu0 0
        %4934 = vmatmul.mubr.bf16.gmra.mxu0 %v4797
        %v4935 = vpop.f32.mrf.mxu0
        %v4936 = vadd.f32 0.0, %v4935
        %v4937 = vpop.f32.mrf.mxu0
        %v4938 = vadd.f32 0.0, %v4937
        %v4939 = vpop.f32.mrf.mxu0
        %v4940 = vadd.f32 0.0, %v4939
        %v4941 = vpop.f32.mrf.mxu0
        %v4942 = vadd.f32 0.0, %v4941
        %4943 = vmatprep.mubr.bf16.mxu0 0
        %4944 = vmatmul.mubr.bf16.gmra.mxu0 %v4798
        %v4945 = vpop.f32.mrf.mxu0
        %v4946 = vadd.f32 0.0, %v4945
        %v4947 = vpop.f32.mrf.mxu0
        %v4948 = vadd.f32 0.0, %v4947
        %v4949 = vpop.f32.mrf.mxu0
        %v4950 = vadd.f32 0.0, %v4949
        %v4951 = vpop.f32.mrf.mxu0
        %v4952 = vadd.f32 0.0, %v4951
        %4953 = vmatprep.mubr.bf16.mxu0 0
        %4954 = vmatmul.mubr.bf16.gmra.mxu0 %v4799
        %v4955 = vpop.f32.mrf.mxu0
        %v4956 = vadd.f32 0.0, %v4955
        %v4957 = vpop.f32.mrf.mxu0
        %v4958 = vadd.f32 0.0, %v4957
        %v4959 = vpop.f32.mrf.mxu0
        %v4960 = vadd.f32 0.0, %v4959
        %v4961 = vpop.f32.mrf.mxu0
        %v4962 = vadd.f32 0.0, %v4961
        %4963 = vmatprep.mubr.bf16.mxu0 0
        %4964 = vmatmul.mubr.bf16.gmra.mxu0 %v4800
        %v4965 = vpop.f32.mrf.mxu0
        %v4966 = vadd.f32 0.0, %v4965
        %v4967 = vpop.f32.mrf.mxu0
        %v4968 = vadd.f32 0.0, %v4967
        %v4969 = vpop.f32.mrf.mxu0
        %v4970 = vadd.f32 0.0, %v4969
        %v4971 = vpop.f32.mrf.mxu0
        %v4972 = vadd.f32 0.0, %v4971
        %4973 = vmatprep.mubr.bf16.mxu0 0
        %4974 = vmatmul.mubr.bf16.gmra.mxu0 %v4801
        %v4975 = vpop.f32.mrf.mxu0
        %v4976 = vadd.f32 0.0, %v4975
        %v4977 = vpop.f32.mrf.mxu0
        %v4978 = vadd.f32 0.0, %v4977
        %v4979 = vpop.f32.mrf.mxu0
        %v4980 = vadd.f32 0.0, %v4979
        %v4981 = vpop.f32.mrf.mxu0
        %v4982 = vadd.f32 0.0, %v4981
        %4983 = vmatprep.mubr.bf16.mxu0 0
        %4984 = vmatmul.mubr.bf16.gmra.mxu0 %v4802
        %v4985 = vpop.f32.mrf.mxu0
        %v4986 = vadd.f32 0.0, %v4985
        %v4987 = vpop.f32.mrf.mxu0
        %v4988 = vadd.f32 0.0, %v4987
        %v4989 = vpop.f32.mrf.mxu0
        %v4990 = vadd.f32 0.0, %v4989
        %v4991 = vpop.f32.mrf.mxu0
        %v4992 = vadd.f32 0.0, %v4991
        %4993 = vmatprep.mubr.bf16.mxu0 0
        %4994 = vmatmul.mubr.bf16.gmra.mxu0 %v4803
        %v4995 = vpop.f32.mrf.mxu0
        %v4996 = vadd.f32 0.0, %v4995
        %v4997 = vpop.f32.mrf.mxu0
        %v4998 = vadd.f32 0.0, %v4997
        %v4999 = vpop.f32.mrf.mxu0
        %v5000 = vadd.f32 0.0, %v4999
        %v5001 = vpop.f32.mrf.mxu0
        %v5002 = vadd.f32 0.0, %v5001
        %5003 = vmatprep.mubr.bf16.mxu0 0
        %5004 = vmatmul.mubr.bf16.gmra.mxu0 %v4804
        %v5005 = vpop.f32.mrf.mxu0
        %v5006 = vadd.f32 0.0, %v5005
        %v5007 = vpop.f32.mrf.mxu0
        %v5008 = vadd.f32 0.0, %v5007
        %v5009 = vpop.f32.mrf.mxu0
        %v5010 = vadd.f32 0.0, %v5009
        %v5011 = vpop.f32.mrf.mxu0
        %v5012 = vadd.f32 0.0, %v5011
        %5013 = vdwg.mxu0
        %v5014 = vmax.f32 %v4856, %v4858
        %5015 = vmax.xlane.f32.xlu0 %v5014
        %v5016 = vpop.xlane.xlu0 %5015
        %v5017 = vmax.f32 %v4860, %v4862
        %5018 = vmax.xlane.f32.xlu0 %v5017
        %v5019 = vpop.xlane.xlu0 %5018
        %v5020 = vmax.f32 %v4866, %v4868
        %5021 = vmax.xlane.f32.xlu0 %v5020
        %v5022 = vpop.xlane.xlu0 %5021
        %v5023 = vmax.f32 %v4870, %v4872
        %5024 = vmax.xlane.f32.xlu0 %v5023
        %v5025 = vpop.xlane.xlu0 %5024
        %v5026 = vmax.f32 %v4876, %v4878
        %5027 = vmax.xlane.f32.xlu0 %v5026
        %v5028 = vpop.xlane.xlu0 %5027
        %v5029 = vmax.f32 %v4880, %v4882
        %5030 = vmax.xlane.f32.xlu0 %v5029
        %v5031 = vpop.xlane.xlu0 %5030
        %v5032 = vmax.f32 %v4886, %v4888
        %5033 = vmax.xlane.f32.xlu0 %v5032
        %v5034 = vpop.xlane.xlu0 %5033
        %v5035 = vmax.f32 %v4890, %v4892
        %5036 = vmax.xlane.f32.xlu0 %v5035
        %v5037 = vpop.xlane.xlu0 %5036
        %v5038 = vmax.f32 %v4896, %v4898
        %5039 = vmax.xlane.f32.xlu0 %v5038
        %v5040 = vpop.xlane.xlu0 %5039
        %v5041 = vmax.f32 %v4900, %v4902
        %5042 = vmax.xlane.f32.xlu0 %v5041
        %v5043 = vpop.xlane.xlu0 %5042
        %v5044 = vmax.f32 %v4906, %v4908
        %5045 = vmax.xlane.f32.xlu0 %v5044
        %v5046 = vpop.xlane.xlu0 %5045
        %v5047 = vmax.f32 %v4910, %v4912
        %5048 = vmax.xlane.f32.xlu0 %v5047
        %v5049 = vpop.xlane.xlu0 %5048
        %v5050 = vmax.f32 %v4916, %v4918
        %5051 = vmax.xlane.f32.xlu0 %v5050
        %v5052 = vpop.xlane.xlu0 %5051
        %v5053 = vmax.f32 %v4920, %v4922
        %5054 = vmax.xlane.f32.xlu0 %v5053
        %v5055 = vpop.xlane.xlu0 %5054
        %v5056 = vmax.f32 %v4926, %v4928
        %5057 = vmax.xlane.f32.xlu0 %v5056
        %v5058 = vpop.xlane.xlu0 %5057
        %v5059 = vmax.f32 %v4930, %v4932
        %5060 = vmax.xlane.f32.xlu0 %v5059
        %v5061 = vpop.xlane.xlu0 %5060
        %v5062 = vmax.f32 %v4936, %v4938
        %5063 = vmax.xlane.f32.xlu0 %v5062
        %v5064 = vpop.xlane.xlu0 %5063
        %v5065 = vmax.f32 %v4940, %v4942
        %5066 = vmax.xlane.f32.xlu0 %v5065
        %v5067 = vpop.xlane.xlu0 %5066
        %v5068 = vmax.f32 %v4946, %v4948
        %5069 = vmax.xlane.f32.xlu0 %v5068
        %v5070 = vpop.xlane.xlu0 %5069
        %v5071 = vmax.f32 %v4950, %v4952
        %5072 = vmax.xlane.f32.xlu0 %v5071
        %v5073 = vpop.xlane.xlu0 %5072
        %v5074 = vmax.f32 %v4956, %v4958
        %5075 = vmax.xlane.f32.xlu0 %v5074
        %v5076 = vpop.xlane.xlu0 %5075
        %v5077 = vmax.f32 %v4960, %v4962
        %5078 = vmax.xlane.f32.xlu0 %v5077
        %v5079 = vpop.xlane.xlu0 %5078
        %v5080 = vmax.f32 %v4966, %v4968
        %5081 = vmax.xlane.f32.xlu0 %v5080
        %v5082 = vpop.xlane.xlu0 %5081
        %v5083 = vmax.f32 %v4970, %v4972
        %5084 = vmax.xlane.f32.xlu0 %v5083
        %v5085 = vpop.xlane.xlu0 %5084
        %v5086 = vmax.f32 %v4976, %v4978
        %5087 = vmax.xlane.f32.xlu0 %v5086
        %v5088 = vpop.xlane.xlu0 %5087
        %v5089 = vmax.f32 %v4980, %v4982
        %5090 = vmax.xlane.f32.xlu0 %v5089
        %v5091 = vpop.xlane.xlu0 %5090
        %v5092 = vmax.f32 %v4986, %v4988
        %5093 = vmax.xlane.f32.xlu0 %v5092
        %v5094 = vpop.xlane.xlu0 %5093
        %v5095 = vmax.f32 %v4990, %v4992
        %5096 = vmax.xlane.f32.xlu0 %v5095
        %v5097 = vpop.xlane.xlu0 %5096
        %v5098 = vmax.f32 %v4996, %v4998
        %5099 = vmax.xlane.f32.xlu0 %v5098
        %v5100 = vpop.xlane.xlu0 %5099
        %v5101 = vmax.f32 %v5000, %v5002
        %5102 = vmax.xlane.f32.xlu0 %v5101
        %v5103 = vpop.xlane.xlu0 %5102
        %v5104 = vmax.f32 %v5006, %v5008
        %5105 = vmax.xlane.f32.xlu0 %v5104
        %v5106 = vpop.xlane.xlu0 %5105
        %v5107 = vmax.f32 %v5010, %v5012
        %5108 = vmax.xlane.f32.xlu0 %v5107
        %v5109 = vpop.xlane.xlu0 %5108
        %v5110 = vsub.f32 %v4856, %v5016
        %v5111 = vsub.f32 %v4858, %v5016
        %v5112 = vsub.f32 %v4860, %v5019
        %v5113 = vsub.f32 %v4862, %v5019
        %v5114 = vsub.f32 %v4866, %v5022
        %v5115 = vsub.f32 %v4868, %v5022
        %v5116 = vsub.f32 %v4870, %v5025
        %v5117 = vsub.f32 %v4872, %v5025
        %v5118 = vsub.f32 %v4876, %v5028
        %v5119 = vsub.f32 %v4878, %v5028
        %v5120 = vsub.f32 %v4880, %v5031
        %v5121 = vsub.f32 %v4882, %v5031
        %v5122 = vsub.f32 %v4886, %v5034
        %v5123 = vsub.f32 %v4888, %v5034
        %v5124 = vsub.f32 %v4890, %v5037
        %v5125 = vsub.f32 %v4892, %v5037
        %v5126 = vsub.f32 %v4896, %v5040
        %v5127 = vsub.f32 %v4898, %v5040
        %v5128 = vsub.f32 %v4900, %v5043
        %v5129 = vsub.f32 %v4902, %v5043
        %v5130 = vsub.f32 %v4906, %v5046
        %v5131 = vsub.f32 %v4908, %v5046
        %v5132 = vsub.f32 %v4910, %v5049
        %v5133 = vsub.f32 %v4912, %v5049
        %v5134 = vsub.f32 %v4916, %v5052
        %v5135 = vsub.f32 %v4918, %v5052
        %v5136 = vsub.f32 %v4920, %v5055
        %v5137 = vsub.f32 %v4922, %v5055
        %v5138 = vsub.f32 %v4926, %v5058
        %v5139 = vsub.f32 %v4928, %v5058
        %v5140 = vsub.f32 %v4930, %v5061
        %v5141 = vsub.f32 %v4932, %v5061
        %v5142 = vsub.f32 %v4936, %v5064
        %v5143 = vsub.f32 %v4938, %v5064
        %v5144 = vsub.f32 %v4940, %v5067
        %v5145 = vsub.f32 %v4942, %v5067
        %v5146 = vsub.f32 %v4946, %v5070
        %v5147 = vsub.f32 %v4948, %v5070
        %v5148 = vsub.f32 %v4950, %v5073
        %v5149 = vsub.f32 %v4952, %v5073
        %v5150 = vsub.f32 %v4956, %v5076
        %v5151 = vsub.f32 %v4958, %v5076
        %v5152 = vsub.f32 %v4960, %v5079
        %v5153 = vsub.f32 %v4962, %v5079
        %v5154 = vsub.f32 %v4966, %v5082
        %v5155 = vsub.f32 %v4968, %v5082
        %v5156 = vsub.f32 %v4970, %v5085
        %v5157 = vsub.f32 %v4972, %v5085
        %v5158 = vsub.f32 %v4976, %v5088
        %v5159 = vsub.f32 %v4978, %v5088
        %v5160 = vsub.f32 %v4980, %v5091
        %v5161 = vsub.f32 %v4982, %v5091
        %v5162 = vsub.f32 %v4986, %v5094
        %v5163 = vsub.f32 %v4988, %v5094
        %v5164 = vsub.f32 %v4990, %v5097
        %v5165 = vsub.f32 %v4992, %v5097
        %v5166 = vsub.f32 %v4996, %v5100
        %v5167 = vsub.f32 %v4998, %v5100
        %v5168 = vsub.f32 %v5000, %v5103
        %v5169 = vsub.f32 %v5002, %v5103
        %v5170 = vsub.f32 %v5006, %v5106
        %v5171 = vsub.f32 %v5008, %v5106
        %v5172 = vsub.f32 %v5010, %v5109
        %v5173 = vsub.f32 %v5012, %v5109
        %v5174 = vmul.f32 %v5110, 1.442695
        %v5175 = vpow.pop %v5174
        %v5176 = vmul.f32 %v5111, 1.442695
        %v5177 = vpow.pop %v5176
        %v5178 = vmul.f32 %v5112, 1.442695
        %v5179 = vpow.pop %v5178
        %v5180 = vmul.f32 %v5113, 1.442695
        %v5181 = vpow.pop %v5180
        %v5182 = vmul.f32 %v5114, 1.442695
        %v5183 = vpow.pop %v5182
        %v5184 = vmul.f32 %v5115, 1.442695
        %v5185 = vpow.pop %v5184
        %v5186 = vmul.f32 %v5116, 1.442695
        %v5187 = vpow.pop %v5186
        %v5188 = vmul.f32 %v5117, 1.442695
        %v5189 = vpow.pop %v5188
        %v5190 = vmul.f32 %v5118, 1.442695
        %v5191 = vpow.pop %v5190
        %v5192 = vmul.f32 %v5119, 1.442695
        %v5193 = vpow.pop %v5192
        %v5194 = vmul.f32 %v5120, 1.442695
        %v5195 = vpow.pop %v5194
        %v5196 = vmul.f32 %v5121, 1.442695
        %v5197 = vpow.pop %v5196
        %v5198 = vmul.f32 %v5122, 1.442695
        %v5199 = vpow.pop %v5198
        %v5200 = vmul.f32 %v5123, 1.442695
        %v5201 = vpow.pop %v5200
        %v5202 = vmul.f32 %v5124, 1.442695
        %v5203 = vpow.pop %v5202
        %v5204 = vmul.f32 %v5125, 1.442695
        %v5205 = vpow.pop %v5204
        %v5206 = vmul.f32 %v5126, 1.442695
        %v5207 = vpow.pop %v5206
        %v5208 = vmul.f32 %v5127, 1.442695
        %v5209 = vpow.pop %v5208
        %v5210 = vmul.f32 %v5128, 1.442695
        %v5211 = vpow.pop %v5210
        %v5212 = vmul.f32 %v5129, 1.442695
        %v5213 = vpow.pop %v5212
        %v5214 = vmul.f32 %v5130, 1.442695
        %v5215 = vpow.pop %v5214
        %v5216 = vmul.f32 %v5131, 1.442695
        %v5217 = vpow.pop %v5216
        %v5218 = vmul.f32 %v5132, 1.442695
        %v5219 = vpow.pop %v5218
        %v5220 = vmul.f32 %v5133, 1.442695
        %v5221 = vpow.pop %v5220
        %v5222 = vmul.f32 %v5134, 1.442695
        %v5223 = vpow.pop %v5222
        %v5224 = vmul.f32 %v5135, 1.442695
        %v5225 = vpow.pop %v5224
        %v5226 = vmul.f32 %v5136, 1.442695
        %v5227 = vpow.pop %v5226
        %v5228 = vmul.f32 %v5137, 1.442695
        %v5229 = vpow.pop %v5228
        %v5230 = vmul.f32 %v5138, 1.442695
        %v5231 = vpow.pop %v5230
        %v5232 = vmul.f32 %v5139, 1.442695
        %v5233 = vpow.pop %v5232
        %v5234 = vmul.f32 %v5140, 1.442695
        %v5235 = vpow.pop %v5234
        %v5236 = vmul.f32 %v5141, 1.442695
        %v5237 = vpow.pop %v5236
        %v5238 = vmul.f32 %v5142, 1.442695
        %v5239 = vpow.pop %v5238
        %v5240 = vmul.f32 %v5143, 1.442695
        %v5241 = vpow.pop %v5240
        %v5242 = vmul.f32 %v5144, 1.442695
        %v5243 = vpow.pop %v5242
        %v5244 = vmul.f32 %v5145, 1.442695
        %v5245 = vpow.pop %v5244
        %v5246 = vmul.f32 %v5146, 1.442695
        %v5247 = vpow.pop %v5246
        %v5248 = vmul.f32 %v5147, 1.442695
        %v5249 = vpow.pop %v5248
        %v5250 = vmul.f32 %v5148, 1.442695
        %v5251 = vpow.pop %v5250
        %v5252 = vmul.f32 %v5149, 1.442695
        %v5253 = vpow.pop %v5252
        %v5254 = vmul.f32 %v5150, 1.442695
        %v5255 = vpow.pop %v5254
        %v5256 = vmul.f32 %v5151, 1.442695
        %v5257 = vpow.pop %v5256
        %v5258 = vmul.f32 %v5152, 1.442695
        %v5259 = vpow.pop %v5258
        %v5260 = vmul.f32 %v5153, 1.442695
        %v5261 = vpow.pop %v5260
        %v5262 = vmul.f32 %v5154, 1.442695
        %v5263 = vpow.pop %v5262
        %v5264 = vmul.f32 %v5155, 1.442695
        %v5265 = vpow.pop %v5264
        %v5266 = vmul.f32 %v5156, 1.442695
        %v5267 = vpow.pop %v5266
        %v5268 = vmul.f32 %v5157, 1.442695
        %v5269 = vpow.pop %v5268
        %v5270 = vmul.f32 %v5158, 1.442695
        %v5271 = vpow.pop %v5270
        %v5272 = vmul.f32 %v5159, 1.442695
        %v5273 = vpow.pop %v5272
        %v5274 = vmul.f32 %v5160, 1.442695
        %v5275 = vpow.pop %v5274
        %v5276 = vmul.f32 %v5161, 1.442695
        %v5277 = vpow.pop %v5276
        %v5278 = vmul.f32 %v5162, 1.442695
        %v5279 = vpow.pop %v5278
        %v5280 = vmul.f32 %v5163, 1.442695
        %v5281 = vpow.pop %v5280
        %v5282 = vmul.f32 %v5164, 1.442695
        %v5283 = vpow.pop %v5282
        %v5284 = vmul.f32 %v5165, 1.442695
        %v5285 = vpow.pop %v5284
        %v5286 = vmul.f32 %v5166, 1.442695
        %v5287 = vpow.pop %v5286
        %v5288 = vmul.f32 %v5167, 1.442695
        %v5289 = vpow.pop %v5288
        %v5290 = vmul.f32 %v5168, 1.442695
        %v5291 = vpow.pop %v5290
        %v5292 = vmul.f32 %v5169, 1.442695
        %v5293 = vpow.pop %v5292
        %v5294 = vmul.f32 %v5170, 1.442695
        %v5295 = vpow.pop %v5294
        %v5296 = vmul.f32 %v5171, 1.442695
        %v5297 = vpow.pop %v5296
        %v5298 = vmul.f32 %v5172, 1.442695
        %v5299 = vpow.pop %v5298
        %v5300 = vmul.f32 %v5173, 1.442695
        %v5301 = vpow.pop %v5300
        %v5302 = vadd.f32 %v5175, %v5177
        %5303 = vadd.xlane.f32.xlu0 %v5302
        %v5304 = vpop.xlane.xlu0 %5303
        %v5305 = vadd.f32 %v5179, %v5181
        %5306 = vadd.xlane.f32.xlu0 %v5305
        %v5307 = vpop.xlane.xlu0 %5306
        %v5308 = vadd.f32 %v5183, %v5185
        %5309 = vadd.xlane.f32.xlu0 %v5308
        %v5310 = vpop.xlane.xlu0 %5309
        %v5311 = vadd.f32 %v5187, %v5189
        %5312 = vadd.xlane.f32.xlu0 %v5311
        %v5313 = vpop.xlane.xlu0 %5312
        %v5314 = vadd.f32 %v5191, %v5193
        %5315 = vadd.xlane.f32.xlu0 %v5314
        %v5316 = vpop.xlane.xlu0 %5315
        %v5317 = vadd.f32 %v5195, %v5197
        %5318 = vadd.xlane.f32.xlu0 %v5317
        %v5319 = vpop.xlane.xlu0 %5318
        %v5320 = vadd.f32 %v5199, %v5201
        %5321 = vadd.xlane.f32.xlu0 %v5320
        %v5322 = vpop.xlane.xlu0 %5321
        %v5323 = vadd.f32 %v5203, %v5205
        %5324 = vadd.xlane.f32.xlu0 %v5323
        %v5325 = vpop.xlane.xlu0 %5324
        %v5326 = vadd.f32 %v5207, %v5209
        %5327 = vadd.xlane.f32.xlu0 %v5326
        %v5328 = vpop.xlane.xlu0 %5327
        %v5329 = vadd.f32 %v5211, %v5213
        %5330 = vadd.xlane.f32.xlu0 %v5329
        %v5331 = vpop.xlane.xlu0 %5330
        %v5332 = vadd.f32 %v5215, %v5217
        %5333 = vadd.xlane.f32.xlu0 %v5332
        %v5334 = vpop.xlane.xlu0 %5333
        %v5335 = vadd.f32 %v5219, %v5221
        %5336 = vadd.xlane.f32.xlu0 %v5335
        %v5337 = vpop.xlane.xlu0 %5336
        %v5338 = vadd.f32 %v5223, %v5225
        %5339 = vadd.xlane.f32.xlu0 %v5338
        %v5340 = vpop.xlane.xlu0 %5339
        %v5341 = vadd.f32 %v5227, %v5229
        %5342 = vadd.xlane.f32.xlu0 %v5341
        %v5343 = vpop.xlane.xlu0 %5342
        %v5344 = vadd.f32 %v5231, %v5233
        %5345 = vadd.xlane.f32.xlu0 %v5344
        %v5346 = vpop.xlane.xlu0 %5345
        %v5347 = vadd.f32 %v5235, %v5237
        %5348 = vadd.xlane.f32.xlu0 %v5347
        %v5349 = vpop.xlane.xlu0 %5348
        %v5350 = vadd.f32 %v5239, %v5241
        %5351 = vadd.xlane.f32.xlu0 %v5350
        %v5352 = vpop.xlane.xlu0 %5351
        %v5353 = vadd.f32 %v5243, %v5245
        %5354 = vadd.xlane.f32.xlu0 %v5353
        %v5355 = vpop.xlane.xlu0 %5354
        %v5356 = vadd.f32 %v5247, %v5249
        %5357 = vadd.xlane.f32.xlu0 %v5356
        %v5358 = vpop.xlane.xlu0 %5357
        %v5359 = vadd.f32 %v5251, %v5253
        %5360 = vadd.xlane.f32.xlu0 %v5359
        %v5361 = vpop.xlane.xlu0 %5360
        %v5362 = vadd.f32 %v5255, %v5257
        %5363 = vadd.xlane.f32.xlu0 %v5362
        %v5364 = vpop.xlane.xlu0 %5363
        %v5365 = vadd.f32 %v5259, %v5261
        %5366 = vadd.xlane.f32.xlu0 %v5365
        %v5367 = vpop.xlane.xlu0 %5366
        %v5368 = vadd.f32 %v5263, %v5265
        %5369 = vadd.xlane.f32.xlu0 %v5368
        %v5370 = vpop.xlane.xlu0 %5369
        %v5371 = vadd.f32 %v5267, %v5269
        %5372 = vadd.xlane.f32.xlu0 %v5371
        %v5373 = vpop.xlane.xlu0 %5372
        %v5374 = vadd.f32 %v5271, %v5273
        %5375 = vadd.xlane.f32.xlu0 %v5374
        %v5376 = vpop.xlane.xlu0 %5375
        %v5377 = vadd.f32 %v5275, %v5277
        %5378 = vadd.xlane.f32.xlu0 %v5377
        %v5379 = vpop.xlane.xlu0 %5378
        %v5380 = vadd.f32 %v5279, %v5281
        %5381 = vadd.xlane.f32.xlu0 %v5380
        %v5382 = vpop.xlane.xlu0 %5381
        %v5383 = vadd.f32 %v5283, %v5285
        %5384 = vadd.xlane.f32.xlu0 %v5383
        %v5385 = vpop.xlane.xlu0 %5384
        %v5386 = vadd.f32 %v5287, %v5289
        %5387 = vadd.xlane.f32.xlu0 %v5386
        %v5388 = vpop.xlane.xlu0 %5387
        %v5389 = vadd.f32 %v5291, %v5293
        %5390 = vadd.xlane.f32.xlu0 %v5389
        %v5391 = vpop.xlane.xlu0 %5390
        %v5392 = vadd.f32 %v5295, %v5297
        %5393 = vadd.xlane.f32.xlu0 %v5392
        %v5394 = vpop.xlane.xlu0 %5393
        %v5395 = vadd.f32 %v5299, %v5301
        %5396 = vadd.xlane.f32.xlu0 %v5395
        %v5397 = vpop.xlane.xlu0 %5396
        %v5398 = vrcp.pop %v5304
        %v5399 = vrcp.pop %v5307
        %v5400 = vrcp.pop %v5310
        %v5401 = vrcp.pop %v5313
        %v5402 = vrcp.pop %v5316
        %v5403 = vrcp.pop %v5319
        %v5404 = vrcp.pop %v5322
        %v5405 = vrcp.pop %v5325
        %v5406 = vrcp.pop %v5328
        %v5407 = vrcp.pop %v5331
        %v5408 = vrcp.pop %v5334
        %v5409 = vrcp.pop %v5337
        %v5410 = vrcp.pop %v5340
        %v5411 = vrcp.pop %v5343
        %v5412 = vrcp.pop %v5346
        %v5413 = vrcp.pop %v5349
        %v5414 = vrcp.pop %v5352
        %v5415 = vrcp.pop %v5355
        %v5416 = vrcp.pop %v5358
        %v5417 = vrcp.pop %v5361
        %v5418 = vrcp.pop %v5364
        %v5419 = vrcp.pop %v5367
        %v5420 = vrcp.pop %v5370
        %v5421 = vrcp.pop %v5373
        %v5422 = vrcp.pop %v5376
        %v5423 = vrcp.pop %v5379
        %v5424 = vrcp.pop %v5382
        %v5425 = vrcp.pop %v5385
        %v5426 = vrcp.pop %v5388
        %v5427 = vrcp.pop %v5391
        %v5428 = vrcp.pop %v5394
        %v5429 = vrcp.pop %v5397
        %v5430 = vmul.f32 %v5175, %v5398
        %v5431 = vmul.f32 %v5177, %v5398
        %v5432 = vmul.f32 %v5179, %v5399
        %v5433 = vmul.f32 %v5181, %v5399
        %v5434 = vmul.f32 %v5183, %v5400
        %v5435 = vmul.f32 %v5185, %v5400
        %v5436 = vmul.f32 %v5187, %v5401
        %v5437 = vmul.f32 %v5189, %v5401
        %v5438 = vmul.f32 %v5191, %v5402
        %v5439 = vmul.f32 %v5193, %v5402
        %v5440 = vmul.f32 %v5195, %v5403
        %v5441 = vmul.f32 %v5197, %v5403
        %v5442 = vmul.f32 %v5199, %v5404
        %v5443 = vmul.f32 %v5201, %v5404
        %v5444 = vmul.f32 %v5203, %v5405
        %v5445 = vmul.f32 %v5205, %v5405
        %v5446 = vmul.f32 %v5207, %v5406
        %v5447 = vmul.f32 %v5209, %v5406
        %v5448 = vmul.f32 %v5211, %v5407
        %v5449 = vmul.f32 %v5213, %v5407
        %v5450 = vmul.f32 %v5215, %v5408
        %v5451 = vmul.f32 %v5217, %v5408
        %v5452 = vmul.f32 %v5219, %v5409
        %v5453 = vmul.f32 %v5221, %v5409
        %v5454 = vmul.f32 %v5223, %v5410
        %v5455 = vmul.f32 %v5225, %v5410
        %v5456 = vmul.f32 %v5227, %v5411
        %v5457 = vmul.f32 %v5229, %v5411
        %v5458 = vmul.f32 %v5231, %v5412
        %v5459 = vmul.f32 %v5233, %v5412
        %v5460 = vmul.f32 %v5235, %v5413
        %v5461 = vmul.f32 %v5237, %v5413
        %v5462 = vmul.f32 %v5239, %v5414
        %v5463 = vmul.f32 %v5241, %v5414
        %v5464 = vmul.f32 %v5243, %v5415
        %v5465 = vmul.f32 %v5245, %v5415
        %v5466 = vmul.f32 %v5247, %v5416
        %v5467 = vmul.f32 %v5249, %v5416
        %v5468 = vmul.f32 %v5251, %v5417
        %v5469 = vmul.f32 %v5253, %v5417
        %v5470 = vmul.f32 %v5255, %v5418
        %v5471 = vmul.f32 %v5257, %v5418
        %v5472 = vmul.f32 %v5259, %v5419
        %v5473 = vmul.f32 %v5261, %v5419
        %v5474 = vmul.f32 %v5263, %v5420
        %v5475 = vmul.f32 %v5265, %v5420
        %v5476 = vmul.f32 %v5267, %v5421
        %v5477 = vmul.f32 %v5269, %v5421
        %v5478 = vmul.f32 %v5271, %v5422
        %v5479 = vmul.f32 %v5273, %v5422
        %v5480 = vmul.f32 %v5275, %v5423
        %v5481 = vmul.f32 %v5277, %v5423
        %v5482 = vmul.f32 %v5279, %v5424
        %v5483 = vmul.f32 %v5281, %v5424
        %v5484 = vmul.f32 %v5283, %v5425
        %v5485 = vmul.f32 %v5285, %v5425
        %v5486 = vmul.f32 %v5287, %v5426
        %v5487 = vmul.f32 %v5289, %v5426
        %v5488 = vmul.f32 %v5291, %v5427
        %v5489 = vmul.f32 %v5293, %v5427
        %v5490 = vmul.f32 %v5295, %v5428
        %v5491 = vmul.f32 %v5297, %v5428
        %v5492 = vmul.f32 %v5299, %v5429
        %v5493 = vmul.f32 %v5301, %v5429
        %v5494 = vadd.f32 %v5430, %v5432
        %v5495 = vadd.f32 %v5494, %v5434
        %v5496 = vadd.f32 %v5495, %v5436
        %v5497 = vadd.f32 %v5496, %v5438
        %v5498 = vadd.f32 %v5497, %v5440
        %v5499 = vadd.f32 %v5498, %v5442
        %v5500 = vadd.f32 %v5499, %v5444
        %v5501 = vadd.f32 %v5500, %v5446
        %v5502 = vadd.f32 %v5501, %v5448
        %v5503 = vadd.f32 %v5502, %v5450
        %v5504 = vadd.f32 %v5503, %v5452
        %v5505 = vadd.f32 %v5504, %v5454
        %v5506 = vadd.f32 %v5505, %v5456
        %v5507 = vadd.f32 %v5506, %v5458
        %v5508 = vadd.f32 %v5507, %v5460
        %v5509 = vadd.f32 %v5508, %v5462
        %v5510 = vadd.f32 %v5509, %v5464
        %v5511 = vadd.f32 %v5510, %v5466
        %v5512 = vadd.f32 %v5511, %v5468
        %v5513 = vadd.f32 %v5512, %v5470
        %v5514 = vadd.f32 %v5513, %v5472
        %v5515 = vadd.f32 %v5514, %v5474
        %v5516 = vadd.f32 %v5515, %v5476
        %v5517 = vadd.f32 %v5516, %v5478
        %v5518 = vadd.f32 %v5517, %v5480
        %v5519 = vadd.f32 %v5518, %v5482
        %v5520 = vadd.f32 %v5519, %v5484
        %v5521 = vadd.f32 %v5520, %v5486
        %v5522 = vadd.f32 %v5521, %v5488
        %v5523 = vadd.f32 %v5522, %v5490
        %v5524 = vadd.f32 %v5523, %v5492
        %v5525 = vrot.slane %v5524, 4
        %v5526 = vadd.f32 %v5524, %v5525
        %v5527 = vrot.slane %v5526, 2
        %v5528 = vadd.f32 %v5526, %v5527
        %v5529 = vrot.slane %v5528, 1
        %v5530 = vadd.f32 %v5528, %v5529
        %v5531 = vadd.f32 %v5431, %v5433
        %v5532 = vadd.f32 %v5531, %v5435
        %v5533 = vadd.f32 %v5532, %v5437
        %v5534 = vadd.f32 %v5533, %v5439
        %v5535 = vadd.f32 %v5534, %v5441
        %v5536 = vadd.f32 %v5535, %v5443
        %v5537 = vadd.f32 %v5536, %v5445
        %v5538 = vadd.f32 %v5537, %v5447
        %v5539 = vadd.f32 %v5538, %v5449
        %v5540 = vadd.f32 %v5539, %v5451
        %v5541 = vadd.f32 %v5540, %v5453
        %v5542 = vadd.f32 %v5541, %v5455
        %v5543 = vadd.f32 %v5542, %v5457
        %v5544 = vadd.f32 %v5543, %v5459
        %v5545 = vadd.f32 %v5544, %v5461
        %v5546 = vadd.f32 %v5545, %v5463
        %v5547 = vadd.f32 %v5546, %v5465
        %v5548 = vadd.f32 %v5547, %v5467
        %v5549 = vadd.f32 %v5548, %v5469
        %v5550 = vadd.f32 %v5549, %v5471
        %v5551 = vadd.f32 %v5550, %v5473
        %v5552 = vadd.f32 %v5551, %v5475
        %v5553 = vadd.f32 %v5552, %v5477
        %v5554 = vadd.f32 %v5553, %v5479
        %v5555 = vadd.f32 %v5554, %v5481
        %v5556 = vadd.f32 %v5555, %v5483
        %v5557 = vadd.f32 %v5556, %v5485
        %v5558 = vadd.f32 %v5557, %v5487
        %v5559 = vadd.f32 %v5558, %v5489
        %v5560 = vadd.f32 %v5559, %v5491
        %v5561 = vadd.f32 %v5560, %v5493
        %v5562 = vrot.slane %v5561, 4
        %v5563 = vadd.f32 %v5561, %v5562
        %v5564 = vrot.slane %v5563, 2
        %v5565 = vadd.f32 %v5563, %v5564
        %v5566 = vrot.slane %v5565, 1
        %v5567 = vadd.f32 %v5565, %v5566
        %v5568 = vadd.f32 %v5530, 1e-09
        %v5569 = vadd.f32 %v5567, 1e-09
        %v5570 = vrcp.pop %v5568
        %v5571 = vrcp.pop %v5569
        %v5572 = vmul.f32 %v5430, %v5570
        %v5573 = vmul.f32 %v5431, %v5571
        %v5574 = vmul.f32 %v5432, %v5570
        %v5575 = vmul.f32 %v5433, %v5571
        %v5576 = vmul.f32 %v5434, %v5570
        %v5577 = vmul.f32 %v5435, %v5571
        %v5578 = vmul.f32 %v5436, %v5570
        %v5579 = vmul.f32 %v5437, %v5571
        %v5580 = vmul.f32 %v5438, %v5570
        %v5581 = vmul.f32 %v5439, %v5571
        %v5582 = vmul.f32 %v5440, %v5570
        %v5583 = vmul.f32 %v5441, %v5571
        %v5584 = vmul.f32 %v5442, %v5570
        %v5585 = vmul.f32 %v5443, %v5571
        %v5586 = vmul.f32 %v5444, %v5570
        %v5587 = vmul.f32 %v5445, %v5571
        %v5588 = vmul.f32 %v5446, %v5570
        %v5589 = vmul.f32 %v5447, %v5571
        %v5590 = vmul.f32 %v5448, %v5570
        %v5591 = vmul.f32 %v5449, %v5571
        %v5592 = vmul.f32 %v5450, %v5570
        %v5593 = vmul.f32 %v5451, %v5571
        %v5594 = vmul.f32 %v5452, %v5570
        %v5595 = vmul.f32 %v5453, %v5571
        %v5596 = vmul.f32 %v5454, %v5570
        %v5597 = vmul.f32 %v5455, %v5571
        %v5598 = vmul.f32 %v5456, %v5570
        %v5599 = vmul.f32 %v5457, %v5571
        %v5600 = vmul.f32 %v5458, %v5570
        %v5601 = vmul.f32 %v5459, %v5571
        %v5602 = vmul.f32 %v5460, %v5570
        %v5603 = vmul.f32 %v5461, %v5571
        %v5604 = vmul.f32 %v5462, %v5570
        %v5605 = vmul.f32 %v5463, %v5571
        %v5606 = vmul.f32 %v5464, %v5570
        %v5607 = vmul.f32 %v5465, %v5571
        %v5608 = vmul.f32 %v5466, %v5570
        %v5609 = vmul.f32 %v5467, %v5571
        %v5610 = vmul.f32 %v5468, %v5570
        %v5611 = vmul.f32 %v5469, %v5571
        %v5612 = vmul.f32 %v5470, %v5570
        %v5613 = vmul.f32 %v5471, %v5571
        %v5614 = vmul.f32 %v5472, %v5570
        %v5615 = vmul.f32 %v5473, %v5571
        %v5616 = vmul.f32 %v5474, %v5570
        %v5617 = vmul.f32 %v5475, %v5571
        %v5618 = vmul.f32 %v5476, %v5570
        %v5619 = vmul.f32 %v5477, %v5571
        %v5620 = vmul.f32 %v5478, %v5570
        %v5621 = vmul.f32 %v5479, %v5571
        %v5622 = vmul.f32 %v5480, %v5570
        %v5623 = vmul.f32 %v5481, %v5571
        %v5624 = vmul.f32 %v5482, %v5570
        %v5625 = vmul.f32 %v5483, %v5571
        %v5626 = vmul.f32 %v5484, %v5570
        %v5627 = vmul.f32 %v5485, %v5571
        %v5628 = vmul.f32 %v5486, %v5570
        %v5629 = vmul.f32 %v5487, %v5571
        %v5630 = vmul.f32 %v5488, %v5570
        %v5631 = vmul.f32 %v5489, %v5571
        %v5632 = vmul.f32 %v5490, %v5570
        %v5633 = vmul.f32 %v5491, %v5571
        %v5634 = vmul.f32 %v5492, %v5570
        %v5635 = vmul.f32 %v5493, %v5571
        %v5636 = vpack.c.bf16 %v5574, %v5572
        %v5637 = vpack.c.bf16 %v5575, %v5573
        %v5638 = vpack.c.bf16 %v5578, %v5576
        %v5639 = vpack.c.bf16 %v5579, %v5577
        %v5640 = vpack.c.bf16 %v5582, %v5580
        %v5641 = vpack.c.bf16 %v5583, %v5581
        %v5642 = vpack.c.bf16 %v5586, %v5584
        %v5643 = vpack.c.bf16 %v5587, %v5585
        %v5644 = vpack.c.bf16 %v5590, %v5588
        %v5645 = vpack.c.bf16 %v5591, %v5589
        %v5646 = vpack.c.bf16 %v5594, %v5592
        %v5647 = vpack.c.bf16 %v5595, %v5593
        %v5648 = vpack.c.bf16 %v5598, %v5596
        %v5649 = vpack.c.bf16 %v5599, %v5597
        %v5650 = vpack.c.bf16 %v5602, %v5600
        %v5651 = vpack.c.bf16 %v5603, %v5601
        %v5652 = vpack.c.bf16 %v5606, %v5604
        %v5653 = vpack.c.bf16 %v5607, %v5605
        %v5654 = vpack.c.bf16 %v5610, %v5608
        %v5655 = vpack.c.bf16 %v5611, %v5609
        %v5656 = vpack.c.bf16 %v5614, %v5612
        %v5657 = vpack.c.bf16 %v5615, %v5613
        %v5658 = vpack.c.bf16 %v5618, %v5616
        %v5659 = vpack.c.bf16 %v5619, %v5617
        %v5660 = vpack.c.bf16 %v5622, %v5620
        %v5661 = vpack.c.bf16 %v5623, %v5621
        %v5662 = vpack.c.bf16 %v5626, %v5624
        %v5663 = vpack.c.bf16 %v5627, %v5625
        %v5664 = vpack.c.bf16 %v5630, %v5628
        %v5665 = vpack.c.bf16 %v5631, %v5629
        %v5666 = vpack.c.bf16 %v5634, %v5632
        %v5667 = vpack.c.bf16 %v5635, %v5633
        %v5668 = vpack.c.bf16 %v1481, %v1477
        %v5669 = vpack.c.bf16 %v1491, %v1487
        %v5670 = vpack.c.bf16 %v1501, %v1497
        %v5671 = vpack.c.bf16 %v1511, %v1507
        %v5672 = vpack.c.bf16 %v1521, %v1517
        %v5673 = vpack.c.bf16 %v1531, %v1527
        %v5674 = vpack.c.bf16 %v1541, %v1537
        %v5675 = vpack.c.bf16 %v1551, %v1547
        %v5676 = vpack.c.bf16 %v1561, %v1557
        %v5677 = vpack.c.bf16 %v1571, %v1567
        %v5678 = vpack.c.bf16 %v1581, %v1577
        %v5679 = vpack.c.bf16 %v1591, %v1587
        %v5680 = vpack.c.bf16 %v1601, %v1597
        %v5681 = vpack.c.bf16 %v1611, %v1607
        %v5682 = vpack.c.bf16 %v1621, %v1617
        %v5683 = vpack.c.bf16 %v1631, %v1627
        %5684 = vmatprep.subr.bf16.mxu0 0
        %5685 = vmatpush1.bf16.msra.mxu0 %v5675
        %5686 = vmatprep.subr.bf16.mxu0 0
        %5687 = vmatpush1.bf16.msra.mxu0 %v5674
        %5688 = vmatprep.subr.bf16.mxu0 0
        %5689 = vmatpush1.bf16.msra.mxu0 %v5673
        %5690 = vmatprep.subr.bf16.mxu0 0
        %5691 = vmatpush1.bf16.msra.mxu0 %v5672
        %5692 = vmatprep.subr.bf16.mxu0 0
        %5693 = vmatpush1.bf16.msra.mxu0 %v5671
        %5694 = vmatprep.subr.bf16.mxu0 0
        %5695 = vmatpush1.bf16.msra.mxu0 %v5670
        %5696 = vmatprep.subr.bf16.mxu0 0
        %5697 = vmatpush1.bf16.msra.mxu0 %v5669
        %5698 = vmatprep.subr.bf16.mxu0 0
        %5699 = vmatpush1.bf16.msra.mxu0 %v5668
        %5700 = vmatprep.subr.bf16.mxu0 0
        %5701 = vmatpush2.bf16.msra.mxu0 %v5683
        %5702 = vmatprep.subr.bf16.mxu0 0
        %5703 = vmatpush2.bf16.msra.mxu0 %v5682
        %5704 = vmatprep.subr.bf16.mxu0 0
        %5705 = vmatpush2.bf16.msra.mxu0 %v5681
        %5706 = vmatprep.subr.bf16.mxu0 0
        %5707 = vmatpush2.bf16.msra.mxu0 %v5680
        %5708 = vmatprep.subr.bf16.mxu0 0
        %5709 = vmatpush2.bf16.msra.mxu0 %v5679
        %5710 = vmatprep.subr.bf16.mxu0 0
        %5711 = vmatpush2.bf16.msra.mxu0 %v5678
        %5712 = vmatprep.subr.bf16.mxu0 0
        %5713 = vmatpush2.bf16.msra.mxu0 %v5677
        %5714 = vmatprep.subr.bf16.mxu0 0
        %5715 = vmatpush2.bf16.msra.mxu0 %v5676
        %5716 = vmatprep.mubr.bf16.mxu0 %v5637
        %5717 = vmatmul.mubr.bf16.gmra.mxu0 %v5636
        %v5718 = vpop.f32.mrf.mxu0
        %v5719 = vadd.f32 0.0, %v5718
        %v5720 = vpop.f32.mrf.mxu0
        %v5721 = vpop.f32.mrf.mxu0
        %v5722 = vadd.f32 0.0, %v5721
        %v5723 = vpop.f32.mrf.mxu0
        %5724 = vmatprep.mubr.bf16.mxu0 %v5639
        %5725 = vmatmul.mubr.bf16.gmra.mxu0 %v5638
        %v5726 = vpop.f32.mrf.mxu0
        %v5727 = vadd.f32 0.0, %v5726
        %v5728 = vpop.f32.mrf.mxu0
        %v5729 = vpop.f32.mrf.mxu0
        %v5730 = vadd.f32 0.0, %v5729
        %v5731 = vpop.f32.mrf.mxu0
        %5732 = vmatprep.mubr.bf16.mxu0 %v5641
        %5733 = vmatmul.mubr.bf16.gmra.mxu0 %v5640
        %v5734 = vpop.f32.mrf.mxu0
        %v5735 = vadd.f32 0.0, %v5734
        %v5736 = vpop.f32.mrf.mxu0
        %v5737 = vpop.f32.mrf.mxu0
        %v5738 = vadd.f32 0.0, %v5737
        %v5739 = vpop.f32.mrf.mxu0
        %5740 = vmatprep.mubr.bf16.mxu0 %v5643
        %5741 = vmatmul.mubr.bf16.gmra.mxu0 %v5642
        %v5742 = vpop.f32.mrf.mxu0
        %v5743 = vadd.f32 0.0, %v5742
        %v5744 = vpop.f32.mrf.mxu0
        %v5745 = vpop.f32.mrf.mxu0
        %v5746 = vadd.f32 0.0, %v5745
        %v5747 = vpop.f32.mrf.mxu0
        %5748 = vmatprep.mubr.bf16.mxu0 %v5645
        %5749 = vmatmul.mubr.bf16.gmra.mxu0 %v5644
        %v5750 = vpop.f32.mrf.mxu0
        %v5751 = vadd.f32 0.0, %v5750
        %v5752 = vpop.f32.mrf.mxu0
        %v5753 = vpop.f32.mrf.mxu0
        %v5754 = vadd.f32 0.0, %v5753
        %v5755 = vpop.f32.mrf.mxu0
        %5756 = vmatprep.mubr.bf16.mxu0 %v5647
        %5757 = vmatmul.mubr.bf16.gmra.mxu0 %v5646
        %v5758 = vpop.f32.mrf.mxu0
        %v5759 = vadd.f32 0.0, %v5758
        %v5760 = vpop.f32.mrf.mxu0
        %v5761 = vpop.f32.mrf.mxu0
        %v5762 = vadd.f32 0.0, %v5761
        %v5763 = vpop.f32.mrf.mxu0
        %5764 = vmatprep.mubr.bf16.mxu0 %v5649
        %5765 = vmatmul.mubr.bf16.gmra.mxu0 %v5648
        %v5766 = vpop.f32.mrf.mxu0
        %v5767 = vadd.f32 0.0, %v5766
        %v5768 = vpop.f32.mrf.mxu0
        %v5769 = vpop.f32.mrf.mxu0
        %v5770 = vadd.f32 0.0, %v5769
        %v5771 = vpop.f32.mrf.mxu0
        %5772 = vmatprep.mubr.bf16.mxu0 %v5651
        %5773 = vmatmul.mubr.bf16.gmra.mxu0 %v5650
        %v5774 = vpop.f32.mrf.mxu0
        %v5775 = vadd.f32 0.0, %v5774
        %v5776 = vpop.f32.mrf.mxu0
        %v5777 = vpop.f32.mrf.mxu0
        %v5778 = vadd.f32 0.0, %v5777
        %v5779 = vpop.f32.mrf.mxu0
        %5780 = vmatprep.mubr.bf16.mxu0 %v5653
        %5781 = vmatmul.mubr.bf16.gmra.mxu0 %v5652
        %v5782 = vpop.f32.mrf.mxu0
        %v5783 = vadd.f32 0.0, %v5782
        %v5784 = vpop.f32.mrf.mxu0
        %v5785 = vpop.f32.mrf.mxu0
        %v5786 = vadd.f32 0.0, %v5785
        %v5787 = vpop.f32.mrf.mxu0
        %5788 = vmatprep.mubr.bf16.mxu0 %v5655
        %5789 = vmatmul.mubr.bf16.gmra.mxu0 %v5654
        %v5790 = vpop.f32.mrf.mxu0
        %v5791 = vadd.f32 0.0, %v5790
        %v5792 = vpop.f32.mrf.mxu0
        %v5793 = vpop.f32.mrf.mxu0
        %v5794 = vadd.f32 0.0, %v5793
        %v5795 = vpop.f32.mrf.mxu0
        %5796 = vmatprep.mubr.bf16.mxu0 %v5657
        %5797 = vmatmul.mubr.bf16.gmra.mxu0 %v5656
        %v5798 = vpop.f32.mrf.mxu0
        %v5799 = vadd.f32 0.0, %v5798
        %v5800 = vpop.f32.mrf.mxu0
        %v5801 = vpop.f32.mrf.mxu0
        %v5802 = vadd.f32 0.0, %v5801
        %v5803 = vpop.f32.mrf.mxu0
        %5804 = vmatprep.mubr.bf16.mxu0 %v5659
        %5805 = vmatmul.mubr.bf16.gmra.mxu0 %v5658
        %v5806 = vpop.f32.mrf.mxu0
        %v5807 = vadd.f32 0.0, %v5806
        %v5808 = vpop.f32.mrf.mxu0
        %v5809 = vpop.f32.mrf.mxu0
        %v5810 = vadd.f32 0.0, %v5809
        %v5811 = vpop.f32.mrf.mxu0
        %5812 = vmatprep.mubr.bf16.mxu0 %v5661
        %5813 = vmatmul.mubr.bf16.gmra.mxu0 %v5660
        %v5814 = vpop.f32.mrf.mxu0
        %v5815 = vadd.f32 0.0, %v5814
        %v5816 = vpop.f32.mrf.mxu0
        %v5817 = vpop.f32.mrf.mxu0
        %v5818 = vadd.f32 0.0, %v5817
        %v5819 = vpop.f32.mrf.mxu0
        %5820 = vmatprep.mubr.bf16.mxu0 %v5663
        %5821 = vmatmul.mubr.bf16.gmra.mxu0 %v5662
        %v5822 = vpop.f32.mrf.mxu0
        %v5823 = vadd.f32 0.0, %v5822
        %v5824 = vpop.f32.mrf.mxu0
        %v5825 = vpop.f32.mrf.mxu0
        %v5826 = vadd.f32 0.0, %v5825
        %v5827 = vpop.f32.mrf.mxu0
        %5828 = vmatprep.mubr.bf16.mxu0 %v5665
        %5829 = vmatmul.mubr.bf16.gmra.mxu0 %v5664
        %v5830 = vpop.f32.mrf.mxu0
        %v5831 = vadd.f32 0.0, %v5830
        %v5832 = vpop.f32.mrf.mxu0
        %v5833 = vpop.f32.mrf.mxu0
        %v5834 = vadd.f32 0.0, %v5833
        %v5835 = vpop.f32.mrf.mxu0
        %5836 = vmatprep.mubr.bf16.mxu0 %v5667
        %5837 = vmatmul.mubr.bf16.gmra.mxu0 %v5666
        %v5838 = vpop.f32.mrf.mxu0
        %v5839 = vadd.f32 0.0, %v5838
        %v5840 = vpop.f32.mrf.mxu0
        %v5841 = vpop.f32.mrf.mxu0
        %v5842 = vadd.f32 0.0, %v5841
        %v5843 = vpop.f32.mrf.mxu0
        %5844 = vdwg.mxu0
        %v5845 = vsub.f32 %v622, %v5719
        %v5846 = vsub.f32 %v623, %v5722
        %v5847 = vsub.f32 %v624, %v5727
        %v5848 = vsub.f32 %v625, %v5730
        %v5849 = vsub.f32 %v626, %v5735
        %v5850 = vsub.f32 %v627, %v5738
        %v5851 = vsub.f32 %v628, %v5743
        %v5852 = vsub.f32 %v629, %v5746
        %v5853 = vsub.f32 %v630, %v5751
        %v5854 = vsub.f32 %v631, %v5754
        %v5855 = vsub.f32 %v632, %v5759
        %v5856 = vsub.f32 %v633, %v5762
        %v5857 = vsub.f32 %v634, %v5767
        %v5858 = vsub.f32 %v635, %v5770
        %v5859 = vsub.f32 %v636, %v5775
        %v5860 = vsub.f32 %v637, %v5778
        %v5861 = vsub.f32 %v638, %v5783
        %v5862 = vsub.f32 %v639, %v5786
        %v5863 = vsub.f32 %v640, %v5791
        %v5864 = vsub.f32 %v641, %v5794
        %v5865 = vsub.f32 %v642, %v5799
        %v5866 = vsub.f32 %v643, %v5802
        %v5867 = vsub.f32 %v644, %v5807
        %v5868 = vsub.f32 %v645, %v5810
        %v5869 = vsub.f32 %v646, %v5815
        %v5870 = vsub.f32 %v647, %v5818
        %v5871 = vsub.f32 %v648, %v5823
        %v5872 = vsub.f32 %v649, %v5826
        %v5873 = vsub.f32 %v650, %v5831
        %v5874 = vsub.f32 %v651, %v5834
        %v5875 = vsub.f32 %v652, %v5839
        %v5876 = vsub.f32 %v653, %v5842
        %v5877 = vpack.c.bf16 %v5846, %v5845
        %v5878 = vpack.c.bf16 %v5848, %v5847
        %v5879 = vpack.c.bf16 %v5850, %v5849
        %v5880 = vpack.c.bf16 %v5852, %v5851
        %v5881 = vpack.c.bf16 %v5854, %v5853
        %v5882 = vpack.c.bf16 %v5856, %v5855
        %v5883 = vpack.c.bf16 %v5858, %v5857
        %v5884 = vpack.c.bf16 %v5860, %v5859
        %v5885 = vpack.c.bf16 %v5862, %v5861
        %v5886 = vpack.c.bf16 %v5864, %v5863
        %v5887 = vpack.c.bf16 %v5866, %v5865
        %v5888 = vpack.c.bf16 %v5868, %v5867
        %v5889 = vpack.c.bf16 %v5870, %v5869
        %v5890 = vpack.c.bf16 %v5872, %v5871
        %v5891 = vpack.c.bf16 %v5874, %v5873
        %v5892 = vpack.c.bf16 %v5876, %v5875
        %v5893 = vunpack.c.h.b16 %v1633
        %v5894 = vunpack.c.h.b16 %v1634
        %v5895 = vunpack.c.h.b16 %v1635
        %v5896 = vunpack.c.h.b16 %v1636
        %v5897 = vunpack.c.h.b16 %v1637
        %v5898 = vunpack.c.h.b16 %v1638
        %v5899 = vunpack.c.h.b16 %v1639
        %v5900 = vunpack.c.h.b16 %v1640
        %v5901 = vunpack.c.h.b16 %v1641
        %v5902 = vunpack.c.h.b16 %v1642
        %v5903 = vunpack.c.h.b16 %v1643
        %v5904 = vunpack.c.h.b16 %v1644
        %v5905 = vunpack.c.h.b16 %v1645
        %v5906 = vunpack.c.h.b16 %v1646
        %v5907 = vunpack.c.h.b16 %v1647
        %v5908 = vunpack.c.h.b16 %v1648
        %v5909 = vpack.c.b16 %v5894, %v5893
        %v5910 = vpack.c.b16 %v5896, %v5895
        %v5911 = vpack.c.b16 %v5898, %v5897
        %v5912 = vpack.c.b16 %v5900, %v5899
        %v5913 = vpack.c.b16 %v5902, %v5901
        %v5914 = vpack.c.b16 %v5904, %v5903
        %v5915 = vpack.c.b16 %v5906, %v5905
        %v5916 = vpack.c.b16 %v5908, %v5907
        %5925 = vmatprep.subr.bf16.mxu0 0
        %5926 = vmatpush1.bf16.msra.mxu0 %v5916
        %5927 = vmatprep.subr.bf16.mxu0 0
        %5928 = vmatpush1.bf16.msra.mxu0 %v5915
        %5929 = vmatprep.subr.bf16.mxu0 0
        %5930 = vmatpush1.bf16.msra.mxu0 %v5914
        %5931 = vmatprep.subr.bf16.mxu0 0
        %5932 = vmatpush1.bf16.msra.mxu0 %v5913
        %5933 = vmatprep.subr.bf16.mxu0 0
        %5934 = vmatpush1.bf16.msra.mxu0 %v5912
        %5935 = vmatprep.subr.bf16.mxu0 0
        %5936 = vmatpush1.bf16.msra.mxu0 %v5911
        %5937 = vmatprep.subr.bf16.mxu0 0
        %5938 = vmatpush1.bf16.msra.mxu0 %v5910
        %5939 = vmatprep.subr.bf16.mxu0 0
        %5940 = vmatpush1.bf16.msra.mxu0 %v5909
        %5941 = vmatprep.subr.bf16.mxu0 0
        %5942 = vmatpush2.bf16.msra.mxu0 0
        %5943 = vmatprep.subr.bf16.mxu0 0
        %5944 = vmatpush2.bf16.msra.mxu0 0
        %5945 = vmatprep.subr.bf16.mxu0 0
        %5946 = vmatpush2.bf16.msra.mxu0 0
        %5947 = vmatprep.subr.bf16.mxu0 0
        %5948 = vmatpush2.bf16.msra.mxu0 0
        %5949 = vmatprep.subr.bf16.mxu0 0
        %5950 = vmatpush2.bf16.msra.mxu0 0
        %5951 = vmatprep.subr.bf16.mxu0 0
        %5952 = vmatpush2.bf16.msra.mxu0 0
        %5953 = vmatprep.subr.bf16.mxu0 0
        %5954 = vmatpush2.bf16.msra.mxu0 0
        %5955 = vmatprep.subr.bf16.mxu0 0
        %5956 = vmatpush2.bf16.msra.mxu0 0
        %5957 = vmatprep.mubr.bf16.mxu0 0
        %5958 = vmatmul.mubr.bf16.gmra.mxu0 %v5877
        %v5959 = vpop.f32.mrf.mxu0
        %v5960 = vadd.f32 0.0, %v5959
        %v5961 = vpop.f32.mrf.mxu0
        %v5962 = vpop.f32.mrf.mxu0
        %v5963 = vadd.f32 0.0, %v5962
        %v5964 = vpop.f32.mrf.mxu0
        %5965 = vmatprep.mubr.bf16.mxu0 0
        %5966 = vmatmul.mubr.bf16.gmra.mxu0 %v5878
        %v5967 = vpop.f32.mrf.mxu0
        %v5968 = vadd.f32 0.0, %v5967
        %v5969 = vpop.f32.mrf.mxu0
        %v5970 = vpop.f32.mrf.mxu0
        %v5971 = vadd.f32 0.0, %v5970
        %v5972 = vpop.f32.mrf.mxu0
        %5973 = vmatprep.mubr.bf16.mxu0 0
        %5974 = vmatmul.mubr.bf16.gmra.mxu0 %v5879
        %v5975 = vpop.f32.mrf.mxu0
        %v5976 = vadd.f32 0.0, %v5975
        %v5977 = vpop.f32.mrf.mxu0
        %v5978 = vpop.f32.mrf.mxu0
        %v5979 = vadd.f32 0.0, %v5978
        %v5980 = vpop.f32.mrf.mxu0
        %5981 = vmatprep.mubr.bf16.mxu0 0
        %5982 = vmatmul.mubr.bf16.gmra.mxu0 %v5880
        %v5983 = vpop.f32.mrf.mxu0
        %v5984 = vadd.f32 0.0, %v5983
        %v5985 = vpop.f32.mrf.mxu0
        %v5986 = vpop.f32.mrf.mxu0
        %v5987 = vadd.f32 0.0, %v5986
        %v5988 = vpop.f32.mrf.mxu0
        %5989 = vmatprep.mubr.bf16.mxu0 0
        %5990 = vmatmul.mubr.bf16.gmra.mxu0 %v5881
        %v5991 = vpop.f32.mrf.mxu0
        %v5992 = vadd.f32 0.0, %v5991
        %v5993 = vpop.f32.mrf.mxu0
        %v5994 = vpop.f32.mrf.mxu0
        %v5995 = vadd.f32 0.0, %v5994
        %v5996 = vpop.f32.mrf.mxu0
        %5997 = vmatprep.mubr.bf16.mxu0 0
        %5998 = vmatmul.mubr.bf16.gmra.mxu0 %v5882
        %v5999 = vpop.f32.mrf.mxu0
        %v6000 = vadd.f32 0.0, %v5999
        %v6001 = vpop.f32.mrf.mxu0
        %v6002 = vpop.f32.mrf.mxu0
        %v6003 = vadd.f32 0.0, %v6002
        %v6004 = vpop.f32.mrf.mxu0
        %6005 = vmatprep.mubr.bf16.mxu0 0
        %6006 = vmatmul.mubr.bf16.gmra.mxu0 %v5883
        %v6007 = vpop.f32.mrf.mxu0
        %v6008 = vadd.f32 0.0, %v6007
        %v6009 = vpop.f32.mrf.mxu0
        %v6010 = vpop.f32.mrf.mxu0
        %v6011 = vadd.f32 0.0, %v6010
        %v6012 = vpop.f32.mrf.mxu0
        %6013 = vmatprep.mubr.bf16.mxu0 0
        %6014 = vmatmul.mubr.bf16.gmra.mxu0 %v5884
        %v6015 = vpop.f32.mrf.mxu0
        %v6016 = vadd.f32 0.0, %v6015
        %v6017 = vpop.f32.mrf.mxu0
        %v6018 = vpop.f32.mrf.mxu0
        %v6019 = vadd.f32 0.0, %v6018
        %v6020 = vpop.f32.mrf.mxu0
        %6021 = vmatprep.mubr.bf16.mxu0 0
        %6022 = vmatmul.mubr.bf16.gmra.mxu0 %v5885
        %v6023 = vpop.f32.mrf.mxu0
        %v6024 = vadd.f32 0.0, %v6023
        %v6025 = vpop.f32.mrf.mxu0
        %v6026 = vpop.f32.mrf.mxu0
        %v6027 = vadd.f32 0.0, %v6026
        %v6028 = vpop.f32.mrf.mxu0
        %6029 = vmatprep.mubr.bf16.mxu0 0
        %6030 = vmatmul.mubr.bf16.gmra.mxu0 %v5886
        %v6031 = vpop.f32.mrf.mxu0
        %v6032 = vadd.f32 0.0, %v6031
        %v6033 = vpop.f32.mrf.mxu0
        %v6034 = vpop.f32.mrf.mxu0
        %v6035 = vadd.f32 0.0, %v6034
        %v6036 = vpop.f32.mrf.mxu0
        %6037 = vmatprep.mubr.bf16.mxu0 0
        %6038 = vmatmul.mubr.bf16.gmra.mxu0 %v5887
        %v6039 = vpop.f32.mrf.mxu0
        %v6040 = vadd.f32 0.0, %v6039
        %v6041 = vpop.f32.mrf.mxu0
        %v6042 = vpop.f32.mrf.mxu0
        %v6043 = vadd.f32 0.0, %v6042
        %v6044 = vpop.f32.mrf.mxu0
        %6045 = vmatprep.mubr.bf16.mxu0 0
        %6046 = vmatmul.mubr.bf16.gmra.mxu0 %v5888
        %v6047 = vpop.f32.mrf.mxu0
        %v6048 = vadd.f32 0.0, %v6047
        %v6049 = vpop.f32.mrf.mxu0
        %v6050 = vpop.f32.mrf.mxu0
        %v6051 = vadd.f32 0.0, %v6050
        %v6052 = vpop.f32.mrf.mxu0
        %6053 = vmatprep.mubr.bf16.mxu0 0
        %6054 = vmatmul.mubr.bf16.gmra.mxu0 %v5889
        %v6055 = vpop.f32.mrf.mxu0
        %v6056 = vadd.f32 0.0, %v6055
        %v6057 = vpop.f32.mrf.mxu0
        %v6058 = vpop.f32.mrf.mxu0
        %v6059 = vadd.f32 0.0, %v6058
        %v6060 = vpop.f32.mrf.mxu0
        %6061 = vmatprep.mubr.bf16.mxu0 0
        %6062 = vmatmul.mubr.bf16.gmra.mxu0 %v5890
        %v6063 = vpop.f32.mrf.mxu0
        %v6064 = vadd.f32 0.0, %v6063
        %v6065 = vpop.f32.mrf.mxu0
        %v6066 = vpop.f32.mrf.mxu0
        %v6067 = vadd.f32 0.0, %v6066
        %v6068 = vpop.f32.mrf.mxu0
        %6069 = vmatprep.mubr.bf16.mxu0 0
        %6070 = vmatmul.mubr.bf16.gmra.mxu0 %v5891
        %v6071 = vpop.f32.mrf.mxu0
        %v6072 = vadd.f32 0.0, %v6071
        %v6073 = vpop.f32.mrf.mxu0
        %v6074 = vpop.f32.mrf.mxu0
        %v6075 = vadd.f32 0.0, %v6074
        %v6076 = vpop.f32.mrf.mxu0
        %6077 = vmatprep.mubr.bf16.mxu0 0
        %6078 = vmatmul.mubr.bf16.gmra.mxu0 %v5892
        %v6079 = vpop.f32.mrf.mxu0
        %v6080 = vadd.f32 0.0, %v6079
        %v6081 = vpop.f32.mrf.mxu0
        %v6082 = vpop.f32.mrf.mxu0
        %v6083 = vadd.f32 0.0, %v6082
        %v6084 = vpop.f32.mrf.mxu0
        %6085 = vdwg.mxu0
        %v6086 = vmax.f32 %v5960, 0.0
        %v6087 = vmax.f32 %v5963, 0.0
        %v6088 = vmax.f32 %v5968, 0.0
        %v6089 = vmax.f32 %v5971, 0.0
        %v6090 = vmax.f32 %v5976, 0.0
        %v6091 = vmax.f32 %v5979, 0.0
        %v6092 = vmax.f32 %v5984, 0.0
        %v6093 = vmax.f32 %v5987, 0.0
        %v6094 = vmax.f32 %v5992, 0.0
        %v6095 = vmax.f32 %v5995, 0.0
        %v6096 = vmax.f32 %v6000, 0.0
        %v6097 = vmax.f32 %v6003, 0.0
        %v6098 = vmax.f32 %v6008, 0.0
        %v6099 = vmax.f32 %v6011, 0.0
        %v6100 = vmax.f32 %v6016, 0.0
        %v6101 = vmax.f32 %v6019, 0.0
        %v6102 = vmax.f32 %v6024, 0.0
        %v6103 = vmax.f32 %v6027, 0.0
        %v6104 = vmax.f32 %v6032, 0.0
        %v6105 = vmax.f32 %v6035, 0.0
        %v6106 = vmax.f32 %v6040, 0.0
        %v6107 = vmax.f32 %v6043, 0.0
        %v6108 = vmax.f32 %v6048, 0.0
        %v6109 = vmax.f32 %v6051, 0.0
        %v6110 = vmax.f32 %v6056, 0.0
        %v6111 = vmax.f32 %v6059, 0.0
        %v6112 = vmax.f32 %v6064, 0.0
        %v6113 = vmax.f32 %v6067, 0.0
        %v6114 = vmax.f32 %v6072, 0.0
        %v6115 = vmax.f32 %v6075, 0.0
        %v6116 = vmax.f32 %v6080, 0.0
        %v6117 = vmax.f32 %v6083, 0.0
        %v6118 = vpack.c.bf16 %v6087, %v6086
        %v6119 = vpack.c.bf16 %v6089, %v6088
        %v6120 = vpack.c.bf16 %v6091, %v6090
        %v6121 = vpack.c.bf16 %v6093, %v6092
        %v6122 = vpack.c.bf16 %v6095, %v6094
        %v6123 = vpack.c.bf16 %v6097, %v6096
        %v6124 = vpack.c.bf16 %v6099, %v6098
        %v6125 = vpack.c.bf16 %v6101, %v6100
        %v6126 = vpack.c.bf16 %v6103, %v6102
        %v6127 = vpack.c.bf16 %v6105, %v6104
        %v6128 = vpack.c.bf16 %v6107, %v6106
        %v6129 = vpack.c.bf16 %v6109, %v6108
        %v6130 = vpack.c.bf16 %v6111, %v6110
        %v6131 = vpack.c.bf16 %v6113, %v6112
        %v6132 = vpack.c.bf16 %v6115, %v6114
        %v6133 = vpack.c.bf16 %v6117, %v6116
        %v6135 = vlaneseq
        %v6136 = vshrl.u32 %v6135, 7
        %v6137 = vsub.s32 0, %v6136
        %v6138 = vrot.slane %v1682, %v6137
        %v6140 = vunpack.c.h.b16 %v1649
        %v6141 = vunpack.c.h.b16 %v1650
        %v6142 = vunpack.c.h.b16 %v1651
        %v6143 = vunpack.c.h.b16 %v1652
        %v6144 = vunpack.c.h.b16 %v1653
        %v6145 = vunpack.c.h.b16 %v1654
        %v6146 = vunpack.c.h.b16 %v1655
        %v6147 = vunpack.c.h.b16 %v1656
        %v6148 = vunpack.c.h.b16 %v1657
        %v6149 = vunpack.c.h.b16 %v1658
        %v6150 = vunpack.c.h.b16 %v1659
        %v6151 = vunpack.c.h.b16 %v1660
        %v6152 = vunpack.c.h.b16 %v1661
        %v6153 = vunpack.c.h.b16 %v1662
        %v6154 = vunpack.c.h.b16 %v1663
        %v6155 = vunpack.c.h.b16 %v1664
        %v6156 = vpack.c.b16 %v6141, %v6140
        %v6157 = vpack.c.b16 %v6143, %v6142
        %v6158 = vpack.c.b16 %v6145, %v6144
        %v6159 = vpack.c.b16 %v6147, %v6146
        %v6160 = vpack.c.b16 %v6149, %v6148
        %v6161 = vpack.c.b16 %v6151, %v6150
        %v6162 = vpack.c.b16 %v6153, %v6152
        %v6163 = vpack.c.b16 %v6155, %v6154
        %6172 = vmatprep.subr.bf16.mxu0 0
        %6173 = vmatpush1.bf16.msra.mxu0 %v6163
        %6174 = vmatprep.subr.bf16.mxu0 0
        %6175 = vmatpush1.bf16.msra.mxu0 %v6162
        %6176 = vmatprep.subr.bf16.mxu0 0
        %6177 = vmatpush1.bf16.msra.mxu0 %v6161
        %6178 = vmatprep.subr.bf16.mxu0 0
        %6179 = vmatpush1.bf16.msra.mxu0 %v6160
        %6180 = vmatprep.subr.bf16.mxu0 0
        %6181 = vmatpush1.bf16.msra.mxu0 %v6159
        %6182 = vmatprep.subr.bf16.mxu0 0
        %6183 = vmatpush1.bf16.msra.mxu0 %v6158
        %6184 = vmatprep.subr.bf16.mxu0 0
        %6185 = vmatpush1.bf16.msra.mxu0 %v6157
        %6186 = vmatprep.subr.bf16.mxu0 0
        %6187 = vmatpush1.bf16.msra.mxu0 %v6156
        %6188 = vmatprep.subr.bf16.mxu0 0
        %6189 = vmatpush2.bf16.msra.mxu0 0
        %6190 = vmatprep.subr.bf16.mxu0 0
        %6191 = vmatpush2.bf16.msra.mxu0 0
        %6192 = vmatprep.subr.bf16.mxu0 0
        %6193 = vmatpush2.bf16.msra.mxu0 0
        %6194 = vmatprep.subr.bf16.mxu0 0
        %6195 = vmatpush2.bf16.msra.mxu0 0
        %6196 = vmatprep.subr.bf16.mxu0 0
        %6197 = vmatpush2.bf16.msra.mxu0 0
        %6198 = vmatprep.subr.bf16.mxu0 0
        %6199 = vmatpush2.bf16.msra.mxu0 0
        %6200 = vmatprep.subr.bf16.mxu0 0
        %6201 = vmatpush2.bf16.msra.mxu0 0
        %6202 = vmatprep.subr.bf16.mxu0 0
        %6203 = vmatpush2.bf16.msra.mxu0 0
        %6204 = vmatprep.mubr.bf16.mxu0 0
        %6205 = vmatmul.mubr.bf16.gmra.mxu0 %v6118
        %v6206 = vpop.f32.mrf.mxu0
        %v6207 = vadd.f32 %v6138, %v6206
        %v6208 = vpop.f32.mrf.mxu0
        %v6209 = vpop.f32.mrf.mxu0
        %v6210 = vadd.f32 %v6138, %v6209
        %v6211 = vpop.f32.mrf.mxu0
        %6212 = vmatprep.mubr.bf16.mxu0 0
        %6213 = vmatmul.mubr.bf16.gmra.mxu0 %v6119
        %v6214 = vpop.f32.mrf.mxu0
        %v6215 = vadd.f32 %v6138, %v6214
        %v6216 = vpop.f32.mrf.mxu0
        %v6217 = vpop.f32.mrf.mxu0
        %v6218 = vadd.f32 %v6138, %v6217
        %v6219 = vpop.f32.mrf.mxu0
        %6220 = vmatprep.mubr.bf16.mxu0 0
        %6221 = vmatmul.mubr.bf16.gmra.mxu0 %v6120
        %v6222 = vpop.f32.mrf.mxu0
        %v6223 = vadd.f32 %v6138, %v6222
        %v6224 = vpop.f32.mrf.mxu0
        %v6225 = vpop.f32.mrf.mxu0
        %v6226 = vadd.f32 %v6138, %v6225
        %v6227 = vpop.f32.mrf.mxu0
        %6228 = vmatprep.mubr.bf16.mxu0 0
        %6229 = vmatmul.mubr.bf16.gmra.mxu0 %v6121
        %v6230 = vpop.f32.mrf.mxu0
        %v6231 = vadd.f32 %v6138, %v6230
        %v6232 = vpop.f32.mrf.mxu0
        %v6233 = vpop.f32.mrf.mxu0
        %v6234 = vadd.f32 %v6138, %v6233
        %v6235 = vpop.f32.mrf.mxu0
        %6236 = vmatprep.mubr.bf16.mxu0 0
        %6237 = vmatmul.mubr.bf16.gmra.mxu0 %v6122
        %v6238 = vpop.f32.mrf.mxu0
        %v6239 = vadd.f32 %v6138, %v6238
        %v6240 = vpop.f32.mrf.mxu0
        %v6241 = vpop.f32.mrf.mxu0
        %v6242 = vadd.f32 %v6138, %v6241
        %v6243 = vpop.f32.mrf.mxu0
        %6244 = vmatprep.mubr.bf16.mxu0 0
        %6245 = vmatmul.mubr.bf16.gmra.mxu0 %v6123
        %v6246 = vpop.f32.mrf.mxu0
        %v6247 = vadd.f32 %v6138, %v6246
        %v6248 = vpop.f32.mrf.mxu0
        %v6249 = vpop.f32.mrf.mxu0
        %v6250 = vadd.f32 %v6138, %v6249
        %v6251 = vpop.f32.mrf.mxu0
        %6252 = vmatprep.mubr.bf16.mxu0 0
        %6253 = vmatmul.mubr.bf16.gmra.mxu0 %v6124
        %v6254 = vpop.f32.mrf.mxu0
        %v6255 = vadd.f32 %v6138, %v6254
        %v6256 = vpop.f32.mrf.mxu0
        %v6257 = vpop.f32.mrf.mxu0
        %v6258 = vadd.f32 %v6138, %v6257
        %v6259 = vpop.f32.mrf.mxu0
        %6260 = vmatprep.mubr.bf16.mxu0 0
        %6261 = vmatmul.mubr.bf16.gmra.mxu0 %v6125
        %v6262 = vpop.f32.mrf.mxu0
        %v6263 = vadd.f32 %v6138, %v6262
        %v6264 = vpop.f32.mrf.mxu0
        %v6265 = vpop.f32.mrf.mxu0
        %v6266 = vadd.f32 %v6138, %v6265
        %v6267 = vpop.f32.mrf.mxu0
        %6268 = vmatprep.mubr.bf16.mxu0 0
        %6269 = vmatmul.mubr.bf16.gmra.mxu0 %v6126
        %v6270 = vpop.f32.mrf.mxu0
        %v6271 = vadd.f32 %v6138, %v6270
        %v6272 = vpop.f32.mrf.mxu0
        %v6273 = vpop.f32.mrf.mxu0
        %v6274 = vadd.f32 %v6138, %v6273
        %v6275 = vpop.f32.mrf.mxu0
        %6276 = vmatprep.mubr.bf16.mxu0 0
        %6277 = vmatmul.mubr.bf16.gmra.mxu0 %v6127
        %v6278 = vpop.f32.mrf.mxu0
        %v6279 = vadd.f32 %v6138, %v6278
        %v6280 = vpop.f32.mrf.mxu0
        %v6281 = vpop.f32.mrf.mxu0
        %v6282 = vadd.f32 %v6138, %v6281
        %v6283 = vpop.f32.mrf.mxu0
        %6284 = vmatprep.mubr.bf16.mxu0 0
        %6285 = vmatmul.mubr.bf16.gmra.mxu0 %v6128
        %v6286 = vpop.f32.mrf.mxu0
        %v6287 = vadd.f32 %v6138, %v6286
        %v6288 = vpop.f32.mrf.mxu0
        %v6289 = vpop.f32.mrf.mxu0
        %v6290 = vadd.f32 %v6138, %v6289
        %v6291 = vpop.f32.mrf.mxu0
        %6292 = vmatprep.mubr.bf16.mxu0 0
        %6293 = vmatmul.mubr.bf16.gmra.mxu0 %v6129
        %v6294 = vpop.f32.mrf.mxu0
        %v6295 = vadd.f32 %v6138, %v6294
        %v6296 = vpop.f32.mrf.mxu0
        %v6297 = vpop.f32.mrf.mxu0
        %v6298 = vadd.f32 %v6138, %v6297
        %v6299 = vpop.f32.mrf.mxu0
        %6300 = vmatprep.mubr.bf16.mxu0 0
        %6301 = vmatmul.mubr.bf16.gmra.mxu0 %v6130
        %v6302 = vpop.f32.mrf.mxu0
        %v6303 = vadd.f32 %v6138, %v6302
        %v6304 = vpop.f32.mrf.mxu0
        %v6305 = vpop.f32.mrf.mxu0
        %v6306 = vadd.f32 %v6138, %v6305
        %v6307 = vpop.f32.mrf.mxu0
        %6308 = vmatprep.mubr.bf16.mxu0 0
        %6309 = vmatmul.mubr.bf16.gmra.mxu0 %v6131
        %v6310 = vpop.f32.mrf.mxu0
        %v6311 = vadd.f32 %v6138, %v6310
        %v6312 = vpop.f32.mrf.mxu0
        %v6313 = vpop.f32.mrf.mxu0
        %v6314 = vadd.f32 %v6138, %v6313
        %v6315 = vpop.f32.mrf.mxu0
        %6316 = vmatprep.mubr.bf16.mxu0 0
        %6317 = vmatmul.mubr.bf16.gmra.mxu0 %v6132
        %v6318 = vpop.f32.mrf.mxu0
        %v6319 = vadd.f32 %v6138, %v6318
        %v6320 = vpop.f32.mrf.mxu0
        %v6321 = vpop.f32.mrf.mxu0
        %v6322 = vadd.f32 %v6138, %v6321
        %v6323 = vpop.f32.mrf.mxu0
        %6324 = vmatprep.mubr.bf16.mxu0 0
        %6325 = vmatmul.mubr.bf16.gmra.mxu0 %v6133
        %v6326 = vpop.f32.mrf.mxu0
        %v6327 = vadd.f32 %v6138, %v6326
        %v6328 = vpop.f32.mrf.mxu0
        %v6329 = vpop.f32.mrf.mxu0
        %v6330 = vadd.f32 %v6138, %v6329
        %v6331 = vpop.f32.mrf.mxu0
        %6332 = vdwg.mxu0
        %v6333 = vmax.f32 %v6207, 0.0
        %v6334 = vmax.f32 %v6210, 0.0
        %v6335 = vmax.f32 %v6215, 0.0
        %v6336 = vmax.f32 %v6218, 0.0
        %v6337 = vmax.f32 %v6223, 0.0
        %v6338 = vmax.f32 %v6226, 0.0
        %v6339 = vmax.f32 %v6231, 0.0
        %v6340 = vmax.f32 %v6234, 0.0
        %v6341 = vmax.f32 %v6239, 0.0
        %v6342 = vmax.f32 %v6242, 0.0
        %v6343 = vmax.f32 %v6247, 0.0
        %v6344 = vmax.f32 %v6250, 0.0
        %v6345 = vmax.f32 %v6255, 0.0
        %v6346 = vmax.f32 %v6258, 0.0
        %v6347 = vmax.f32 %v6263, 0.0
        %v6348 = vmax.f32 %v6266, 0.0
        %v6349 = vmax.f32 %v6271, 0.0
        %v6350 = vmax.f32 %v6274, 0.0
        %v6351 = vmax.f32 %v6279, 0.0
        %v6352 = vmax.f32 %v6282, 0.0
        %v6353 = vmax.f32 %v6287, 0.0
        %v6354 = vmax.f32 %v6290, 0.0
        %v6355 = vmax.f32 %v6295, 0.0
        %v6356 = vmax.f32 %v6298, 0.0
        %v6357 = vmax.f32 %v6303, 0.0
        %v6358 = vmax.f32 %v6306, 0.0
        %v6359 = vmax.f32 %v6311, 0.0
        %v6360 = vmax.f32 %v6314, 0.0
        %v6361 = vmax.f32 %v6319, 0.0
        %v6362 = vmax.f32 %v6322, 0.0
        %v6363 = vmax.f32 %v6327, 0.0
        %v6364 = vmax.f32 %v6330, 0.0
        %v6365 = vpack.c.bf16 %v6334, %v6333
        %v6366 = vpack.c.bf16 %v6336, %v6335
        %v6367 = vpack.c.bf16 %v6338, %v6337
        %v6368 = vpack.c.bf16 %v6340, %v6339
        %v6369 = vpack.c.bf16 %v6342, %v6341
        %v6370 = vpack.c.bf16 %v6344, %v6343
        %v6371 = vpack.c.bf16 %v6346, %v6345
        %v6372 = vpack.c.bf16 %v6348, %v6347
        %v6373 = vpack.c.bf16 %v6350, %v6349
        %v6374 = vpack.c.bf16 %v6352, %v6351
        %v6375 = vpack.c.bf16 %v6354, %v6353
        %v6376 = vpack.c.bf16 %v6356, %v6355
        %v6377 = vpack.c.bf16 %v6358, %v6357
        %v6378 = vpack.c.bf16 %v6360, %v6359
        %v6379 = vpack.c.bf16 %v6362, %v6361
        %v6380 = vpack.c.bf16 %v6364, %v6363
        %v6382 = vlaneseq
        %v6383 = vshrl.u32 %v6382, 7
        %v6384 = vsub.s32 0, %v6383
        %v6385 = vrot.slane %v1684, %v6384
        %v6387 = vunpack.c.h.b16 %v1665
        %v6388 = vunpack.c.h.b16 %v1666
        %v6389 = vunpack.c.h.b16 %v1667
        %v6390 = vunpack.c.h.b16 %v1668
        %v6391 = vunpack.c.h.b16 %v1669
        %v6392 = vunpack.c.h.b16 %v1670
        %v6393 = vunpack.c.h.b16 %v1671
        %v6394 = vunpack.c.h.b16 %v1672
        %v6395 = vunpack.c.h.b16 %v1673
        %v6396 = vunpack.c.h.b16 %v1674
        %v6397 = vunpack.c.h.b16 %v1675
        %v6398 = vunpack.c.h.b16 %v1676
        %v6399 = vunpack.c.h.b16 %v1677
        %v6400 = vunpack.c.h.b16 %v1678
        %v6401 = vunpack.c.h.b16 %v1679
        %v6402 = vunpack.c.h.b16 %v1680
        %v6403 = vpack.c.b16 %v6388, %v6387
        %v6404 = vpack.c.b16 %v6390, %v6389
        %v6405 = vpack.c.b16 %v6392, %v6391
        %v6406 = vpack.c.b16 %v6394, %v6393
        %v6407 = vpack.c.b16 %v6396, %v6395
        %v6408 = vpack.c.b16 %v6398, %v6397
        %v6409 = vpack.c.b16 %v6400, %v6399
        %v6410 = vpack.c.b16 %v6402, %v6401
        %6419 = vmatprep.subr.bf16.mxu0 0
        %6420 = vmatpush1.bf16.msra.mxu0 %v6410
        %6421 = vmatprep.subr.bf16.mxu0 0
        %6422 = vmatpush1.bf16.msra.mxu0 %v6409
        %6423 = vmatprep.subr.bf16.mxu0 0
        %6424 = vmatpush1.bf16.msra.mxu0 %v6408
        %6425 = vmatprep.subr.bf16.mxu0 0
        %6426 = vmatpush1.bf16.msra.mxu0 %v6407
        %6427 = vmatprep.subr.bf16.mxu0 0
        %6428 = vmatpush1.bf16.msra.mxu0 %v6406
        %6429 = vmatprep.subr.bf16.mxu0 0
        %6430 = vmatpush1.bf16.msra.mxu0 %v6405
        %6431 = vmatprep.subr.bf16.mxu0 0
        %6432 = vmatpush1.bf16.msra.mxu0 %v6404
        %6433 = vmatprep.subr.bf16.mxu0 0
        %6434 = vmatpush1.bf16.msra.mxu0 %v6403
        %6435 = vmatprep.subr.bf16.mxu0 0
        %6436 = vmatpush2.bf16.msra.mxu0 0
        %6437 = vmatprep.subr.bf16.mxu0 0
        %6438 = vmatpush2.bf16.msra.mxu0 0
        %6439 = vmatprep.subr.bf16.mxu0 0
        %6440 = vmatpush2.bf16.msra.mxu0 0
        %6441 = vmatprep.subr.bf16.mxu0 0
        %6442 = vmatpush2.bf16.msra.mxu0 0
        %6443 = vmatprep.subr.bf16.mxu0 0
        %6444 = vmatpush2.bf16.msra.mxu0 0
        %6445 = vmatprep.subr.bf16.mxu0 0
        %6446 = vmatpush2.bf16.msra.mxu0 0
        %6447 = vmatprep.subr.bf16.mxu0 0
        %6448 = vmatpush2.bf16.msra.mxu0 0
        %6449 = vmatprep.subr.bf16.mxu0 0
        %6450 = vmatpush2.bf16.msra.mxu0 0
        %6451 = vmatprep.mubr.bf16.mxu0 0
        %6452 = vmatmul.mubr.bf16.gmra.mxu0 %v6365
        %v6453 = vpop.f32.mrf.mxu0
        %v6454 = vadd.f32 %v6385, %v6453
        %v6455 = vpop.f32.mrf.mxu0
        %v6456 = vpop.f32.mrf.mxu0
        %v6457 = vadd.f32 %v6385, %v6456
        %v6458 = vpop.f32.mrf.mxu0
        %6459 = vmatprep.mubr.bf16.mxu0 0
        %6460 = vmatmul.mubr.bf16.gmra.mxu0 %v6366
        %v6461 = vpop.f32.mrf.mxu0
        %v6462 = vadd.f32 %v6385, %v6461
        %v6463 = vpop.f32.mrf.mxu0
        %v6464 = vpop.f32.mrf.mxu0
        %v6465 = vadd.f32 %v6385, %v6464
        %v6466 = vpop.f32.mrf.mxu0
        %6467 = vmatprep.mubr.bf16.mxu0 0
        %6468 = vmatmul.mubr.bf16.gmra.mxu0 %v6367
        %v6469 = vpop.f32.mrf.mxu0
        %v6470 = vadd.f32 %v6385, %v6469
        %v6471 = vpop.f32.mrf.mxu0
        %v6472 = vpop.f32.mrf.mxu0
        %v6473 = vadd.f32 %v6385, %v6472
        %v6474 = vpop.f32.mrf.mxu0
        %6475 = vmatprep.mubr.bf16.mxu0 0
        %6476 = vmatmul.mubr.bf16.gmra.mxu0 %v6368
        %v6477 = vpop.f32.mrf.mxu0
        %v6478 = vadd.f32 %v6385, %v6477
        %v6479 = vpop.f32.mrf.mxu0
        %v6480 = vpop.f32.mrf.mxu0
        %v6481 = vadd.f32 %v6385, %v6480
        %v6482 = vpop.f32.mrf.mxu0
        %6483 = vmatprep.mubr.bf16.mxu0 0
        %6484 = vmatmul.mubr.bf16.gmra.mxu0 %v6369
        %v6485 = vpop.f32.mrf.mxu0
        %v6486 = vadd.f32 %v6385, %v6485
        %v6487 = vpop.f32.mrf.mxu0
        %v6488 = vpop.f32.mrf.mxu0
        %v6489 = vadd.f32 %v6385, %v6488
        %v6490 = vpop.f32.mrf.mxu0
        %6491 = vmatprep.mubr.bf16.mxu0 0
        %6492 = vmatmul.mubr.bf16.gmra.mxu0 %v6370
        %v6493 = vpop.f32.mrf.mxu0
        %v6494 = vadd.f32 %v6385, %v6493
        %v6495 = vpop.f32.mrf.mxu0
        %v6496 = vpop.f32.mrf.mxu0
        %v6497 = vadd.f32 %v6385, %v6496
        %v6498 = vpop.f32.mrf.mxu0
        %6499 = vmatprep.mubr.bf16.mxu0 0
        %6500 = vmatmul.mubr.bf16.gmra.mxu0 %v6371
        %v6501 = vpop.f32.mrf.mxu0
        %v6502 = vadd.f32 %v6385, %v6501
        %v6503 = vpop.f32.mrf.mxu0
        %v6504 = vpop.f32.mrf.mxu0
        %v6505 = vadd.f32 %v6385, %v6504
        %v6506 = vpop.f32.mrf.mxu0
        %6507 = vmatprep.mubr.bf16.mxu0 0
        %6508 = vmatmul.mubr.bf16.gmra.mxu0 %v6372
        %v6509 = vpop.f32.mrf.mxu0
        %v6510 = vadd.f32 %v6385, %v6509
        %v6511 = vpop.f32.mrf.mxu0
        %v6512 = vpop.f32.mrf.mxu0
        %v6513 = vadd.f32 %v6385, %v6512
        %v6514 = vpop.f32.mrf.mxu0
        %6515 = vmatprep.mubr.bf16.mxu0 0
        %6516 = vmatmul.mubr.bf16.gmra.mxu0 %v6373
        %v6517 = vpop.f32.mrf.mxu0
        %v6518 = vadd.f32 %v6385, %v6517
        %v6519 = vpop.f32.mrf.mxu0
        %v6520 = vpop.f32.mrf.mxu0
        %v6521 = vadd.f32 %v6385, %v6520
        %v6522 = vpop.f32.mrf.mxu0
        %6523 = vmatprep.mubr.bf16.mxu0 0
        %6524 = vmatmul.mubr.bf16.gmra.mxu0 %v6374
        %v6525 = vpop.f32.mrf.mxu0
        %v6526 = vadd.f32 %v6385, %v6525
        %v6527 = vpop.f32.mrf.mxu0
        %v6528 = vpop.f32.mrf.mxu0
        %v6529 = vadd.f32 %v6385, %v6528
        %v6530 = vpop.f32.mrf.mxu0
        %6531 = vmatprep.mubr.bf16.mxu0 0
        %6532 = vmatmul.mubr.bf16.gmra.mxu0 %v6375
        %v6533 = vpop.f32.mrf.mxu0
        %v6534 = vadd.f32 %v6385, %v6533
        %v6535 = vpop.f32.mrf.mxu0
        %v6536 = vpop.f32.mrf.mxu0
        %v6537 = vadd.f32 %v6385, %v6536
        %v6538 = vpop.f32.mrf.mxu0
        %6539 = vmatprep.mubr.bf16.mxu0 0
        %6540 = vmatmul.mubr.bf16.gmra.mxu0 %v6376
        %v6541 = vpop.f32.mrf.mxu0
        %v6542 = vadd.f32 %v6385, %v6541
        %v6543 = vpop.f32.mrf.mxu0
        %v6544 = vpop.f32.mrf.mxu0
        %v6545 = vadd.f32 %v6385, %v6544
        %v6546 = vpop.f32.mrf.mxu0
        %6547 = vmatprep.mubr.bf16.mxu0 0
        %6548 = vmatmul.mubr.bf16.gmra.mxu0 %v6377
        %v6549 = vpop.f32.mrf.mxu0
        %v6550 = vadd.f32 %v6385, %v6549
        %v6551 = vpop.f32.mrf.mxu0
        %v6552 = vpop.f32.mrf.mxu0
        %v6553 = vadd.f32 %v6385, %v6552
        %v6554 = vpop.f32.mrf.mxu0
        %6555 = vmatprep.mubr.bf16.mxu0 0
        %6556 = vmatmul.mubr.bf16.gmra.mxu0 %v6378
        %v6557 = vpop.f32.mrf.mxu0
        %v6558 = vadd.f32 %v6385, %v6557
        %v6559 = vpop.f32.mrf.mxu0
        %v6560 = vpop.f32.mrf.mxu0
        %v6561 = vadd.f32 %v6385, %v6560
        %v6562 = vpop.f32.mrf.mxu0
        %6563 = vmatprep.mubr.bf16.mxu0 0
        %6564 = vmatmul.mubr.bf16.gmra.mxu0 %v6379
        %v6565 = vpop.f32.mrf.mxu0
        %v6566 = vadd.f32 %v6385, %v6565
        %v6567 = vpop.f32.mrf.mxu0
        %v6568 = vpop.f32.mrf.mxu0
        %v6569 = vadd.f32 %v6385, %v6568
        %v6570 = vpop.f32.mrf.mxu0
        %6571 = vmatprep.mubr.bf16.mxu0 0
        %6572 = vmatmul.mubr.bf16.gmra.mxu0 %v6380
        %v6573 = vpop.f32.mrf.mxu0
        %v6574 = vadd.f32 %v6385, %v6573
        %v6575 = vpop.f32.mrf.mxu0
        %v6576 = vpop.f32.mrf.mxu0
        %v6577 = vadd.f32 %v6385, %v6576
        %v6578 = vpop.f32.mrf.mxu0
        %6579 = vdwg.mxu0
        %v6580 = vadd.f32 %v6086, %v6454
        %v6581 = vadd.f32 %v6087, %v6457
        %v6582 = vadd.f32 %v6088, %v6462
        %v6583 = vadd.f32 %v6089, %v6465
        %v6584 = vadd.f32 %v6090, %v6470
        %v6585 = vadd.f32 %v6091, %v6473
        %v6586 = vadd.f32 %v6092, %v6478
        %v6587 = vadd.f32 %v6093, %v6481
        %v6588 = vadd.f32 %v6094, %v6486
        %v6589 = vadd.f32 %v6095, %v6489
        %v6590 = vadd.f32 %v6096, %v6494
        %v6591 = vadd.f32 %v6097, %v6497
        %v6592 = vadd.f32 %v6098, %v6502
        %v6593 = vadd.f32 %v6099, %v6505
        %v6594 = vadd.f32 %v6100, %v6510
        %v6595 = vadd.f32 %v6101, %v6513
        %v6596 = vadd.f32 %v6102, %v6518
        %v6597 = vadd.f32 %v6103, %v6521
        %v6598 = vadd.f32 %v6104, %v6526
        %v6599 = vadd.f32 %v6105, %v6529
        %v6600 = vadd.f32 %v6106, %v6534
        %v6601 = vadd.f32 %v6107, %v6537
        %v6602 = vadd.f32 %v6108, %v6542
        %v6603 = vadd.f32 %v6109, %v6545
        %v6604 = vadd.f32 %v6110, %v6550
        %v6605 = vadd.f32 %v6111, %v6553
        %v6606 = vadd.f32 %v6112, %v6558
        %v6607 = vadd.f32 %v6113, %v6561
        %v6608 = vadd.f32 %v6114, %v6566
        %v6609 = vadd.f32 %v6115, %v6569
        %v6610 = vadd.f32 %v6116, %v6574
        %v6611 = vadd.f32 %v6117, %v6577
        %6612 = vadd.xlane.f32.xlu0 %v6580
        %v6613 = vpop.xlane.xlu0 %6612
        %6614 = vadd.xlane.f32.xlu0 %v6581
        %v6615 = vpop.xlane.xlu0 %6614
        %6616 = vadd.xlane.f32.xlu0 %v6582
        %v6617 = vpop.xlane.xlu0 %6616
        %6618 = vadd.xlane.f32.xlu0 %v6583
        %v6619 = vpop.xlane.xlu0 %6618
        %6620 = vadd.xlane.f32.xlu0 %v6584
        %v6621 = vpop.xlane.xlu0 %6620
        %6622 = vadd.xlane.f32.xlu0 %v6585
        %v6623 = vpop.xlane.xlu0 %6622
        %6624 = vadd.xlane.f32.xlu0 %v6586
        %v6625 = vpop.xlane.xlu0 %6624
        %6626 = vadd.xlane.f32.xlu0 %v6587
        %v6627 = vpop.xlane.xlu0 %6626
        %6628 = vadd.xlane.f32.xlu0 %v6588
        %v6629 = vpop.xlane.xlu0 %6628
        %6630 = vadd.xlane.f32.xlu0 %v6589
        %v6631 = vpop.xlane.xlu0 %6630
        %6632 = vadd.xlane.f32.xlu0 %v6590
        %v6633 = vpop.xlane.xlu0 %6632
        %6634 = vadd.xlane.f32.xlu0 %v6591
        %v6635 = vpop.xlane.xlu0 %6634
        %6636 = vadd.xlane.f32.xlu0 %v6592
        %v6637 = vpop.xlane.xlu0 %6636
        %6638 = vadd.xlane.f32.xlu0 %v6593
        %v6639 = vpop.xlane.xlu0 %6638
        %6640 = vadd.xlane.f32.xlu0 %v6594
        %v6641 = vpop.xlane.xlu0 %6640
        %6642 = vadd.xlane.f32.xlu0 %v6595
        %v6643 = vpop.xlane.xlu0 %6642
        %6644 = vadd.xlane.f32.xlu0 %v6596
        %v6645 = vpop.xlane.xlu0 %6644
        %6646 = vadd.xlane.f32.xlu0 %v6597
        %v6647 = vpop.xlane.xlu0 %6646
        %6648 = vadd.xlane.f32.xlu0 %v6598
        %v6649 = vpop.xlane.xlu0 %6648
        %6650 = vadd.xlane.f32.xlu0 %v6599
        %v6651 = vpop.xlane.xlu0 %6650
        %6652 = vadd.xlane.f32.xlu0 %v6600
        %v6653 = vpop.xlane.xlu0 %6652
        %6654 = vadd.xlane.f32.xlu0 %v6601
        %v6655 = vpop.xlane.xlu0 %6654
        %6656 = vadd.xlane.f32.xlu0 %v6602
        %v6657 = vpop.xlane.xlu0 %6656
        %6658 = vadd.xlane.f32.xlu0 %v6603
        %v6659 = vpop.xlane.xlu0 %6658
        %6660 = vadd.xlane.f32.xlu0 %v6604
        %v6661 = vpop.xlane.xlu0 %6660
        %6662 = vadd.xlane.f32.xlu0 %v6605
        %v6663 = vpop.xlane.xlu0 %6662
        %6664 = vadd.xlane.f32.xlu0 %v6606
        %v6665 = vpop.xlane.xlu0 %6664
        %6666 = vadd.xlane.f32.xlu0 %v6607
        %v6667 = vpop.xlane.xlu0 %6666
        %6668 = vadd.xlane.f32.xlu0 %v6608
        %v6669 = vpop.xlane.xlu0 %6668
        %6670 = vadd.xlane.f32.xlu0 %v6609
        %v6671 = vpop.xlane.xlu0 %6670
        %6672 = vadd.xlane.f32.xlu0 %v6610
        %v6673 = vpop.xlane.xlu0 %6672
        %6674 = vadd.xlane.f32.xlu0 %v6611
        %v6675 = vpop.xlane.xlu0 %6674
        %v6676 = vmul.f32 %v6613, %v4008
        %v6677 = vmul.f32 %v6615, %v4008
        %v6678 = vmul.f32 %v6617, %v4008
        %v6679 = vmul.f32 %v6619, %v4008
        %v6680 = vmul.f32 %v6621, %v4008
        %v6681 = vmul.f32 %v6623, %v4008
        %v6682 = vmul.f32 %v6625, %v4008
        %v6683 = vmul.f32 %v6627, %v4008
        %v6684 = vmul.f32 %v6629, %v4008
        %v6685 = vmul.f32 %v6631, %v4008
        %v6686 = vmul.f32 %v6633, %v4008
        %v6687 = vmul.f32 %v6635, %v4008
        %v6688 = vmul.f32 %v6637, %v4008
        %v6689 = vmul.f32 %v6639, %v4008
        %v6690 = vmul.f32 %v6641, %v4008
        %v6691 = vmul.f32 %v6643, %v4008
        %v6692 = vmul.f32 %v6645, %v4008
        %v6693 = vmul.f32 %v6647, %v4008
        %v6694 = vmul.f32 %v6649, %v4008
        %v6695 = vmul.f32 %v6651, %v4008
        %v6696 = vmul.f32 %v6653, %v4008
        %v6697 = vmul.f32 %v6655, %v4008
        %v6698 = vmul.f32 %v6657, %v4008
        %v6699 = vmul.f32 %v6659, %v4008
        %v6700 = vmul.f32 %v6661, %v4008
        %v6701 = vmul.f32 %v6663, %v4008
        %v6702 = vmul.f32 %v6665, %v4008
        %v6703 = vmul.f32 %v6667, %v4008
        %v6704 = vmul.f32 %v6669, %v4008
        %v6705 = vmul.f32 %v6671, %v4008
        %v6706 = vmul.f32 %v6673, %v4008
        %v6707 = vmul.f32 %v6675, %v4008
        %v6708 = vsub.f32 %v6580, %v6676
        %v6709 = vsub.f32 %v6581, %v6677
        %v6710 = vsub.f32 %v6582, %v6678
        %v6711 = vsub.f32 %v6583, %v6679
        %v6712 = vsub.f32 %v6584, %v6680
        %v6713 = vsub.f32 %v6585, %v6681
        %v6714 = vsub.f32 %v6586, %v6682
        %v6715 = vsub.f32 %v6587, %v6683
        %v6716 = vsub.f32 %v6588, %v6684
        %v6717 = vsub.f32 %v6589, %v6685
        %v6718 = vsub.f32 %v6590, %v6686
        %v6719 = vsub.f32 %v6591, %v6687
        %v6720 = vsub.f32 %v6592, %v6688
        %v6721 = vsub.f32 %v6593, %v6689
        %v6722 = vsub.f32 %v6594, %v6690
        %v6723 = vsub.f32 %v6595, %v6691
        %v6724 = vsub.f32 %v6596, %v6692
        %v6725 = vsub.f32 %v6597, %v6693
        %v6726 = vsub.f32 %v6598, %v6694
        %v6727 = vsub.f32 %v6599, %v6695
        %v6728 = vsub.f32 %v6600, %v6696
        %v6729 = vsub.f32 %v6601, %v6697
        %v6730 = vsub.f32 %v6602, %v6698
        %v6731 = vsub.f32 %v6603, %v6699
        %v6732 = vsub.f32 %v6604, %v6700
        %v6733 = vsub.f32 %v6605, %v6701
        %v6734 = vsub.f32 %v6606, %v6702
        %v6735 = vsub.f32 %v6607, %v6703
        %v6736 = vsub.f32 %v6608, %v6704
        %v6737 = vsub.f32 %v6609, %v6705
        %v6738 = vsub.f32 %v6610, %v6706
        %v6739 = vsub.f32 %v6611, %v6707
        %v6740 = vmul.f32 %v6708, %v6708
        %v6741 = vmul.f32 %v6709, %v6709
        %v6742 = vmul.f32 %v6710, %v6710
        %v6743 = vmul.f32 %v6711, %v6711
        %v6744 = vmul.f32 %v6712, %v6712
        %v6745 = vmul.f32 %v6713, %v6713
        %v6746 = vmul.f32 %v6714, %v6714
        %v6747 = vmul.f32 %v6715, %v6715
        %v6748 = vmul.f32 %v6716, %v6716
        %v6749 = vmul.f32 %v6717, %v6717
        %v6750 = vmul.f32 %v6718, %v6718
        %v6751 = vmul.f32 %v6719, %v6719
        %v6752 = vmul.f32 %v6720, %v6720
        %v6753 = vmul.f32 %v6721, %v6721
        %v6754 = vmul.f32 %v6722, %v6722
        %v6755 = vmul.f32 %v6723, %v6723
        %v6756 = vmul.f32 %v6724, %v6724
        %v6757 = vmul.f32 %v6725, %v6725
        %v6758 = vmul.f32 %v6726, %v6726
        %v6759 = vmul.f32 %v6727, %v6727
        %v6760 = vmul.f32 %v6728, %v6728
        %v6761 = vmul.f32 %v6729, %v6729
        %v6762 = vmul.f32 %v6730, %v6730
        %v6763 = vmul.f32 %v6731, %v6731
        %v6764 = vmul.f32 %v6732, %v6732
        %v6765 = vmul.f32 %v6733, %v6733
        %v6766 = vmul.f32 %v6734, %v6734
        %v6767 = vmul.f32 %v6735, %v6735
        %v6768 = vmul.f32 %v6736, %v6736
        %v6769 = vmul.f32 %v6737, %v6737
        %v6770 = vmul.f32 %v6738, %v6738
        %v6771 = vmul.f32 %v6739, %v6739
        %6772 = vadd.xlane.f32.xlu0 %v6740
        %v6773 = vpop.xlane.xlu0 %6772
        %6774 = vadd.xlane.f32.xlu0 %v6741
        %v6775 = vpop.xlane.xlu0 %6774
        %6776 = vadd.xlane.f32.xlu0 %v6742
        %v6777 = vpop.xlane.xlu0 %6776
        %6778 = vadd.xlane.f32.xlu0 %v6743
        %v6779 = vpop.xlane.xlu0 %6778
        %6780 = vadd.xlane.f32.xlu0 %v6744
        %v6781 = vpop.xlane.xlu0 %6780
        %6782 = vadd.xlane.f32.xlu0 %v6745
        %v6783 = vpop.xlane.xlu0 %6782
        %6784 = vadd.xlane.f32.xlu0 %v6746
        %v6785 = vpop.xlane.xlu0 %6784
        %6786 = vadd.xlane.f32.xlu0 %v6747
        %v6787 = vpop.xlane.xlu0 %6786
        %6788 = vadd.xlane.f32.xlu0 %v6748
        %v6789 = vpop.xlane.xlu0 %6788
        %6790 = vadd.xlane.f32.xlu0 %v6749
        %v6791 = vpop.xlane.xlu0 %6790
        %6792 = vadd.xlane.f32.xlu0 %v6750
        %v6793 = vpop.xlane.xlu0 %6792
        %6794 = vadd.xlane.f32.xlu0 %v6751
        %v6795 = vpop.xlane.xlu0 %6794
        %6796 = vadd.xlane.f32.xlu0 %v6752
        %v6797 = vpop.xlane.xlu0 %6796
        %6798 = vadd.xlane.f32.xlu0 %v6753
        %v6799 = vpop.xlane.xlu0 %6798
        %6800 = vadd.xlane.f32.xlu0 %v6754
        %v6801 = vpop.xlane.xlu0 %6800
        %6802 = vadd.xlane.f32.xlu0 %v6755
        %v6803 = vpop.xlane.xlu0 %6802
        %6804 = vadd.xlane.f32.xlu0 %v6756
        %v6805 = vpop.xlane.xlu0 %6804
        %6806 = vadd.xlane.f32.xlu0 %v6757
        %v6807 = vpop.xlane.xlu0 %6806
        %6808 = vadd.xlane.f32.xlu0 %v6758
        %v6809 = vpop.xlane.xlu0 %6808
        %6810 = vadd.xlane.f32.xlu0 %v6759
        %v6811 = vpop.xlane.xlu0 %6810
        %6812 = vadd.xlane.f32.xlu0 %v6760
        %v6813 = vpop.xlane.xlu0 %6812
        %6814 = vadd.xlane.f32.xlu0 %v6761
        %v6815 = vpop.xlane.xlu0 %6814
        %6816 = vadd.xlane.f32.xlu0 %v6762
        %v6817 = vpop.xlane.xlu0 %6816
        %6818 = vadd.xlane.f32.xlu0 %v6763
        %v6819 = vpop.xlane.xlu0 %6818
        %6820 = vadd.xlane.f32.xlu0 %v6764
        %v6821 = vpop.xlane.xlu0 %6820
        %6822 = vadd.xlane.f32.xlu0 %v6765
        %v6823 = vpop.xlane.xlu0 %6822
        %6824 = vadd.xlane.f32.xlu0 %v6766
        %v6825 = vpop.xlane.xlu0 %6824
        %6826 = vadd.xlane.f32.xlu0 %v6767
        %v6827 = vpop.xlane.xlu0 %6826
        %6828 = vadd.xlane.f32.xlu0 %v6768
        %v6829 = vpop.xlane.xlu0 %6828
        %6830 = vadd.xlane.f32.xlu0 %v6769
        %v6831 = vpop.xlane.xlu0 %6830
        %6832 = vadd.xlane.f32.xlu0 %v6770
        %v6833 = vpop.xlane.xlu0 %6832
        %6834 = vadd.xlane.f32.xlu0 %v6771
        %v6835 = vpop.xlane.xlu0 %6834
        %v6836 = vmul.f32 %v6773, %v4008
        %v6837 = vmul.f32 %v6775, %v4008
        %v6838 = vmul.f32 %v6777, %v4008
        %v6839 = vmul.f32 %v6779, %v4008
        %v6840 = vmul.f32 %v6781, %v4008
        %v6841 = vmul.f32 %v6783, %v4008
        %v6842 = vmul.f32 %v6785, %v4008
        %v6843 = vmul.f32 %v6787, %v4008
        %v6844 = vmul.f32 %v6789, %v4008
        %v6845 = vmul.f32 %v6791, %v4008
        %v6846 = vmul.f32 %v6793, %v4008
        %v6847 = vmul.f32 %v6795, %v4008
        %v6848 = vmul.f32 %v6797, %v4008
        %v6849 = vmul.f32 %v6799, %v4008
        %v6850 = vmul.f32 %v6801, %v4008
        %v6851 = vmul.f32 %v6803, %v4008
        %v6852 = vmul.f32 %v6805, %v4008
        %v6853 = vmul.f32 %v6807, %v4008
        %v6854 = vmul.f32 %v6809, %v4008
        %v6855 = vmul.f32 %v6811, %v4008
        %v6856 = vmul.f32 %v6813, %v4008
        %v6857 = vmul.f32 %v6815, %v4008
        %v6858 = vmul.f32 %v6817, %v4008
        %v6859 = vmul.f32 %v6819, %v4008
        %v6860 = vmul.f32 %v6821, %v4008
        %v6861 = vmul.f32 %v6823, %v4008
        %v6862 = vmul.f32 %v6825, %v4008
        %v6863 = vmul.f32 %v6827, %v4008
        %v6864 = vmul.f32 %v6829, %v4008
        %v6865 = vmul.f32 %v6831, %v4008
        %v6866 = vmul.f32 %v6833, %v4008
        %v6867 = vmul.f32 %v6835, %v4008
        %v6868 = vadd.f32 %v6836, 1e-05
        %v6869 = vadd.f32 %v6837, 1e-05
        %v6870 = vadd.f32 %v6838, 1e-05
        %v6871 = vadd.f32 %v6839, 1e-05
        %v6872 = vadd.f32 %v6840, 1e-05
        %v6873 = vadd.f32 %v6841, 1e-05
        %v6874 = vadd.f32 %v6842, 1e-05
        %v6875 = vadd.f32 %v6843, 1e-05
        %v6876 = vadd.f32 %v6844, 1e-05
        %v6877 = vadd.f32 %v6845, 1e-05
        %v6878 = vadd.f32 %v6846, 1e-05
        %v6879 = vadd.f32 %v6847, 1e-05
        %v6880 = vadd.f32 %v6848, 1e-05
        %v6881 = vadd.f32 %v6849, 1e-05
        %v6882 = vadd.f32 %v6850, 1e-05
        %v6883 = vadd.f32 %v6851, 1e-05
        %v6884 = vadd.f32 %v6852, 1e-05
        %v6885 = vadd.f32 %v6853, 1e-05
        %v6886 = vadd.f32 %v6854, 1e-05
        %v6887 = vadd.f32 %v6855, 1e-05
        %v6888 = vadd.f32 %v6856, 1e-05
        %v6889 = vadd.f32 %v6857, 1e-05
        %v6890 = vadd.f32 %v6858, 1e-05
        %v6891 = vadd.f32 %v6859, 1e-05
        %v6892 = vadd.f32 %v6860, 1e-05
        %v6893 = vadd.f32 %v6861, 1e-05
        %v6894 = vadd.f32 %v6862, 1e-05
        %v6895 = vadd.f32 %v6863, 1e-05
        %v6896 = vadd.f32 %v6864, 1e-05
        %v6897 = vadd.f32 %v6865, 1e-05
        %v6898 = vadd.f32 %v6866, 1e-05
        %v6899 = vadd.f32 %v6867, 1e-05
        %v6900 = vrsqrt.pop %v6868
        %v6901 = vrsqrt.pop %v6869
        %v6902 = vrsqrt.pop %v6870
        %v6903 = vrsqrt.pop %v6871
        %v6904 = vrsqrt.pop %v6872
        %v6905 = vrsqrt.pop %v6873
        %v6906 = vrsqrt.pop %v6874
        %v6907 = vrsqrt.pop %v6875
        %v6908 = vrsqrt.pop %v6876
        %v6909 = vrsqrt.pop %v6877
        %v6910 = vrsqrt.pop %v6878
        %v6911 = vrsqrt.pop %v6879
        %v6912 = vrsqrt.pop %v6880
        %v6913 = vrsqrt.pop %v6881
        %v6914 = vrsqrt.pop %v6882
        %v6915 = vrsqrt.pop %v6883
        %v6916 = vrsqrt.pop %v6884
        %v6917 = vrsqrt.pop %v6885
        %v6918 = vrsqrt.pop %v6886
        %v6919 = vrsqrt.pop %v6887
        %v6920 = vrsqrt.pop %v6888
        %v6921 = vrsqrt.pop %v6889
        %v6922 = vrsqrt.pop %v6890
        %v6923 = vrsqrt.pop %v6891
        %v6924 = vrsqrt.pop %v6892
        %v6925 = vrsqrt.pop %v6893
        %v6926 = vrsqrt.pop %v6894
        %v6927 = vrsqrt.pop %v6895
        %v6928 = vrsqrt.pop %v6896
        %v6929 = vrsqrt.pop %v6897
        %v6930 = vrsqrt.pop %v6898
        %v6931 = vrsqrt.pop %v6899
        %v6932 = vmul.f32 %v6708, %v6900
        %v6933 = vmul.f32 %v6709, %v6901
        %v6934 = vmul.f32 %v6710, %v6902
        %v6935 = vmul.f32 %v6711, %v6903
        %v6936 = vmul.f32 %v6712, %v6904
        %v6937 = vmul.f32 %v6713, %v6905
        %v6938 = vmul.f32 %v6714, %v6906
        %v6939 = vmul.f32 %v6715, %v6907
        %v6940 = vmul.f32 %v6716, %v6908
        %v6941 = vmul.f32 %v6717, %v6909
        %v6942 = vmul.f32 %v6718, %v6910
        %v6943 = vmul.f32 %v6719, %v6911
        %v6944 = vmul.f32 %v6720, %v6912
        %v6945 = vmul.f32 %v6721, %v6913
        %v6946 = vmul.f32 %v6722, %v6914
        %v6947 = vmul.f32 %v6723, %v6915
        %v6948 = vmul.f32 %v6724, %v6916
        %v6949 = vmul.f32 %v6725, %v6917
        %v6950 = vmul.f32 %v6726, %v6918
        %v6951 = vmul.f32 %v6727, %v6919
        %v6952 = vmul.f32 %v6728, %v6920
        %v6953 = vmul.f32 %v6729, %v6921
        %v6954 = vmul.f32 %v6730, %v6922
        %v6955 = vmul.f32 %v6731, %v6923
        %v6956 = vmul.f32 %v6732, %v6924
        %v6957 = vmul.f32 %v6733, %v6925
        %v6958 = vmul.f32 %v6734, %v6926
        %v6959 = vmul.f32 %v6735, %v6927
        %v6960 = vmul.f32 %v6736, %v6928
        %v6961 = vmul.f32 %v6737, %v6929
        %v6962 = vmul.f32 %v6738, %v6930
        %v6963 = vmul.f32 %v6739, %v6931
        %v6965 = vlaneseq
        %v6966 = vshrl.u32 %v6965, 7
        %v6967 = vsub.s32 0, %v6966
        %v6968 = vrot.slane %v1686, %v6967
        %v6970 = vmul.f32 %v6932, %v6968
        %v6971 = vmul.f32 %v6933, %v6968
        %v6972 = vmul.f32 %v6934, %v6968
        %v6973 = vmul.f32 %v6935, %v6968
        %v6974 = vmul.f32 %v6936, %v6968
        %v6975 = vmul.f32 %v6937, %v6968
        %v6976 = vmul.f32 %v6938, %v6968
        %v6977 = vmul.f32 %v6939, %v6968
        %v6978 = vmul.f32 %v6940, %v6968
        %v6979 = vmul.f32 %v6941, %v6968
        %v6980 = vmul.f32 %v6942, %v6968
        %v6981 = vmul.f32 %v6943, %v6968
        %v6982 = vmul.f32 %v6944, %v6968
        %v6983 = vmul.f32 %v6945, %v6968
        %v6984 = vmul.f32 %v6946, %v6968
        %v6985 = vmul.f32 %v6947, %v6968
        %v6986 = vmul.f32 %v6948, %v6968
        %v6987 = vmul.f32 %v6949, %v6968
        %v6988 = vmul.f32 %v6950, %v6968
        %v6989 = vmul.f32 %v6951, %v6968
        %v6990 = vmul.f32 %v6952, %v6968
        %v6991 = vmul.f32 %v6953, %v6968
        %v6992 = vmul.f32 %v6954, %v6968
        %v6993 = vmul.f32 %v6955, %v6968
        %v6994 = vmul.f32 %v6956, %v6968
        %v6995 = vmul.f32 %v6957, %v6968
        %v6996 = vmul.f32 %v6958, %v6968
        %v6997 = vmul.f32 %v6959, %v6968
        %v6998 = vmul.f32 %v6960, %v6968
        %v6999 = vmul.f32 %v6961, %v6968
        %v7000 = vmul.f32 %v6962, %v6968
        %v7001 = vmul.f32 %v6963, %v6968
        %v7003 = vlaneseq
        %v7004 = vshrl.u32 %v7003, 7
        %v7005 = vsub.s32 0, %v7004
        %v7006 = vrot.slane %v1688, %v7005
        %v7008 = vadd.f32 %v6970, %v7006
        %v7009 = vadd.f32 %v6971, %v7006
        %v7010 = vadd.f32 %v6972, %v7006
        %v7011 = vadd.f32 %v6973, %v7006
        %v7012 = vadd.f32 %v6974, %v7006
        %v7013 = vadd.f32 %v6975, %v7006
        %v7014 = vadd.f32 %v6976, %v7006
        %v7015 = vadd.f32 %v6977, %v7006
        %v7016 = vadd.f32 %v6978, %v7006
        %v7017 = vadd.f32 %v6979, %v7006
        %v7018 = vadd.f32 %v6980, %v7006
        %v7019 = vadd.f32 %v6981, %v7006
        %v7020 = vadd.f32 %v6982, %v7006
        %v7021 = vadd.f32 %v6983, %v7006
        %v7022 = vadd.f32 %v6984, %v7006
        %v7023 = vadd.f32 %v6985, %v7006
        %v7024 = vadd.f32 %v6986, %v7006
        %v7025 = vadd.f32 %v6987, %v7006
        %v7026 = vadd.f32 %v6988, %v7006
        %v7027 = vadd.f32 %v6989, %v7006
        %v7028 = vadd.f32 %v6990, %v7006
        %v7029 = vadd.f32 %v6991, %v7006
        %v7030 = vadd.f32 %v6992, %v7006
        %v7031 = vadd.f32 %v6993, %v7006
        %v7032 = vadd.f32 %v6994, %v7006
        %v7033 = vadd.f32 %v6995, %v7006
        %v7034 = vadd.f32 %v6996, %v7006
        %v7035 = vadd.f32 %v6997, %v7006
        %v7036 = vadd.f32 %v6998, %v7006
        %v7037 = vadd.f32 %v6999, %v7006
        %v7038 = vadd.f32 %v7000, %v7006
        %v7039 = vadd.f32 %v7001, %v7006
        %7040 = vst [vmem:[%s619 + $0x8] sm:$0xff] %v7008
        %7041 = vst [vmem:[%s619 + $0x18] sm:$0xff] %v7009
        %7042 = vst [vmem:[%s619 + $0x28] sm:$0xff] %v7010
        %7043 = vst [vmem:[%s619 + $0x38] sm:$0xff] %v7011
        %7044 = vst [vmem:[%s619 + $0x48] sm:$0xff] %v7012
        %7045 = vst [vmem:[%s619 + $0x58] sm:$0xff] %v7013
        %7046 = vst [vmem:[%s619 + $0x68] sm:$0xff] %v7014
        %7047 = vst [vmem:[%s619 + $0x78] sm:$0xff] %v7015
        %7048 = vst [vmem:[%s619 + $0x88] sm:$0xff] %v7016
        %7049 = vst [vmem:[%s619 + $0x98] sm:$0xff] %v7017
        %7050 = vst [vmem:[%s619 + $0xa8] sm:$0xff] %v7018
        %7051 = vst [vmem:[%s619 + $0xb8] sm:$0xff] %v7019
        %7052 = vst [vmem:[%s619 + $0xc8] sm:$0xff] %v7020
        %7053 = vst [vmem:[%s619 + $0xd8] sm:$0xff] %v7021
        %7054 = vst [vmem:[%s619 + $0xe8] sm:$0xff] %v7022
        %7055 = vst [vmem:[%s619 + $0xf8] sm:$0xff] %v7023
        %7056 = vst [vmem:[%s619 + $0x108] sm:$0xff] %v7024
        %7057 = vst [vmem:[%s619 + $0x118] sm:$0xff] %v7025
        %7058 = vst [vmem:[%s619 + $0x128] sm:$0xff] %v7026
        %7059 = vst [vmem:[%s619 + $0x138] sm:$0xff] %v7027
        %7060 = vst [vmem:[%s619 + $0x148] sm:$0xff] %v7028
        %7061 = vst [vmem:[%s619 + $0x158] sm:$0xff] %v7029
        %7062 = vst [vmem:[%s619 + $0x168] sm:$0xff] %v7030
        %7063 = vst [vmem:[%s619 + $0x178] sm:$0xff] %v7031
        %7064 = vst [vmem:[%s619 + $0x188] sm:$0xff] %v7032
        %7065 = vst [vmem:[%s619 + $0x198] sm:$0xff] %v7033
        %7066 = vst [vmem:[%s619 + $0x1a8] sm:$0xff] %v7034
        %7067 = vst [vmem:[%s619 + $0x1b8] sm:$0xff] %v7035
        %7068 = vst [vmem:[%s619 + $0x1c8] sm:$0xff] %v7036
        %7069 = vst [vmem:[%s619 + $0x1d8] sm:$0xff] %v7037
        %7070 = vst [vmem:[%s619 + $0x1e8] sm:$0xff] %v7038
        %7071 = vst [vmem:[%s619 + $0x1f8] sm:$0xff] %v7039
        %s7072 = sand.u32 %s332, 1
        %s7073 = scalar_lea.sflag [#allocation4], %s7072
        %s7074 = sand.u32 %s332, 1
        %s7075 = smul.addr %s7074, 512
        %s7076 = scalar_lea.vmem [#allocation17], %s7075
        // Predicated region
        $region109: #{tpu_custom_call.1} parent=71 // pred_check
          %p7077 = pneg %p342
        $region110: #{tpu_custom_call.1} parent=71 // pred_check_branch
          %7079 = sbr.rel (%p7077) target = $region112
        $region111: #{tpu_custom_call.1} parent=71 // pred_region
          %s7080 = smul.u32 2, %s36
          %s7082 = ssub.s32 8192, 8192
          %7083 = vsyncadd %s7073, %s7082
          %s7084 = smul.addr %s7080, 128
          %s7085 = scalar_lea.hbm %s13, %s7084
          %s7086 = sshll.u32 %s7076, 4
          %s7087 = int_to_ptr.vmem [resolvable:$true] %s7086
          %7092 = dma.vmem_to_hbm [thread:$0]  %s7087, 8192, %s7085, %s7073, 256, 512, 16
        $region112: #{tpu_custom_call.1} parent=71 // pred_fallthru
          _
      $region72: #{tpu_custom_call.1} parent=5 // pred_fallthru
        _
      %p7093 = scmp.le.s32.totalorder 2, %s31
      // Predicated region
      $region113: #{tpu_custom_call.1} parent=5 // pred_check
        %p7094 = pneg %p7093
      $region114: #{tpu_custom_call.1} parent=5 // pred_check_branch
        %7096 = sbr.rel (%p7094) target = $region116
      $region115: #{tpu_custom_call.1} parent=5 // pred_region
        %s7097 = ssub.s32 %s31, 2
        // Predicated region
        $region117: #{tpu_custom_call.1} parent=115 // pred_check
          %p7098 = pneg %p348
        $region118: #{tpu_custom_call.1} parent=115 // pred_check_branch
          %7100 = sbr.rel (%p7098) target = $region120
        $region119: #{tpu_custom_call.1} parent=115 // pred_region
          %s7101 = sand.u32 %s333, 1
          %s7102 = scalar_lea.sflag [#allocation4], %s7101
          %s7103 = sand.u32 %s333, 1
          %s7104 = smul.addr %s7103, 512
          %s7105 = scalar_lea.vmem [#allocation17], %s7104
          %7106 = dma.done %s7102, 8192
        $region120: #{tpu_custom_call.1} parent=115 // pred_fallthru
          _
      $region116: #{tpu_custom_call.1} parent=5 // pred_fallthru
        _
    $region6: #{tpu_custom_call.1} parent=1 // loop_footer
      %s35 = sadd.s32 1, %s31
    $region7: #{tpu_custom_call.1} parent=1 // loop_footer_branch
      %30 = sbr.rel target = $region3
    $region8: #{tpu_custom_call.1} parent=1 // loop_exit
      _
    %7107 = vsyncpa [#allocation3], 1
    %s7108 = scalar_lea.sflag [#allocation3], 1
    %7109 = vsyncpa %s7108, 1
    %7110 = vsyncpa [#allocation6], 1
    %s7111 = scalar_lea.sflag [#allocation6], 1
    %7112 = vsyncpa %s7111, 1
    %7113 = vsyncpa [#allocation9], 1
    %7114 = vsyncpa [#allocation12], 1
    %7115 = vsyncpa [#allocation15], 1
    %7116 = vsyncpa [#allocation4], 1
    %s7117 = scalar_lea.sflag [#allocation4], 1
    %7118 = vsyncpa %s7117, 1

</llo_original>
